<compile_context>
chip_gen: v7x
topology: tpu7x:2x2x1
jax: 0.10.0
libtpu: 0.0.40
codegen_flags: <defaults>
</compile_context>

<pallas_src>
import functools

import jax
import jax.numpy as jnp
from jax.experimental import pallas as pl
from jax.experimental.pallas import tpu as pltpu

# ---------------- configuration -------------------------------------------
C_IN = 16            # irreps_node_input  = 16x0e
C_PRE = 16           # irreps_pre_attn    = 16x0e
C_OUT = 16           # irreps_node_output = 16x0e
NUM_HEADS = 2
HEAD_DIM = 8         # irreps_head = 8x0e
MUL_ALPHA_HEAD = 8   # = get_mul_0(irreps_head * num_heads) // num_heads
EDGE_ATTR_DIM = 1    # irreps_edge_attr = 1x0e
EDGE_SCALAR_DIM = 8  # fc_neurons[0]
RAD_HIDDEN = 16      # fc_neurons[1]
WEIGHT_NUMEL = C_PRE                                   # dtp weight_numel ('uvu', 16x0e x 1x0e)
C_ATTN_ALL = NUM_HEADS * (MUL_ALPHA_HEAD + HEAD_DIM)   # 32 (alpha + value, per head)
C_ATTN_HEADS = NUM_HEADS * HEAD_DIM                    # 16
N_ALPHA = NUM_HEADS * MUL_ALPHA_HEAD                   # 16

EDGE_TILE = 512      # edges per grid step (multiple of 128 for the [1,TE] row block)
IDX_W = 8            # packed int32 edge-index stream width (col0=src, col1=dst)
EFEAT_W = 16         # packed f32 edge-feature stream width (scalars | attr | pad)


# ---------------- fused edge-tiled kernel -----------------------------------
def _graph_attention_kernel(
    # packed per-edge-tile inputs
    idx_ref, dstrow_ref, efeat_ref,
    # resident node data / parameters (constant index maps -> fetched once)
    x_ref, wsrc_ref, bsrc_ref, wdst_ref,
    wr1_ref, lng_ref, lnb_ref, wr2_ref, roff_ref, selea_ref,
    wa_ref, ba_ref, wv_ref, bv_ref,
    seladot_ref, selv_ref, wproj_ref, bproj_ref,
    # output
    out_ref,
    # VMEM scratch (persistent across edge tiles)
    msrc_ref, mdst_ref, accd_ref, accn_ref, m_ref,
    *, n_nodes):
  t = pl.program_id(0)

  # ---- tile 0: fused merge_src / merge_dst (bf16-resident) + acc init -------
  @pl.when(t == 0)
  def _init():
    x = x_ref[...]
    msrc_ref[...] = (jnp.dot(x, wsrc_ref[...], preferred_element_type=jnp.float32)
                     + bsrc_ref[...]).astype(jnp.bfloat16)
    mdst_ref[...] = jnp.dot(x, wdst_ref[...],
                            preferred_element_type=jnp.float32).astype(jnp.bfloat16)
    accd_ref[...] = jnp.zeros_like(accd_ref)
    accn_ref[...] = jnp.zeros_like(accn_ref)
    m_ref[...] = jnp.full_like(m_ref, -1e30)

  # ---- gather: msg = msg_src[edge_src] + msg_dst[edge_dst] -------------------
  # one-hots built in-register from iota compares; bf16 MXU (one-hot exact in bf16)
  src = idx_ref[:, 0:1]                                         # [TE, 1] i32
  dst = idx_ref[:, 1:2]                                         # [TE, 1] i32
  te = src.shape[0]
  lane_n = jax.lax.broadcasted_iota(jnp.int32, (te, n_nodes), 1)
  oh_src = (lane_n == src).astype(jnp.bfloat16)                 # padded src=N -> all zero
  oh_dst = (lane_n == dst).astype(jnp.bfloat16)
  msg = (jnp.dot(oh_src, msrc_ref[...], preferred_element_type=jnp.float32)
         + jnp.dot(oh_dst, mdst_ref[...], preferred_element_type=jnp.float32))

  # ---- RadialProfile(edge_scalars): Linear -> LayerNorm -> SiLU -> Linear+off
  # edge_scalars occupy efeat cols 0..7; w_rad1 is zero-padded to EFEAT_W rows,
  # so no lane-slicing of the packed feature block is needed.
  ef = efeat_ref[...]                                           # [TE, EFEAT_W]
  h = jnp.dot(ef, wr1_ref[...], preferred_element_type=jnp.float32)
  mu = jnp.mean(h, axis=-1, keepdims=True)
  var = jnp.mean((h - mu) ** 2, axis=-1, keepdims=True)
  h = (h - mu) * jax.lax.rsqrt(var + 1e-5) * lng_ref[...] + lnb_ref[...]
  h = h * jax.nn.sigmoid(h)                                     # SiLU
  rad_w = (jnp.dot(h, wr2_ref[...], preferred_element_type=jnp.float32)
           + roff_ref[...])                                     # [TE, C_PRE]

  # edge_attr broadcast to all channels via a selector matmul (col 8 of efeat)
  ea_b = jnp.dot(ef, selea_ref[...], preferred_element_type=jnp.float32)  # [TE, C_PRE]

  # ---- depthwise tensor product (0e x 0e -> 0e, 'uvu'): per-channel product -
  dtp = msg * ea_b * rad_w                                      # [TE, C_PRE]

  # ---- sep.lin split into lane-aligned alpha / value blocks -----------------
  alpha = (jnp.dot(dtp, wa_ref[...], preferred_element_type=jnp.float32)
           + ba_ref[...])                                       # [TE, H*mul_alpha_head]
  value = (jnp.dot(dtp, wv_ref[...], preferred_element_type=jnp.float32)
           + bv_ref[...])                                       # [TE, H*head_dim]

  # ---- SmoothLeakyReLU(0.2) -------------------------------------------------
  a = 0.2
  alpha = ((1.0 + a) / 2.0) * alpha \
      + ((1.0 - a) / 2.0) * alpha * (2.0 * jax.nn.sigmoid(alpha) - 1.0)

  # ---- logits = einsum('bik,aik->bi'); alpha_dot folded into the selector ---
  logits = jnp.dot(alpha, seladot_ref[...],
                   preferred_element_type=jnp.float32)          # [TE, H]

  # ---- online globally-stabilized segment softmax accumulation --------------
  # Padded edges have zero features -> bias-bounded logits (harmless in the max)
  # and dst = N (out of range) -> they never match the scatter one-hot.
  m_old = m_ref[...]                                            # [1, H]
  m_new = jnp.maximum(m_old, jnp.max(logits, axis=0, keepdims=True))
  scale = jnp.exp(m_old - m_new)                                # [1, H]
  m_ref[...] = m_new

  w_exp = jnp.exp(logits - m_new)                               # [TE, H]
  w_val = jnp.dot(w_exp, selv_ref[...],
                  preferred_element_type=jnp.float32)           # [TE, H*head_dim]

  sub_n = jax.lax.broadcasted_iota(jnp.int32, (n_nodes, te), 0)
  oh_scatter = (sub_n == dstrow_ref[...]).astype(jnp.bfloat16)  # [N, TE]

  # fused rescale + scatter-add (one read-modify-write per accumulator)
  accd_ref[...] = accd_ref[...] * scale + jnp.dot(
      oh_scatter, w_exp.astype(jnp.bfloat16),
      preferred_element_type=jnp.float32)                       # [N, H]
  scale_v = jnp.dot(scale, selv_ref[...], preferred_element_type=jnp.float32)
  accn_ref[...] = accn_ref[...] * scale_v + jnp.dot(
      oh_scatter, (value * w_val).astype(jnp.bfloat16),
      preferred_element_type=jnp.float32)                       # [N, H*head_dim]

  # ---- last tile: normalize, heads2vec (layout identity), proj --------------
  @pl.when(t == pl.num_programs(0) - 1)
  def _finalize():
    den = accd_ref[...]
    den = jnp.where(den > 0.0, den, 1.0)                        # nodes w/o in-edges
    inv = pl.reciprocal(den, approx=True)                       # EUP
    inv_full = jnp.dot(inv, selv_ref[...], preferred_element_type=jnp.float32)
    node_attn = accn_ref[...] * inv_full                        # [N, H*head_dim]
    out_ref[...] = (jnp.dot(node_attn, wproj_ref[...],
                            preferred_element_type=jnp.float32) + bproj_ref[...])


# ---------------- wrapper ----------------------------------------------------
def graph_attention(params, node_input, node_attr, edge_src, edge_dst,
                    edge_attr, edge_scalars, batch, *, edge_tile=EDGE_TILE):
  """Forward pass of GraphAttention (scalar-irreps config). node_attr / batch
  are accepted for signature fidelity but (as in the reference) unused."""
  del node_attr, batch
  N = node_input.shape[0]
  E = edge_src.shape[0]
  TE = int(edge_tile)
  assert TE % 128 == 0, "edge_tile must be a multiple of 128"
  n_tiles = max(1, -(-E // TE))
  E_pad = n_tiles * TE

  # ---- packed per-edge streams (3 DMAs/tile instead of 6; no mask stream) ----
  src32 = edge_src.astype(jnp.int32)
  dst32 = edge_dst.astype(jnp.int32)
  idx = jnp.full((E_pad, IDX_W), N, jnp.int32)          # padded edges -> node N (OOR)
  idx = idx.at[:E, 0].set(src32).at[:E, 1].set(dst32)
  dst_row = jnp.full((1, E_pad), N, jnp.int32).at[0, :E].set(dst32)
  efeat = jnp.zeros((E_pad, EFEAT_W), jnp.float32)
  efeat = efeat.at[:E, :EDGE_SCALAR_DIM].set(edge_scalars)
  efeat = efeat.at[:E, EDGE_SCALAR_DIM:EDGE_SCALAR_DIM + EDGE_ATTR_DIM].set(edge_attr)

  # ---- one-time parameter reshaping (outside the kernel) ---------------------
  # radial-net first layer consumes the packed feature block directly
  w_rad1_p = jnp.zeros((EFEAT_W, RAD_HIDDEN), jnp.float32)
  w_rad1_p = w_rad1_p.at[:EDGE_SCALAR_DIM, :].set(params["w_rad1"])
  # selector that broadcasts edge_attr (efeat col 8) to all C_PRE channels
  sel_ea = jnp.zeros((EFEAT_W, C_PRE), jnp.float32).at[EDGE_SCALAR_DIM, :].set(1.0)

  # split sep.lin columns into head-major alpha / value blocks (no in-kernel slices)
  per_head = MUL_ALPHA_HEAD + HEAD_DIM
  perm_a = jnp.asarray([h * per_head + k for h in range(NUM_HEADS)
                        for k in range(MUL_ALPHA_HEAD)], jnp.int32)
  perm_v = jnp.asarray([h * per_head + MUL_ALPHA_HEAD + k for h in range(NUM_HEADS)
                        for k in range(HEAD_DIM)], jnp.int32)
  w_alpha, b_alpha = params["w_lin"][:, perm_a], params["b_lin"][:, perm_a]
  w_value, b_value = params["w_lin"][:, perm_v], params["b_lin"][:, perm_v]

  # per-head selectors; alpha_dot folded into the logits selector
  sel01 = (jnp.arange(N_ALPHA)[:, None] // MUL_ALPHA_HEAD
           == jnp.arange(NUM_HEADS)[None, :]).astype(jnp.float32)   # [16, H]
  sel_adot = sel01 * params["adot"].reshape(-1, 1)                  # [16, H]
  sel_val = (jnp.arange(NUM_HEADS)[:, None]
             == jnp.arange(C_ATTN_HEADS)[None, :] // HEAD_DIM).astype(jnp.float32)  # [H, 16]

  args = (idx, dst_row, efeat,
          node_input, params["w_src"], params["b_src"], params["w_dst"],
          w_rad1_p, params["ln_g"], params["ln_b"], params["w_rad2"], params["rad_off"],
          sel_ea, w_alpha, b_alpha, w_value, b_value,
          sel_adot, sel_val, params["w_proj"], params["b_proj"])

  edge_specs = [
      pl.BlockSpec((TE, IDX_W), lambda t: (t, 0)),                # packed src/dst cols
      pl.BlockSpec((1, TE), lambda t: (0, t)),                    # dst row (scatter)
      pl.BlockSpec((TE, EFEAT_W), lambda t: (t, 0)),              # packed edge features
  ]
  const_specs = [pl.BlockSpec(a.shape, lambda t: (0, 0)) for a in args[3:]]

  kernel = functools.partial(_graph_attention_kernel, n_nodes=N)

  return pl.pallas_call(
      kernel,
      out_shape=jax.ShapeDtypeStruct((N, C_OUT), jnp.float32),
      grid=(n_tiles,),
      in_specs=edge_specs + const_specs,
      out_specs=pl.BlockSpec((N, C_OUT), lambda t: (0, 0)),
      scratch_shapes=[
          pltpu.VMEM((N, C_PRE), jnp.bfloat16),                   # msg_src (bf16-resident)
          pltpu.VMEM((N, C_PRE), jnp.bfloat16),                   # msg_dst (bf16-resident)
          pltpu.VMEM((N, NUM_HEADS), jnp.float32),                # softmax denominator acc
          pltpu.VMEM((N, C_ATTN_HEADS), jnp.float32),             # weighted-value acc
          pltpu.VMEM((1, NUM_HEADS), jnp.float32),                # running max
      ],
      compiler_params=pltpu.CompilerParams(
          dimension_semantics=("arbitrary",),        # serial accumulation over edge tiles
          vmem_limit_bytes=48 * 1024 * 1024),        # fits v7x 64 MiB; headroom on v5e/v6e
  )(*args)


# ---------------- pure-JAX reference (for a correctness check) -------------
def graph_attention_ref(params, node_input, node_attr, edge_src, edge_dst,
                        edge_attr, edge_scalars, batch):
  del node_attr, batch
  N = node_input.shape[0]
  msg_src = node_input @ params["w_src"] + params["b_src"]
  msg_dst = node_input @ params["w_dst"]
  msg = msg_src[edge_src] + msg_dst[edge_dst]
  h = edge_scalars @ params["w_rad1"]
  mu = h.mean(-1, keepdims=True)
  var = ((h - mu) ** 2).mean(-1, keepdims=True)
  h = (h - mu) / jnp.sqrt(var + 1e-5) * params["ln_g"] + params["ln_b"]
  h = h * jax.nn.sigmoid(h)
  rad_w = h @ params["w_rad2"] + params["rad_off"]
  dtp = msg * edge_attr * rad_w
  sep = dtp @ params["w_lin"] + params["b_lin"]
  m3 = sep.reshape(-1, NUM_HEADS, MUL_ALPHA_HEAD + HEAD_DIM)
  alpha, value = m3[:, :, :MUL_ALPHA_HEAD], m3[:, :, MUL_ALPHA_HEAD:]
  a = 0.2
  alpha = (1 + a) / 2 * alpha + (1 - a) / 2 * alpha * (2 * jax.nn.sigmoid(alpha) - 1)
  adot = params["adot"].reshape(1, NUM_HEADS, MUL_ALPHA_HEAD)
  logits = jnp.einsum("bik,aik->bi", alpha, adot)
  seg_max = jax.ops.segment_max(logits, edge_dst, num_segments=N)
  w_exp = jnp.exp(logits - seg_max[edge_dst])
  seg_sum = jax.ops.segment_sum(w_exp, edge_dst, num_segments=N)
  alpha_sm = w_exp / seg_sum[edge_dst]
  attn = value * alpha_sm[:, :, None]
  node_attn = jax.ops.segment_sum(attn, edge_dst, num_segments=N)
  node_attn = node_attn.reshape(N, NUM_HEADS * HEAD_DIM)
  return node_attn @ params["w_proj"] + params["b_proj"]


# ---------------- deterministic parameter init ------------------------------
def init_params(key):
  ks = jax.random.split(key, 16)

  def glorot(k, shape):
    s = (6.0 / (shape[0] + shape[1])) ** 0.5
    return jax.random.uniform(k, shape, jnp.float32, -s, s)

  return {
      "w_src": glorot(ks[0], (C_IN, C_PRE)),
      "b_src": jax.random.normal(ks[1], (1, C_PRE), jnp.float32) * 0.02,
      "w_dst": glorot(ks[2], (C_IN, C_PRE)),
      "w_rad1": glorot(ks[3], (EDGE_SCALAR_DIM, RAD_HIDDEN)),
      "ln_g": jnp.ones((1, RAD_HIDDEN), jnp.float32),
      "ln_b": jnp.zeros((1, RAD_HIDDEN), jnp.float32),
      "w_rad2": glorot(ks[4], (RAD_HIDDEN, WEIGHT_NUMEL)),
      "rad_off": jax.random.normal(ks[5], (1, WEIGHT_NUMEL), jnp.float32) * 0.02,
      "w_lin": glorot(ks[6], (C_PRE, C_ATTN_ALL)),
      "b_lin": jax.random.normal(ks[7], (1, C_ATTN_ALL), jnp.float32) * 0.02,
      "adot": glorot(ks[8], (1, NUM_HEADS * MUL_ALPHA_HEAD)),
      "w_proj": glorot(ks[9], (C_ATTN_HEADS, C_OUT)),
      "b_proj": jax.random.normal(ks[10], (1, C_OUT), jnp.float32) * 0.02,
  }


def _make_inputs(key, n_nodes, n_edges):
  kn, ks, kd, ka, ke = jax.random.split(key, 5)
  node_input = jax.random.normal(kn, (n_nodes, C_IN), jnp.float32)
  node_attr = jnp.ones((n_nodes, 1), jnp.float32)            # unused by forward
  edge_src = jax.random.randint(ks, (n_edges,), 0, n_nodes)
  edge_dst = jax.random.randint(kd, (n_edges,), 0, n_nodes)
  edge_attr = jax.random.normal(ka, (n_edges, EDGE_ATTR_DIM), jnp.float32)
  edge_scalars = jax.random.normal(ke, (n_edges, EDGE_SCALAR_DIM), jnp.float32)
  batch = jnp.zeros((n_nodes,), jnp.int32)                   # unused by forward
  return node_input, node_attr, edge_src, edge_dst, edge_attr, edge_scalars, batch


# ---------------- main ------------------------------------------------------
if __name__ == "__main__":
  key = jax.random.PRNGKey(0)
  kp, k1, k2, k3 = jax.random.split(key, 4)
  params = init_params(kp)

  # bf16 MXU operands on the gather/scatter path + approx reciprocal
  # -> ~1e-2 relative drift vs the f32 reference
  TOL = 3e-2

  # test 1: tiny graph, single (heavily padded) edge tile at the default TE=512
  inputs1 = _make_inputs(k1, 8, 32)
  out1 = jax.block_until_ready(graph_attention(params, *inputs1))
  ref1 = graph_attention_ref(params, *inputs1)
  assert out1.shape == (8, C_OUT)
  assert bool(jnp.all(jnp.isfinite(out1))), "non-finite output (test 1)"
  assert jnp.allclose(out1, ref1, rtol=TOL, atol=TOL), "mismatch vs reference (test 1)"

  # test 2: multi-tile accumulation with a small tile size (3 tiles of 128)
  inputs2 = _make_inputs(k2, 40, 300)
  out2 = jax.block_until_ready(graph_attention(params, *inputs2, edge_tile=128))
  ref2 = graph_attention_ref(params, *inputs2)
  assert out2.shape == (40, C_OUT)
  assert bool(jnp.all(jnp.isfinite(out2))), "non-finite output (test 2)"
  assert jnp.allclose(out2, ref2, rtol=TOL, atol=TOL), "mismatch vs reference (test 2)"

  # test 3: multi-tile accumulation at the default production tile size (512)
  inputs3 = _make_inputs(k3, 40, 1200)
  out3 = jax.block_until_ready(graph_attention(params, *inputs3))
  ref3 = graph_attention_ref(params, *inputs3)
  assert out3.shape == (40, C_OUT)
  assert bool(jnp.all(jnp.isfinite(out3))), "non-finite output (test 3)"
  assert jnp.allclose(out3, ref3, rtol=TOL, atol=TOL), "mismatch vs reference (test 3)"

  print("KERNEL_OK")
</pallas_src>

<mosaic_0001>
module attributes {stable_mosaic.version = 11 : i64} {
  func.func @_graph_attention_kernel(%arg0: i32, %arg1: memref<512x8xi32, #tpu.memory_space<vmem>>, %arg2: memref<1x512xi32, #tpu.memory_space<vmem>>, %arg3: memref<512x16xf32, #tpu.memory_space<vmem>>, %arg4: memref<8x16xf32, #tpu.memory_space<vmem>>, %arg5: memref<16x16xf32, #tpu.memory_space<vmem>>, %arg6: memref<1x16xf32, #tpu.memory_space<vmem>>, %arg7: memref<16x16xf32, #tpu.memory_space<vmem>>, %arg8: memref<16x16xf32, #tpu.memory_space<vmem>>, %arg9: memref<1x16xf32, #tpu.memory_space<vmem>>, %arg10: memref<1x16xf32, #tpu.memory_space<vmem>>, %arg11: memref<16x16xf32, #tpu.memory_space<vmem>>, %arg12: memref<1x16xf32, #tpu.memory_space<vmem>>, %arg13: memref<16x16xf32, #tpu.memory_space<vmem>>, %arg14: memref<16x16xf32, #tpu.memory_space<vmem>>, %arg15: memref<1x16xf32, #tpu.memory_space<vmem>>, %arg16: memref<16x16xf32, #tpu.memory_space<vmem>>, %arg17: memref<1x16xf32, #tpu.memory_space<vmem>>, %arg18: memref<16x2xf32, #tpu.memory_space<vmem>>, %arg19: memref<2x16xf32, #tpu.memory_space<vmem>>, %arg20: memref<16x16xf32, #tpu.memory_space<vmem>>, %arg21: memref<1x16xf32, #tpu.memory_space<vmem>>, %arg22: memref<8x16xf32, #tpu.memory_space<vmem>>, %arg23: memref<8x16xbf16, #tpu.memory_space<vmem>>, %arg24: memref<8x16xbf16, #tpu.memory_space<vmem>>, %arg25: memref<8x2xf32, #tpu.memory_space<vmem>>, %arg26: memref<8x16xf32, #tpu.memory_space<vmem>>, %arg27: memref<1x2xf32, #tpu.memory_space<vmem>>) attributes {dimension_semantics = [#tpu.dimension_semantics<arbitrary>], iteration_bounds = array<i64: 1>, scalar_prefetch = 0 : i64, scratch_operands = 5 : i64, tpu.core_type = #tpu.core_type<tc>, window_params = [{transform_indices = @transform_0, window_bounds = array<i64: 512, 8>}, {transform_indices = @transform_1, window_bounds = array<i64: 1, 512>}, {transform_indices = @transform_2, window_bounds = array<i64: 512, 16>}, {pipeline_mode = #tpu.pipeline_mode<synchronous>, transform_indices = @transform_3, window_bounds = array<i64: 8, 16>}, {pipeline_mode = #tpu.pipeline_mode<synchronous>, transform_indices = @transform_4, window_bounds = array<i64: 16, 16>}, {pipeline_mode = #tpu.pipeline_mode<synchronous>, transform_indices = @transform_5, window_bounds = array<i64: 1, 16>}, {pipeline_mode = #tpu.pipeline_mode<synchronous>, transform_indices = @transform_6, window_bounds = array<i64: 16, 16>}, {pipeline_mode = #tpu.pipeline_mode<synchronous>, transform_indices = @transform_7, window_bounds = array<i64: 16, 16>}, {pipeline_mode = #tpu.pipeline_mode<synchronous>, transform_indices = @transform_8, window_bounds = array<i64: 1, 16>}, {pipeline_mode = #tpu.pipeline_mode<synchronous>, transform_indices = @transform_9, window_bounds = array<i64: 1, 16>}, {pipeline_mode = #tpu.pipeline_mode<synchronous>, transform_indices = @transform_10, window_bounds = array<i64: 16, 16>}, {pipeline_mode = #tpu.pipeline_mode<synchronous>, transform_indices = @transform_11, window_bounds = array<i64: 1, 16>}, {pipeline_mode = #tpu.pipeline_mode<synchronous>, transform_indices = @transform_12, window_bounds = array<i64: 16, 16>}, {pipeline_mode = #tpu.pipeline_mode<synchronous>, transform_indices = @transform_13, window_bounds = array<i64: 16, 16>}, {pipeline_mode = #tpu.pipeline_mode<synchronous>, transform_indices = @transform_14, window_bounds = array<i64: 1, 16>}, {pipeline_mode = #tpu.pipeline_mode<synchronous>, transform_indices = @transform_15, window_bounds = array<i64: 16, 16>}, {pipeline_mode = #tpu.pipeline_mode<synchronous>, transform_indices = @transform_16, window_bounds = array<i64: 1, 16>}, {pipeline_mode = #tpu.pipeline_mode<synchronous>, transform_indices = @transform_17, window_bounds = array<i64: 16, 2>}, {pipeline_mode = #tpu.pipeline_mode<synchronous>, transform_indices = @transform_18, window_bounds = array<i64: 2, 16>}, {pipeline_mode = #tpu.pipeline_mode<synchronous>, transform_indices = @transform_19, window_bounds = array<i64: 16, 16>}, {pipeline_mode = #tpu.pipeline_mode<synchronous>, transform_indices = @transform_20, window_bounds = array<i64: 1, 16>}, {pipeline_mode = #tpu.pipeline_mode<synchronous>, transform_indices = @transform_21, window_bounds = array<i64: 8, 16>}]} {
    %c0_i32 = arith.constant 0 : i32
    %0 = arith.cmpi eq, %arg0, %c0_i32 : i32
    %1 = arith.extui %0 : i1 to i32
    %c0_i32_0 = arith.constant 0 : i32
    %2 = arith.cmpi ne, %1, %c0_i32_0 : i32
    scf.if %2 {
      %c0_74 = arith.constant 0 : index
      %c0_75 = arith.constant 0 : index
      %129 = vector.load %arg4[%c0_74, %c0_75] : memref<8x16xf32, #tpu.memory_space<vmem>>, vector<8x16xf32>
      %c0_76 = arith.constant 0 : index
      %c0_77 = arith.constant 0 : index
      %130 = vector.load %arg5[%c0_76, %c0_77] : memref<16x16xf32, #tpu.memory_space<vmem>>, vector<16x16xf32>
      %cst_78 = arith.constant dense<0.000000e+00> : vector<8x16xf32>
      %131 = tpu.matmul %129, %130, %cst_78 {dimension_numbers = #tpu.dot_dimension_numbers<[1], [0], [0], [1], [0, 0, 1, 1], [], []>} : vector<8x16xf32>, vector<16x16xf32>, vector<8x16xf32> -> vector<8x16xf32>
      %c0_79 = arith.constant 0 : index
      %c0_80 = arith.constant 0 : index
      %132 = vector.load %arg6[%c0_79, %c0_80] : memref<1x16xf32, #tpu.memory_space<vmem>>, vector<1x16xf32>
      %133 = vector.broadcast %132 : vector<1x16xf32> to vector<8x16xf32>
      %134 = arith.addf %131, %133 : vector<8x16xf32>
      %135 = arith.truncf %134 : vector<8x16xf32> to vector<8x16xbf16>
      %c0_81 = arith.constant 0 : index
      %c0_82 = arith.constant 0 : index
      %136 = vector.load %arg23[%c0_81, %c0_82] : memref<8x16xbf16, #tpu.memory_space<vmem>>, vector<8x16xbf16>
      tpu.vector_store %arg23[%c0_81, %c0_82], %135 {strides = array<i32>} : memref<8x16xbf16, #tpu.memory_space<vmem>>, vector<8x16xbf16>,
      %c0_83 = arith.constant 0 : index
      %c0_84 = arith.constant 0 : index
      %137 = vector.load %arg7[%c0_83, %c0_84] : memref<16x16xf32, #tpu.memory_space<vmem>>, vector<16x16xf32>
      %cst_85 = arith.constant dense<0.000000e+00> : vector<8x16xf32>
      %138 = tpu.matmul %129, %137, %cst_85 {dimension_numbers = #tpu.dot_dimension_numbers<[1], [0], [0], [1], [0, 0, 1, 1], [], []>} : vector<8x16xf32>, vector<16x16xf32>, vector<8x16xf32> -> vector<8x16xf32>
      %139 = arith.truncf %138 : vector<8x16xf32> to vector<8x16xbf16>
      %c0_86 = arith.constant 0 : index
      %c0_87 = arith.constant 0 : index
      %140 = vector.load %arg24[%c0_86, %c0_87] : memref<8x16xbf16, #tpu.memory_space<vmem>>, vector<8x16xbf16>
      tpu.vector_store %arg24[%c0_86, %c0_87], %139 {strides = array<i32>} : memref<8x16xbf16, #tpu.memory_space<vmem>>, vector<8x16xbf16>,
      %cst_88 = arith.constant 0.000000e+00 : f32
      %141 = vector.broadcast %cst_88 : f32 to vector<8x2xf32>
      %c0_89 = arith.constant 0 : index
      %c0_90 = arith.constant 0 : index
      %142 = vector.load %arg25[%c0_89, %c0_90] : memref<8x2xf32, #tpu.memory_space<vmem>>, vector<8x2xf32>
      tpu.vector_store %arg25[%c0_89, %c0_90], %141 {strides = array<i32>} : memref<8x2xf32, #tpu.memory_space<vmem>>, vector<8x2xf32>,
      %cst_91 = arith.constant 0.000000e+00 : f32
      %143 = vector.broadcast %cst_91 : f32 to vector<8x16xf32>
      %c0_92 = arith.constant 0 : index
      %c0_93 = arith.constant 0 : index
      %144 = vector.load %arg26[%c0_92, %c0_93] : memref<8x16xf32, #tpu.memory_space<vmem>>, vector<8x16xf32>
      tpu.vector_store %arg26[%c0_92, %c0_93], %143 {strides = array<i32>} : memref<8x16xf32, #tpu.memory_space<vmem>>, vector<8x16xf32>,
      %cst_94 = arith.constant -1.000000e+30 : f32
      %145 = vector.broadcast %cst_94 : f32 to vector<1x2xf32>
      %c0_95 = arith.constant 0 : index
      %c0_96 = arith.constant 0 : index
      %146 = vector.load %arg27[%c0_95, %c0_96] : memref<1x2xf32, #tpu.memory_space<vmem>>, vector<1x2xf32>
      tpu.vector_store %arg27[%c0_95, %c0_96], %145 {strides = array<i32>} : memref<1x2xf32, #tpu.memory_space<vmem>>, vector<1x2xf32>,
    } else {
    }
    %c0 = arith.constant 0 : index
    %c0_1 = arith.constant 0 : index
    %3 = vector.load %arg1[%c0, %c0_1] : memref<512x8xi32, #tpu.memory_space<vmem>>, vector<512x1xi32>
    %c0_2 = arith.constant 0 : index
    %c1 = arith.constant 1 : index
    %4 = vector.load %arg1[%c0_2, %c1] : memref<512x8xi32, #tpu.memory_space<vmem>>, vector<512x1xi32>
    %5 = tpu.iota {dimensions = array<i32: 1>} : vector<512x8xi32>
    %6 = vector.broadcast %3 : vector<512x1xi32> to vector<512x8xi32>
    %7 = arith.cmpi eq, %5, %6 : vector<512x8xi32>
    %8 = arith.extui %7 : vector<512x8xi1> to vector<512x8xi32>
    %9 = arith.sitofp %8 : vector<512x8xi32> to vector<512x8xf32>
    %10 = arith.truncf %9 : vector<512x8xf32> to vector<512x8xbf16>
    %11 = vector.broadcast %4 : vector<512x1xi32> to vector<512x8xi32>
    %12 = arith.cmpi eq, %5, %11 : vector<512x8xi32>
    %13 = arith.extui %12 : vector<512x8xi1> to vector<512x8xi32>
    %14 = arith.sitofp %13 : vector<512x8xi32> to vector<512x8xf32>
    %15 = arith.truncf %14 : vector<512x8xf32> to vector<512x8xbf16>
    %c0_3 = arith.constant 0 : index
    %c0_4 = arith.constant 0 : index
    %16 = vector.load %arg23[%c0_3, %c0_4] : memref<8x16xbf16, #tpu.memory_space<vmem>>, vector<8x16xbf16>
    %cst = arith.constant dense<0.000000e+00> : vector<512x16xf32>
    %17 = tpu.matmul %10, %16, %cst {dimension_numbers = #tpu.dot_dimension_numbers<[1], [0], [0], [1], [0, 0, 1, 1], [], []>} : vector<512x8xbf16>, vector<8x16xbf16>, vector<512x16xf32> -> vector<512x16xf32>
    %c0_5 = arith.constant 0 : index
    %c0_6 = arith.constant 0 : index
    %18 = vector.load %arg24[%c0_5, %c0_6] : memref<8x16xbf16, #tpu.memory_space<vmem>>, vector<8x16xbf16>
    %cst_7 = arith.constant dense<0.000000e+00> : vector<512x16xf32>
    %19 = tpu.matmul %15, %18, %cst_7 {dimension_numbers = #tpu.dot_dimension_numbers<[1], [0], [0], [1], [0, 0, 1, 1], [], []>} : vector<512x8xbf16>, vector<8x16xbf16>, vector<512x16xf32> -> vector<512x16xf32>
    %20 = arith.addf %17, %19 : vector<512x16xf32>
    %c0_8 = arith.constant 0 : index
    %c0_9 = arith.constant 0 : index
    %21 = vector.load %arg3[%c0_8, %c0_9] : memref<512x16xf32, #tpu.memory_space<vmem>>, vector<512x16xf32>
    %c0_10 = arith.constant 0 : index
    %c0_11 = arith.constant 0 : index
    %22 = vector.load %arg8[%c0_10, %c0_11] : memref<16x16xf32, #tpu.memory_space<vmem>>, vector<16x16xf32>
    %cst_12 = arith.constant dense<0.000000e+00> : vector<512x16xf32>
    %23 = tpu.matmul %21, %22, %cst_12 {dimension_numbers = #tpu.dot_dimension_numbers<[1], [0], [0], [1], [0, 0, 1, 1], [], []>} : vector<512x16xf32>, vector<16x16xf32>, vector<512x16xf32> -> vector<512x16xf32>
    %cst_13 = arith.constant dense<0.000000e+00> : vector<512xf32>
    %24 = vector.multi_reduction <add>, %23, %cst_13 [1] : vector<512x16xf32> to vector<512xf32>
    %25 = vector.shape_cast %24 : vector<512xf32> to vector<512x1xf32>
    %cst_14 = arith.constant 1.600000e+01 : f32
    %26 = vector.broadcast %cst_14 : f32 to vector<512x1xf32>
    %27 = arith.divf %25, %26 : vector<512x1xf32>
    %28 = vector.broadcast %27 : vector<512x1xf32> to vector<512x16xf32>
    %29 = arith.subf %23, %28 : vector<512x16xf32>
    %30 = arith.mulf %29, %29 : vector<512x16xf32>
    %cst_15 = arith.constant dense<0.000000e+00> : vector<512xf32>
    %31 = vector.multi_reduction <add>, %30, %cst_15 [1] : vector<512x16xf32> to vector<512xf32>
    %32 = vector.shape_cast %31 : vector<512xf32> to vector<512x1xf32>
    %cst_16 = arith.constant 1.600000e+01 : f32
    %33 = vector.broadcast %cst_16 : f32 to vector<512x1xf32>
    %34 = arith.divf %32, %33 : vector<512x1xf32>
    %35 = vector.broadcast %27 : vector<512x1xf32> to vector<512x16xf32>
    %36 = arith.subf %23, %35 : vector<512x16xf32>
    %cst_17 = arith.constant 9.99999974E-6 : f32
    %37 = vector.broadcast %cst_17 : f32 to vector<512x1xf32>
    %38 = arith.addf %34, %37 : vector<512x1xf32>
    %39 = math.rsqrt %38 : vector<512x1xf32>
    %40 = vector.broadcast %39 : vector<512x1xf32> to vector<512x16xf32>
    %41 = arith.mulf %36, %40 : vector<512x16xf32>
    %c0_18 = arith.constant 0 : index
    %c0_19 = arith.constant 0 : index
    %42 = vector.load %arg9[%c0_18, %c0_19] : memref<1x16xf32, #tpu.memory_space<vmem>>, vector<1x16xf32>
    %43 = vector.broadcast %42 : vector<1x16xf32> to vector<512x16xf32>
    %44 = arith.mulf %41, %43 : vector<512x16xf32>
    %c0_20 = arith.constant 0 : index
    %c0_21 = arith.constant 0 : index
    %45 = vector.load %arg10[%c0_20, %c0_21] : memref<1x16xf32, #tpu.memory_space<vmem>>, vector<1x16xf32>
    %46 = vector.broadcast %45 : vector<1x16xf32> to vector<512x16xf32>
    %47 = arith.addf %44, %46 : vector<512x16xf32>
    %48 = arith.negf %47 : vector<512x16xf32>
    %49 = math.exp %48 : vector<512x16xf32>
    %cst_22 = arith.constant 1.000000e+00 : f32
    %50 = vector.broadcast %cst_22 : f32 to vector<512x16xf32>
    %51 = arith.addf %50, %49 : vector<512x16xf32>
    %52 = arith.divf %50, %51 : vector<512x16xf32>
    %53 = arith.mulf %47, %52 : vector<512x16xf32>
    %c0_23 = arith.constant 0 : index
    %c0_24 = arith.constant 0 : index
    %54 = vector.load %arg11[%c0_23, %c0_24] : memref<16x16xf32, #tpu.memory_space<vmem>>, vector<16x16xf32>
    %cst_25 = arith.constant dense<0.000000e+00> : vector<512x16xf32>
    %55 = tpu.matmul %53, %54, %cst_25 {dimension_numbers = #tpu.dot_dimension_numbers<[1], [0], [0], [1], [0, 0, 1, 1], [], []>} : vector<512x16xf32>, vector<16x16xf32>, vector<512x16xf32> -> vector<512x16xf32>
    %c0_26 = arith.constant 0 : index
    %c0_27 = arith.constant 0 : index
    %56 = vector.load %arg12[%c0_26, %c0_27] : memref<1x16xf32, #tpu.memory_space<vmem>>, vector<1x16xf32>
    %57 = vector.broadcast %56 : vector<1x16xf32> to vector<512x16xf32>
    %58 = arith.addf %55, %57 : vector<512x16xf32>
    %c0_28 = arith.constant 0 : index
    %c0_29 = arith.constant 0 : index
    %59 = vector.load %arg13[%c0_28, %c0_29] : memref<16x16xf32, #tpu.memory_space<vmem>>, vector<16x16xf32>
    %cst_30 = arith.constant dense<0.000000e+00> : vector<512x16xf32>
    %60 = tpu.matmul %21, %59, %cst_30 {dimension_numbers = #tpu.dot_dimension_numbers<[1], [0], [0], [1], [0, 0, 1, 1], [], []>} : vector<512x16xf32>, vector<16x16xf32>, vector<512x16xf32> -> vector<512x16xf32>
    %61 = arith.mulf %20, %60 : vector<512x16xf32>
    %62 = arith.mulf %61, %58 : vector<512x16xf32>
    %c0_31 = arith.constant 0 : index
    %c0_32 = arith.constant 0 : index
    %63 = vector.load %arg14[%c0_31, %c0_32] : memref<16x16xf32, #tpu.memory_space<vmem>>, vector<16x16xf32>
    %cst_33 = arith.constant dense<0.000000e+00> : vector<512x16xf32>
    %64 = tpu.matmul %62, %63, %cst_33 {dimension_numbers = #tpu.dot_dimension_numbers<[1], [0], [0], [1], [0, 0, 1, 1], [], []>} : vector<512x16xf32>, vector<16x16xf32>, vector<512x16xf32> -> vector<512x16xf32>
    %c0_34 = arith.constant 0 : index
    %c0_35 = arith.constant 0 : index
    %65 = vector.load %arg15[%c0_34, %c0_35] : memref<1x16xf32, #tpu.memory_space<vmem>>, vector<1x16xf32>
    %66 = vector.broadcast %65 : vector<1x16xf32> to vector<512x16xf32>
    %67 = arith.addf %64, %66 : vector<512x16xf32>
    %c0_36 = arith.constant 0 : index
    %c0_37 = arith.constant 0 : index
    %68 = vector.load %arg16[%c0_36, %c0_37] : memref<16x16xf32, #tpu.memory_space<vmem>>, vector<16x16xf32>
    %cst_38 = arith.constant dense<0.000000e+00> : vector<512x16xf32>
    %69 = tpu.matmul %62, %68, %cst_38 {dimension_numbers = #tpu.dot_dimension_numbers<[1], [0], [0], [1], [0, 0, 1, 1], [], []>} : vector<512x16xf32>, vector<16x16xf32>, vector<512x16xf32> -> vector<512x16xf32>
    %c0_39 = arith.constant 0 : index
    %c0_40 = arith.constant 0 : index
    %70 = vector.load %arg17[%c0_39, %c0_40] : memref<1x16xf32, #tpu.memory_space<vmem>>, vector<1x16xf32>
    %71 = vector.broadcast %70 : vector<1x16xf32> to vector<512x16xf32>
    %72 = arith.addf %69, %71 : vector<512x16xf32>
    %cst_41 = arith.constant 6.000000e-01 : f32
    %73 = vector.broadcast %cst_41 : f32 to vector<512x16xf32>
    %74 = arith.mulf %73, %67 : vector<512x16xf32>
    %cst_42 = arith.constant 4.000000e-01 : f32
    %75 = vector.broadcast %cst_42 : f32 to vector<512x16xf32>
    %76 = arith.mulf %75, %67 : vector<512x16xf32>
    %77 = arith.negf %67 : vector<512x16xf32>
    %78 = math.exp %77 : vector<512x16xf32>
    %cst_43 = arith.constant 1.000000e+00 : f32
    %79 = vector.broadcast %cst_43 : f32 to vector<512x16xf32>
    %80 = arith.addf %79, %78 : vector<512x16xf32>
    %81 = arith.divf %79, %80 : vector<512x16xf32>
    %cst_44 = arith.constant 2.000000e+00 : f32
    %82 = vector.broadcast %cst_44 : f32 to vector<512x16xf32>
    %83 = arith.mulf %82, %81 : vector<512x16xf32>
    %cst_45 = arith.constant 1.000000e+00 : f32
    %84 = vector.broadcast %cst_45 : f32 to vector<512x16xf32>
    %85 = arith.subf %83, %84 : vector<512x16xf32>
    %86 = arith.mulf %76, %85 : vector<512x16xf32>
    %87 = arith.addf %74, %86 : vector<512x16xf32>
    %c0_46 = arith.constant 0 : index
    %c0_47 = arith.constant 0 : index
    %88 = vector.load %arg18[%c0_46, %c0_47] : memref<16x2xf32, #tpu.memory_space<vmem>>, vector<16x2xf32>
    %cst_48 = arith.constant dense<0.000000e+00> : vector<512x2xf32>
    %89 = tpu.matmul %87, %88, %cst_48 {dimension_numbers = #tpu.dot_dimension_numbers<[1], [0], [0], [1], [0, 0, 1, 1], [], []>} : vector<512x16xf32>, vector<16x2xf32>, vector<512x2xf32> -> vector<512x2xf32>
    %c0_49 = arith.constant 0 : index
    %c0_50 = arith.constant 0 : index
    %90 = vector.load %arg27[%c0_49, %c0_50] : memref<1x2xf32, #tpu.memory_space<vmem>>, vector<1x2xf32>
    %cst_51 = arith.constant dense<0xFF800000> : vector<2xf32>
    %91 = vector.multi_reduction <maximumf>, %89, %cst_51 [0] : vector<512x2xf32> to vector<2xf32>
    %92 = vector.shape_cast %91 : vector<2xf32> to vector<1x2xf32>
    %93 = arith.maximumf %90, %92 : vector<1x2xf32>
    %94 = arith.subf %90, %93 : vector<1x2xf32>
    %95 = math.exp %94 : vector<1x2xf32>
    %c0_52 = arith.constant 0 : index
    %c0_53 = arith.constant 0 : index
    %96 = vector.load %arg27[%c0_52, %c0_53] : memref<1x2xf32, #tpu.memory_space<vmem>>, vector<1x2xf32>
    tpu.vector_store %arg27[%c0_52, %c0_53], %93 {strides = array<i32>} : memref<1x2xf32, #tpu.memory_space<vmem>>, vector<1x2xf32>,
    %97 = vector.broadcast %93 : vector<1x2xf32> to vector<512x2xf32>
    %98 = arith.subf %89, %97 : vector<512x2xf32>
    %99 = math.exp %98 : vector<512x2xf32>
    %c0_54 = arith.constant 0 : index
    %c0_55 = arith.constant 0 : index
    %100 = vector.load %arg19[%c0_54, %c0_55] : memref<2x16xf32, #tpu.memory_space<vmem>>, vector<2x16xf32>
    %cst_56 = arith.constant dense<0.000000e+00> : vector<512x16xf32>
    %101 = tpu.matmul %99, %100, %cst_56 {dimension_numbers = #tpu.dot_dimension_numbers<[1], [0], [0], [1], [0, 0, 1, 1], [], []>} : vector<512x2xf32>, vector<2x16xf32>, vector<512x16xf32> -> vector<512x16xf32>
    %102 = tpu.iota {dimensions = array<i32: 0>} : vector<8x512xi32>
    %c0_57 = arith.constant 0 : index
    %c0_58 = arith.constant 0 : index
    %103 = vector.load %arg2[%c0_57, %c0_58] : memref<1x512xi32, #tpu.memory_space<vmem>>, vector<1x512xi32>
    %104 = vector.broadcast %103 : vector<1x512xi32> to vector<8x512xi32>
    %105 = arith.cmpi eq, %102, %104 : vector<8x512xi32>
    %106 = arith.extui %105 : vector<8x512xi1> to vector<8x512xi32>
    %107 = arith.sitofp %106 : vector<8x512xi32> to vector<8x512xf32>
    %108 = arith.truncf %107 : vector<8x512xf32> to vector<8x512xbf16>
    %c0_59 = arith.constant 0 : index
    %c0_60 = arith.constant 0 : index
    %109 = vector.load %arg25[%c0_59, %c0_60] : memref<8x2xf32, #tpu.memory_space<vmem>>, vector<8x2xf32>
    %110 = vector.broadcast %95 : vector<1x2xf32> to vector<8x2xf32>
    %111 = arith.mulf %109, %110 : vector<8x2xf32>
    %112 = arith.truncf %99 : vector<512x2xf32> to vector<512x2xbf16>
    %cst_61 = arith.constant dense<0.000000e+00> : vector<8x2xf32>
    %113 = tpu.matmul %108, %112, %cst_61 {dimension_numbers = #tpu.dot_dimension_numbers<[1], [0], [0], [1], [0, 0, 1, 1], [], []>} : vector<8x512xbf16>, vector<512x2xbf16>, vector<8x2xf32> -> vector<8x2xf32>
    %114 = arith.addf %111, %113 : vector<8x2xf32>
    %c0_62 = arith.constant 0 : index
    %c0_63 = arith.constant 0 : index
    %115 = vector.load %arg25[%c0_62, %c0_63] : memref<8x2xf32, #tpu.memory_space<vmem>>, vector<8x2xf32>
    tpu.vector_store %arg25[%c0_62, %c0_63], %114 {strides = array<i32>} : memref<8x2xf32, #tpu.memory_space<vmem>>, vector<8x2xf32>,
    %c0_64 = arith.constant 0 : index
    %c0_65 = arith.constant 0 : index
    %116 = vector.load %arg19[%c0_64, %c0_65] : memref<2x16xf32, #tpu.memory_space<vmem>>, vector<2x16xf32>
    %cst_66 = arith.constant dense<0.000000e+00> : vector<1x16xf32>
    %117 = tpu.matmul %95, %116, %cst_66 {dimension_numbers = #tpu.dot_dimension_numbers<[1], [0], [0], [1], [0, 0, 1, 1], [], []>} : vector<1x2xf32>, vector<2x16xf32>, vector<1x16xf32> -> vector<1x16xf32>
    %c0_67 = arith.constant 0 : index
    %c0_68 = arith.constant 0 : index
    %118 = vector.load %arg26[%c0_67, %c0_68] : memref<8x16xf32, #tpu.memory_space<vmem>>, vector<8x16xf32>
    %119 = vector.broadcast %117 : vector<1x16xf32> to vector<8x16xf32>
    %120 = arith.mulf %118, %119 : vector<8x16xf32>
    %121 = arith.mulf %72, %101 : vector<512x16xf32>
    %122 = arith.truncf %121 : vector<512x16xf32> to vector<512x16xbf16>
    %cst_69 = arith.constant dense<0.000000e+00> : vector<8x16xf32>
    %123 = tpu.matmul %108, %122, %cst_69 {dimension_numbers = #tpu.dot_dimension_numbers<[1], [0], [0], [1], [0, 0, 1, 1], [], []>} : vector<8x512xbf16>, vector<512x16xbf16>, vector<8x16xf32> -> vector<8x16xf32>
    %124 = arith.addf %120, %123 : vector<8x16xf32>
    %c0_70 = arith.constant 0 : index
    %c0_71 = arith.constant 0 : index
    %125 = vector.load %arg26[%c0_70, %c0_71] : memref<8x16xf32, #tpu.memory_space<vmem>>, vector<8x16xf32>
    tpu.vector_store %arg26[%c0_70, %c0_71], %124 {strides = array<i32>} : memref<8x16xf32, #tpu.memory_space<vmem>>, vector<8x16xf32>,
    %c0_i32_72 = arith.constant 0 : i32
    %126 = arith.cmpi eq, %arg0, %c0_i32_72 : i32
    %127 = arith.extui %126 : i1 to i32
    %c0_i32_73 = arith.constant 0 : i32
    %128 = arith.cmpi ne, %127, %c0_i32_73 : i32
    scf.if %128 {
      %c0_74 = arith.constant 0 : index
      %c0_75 = arith.constant 0 : index
      %129 = vector.load %arg25[%c0_74, %c0_75] : memref<8x2xf32, #tpu.memory_space<vmem>>, vector<8x2xf32>
      %cst_76 = arith.constant 0.000000e+00 : f32
      %130 = vector.broadcast %cst_76 : f32 to vector<8x2xf32>
      %131 = arith.cmpf ogt, %129, %130 : vector<8x2xf32>
      %cst_77 = arith.constant 1.000000e+00 : f32
      %132 = vector.broadcast %cst_77 : f32 to vector<8x2xf32>
      %133 = arith.select %131, %129, %132 : vector<8x2xi1>, vector<8x2xf32>
      %134 = tpu.reciprocal %133 {approx = true} : vector<8x2xf32> -> vector<8x2xf32>
      %c0_78 = arith.constant 0 : index
      %c0_79 = arith.constant 0 : index
      %135 = vector.load %arg19[%c0_78, %c0_79] : memref<2x16xf32, #tpu.memory_space<vmem>>, vector<2x16xf32>
      %cst_80 = arith.constant dense<0.000000e+00> : vector<8x16xf32>
      %136 = tpu.matmul %134, %135, %cst_80 {dimension_numbers = #tpu.dot_dimension_numbers<[1], [0], [0], [1], [0, 0, 1, 1], [], []>} : vector<8x2xf32>, vector<2x16xf32>, vector<8x16xf32> -> vector<8x16xf32>
      %c0_81 = arith.constant 0 : index
      %c0_82 = arith.constant 0 : index
      %137 = vector.load %arg26[%c0_81, %c0_82] : memref<8x16xf32, #tpu.memory_space<vmem>>, vector<8x16xf32>
      %138 = arith.mulf %137, %136 : vector<8x16xf32>
      %c0_83 = arith.constant 0 : index
      %c0_84 = arith.constant 0 : index
      %139 = vector.load %arg20[%c0_83, %c0_84] : memref<16x16xf32, #tpu.memory_space<vmem>>, vector<16x16xf32>
      %cst_85 = arith.constant dense<0.000000e+00> : vector<8x16xf32>
      %140 = tpu.matmul %138, %139, %cst_85 {dimension_numbers = #tpu.dot_dimension_numbers<[1], [0], [0], [1], [0, 0, 1, 1], [], []>} : vector<8x16xf32>, vector<16x16xf32>, vector<8x16xf32> -> vector<8x16xf32>
      %c0_86 = arith.constant 0 : index
      %c0_87 = arith.constant 0 : index
      %141 = vector.load %arg21[%c0_86, %c0_87] : memref<1x16xf32, #tpu.memory_space<vmem>>, vector<1x16xf32>
      %142 = vector.broadcast %141 : vector<1x16xf32> to vector<8x16xf32>
      %143 = arith.addf %140, %142 : vector<8x16xf32>
      %c0_88 = arith.constant 0 : index
      %c0_89 = arith.constant 0 : index
      %144 = vector.load %arg22[%c0_88, %c0_89] : memref<8x16xf32, #tpu.memory_space<vmem>>, vector<8x16xf32>
      tpu.vector_store %arg22[%c0_88, %c0_89], %143 {strides = array<i32>} : memref<8x16xf32, #tpu.memory_space<vmem>>, vector<8x16xf32>,
    } else {
    }
    return
  }
  func.func @transform_0(%arg0: i32) -> (i32, i32) {
    %c0_i32 = arith.constant 0 : i32
    %c0_i32_0 = arith.constant 0 : i32
    return %arg0, %c0_i32 : i32, i32
  }
  func.func @transform_1(%arg0: i32) -> (i32, i32) {
    %c0_i32 = arith.constant 0 : i32
    %c0_i32_0 = arith.constant 0 : i32
    return %c0_i32, %arg0 : i32, i32
  }
  func.func @transform_2(%arg0: i32) -> (i32, i32) {
    %c0_i32 = arith.constant 0 : i32
    %c0_i32_0 = arith.constant 0 : i32
    return %arg0, %c0_i32 : i32, i32
  }
  func.func @transform_3(%arg0: i32) -> (i32, i32) {
    %c0_i32 = arith.constant 0 : i32
    %c0_i32_0 = arith.constant 0 : i32
    %c0_i32_1 = arith.constant 0 : i32
    return %c0_i32, %c0_i32_0 : i32, i32
  }
  func.func @transform_4(%arg0: i32) -> (i32, i32) {
    %c0_i32 = arith.constant 0 : i32
    %c0_i32_0 = arith.constant 0 : i32
    %c0_i32_1 = arith.constant 0 : i32
    return %c0_i32, %c0_i32_0 : i32, i32
  }
  func.func @transform_5(%arg0: i32) -> (i32, i32) {
    %c0_i32 = arith.constant 0 : i32
    %c0_i32_0 = arith.constant 0 : i32
    %c0_i32_1 = arith.constant 0 : i32
    return %c0_i32, %c0_i32_0 : i32, i32
  }
  func.func @transform_6(%arg0: i32) -> (i32, i32) {
    %c0_i32 = arith.constant 0 : i32
    %c0_i32_0 = arith.constant 0 : i32
    %c0_i32_1 = arith.constant 0 : i32
    return %c0_i32, %c0_i32_0 : i32, i32
  }
  func.func @transform_7(%arg0: i32) -> (i32, i32) {
    %c0_i32 = arith.constant 0 : i32
    %c0_i32_0 = arith.constant 0 : i32
    %c0_i32_1 = arith.constant 0 : i32
    return %c0_i32, %c0_i32_0 : i32, i32
  }
  func.func @transform_8(%arg0: i32) -> (i32, i32) {
    %c0_i32 = arith.constant 0 : i32
    %c0_i32_0 = arith.constant 0 : i32
    %c0_i32_1 = arith.constant 0 : i32
    return %c0_i32, %c0_i32_0 : i32, i32
  }
  func.func @transform_9(%arg0: i32) -> (i32, i32) {
    %c0_i32 = arith.constant 0 : i32
    %c0_i32_0 = arith.constant 0 : i32
    %c0_i32_1 = arith.constant 0 : i32
    return %c0_i32, %c0_i32_0 : i32, i32
  }
  func.func @transform_10(%arg0: i32) -> (i32, i32) {
    %c0_i32 = arith.constant 0 : i32
    %c0_i32_0 = arith.constant 0 : i32
    %c0_i32_1 = arith.constant 0 : i32
    return %c0_i32, %c0_i32_0 : i32, i32
  }
  func.func @transform_11(%arg0: i32) -> (i32, i32) {
    %c0_i32 = arith.constant 0 : i32
    %c0_i32_0 = arith.constant 0 : i32
    %c0_i32_1 = arith.constant 0 : i32
    return %c0_i32, %c0_i32_0 : i32, i32
  }
  func.func @transform_12(%arg0: i32) -> (i32, i32) {
    %c0_i32 = arith.constant 0 : i32
    %c0_i32_0 = arith.constant 0 : i32
    %c0_i32_1 = arith.constant 0 : i32
    return %c0_i32, %c0_i32_0 : i32, i32
  }
  func.func @transform_13(%arg0: i32) -> (i32, i32) {
    %c0_i32 = arith.constant 0 : i32
    %c0_i32_0 = arith.constant 0 : i32
    %c0_i32_1 = arith.constant 0 : i32
    return %c0_i32, %c0_i32_0 : i32, i32
  }
  func.func @transform_14(%arg0: i32) -> (i32, i32) {
    %c0_i32 = arith.constant 0 : i32
    %c0_i32_0 = arith.constant 0 : i32
    %c0_i32_1 = arith.constant 0 : i32
    return %c0_i32, %c0_i32_0 : i32, i32
  }
  func.func @transform_15(%arg0: i32) -> (i32, i32) {
    %c0_i32 = arith.constant 0 : i32
    %c0_i32_0 = arith.constant 0 : i32
    %c0_i32_1 = arith.constant 0 : i32
    return %c0_i32, %c0_i32_0 : i32, i32
  }
  func.func @transform_16(%arg0: i32) -> (i32, i32) {
    %c0_i32 = arith.constant 0 : i32
    %c0_i32_0 = arith.constant 0 : i32
    %c0_i32_1 = arith.constant 0 : i32
    return %c0_i32, %c0_i32_0 : i32, i32
  }
  func.func @transform_17(%arg0: i32) -> (i32, i32) {
    %c0_i32 = arith.constant 0 : i32
    %c0_i32_0 = arith.constant 0 : i32
    %c0_i32_1 = arith.constant 0 : i32
    return %c0_i32, %c0_i32_0 : i32, i32
  }
  func.func @transform_18(%arg0: i32) -> (i32, i32) {
    %c0_i32 = arith.constant 0 : i32
    %c0_i32_0 = arith.constant 0 : i32
    %c0_i32_1 = arith.constant 0 : i32
    return %c0_i32, %c0_i32_0 : i32, i32
  }
  func.func @transform_19(%arg0: i32) -> (i32, i32) {
    %c0_i32 = arith.constant 0 : i32
    %c0_i32_0 = arith.constant 0 : i32
    %c0_i32_1 = arith.constant 0 : i32
    return %c0_i32, %c0_i32_0 : i32, i32
  }
  func.func @transform_20(%arg0: i32) -> (i32, i32) {
    %c0_i32 = arith.constant 0 : i32
    %c0_i32_0 = arith.constant 0 : i32
    %c0_i32_1 = arith.constant 0 : i32
    return %c0_i32, %c0_i32_0 : i32, i32
  }
  func.func @transform_21(%arg0: i32) -> (i32, i32) {
    %c0_i32 = arith.constant 0 : i32
    %c0_i32_0 = arith.constant 0 : i32
    %c0_i32_1 = arith.constant 0 : i32
    return %c0_i32, %c0_i32_0 : i32, i32
  }
}

</mosaic_0001>

<llo_original>
// kernel: tpu_custom_call.1
$region0: #{tpu_custom_call.1}
  #allocation0 [shape = 'u32[]', space=smem, size = 0x4, offset = 0x4, fixed_abs, tag = 'smem constant byte address 0x4 - core index']
  #allocation1 [shape = 'u32[144,128]{1,0:T(1,128)}', space=vmem, size = 0x12000, scoped, tag = 'internal scratch']
  #allocation2 [shape = 'bf16[8,16]{1,0:T(8,128)(2,1)}', space=vmem, size = 0x800, scoped, tag = 'scratch operand']
  #allocation3 [shape = 'bf16[8,16]{1,0:T(8,128)(2,1)}', space=vmem, size = 0x800, scoped, tag = 'scratch operand']
  #allocation4 [shape = 'f32[8,2]{1,0:T(8,128)}', space=vmem, size = 0x1000, scoped, tag = 'scratch operand']
  #allocation5 [shape = 'f32[8,16]{1,0:T(8,128)}', space=vmem, size = 0x1000, scoped, tag = 'scratch operand']
  #allocation6 [shape = 'f32[1,2]{1,0:T(1,128)}', space=vmem, size = 0x200, scoped, tag = 'scratch operand']
  %s0 = inlined_call_operand.vmem [shape: s32[512,8], index: 0, kind: input, shape index: {}]
  %s1 = inlined_call_operand.vmem [shape: s32[1,512], index: 1, kind: input, shape index: {}]
  %s2 = inlined_call_operand.vmem [shape: f32[512,16], index: 2, kind: input, shape index: {}]
  %s3 = inlined_call_operand.vmem [shape: f32[8,16], index: 3, kind: input, shape index: {}]
  %s4 = inlined_call_operand.vmem [shape: f32[16,16], index: 4, kind: input, shape index: {}]
  %s5 = inlined_call_operand.vmem [shape: f32[1,16], index: 5, kind: input, shape index: {}]
  %s6 = inlined_call_operand.vmem [shape: f32[16,16], index: 6, kind: input, shape index: {}]
  %s7 = inlined_call_operand.vmem [shape: f32[16,16], index: 7, kind: input, shape index: {}]
  %s8 = inlined_call_operand.vmem [shape: f32[1,16], index: 8, kind: input, shape index: {}]
  %s9 = inlined_call_operand.vmem [shape: f32[1,16], index: 9, kind: input, shape index: {}]
  %s10 = inlined_call_operand.vmem [shape: f32[16,16], index: 10, kind: input, shape index: {}]
  %s11 = inlined_call_operand.vmem [shape: f32[1,16], index: 11, kind: input, shape index: {}]
  %s12 = inlined_call_operand.vmem [shape: f32[16,16], index: 12, kind: input, shape index: {}]
  %s13 = inlined_call_operand.vmem [shape: f32[16,16], index: 13, kind: input, shape index: {}]
  %s14 = inlined_call_operand.vmem [shape: f32[1,16], index: 14, kind: input, shape index: {}]
  %s15 = inlined_call_operand.vmem [shape: f32[16,16], index: 15, kind: input, shape index: {}]
  %s16 = inlined_call_operand.vmem [shape: f32[1,16], index: 16, kind: input, shape index: {}]
  %s17 = inlined_call_operand.vmem [shape: f32[16,2], index: 17, kind: input, shape index: {}]
  %s18 = inlined_call_operand.vmem [shape: f32[2,16], index: 18, kind: input, shape index: {}]
  %s19 = inlined_call_operand.vmem [shape: f32[16,16], index: 19, kind: input, shape index: {}]
  %s20 = inlined_call_operand.vmem [shape: f32[1,16], index: 20, kind: input, shape index: {}]
  %s21 = inlined_call_operand.hbm [shape: f32[8,16], index: 21, kind: output, shape index: {}]
  %s22 = sld [smem:[#allocation0]]
  $region102: #{tpu_custom_call.1} parent=0
    _
  %s24 = ssub.s32 1, %s22
  %s25 = scalar_select 0, %s24, %s22
  $region1: #{tpu_custom_call.1} parent=0
    #allocation7 [shape = 'u8[4096]{0}', space=vmem, size = 0x1000, scoped, tag = 'output window, operand 0, single buffered']
    #allocation8 [shape = 's32[1]{0}', space=sflag, size = 0x4, scoped, tag = 'scoped memory for tpu_custom_call.1']
    %26 = vsyncpa [#allocation8], 0
    // Predicated region
    $region2: #{tpu_custom_call.1} parent=1 // pred_check
      _
    $region3: #{tpu_custom_call.1} parent=1 // pred_check_branch
      %28 = sbr.rel (0) target = $region5
    $region4: #{tpu_custom_call.1} parent=1 // pred_region
      _
    $region5: #{tpu_custom_call.1} parent=1 // pred_fallthru
      _
    // Predicated region
    $region6: #{tpu_custom_call.1} parent=1 // pred_check
      _
    $region7: #{tpu_custom_call.1} parent=1 // pred_check_branch
      %30 = sbr.rel (0) target = $region9
    $region8: #{tpu_custom_call.1} parent=1 // pred_region
      _
    $region9: #{tpu_custom_call.1} parent=1 // pred_fallthru
      _
    // Predicated region
    $region10: #{tpu_custom_call.1} parent=1 // pred_check
      _
    $region11: #{tpu_custom_call.1} parent=1 // pred_check_branch
      %32 = sbr.rel (0) target = $region13
    $region12: #{tpu_custom_call.1} parent=1 // pred_region
      _
    $region13: #{tpu_custom_call.1} parent=1 // pred_fallthru
      _
    // Predicated region
    $region14: #{tpu_custom_call.1} parent=1 // pred_check
      _
    $region15: #{tpu_custom_call.1} parent=1 // pred_check_branch
      %34 = sbr.rel (0) target = $region17
    $region16: #{tpu_custom_call.1} parent=1 // pred_region
      _
    $region17: #{tpu_custom_call.1} parent=1 // pred_fallthru
      _
    // Predicated region
    $region18: #{tpu_custom_call.1} parent=1 // pred_check
      _
    $region19: #{tpu_custom_call.1} parent=1 // pred_check_branch
      %36 = sbr.rel (0) target = $region21
    $region20: #{tpu_custom_call.1} parent=1 // pred_region
      _
    $region21: #{tpu_custom_call.1} parent=1 // pred_fallthru
      _
    // Predicated region
    $region22: #{tpu_custom_call.1} parent=1 // pred_check
      _
    $region23: #{tpu_custom_call.1} parent=1 // pred_check_branch
      %38 = sbr.rel (0) target = $region25
    $region24: #{tpu_custom_call.1} parent=1 // pred_region
      _
    $region25: #{tpu_custom_call.1} parent=1 // pred_fallthru
      _
    // Predicated region
    $region26: #{tpu_custom_call.1} parent=1 // pred_check
      _
    $region27: #{tpu_custom_call.1} parent=1 // pred_check_branch
      %40 = sbr.rel (0) target = $region29
    $region28: #{tpu_custom_call.1} parent=1 // pred_region
      _
    $region29: #{tpu_custom_call.1} parent=1 // pred_fallthru
      _
    // Predicated region
    $region30: #{tpu_custom_call.1} parent=1 // pred_check
      _
    $region31: #{tpu_custom_call.1} parent=1 // pred_check_branch
      %42 = sbr.rel (0) target = $region33
    $region32: #{tpu_custom_call.1} parent=1 // pred_region
      _
    $region33: #{tpu_custom_call.1} parent=1 // pred_fallthru
      _
    // Predicated region
    $region34: #{tpu_custom_call.1} parent=1 // pred_check
      _
    $region35: #{tpu_custom_call.1} parent=1 // pred_check_branch
      %44 = sbr.rel (0) target = $region37
    $region36: #{tpu_custom_call.1} parent=1 // pred_region
      _
    $region37: #{tpu_custom_call.1} parent=1 // pred_fallthru
      _
    // Predicated region
    $region38: #{tpu_custom_call.1} parent=1 // pred_check
      _
    $region39: #{tpu_custom_call.1} parent=1 // pred_check_branch
      %46 = sbr.rel (0) target = $region41
    $region40: #{tpu_custom_call.1} parent=1 // pred_region
      _
    $region41: #{tpu_custom_call.1} parent=1 // pred_fallthru
      _
    // Predicated region
    $region42: #{tpu_custom_call.1} parent=1 // pred_check
      _
    $region43: #{tpu_custom_call.1} parent=1 // pred_check_branch
      %48 = sbr.rel (0) target = $region45
    $region44: #{tpu_custom_call.1} parent=1 // pred_region
      _
    $region45: #{tpu_custom_call.1} parent=1 // pred_fallthru
      _
    // Predicated region
    $region46: #{tpu_custom_call.1} parent=1 // pred_check
      _
    $region47: #{tpu_custom_call.1} parent=1 // pred_check_branch
      %50 = sbr.rel (0) target = $region49
    $region48: #{tpu_custom_call.1} parent=1 // pred_region
      _
    $region49: #{tpu_custom_call.1} parent=1 // pred_fallthru
      _
    // Predicated region
    $region50: #{tpu_custom_call.1} parent=1 // pred_check
      _
    $region51: #{tpu_custom_call.1} parent=1 // pred_check_branch
      %52 = sbr.rel (0) target = $region53
    $region52: #{tpu_custom_call.1} parent=1 // pred_region
      _
    $region53: #{tpu_custom_call.1} parent=1 // pred_fallthru
      _
    // Predicated region
    $region54: #{tpu_custom_call.1} parent=1 // pred_check
      _
    $region55: #{tpu_custom_call.1} parent=1 // pred_check_branch
      %54 = sbr.rel (0) target = $region57
    $region56: #{tpu_custom_call.1} parent=1 // pred_region
      _
    $region57: #{tpu_custom_call.1} parent=1 // pred_fallthru
      _
    // Predicated region
    $region58: #{tpu_custom_call.1} parent=1 // pred_check
      _
    $region59: #{tpu_custom_call.1} parent=1 // pred_check_branch
      %56 = sbr.rel (0) target = $region61
    $region60: #{tpu_custom_call.1} parent=1 // pred_region
      _
    $region61: #{tpu_custom_call.1} parent=1 // pred_fallthru
      _
    // Predicated region
    $region62: #{tpu_custom_call.1} parent=1 // pred_check
      _
    $region63: #{tpu_custom_call.1} parent=1 // pred_check_branch
      %58 = sbr.rel (0) target = $region65
    $region64: #{tpu_custom_call.1} parent=1 // pred_region
      _
    $region65: #{tpu_custom_call.1} parent=1 // pred_fallthru
      _
    // Predicated region
    $region66: #{tpu_custom_call.1} parent=1 // pred_check
      _
    $region67: #{tpu_custom_call.1} parent=1 // pred_check_branch
      %60 = sbr.rel (0) target = $region69
    $region68: #{tpu_custom_call.1} parent=1 // pred_region
      _
    $region69: #{tpu_custom_call.1} parent=1 // pred_fallthru
      _
    // Predicated region
    $region70: #{tpu_custom_call.1} parent=1 // pred_check
      _
    $region71: #{tpu_custom_call.1} parent=1 // pred_check_branch
      %62 = sbr.rel (0) target = $region73
    $region72: #{tpu_custom_call.1} parent=1 // pred_region
      _
    $region73: #{tpu_custom_call.1} parent=1 // pred_fallthru
      _
    // Predicated region
    $region74: #{tpu_custom_call.1} parent=1 // pred_check
      _
    $region75: #{tpu_custom_call.1} parent=1 // pred_check_branch
      %64 = sbr.rel (0) target = $region77
    $region76: #{tpu_custom_call.1} parent=1 // pred_region
      _
    $region77: #{tpu_custom_call.1} parent=1 // pred_fallthru
      _
    // Predicated region
    $region78: #{tpu_custom_call.1} parent=1 // pred_check
      _
    $region79: #{tpu_custom_call.1} parent=1 // pred_check_branch
      %66 = sbr.rel (0) target = $region81
    $region80: #{tpu_custom_call.1} parent=1 // pred_region
      _
    $region81: #{tpu_custom_call.1} parent=1 // pred_fallthru
      _
    // Predicated region
    $region82: #{tpu_custom_call.1} parent=1 // pred_check
      _
    $region83: #{tpu_custom_call.1} parent=1 // pred_check_branch
      %68 = sbr.rel (0) target = $region85
    $region84: #{tpu_custom_call.1} parent=1 // pred_region
      _
    $region85: #{tpu_custom_call.1} parent=1 // pred_fallthru
      _
    %p70 = scmp.eq.s32.totalorder 0, 0
    // Predicated region
    $region86: #{tpu_custom_call.1} parent=1 // pred_check
      %p71 = pneg %p70
    $region87: #{tpu_custom_call.1} parent=1 // pred_check_branch
      %73 = sbr.rel (%p71) target = $region89
    $region88: #{tpu_custom_call.1} parent=1 // pred_region
      %v74 = vld [vmem:[%s3] sm:$0xff]
      %v75 = vld [vmem:[%s4] sm:$0xff]
      %v76 = vld [vmem:[%s4 + $0x8] sm:$0xff]
      %v77 = vld [vmem:[%s5] sm:$0x1]
      %v79 = vlaneseq
      %v80 = vshrl.u32 %v79, 7
      %v81 = vsub.s32 0, %v80
      %v82 = vrot.slane %v77, %v81
      %vm84 = vcmask 130048
      %v86 = vsel %vm84, %v74, 0
      %88 = vmatprep.subr.mxu0 0.0
      %89 = vmatpush1.msra.mxu0 %v75
      %90 = vmatprep.subr.mxu0 0.0
      %91 = vmatpush1.msra.mxu0 %v76
      %92 = vmatprep.subr.mxu0 0.0
      %93 = vmatpush1.msra.mxu0 0.0
      %94 = vmatprep.subr.mxu0 0.0
      %95 = vmatpush1.msra.mxu0 0.0
      %96 = vmatprep.subr.mxu0 0.0
      %97 = vmatpush1.msra.mxu0 0.0
      %98 = vmatprep.subr.mxu0 0.0
      %99 = vmatpush1.msra.mxu0 0.0
      %100 = vmatprep.subr.mxu0 0.0
      %101 = vmatpush1.msra.mxu0 0.0
      %102 = vmatprep.subr.mxu0 0.0
      %103 = vmatpush1.msra.mxu0 0.0
      %104 = vmatprep.subr.mxu0 0.0
      %105 = vmatpush1.msra.mxu0 0.0
      %106 = vmatprep.subr.mxu0 0.0
      %107 = vmatpush1.msra.mxu0 0.0
      %108 = vmatprep.subr.mxu0 0.0
      %109 = vmatpush1.msra.mxu0 0.0
      %110 = vmatprep.subr.mxu0 0.0
      %111 = vmatpush1.msra.mxu0 0.0
      %112 = vmatprep.subr.mxu0 0.0
      %113 = vmatpush1.msra.mxu0 0.0
      %114 = vmatprep.subr.mxu0 0.0
      %115 = vmatpush1.msra.mxu0 0.0
      %116 = vmatprep.subr.mxu0 0.0
      %117 = vmatpush1.msra.mxu0 0.0
      %118 = vmatprep.subr.mxu0 0.0
      %119 = vmatpush1.msra.mxu0 0.0
      %120 = vmatprep.subr.mxu0 0.0
      %121 = vmatpush1.msra.mxu0 0.0
      %122 = vmatprep.subr.mxu0 0.0
      %123 = vmatpush1.msra.mxu0 0.0
      %124 = vmatprep.subr.mxu0 0.0
      %125 = vmatpush1.msra.mxu0 0.0
      %126 = vmatprep.subr.mxu0 0.0
      %127 = vmatpush1.msra.mxu0 0.0
      %128 = vmatprep.subr.mxu0 0.0
      %129 = vmatpush1.msra.mxu0 0.0
      %130 = vmatprep.subr.mxu0 0.0
      %131 = vmatpush1.msra.mxu0 0.0
      %132 = vmatprep.subr.mxu0 0.0
      %133 = vmatpush1.msra.mxu0 0.0
      %134 = vmatprep.subr.mxu0 0.0
      %135 = vmatpush1.msra.mxu0 0.0
      %136 = vmatprep.subr.mxu0 0.0
      %137 = vmatpush1.msra.mxu0 0.0
      %138 = vmatprep.subr.mxu0 0.0
      %139 = vmatpush1.msra.mxu0 0.0
      %140 = vmatprep.subr.mxu0 0.0
      %141 = vmatpush1.msra.mxu0 0.0
      %142 = vmatprep.subr.mxu0 0.0
      %143 = vmatpush1.msra.mxu0 0.0
      %144 = vmatprep.subr.mxu0 0.0
      %145 = vmatpush1.msra.mxu0 0.0
      %146 = vmatprep.subr.mxu0 0.0
      %147 = vmatpush1.msra.mxu0 0.0
      %148 = vmatprep.subr.mxu0 0.0
      %149 = vmatpush1.msra.mxu0 0.0
      %150 = vmatprep.subr.mxu0 0.0
      %151 = vmatpush1.msra.mxu0 0.0
      %152 = vmatprep.mubr.f32.mxu0 0.0
      %153 = vmatmul.mubr.f32.gmra.mrb[0].mxu0 %v86
      %v154 = vpop.f32.mrb[0].mxu0
      %v155 = vadd.f32 %v82, %v154
      %v156 = vpop.f32.mrb[0].mxu0
      %157 = vdwg.mxu0
      %v158 = vpack.c.bf16 %v155, %v155
      %vm159 = vcmask 125952
      %160 = vst.msk [vmem:[#allocation2] sm:$0xf] %vm159, %v158
      %v161 = vld [vmem:[%s6] sm:$0xff]
      %v162 = vld [vmem:[%s6 + $0x8] sm:$0xff]
      %163 = vmatprep.subr.mxu0 0.0
      %164 = vmatpush1.msra.mxu0 %v161
      %165 = vmatprep.subr.mxu0 0.0
      %166 = vmatpush1.msra.mxu0 %v162
      %167 = vmatprep.subr.mxu0 0.0
      %168 = vmatpush1.msra.mxu0 0.0
      %169 = vmatprep.subr.mxu0 0.0
      %170 = vmatpush1.msra.mxu0 0.0
      %171 = vmatprep.subr.mxu0 0.0
      %172 = vmatpush1.msra.mxu0 0.0
      %173 = vmatprep.subr.mxu0 0.0
      %174 = vmatpush1.msra.mxu0 0.0
      %175 = vmatprep.subr.mxu0 0.0
      %176 = vmatpush1.msra.mxu0 0.0
      %177 = vmatprep.subr.mxu0 0.0
      %178 = vmatpush1.msra.mxu0 0.0
      %179 = vmatprep.subr.mxu0 0.0
      %180 = vmatpush1.msra.mxu0 0.0
      %181 = vmatprep.subr.mxu0 0.0
      %182 = vmatpush1.msra.mxu0 0.0
      %183 = vmatprep.subr.mxu0 0.0
      %184 = vmatpush1.msra.mxu0 0.0
      %185 = vmatprep.subr.mxu0 0.0
      %186 = vmatpush1.msra.mxu0 0.0
      %187 = vmatprep.subr.mxu0 0.0
      %188 = vmatpush1.msra.mxu0 0.0
      %189 = vmatprep.subr.mxu0 0.0
      %190 = vmatpush1.msra.mxu0 0.0
      %191 = vmatprep.subr.mxu0 0.0
      %192 = vmatpush1.msra.mxu0 0.0
      %193 = vmatprep.subr.mxu0 0.0
      %194 = vmatpush1.msra.mxu0 0.0
      %195 = vmatprep.subr.mxu0 0.0
      %196 = vmatpush1.msra.mxu0 0.0
      %197 = vmatprep.subr.mxu0 0.0
      %198 = vmatpush1.msra.mxu0 0.0
      %199 = vmatprep.subr.mxu0 0.0
      %200 = vmatpush1.msra.mxu0 0.0
      %201 = vmatprep.subr.mxu0 0.0
      %202 = vmatpush1.msra.mxu0 0.0
      %203 = vmatprep.subr.mxu0 0.0
      %204 = vmatpush1.msra.mxu0 0.0
      %205 = vmatprep.subr.mxu0 0.0
      %206 = vmatpush1.msra.mxu0 0.0
      %207 = vmatprep.subr.mxu0 0.0
      %208 = vmatpush1.msra.mxu0 0.0
      %209 = vmatprep.subr.mxu0 0.0
      %210 = vmatpush1.msra.mxu0 0.0
      %211 = vmatprep.subr.mxu0 0.0
      %212 = vmatpush1.msra.mxu0 0.0
      %213 = vmatprep.subr.mxu0 0.0
      %214 = vmatpush1.msra.mxu0 0.0
      %215 = vmatprep.subr.mxu0 0.0
      %216 = vmatpush1.msra.mxu0 0.0
      %217 = vmatprep.subr.mxu0 0.0
      %218 = vmatpush1.msra.mxu0 0.0
      %219 = vmatprep.subr.mxu0 0.0
      %220 = vmatpush1.msra.mxu0 0.0
      %221 = vmatprep.subr.mxu0 0.0
      %222 = vmatpush1.msra.mxu0 0.0
      %223 = vmatprep.subr.mxu0 0.0
      %224 = vmatpush1.msra.mxu0 0.0
      %225 = vmatprep.subr.mxu0 0.0
      %226 = vmatpush1.msra.mxu0 0.0
      %227 = vmatprep.mubr.f32.mxu0 0.0
      %228 = vmatmul.mubr.f32.gmra.mrb[0].mxu0 %v86
      %v229 = vpop.f32.mrb[0].mxu0
      %v230 = vadd.f32 0.0, %v229
      %v231 = vpop.f32.mrb[0].mxu0
      %232 = vdwg.mxu0
      %v233 = vpack.c.bf16 %v230, %v230
      %234 = vst.msk [vmem:[#allocation3] sm:$0xf] %vm159, %v233
      %vm235 = vcmask 15360
      %236 = vst.msk [vmem:[#allocation4] sm:$0xff] %vm235, 0.0
      %237 = vst.msk [vmem:[#allocation5] sm:$0xff] %vm84, 0.0
      %vm238 = vcmask 8192
      %239 = vst.msk [vmem:[#allocation6] sm:$0x1] %vm238, -1e+30
    $region89: #{tpu_custom_call.1} parent=1 // pred_fallthru
      _
    %v240 = vld [vmem:[%s0] sm:$0xff]
    %v241 = vld [vmem:[%s0 + $0x8] sm:$0xff]
    %v242 = vld [vmem:[%s0 + $0x10] sm:$0xff]
    %v243 = vld [vmem:[%s0 + $0x18] sm:$0xff]
    %v244 = vld [vmem:[%s0 + $0x20] sm:$0xff]
    %v245 = vld [vmem:[%s0 + $0x28] sm:$0xff]
    %v246 = vld [vmem:[%s0 + $0x30] sm:$0xff]
    %v247 = vld [vmem:[%s0 + $0x38] sm:$0xff]
    %v248 = vld [vmem:[%s0 + $0x40] sm:$0xff]
    %v249 = vld [vmem:[%s0 + $0x48] sm:$0xff]
    %v250 = vld [vmem:[%s0 + $0x50] sm:$0xff]
    %v251 = vld [vmem:[%s0 + $0x58] sm:$0xff]
    %v252 = vld [vmem:[%s0 + $0x60] sm:$0xff]
    %v253 = vld [vmem:[%s0 + $0x68] sm:$0xff]
    %v254 = vld [vmem:[%s0 + $0x70] sm:$0xff]
    %v255 = vld [vmem:[%s0 + $0x78] sm:$0xff]
    %v256 = vld [vmem:[%s0 + $0x80] sm:$0xff]
    %v257 = vld [vmem:[%s0 + $0x88] sm:$0xff]
    %v258 = vld [vmem:[%s0 + $0x90] sm:$0xff]
    %v259 = vld [vmem:[%s0 + $0x98] sm:$0xff]
    %v260 = vld [vmem:[%s0 + $0xa0] sm:$0xff]
    %v261 = vld [vmem:[%s0 + $0xa8] sm:$0xff]
    %v262 = vld [vmem:[%s0 + $0xb0] sm:$0xff]
    %v263 = vld [vmem:[%s0 + $0xb8] sm:$0xff]
    %v264 = vld [vmem:[%s0 + $0xc0] sm:$0xff]
    %v265 = vld [vmem:[%s0 + $0xc8] sm:$0xff]
    %v266 = vld [vmem:[%s0 + $0xd0] sm:$0xff]
    %v267 = vld [vmem:[%s0 + $0xd8] sm:$0xff]
    %v268 = vld [vmem:[%s0 + $0xe0] sm:$0xff]
    %v269 = vld [vmem:[%s0 + $0xe8] sm:$0xff]
    %v270 = vld [vmem:[%s0 + $0xf0] sm:$0xff]
    %v271 = vld [vmem:[%s0 + $0xf8] sm:$0xff]
    %v272 = vld [vmem:[%s0 + $0x100] sm:$0xff]
    %v273 = vld [vmem:[%s0 + $0x108] sm:$0xff]
    %v274 = vld [vmem:[%s0 + $0x110] sm:$0xff]
    %v275 = vld [vmem:[%s0 + $0x118] sm:$0xff]
    %v276 = vld [vmem:[%s0 + $0x120] sm:$0xff]
    %v277 = vld [vmem:[%s0 + $0x128] sm:$0xff]
    %v278 = vld [vmem:[%s0 + $0x130] sm:$0xff]
    %v279 = vld [vmem:[%s0 + $0x138] sm:$0xff]
    %v280 = vld [vmem:[%s0 + $0x140] sm:$0xff]
    %v281 = vld [vmem:[%s0 + $0x148] sm:$0xff]
    %v282 = vld [vmem:[%s0 + $0x150] sm:$0xff]
    %v283 = vld [vmem:[%s0 + $0x158] sm:$0xff]
    %v284 = vld [vmem:[%s0 + $0x160] sm:$0xff]
    %v285 = vld [vmem:[%s0 + $0x168] sm:$0xff]
    %v286 = vld [vmem:[%s0 + $0x170] sm:$0xff]
    %v287 = vld [vmem:[%s0 + $0x178] sm:$0xff]
    %v288 = vld [vmem:[%s0 + $0x180] sm:$0xff]
    %v289 = vld [vmem:[%s0 + $0x188] sm:$0xff]
    %v290 = vld [vmem:[%s0 + $0x190] sm:$0xff]
    %v291 = vld [vmem:[%s0 + $0x198] sm:$0xff]
    %v292 = vld [vmem:[%s0 + $0x1a0] sm:$0xff]
    %v293 = vld [vmem:[%s0 + $0x1a8] sm:$0xff]
    %v294 = vld [vmem:[%s0 + $0x1b0] sm:$0xff]
    %v295 = vld [vmem:[%s0 + $0x1b8] sm:$0xff]
    %v296 = vld [vmem:[%s0 + $0x1c0] sm:$0xff]
    %v297 = vld [vmem:[%s0 + $0x1c8] sm:$0xff]
    %v298 = vld [vmem:[%s0 + $0x1d0] sm:$0xff]
    %v299 = vld [vmem:[%s0 + $0x1d8] sm:$0xff]
    %v300 = vld [vmem:[%s0 + $0x1e0] sm:$0xff]
    %v301 = vld [vmem:[%s0 + $0x1e8] sm:$0xff]
    %v302 = vld [vmem:[%s0 + $0x1f0] sm:$0xff]
    %v303 = vld [vmem:[%s0 + $0x1f8] sm:$0xff]
    %v304 = vlaneseq
    %v305 = vand.u32 %v304, 127
    %306 = vset.pattern.permute.xlu0 0
    %307 = vperm.xlu0 %306, %v240
    %v308 = vpop.permute.xlu0 %307
    %309 = vset.pattern.permute.xlu0 0
    %310 = vperm.xlu0 %309, %v241
    %v311 = vpop.permute.xlu0 %310
    %312 = vset.pattern.permute.xlu0 0
    %313 = vperm.xlu0 %312, %v242
    %v314 = vpop.permute.xlu0 %313
    %315 = vset.pattern.permute.xlu0 0
    %316 = vperm.xlu0 %315, %v243
    %v317 = vpop.permute.xlu0 %316
    %318 = vset.pattern.permute.xlu0 0
    %319 = vperm.xlu0 %318, %v244
    %v320 = vpop.permute.xlu0 %319
    %321 = vset.pattern.permute.xlu0 0
    %322 = vperm.xlu0 %321, %v245
    %v323 = vpop.permute.xlu0 %322
    %324 = vset.pattern.permute.xlu0 0
    %325 = vperm.xlu0 %324, %v246
    %v326 = vpop.permute.xlu0 %325
    %327 = vset.pattern.permute.xlu0 0
    %328 = vperm.xlu0 %327, %v247
    %v329 = vpop.permute.xlu0 %328
    %330 = vset.pattern.permute.xlu0 0
    %331 = vperm.xlu0 %330, %v248
    %v332 = vpop.permute.xlu0 %331
    %333 = vset.pattern.permute.xlu0 0
    %334 = vperm.xlu0 %333, %v249
    %v335 = vpop.permute.xlu0 %334
    %336 = vset.pattern.permute.xlu0 0
    %337 = vperm.xlu0 %336, %v250
    %v338 = vpop.permute.xlu0 %337
    %339 = vset.pattern.permute.xlu0 0
    %340 = vperm.xlu0 %339, %v251
    %v341 = vpop.permute.xlu0 %340
    %342 = vset.pattern.permute.xlu0 0
    %343 = vperm.xlu0 %342, %v252
    %v344 = vpop.permute.xlu0 %343
    %345 = vset.pattern.permute.xlu0 0
    %346 = vperm.xlu0 %345, %v253
    %v347 = vpop.permute.xlu0 %346
    %348 = vset.pattern.permute.xlu0 0
    %349 = vperm.xlu0 %348, %v254
    %v350 = vpop.permute.xlu0 %349
    %351 = vset.pattern.permute.xlu0 0
    %352 = vperm.xlu0 %351, %v255
    %v353 = vpop.permute.xlu0 %352
    %354 = vset.pattern.permute.xlu0 0
    %355 = vperm.xlu0 %354, %v256
    %v356 = vpop.permute.xlu0 %355
    %357 = vset.pattern.permute.xlu0 0
    %358 = vperm.xlu0 %357, %v257
    %v359 = vpop.permute.xlu0 %358
    %360 = vset.pattern.permute.xlu0 0
    %361 = vperm.xlu0 %360, %v258
    %v362 = vpop.permute.xlu0 %361
    %363 = vset.pattern.permute.xlu0 0
    %364 = vperm.xlu0 %363, %v259
    %v365 = vpop.permute.xlu0 %364
    %366 = vset.pattern.permute.xlu0 0
    %367 = vperm.xlu0 %366, %v260
    %v368 = vpop.permute.xlu0 %367
    %369 = vset.pattern.permute.xlu0 0
    %370 = vperm.xlu0 %369, %v261
    %v371 = vpop.permute.xlu0 %370
    %372 = vset.pattern.permute.xlu0 0
    %373 = vperm.xlu0 %372, %v262
    %v374 = vpop.permute.xlu0 %373
    %375 = vset.pattern.permute.xlu0 0
    %376 = vperm.xlu0 %375, %v263
    %v377 = vpop.permute.xlu0 %376
    %378 = vset.pattern.permute.xlu0 0
    %379 = vperm.xlu0 %378, %v264
    %v380 = vpop.permute.xlu0 %379
    %381 = vset.pattern.permute.xlu0 0
    %382 = vperm.xlu0 %381, %v265
    %v383 = vpop.permute.xlu0 %382
    %384 = vset.pattern.permute.xlu0 0
    %385 = vperm.xlu0 %384, %v266
    %v386 = vpop.permute.xlu0 %385
    %387 = vset.pattern.permute.xlu0 0
    %388 = vperm.xlu0 %387, %v267
    %v389 = vpop.permute.xlu0 %388
    %390 = vset.pattern.permute.xlu0 0
    %391 = vperm.xlu0 %390, %v268
    %v392 = vpop.permute.xlu0 %391
    %393 = vset.pattern.permute.xlu0 0
    %394 = vperm.xlu0 %393, %v269
    %v395 = vpop.permute.xlu0 %394
    %396 = vset.pattern.permute.xlu0 0
    %397 = vperm.xlu0 %396, %v270
    %v398 = vpop.permute.xlu0 %397
    %399 = vset.pattern.permute.xlu0 0
    %400 = vperm.xlu0 %399, %v271
    %v401 = vpop.permute.xlu0 %400
    %402 = vset.pattern.permute.xlu0 0
    %403 = vperm.xlu0 %402, %v272
    %v404 = vpop.permute.xlu0 %403
    %405 = vset.pattern.permute.xlu0 0
    %406 = vperm.xlu0 %405, %v273
    %v407 = vpop.permute.xlu0 %406
    %408 = vset.pattern.permute.xlu0 0
    %409 = vperm.xlu0 %408, %v274
    %v410 = vpop.permute.xlu0 %409
    %411 = vset.pattern.permute.xlu0 0
    %412 = vperm.xlu0 %411, %v275
    %v413 = vpop.permute.xlu0 %412
    %414 = vset.pattern.permute.xlu0 0
    %415 = vperm.xlu0 %414, %v276
    %v416 = vpop.permute.xlu0 %415
    %417 = vset.pattern.permute.xlu0 0
    %418 = vperm.xlu0 %417, %v277
    %v419 = vpop.permute.xlu0 %418
    %420 = vset.pattern.permute.xlu0 0
    %421 = vperm.xlu0 %420, %v278
    %v422 = vpop.permute.xlu0 %421
    %423 = vset.pattern.permute.xlu0 0
    %424 = vperm.xlu0 %423, %v279
    %v425 = vpop.permute.xlu0 %424
    %426 = vset.pattern.permute.xlu0 0
    %427 = vperm.xlu0 %426, %v280
    %v428 = vpop.permute.xlu0 %427
    %429 = vset.pattern.permute.xlu0 0
    %430 = vperm.xlu0 %429, %v281
    %v431 = vpop.permute.xlu0 %430
    %432 = vset.pattern.permute.xlu0 0
    %433 = vperm.xlu0 %432, %v282
    %v434 = vpop.permute.xlu0 %433
    %435 = vset.pattern.permute.xlu0 0
    %436 = vperm.xlu0 %435, %v283
    %v437 = vpop.permute.xlu0 %436
    %438 = vset.pattern.permute.xlu0 0
    %439 = vperm.xlu0 %438, %v284
    %v440 = vpop.permute.xlu0 %439
    %441 = vset.pattern.permute.xlu0 0
    %442 = vperm.xlu0 %441, %v285
    %v443 = vpop.permute.xlu0 %442
    %444 = vset.pattern.permute.xlu0 0
    %445 = vperm.xlu0 %444, %v286
    %v446 = vpop.permute.xlu0 %445
    %447 = vset.pattern.permute.xlu0 0
    %448 = vperm.xlu0 %447, %v287
    %v449 = vpop.permute.xlu0 %448
    %450 = vset.pattern.permute.xlu0 0
    %451 = vperm.xlu0 %450, %v288
    %v452 = vpop.permute.xlu0 %451
    %453 = vset.pattern.permute.xlu0 0
    %454 = vperm.xlu0 %453, %v289
    %v455 = vpop.permute.xlu0 %454
    %456 = vset.pattern.permute.xlu0 0
    %457 = vperm.xlu0 %456, %v290
    %v458 = vpop.permute.xlu0 %457
    %459 = vset.pattern.permute.xlu0 0
    %460 = vperm.xlu0 %459, %v291
    %v461 = vpop.permute.xlu0 %460
    %462 = vset.pattern.permute.xlu0 0
    %463 = vperm.xlu0 %462, %v292
    %v464 = vpop.permute.xlu0 %463
    %465 = vset.pattern.permute.xlu0 0
    %466 = vperm.xlu0 %465, %v293
    %v467 = vpop.permute.xlu0 %466
    %468 = vset.pattern.permute.xlu0 0
    %469 = vperm.xlu0 %468, %v294
    %v470 = vpop.permute.xlu0 %469
    %471 = vset.pattern.permute.xlu0 0
    %472 = vperm.xlu0 %471, %v295
    %v473 = vpop.permute.xlu0 %472
    %474 = vset.pattern.permute.xlu0 0
    %475 = vperm.xlu0 %474, %v296
    %v476 = vpop.permute.xlu0 %475
    %477 = vset.pattern.permute.xlu0 0
    %478 = vperm.xlu0 %477, %v297
    %v479 = vpop.permute.xlu0 %478
    %480 = vset.pattern.permute.xlu0 0
    %481 = vperm.xlu0 %480, %v298
    %v482 = vpop.permute.xlu0 %481
    %483 = vset.pattern.permute.xlu0 0
    %484 = vperm.xlu0 %483, %v299
    %v485 = vpop.permute.xlu0 %484
    %486 = vset.pattern.permute.xlu0 0
    %487 = vperm.xlu0 %486, %v300
    %v488 = vpop.permute.xlu0 %487
    %489 = vset.pattern.permute.xlu0 0
    %490 = vperm.xlu0 %489, %v301
    %v491 = vpop.permute.xlu0 %490
    %492 = vset.pattern.permute.xlu0 0
    %493 = vperm.xlu0 %492, %v302
    %v494 = vpop.permute.xlu0 %493
    %495 = vset.pattern.permute.xlu0 0
    %496 = vperm.xlu0 %495, %v303
    %v497 = vpop.permute.xlu0 %496
    %vm498 = vcmp.eq.s32.totalorder %v305, %v308
    %vm499 = vcmp.eq.s32.totalorder %v305, %v311
    %vm500 = vcmp.eq.s32.totalorder %v305, %v314
    %vm501 = vcmp.eq.s32.totalorder %v305, %v317
    %vm502 = vcmp.eq.s32.totalorder %v305, %v320
    %vm503 = vcmp.eq.s32.totalorder %v305, %v323
    %vm504 = vcmp.eq.s32.totalorder %v305, %v326
    %vm505 = vcmp.eq.s32.totalorder %v305, %v329
    %vm506 = vcmp.eq.s32.totalorder %v305, %v332
    %vm507 = vcmp.eq.s32.totalorder %v305, %v335
    %vm508 = vcmp.eq.s32.totalorder %v305, %v338
    %vm509 = vcmp.eq.s32.totalorder %v305, %v341
    %vm510 = vcmp.eq.s32.totalorder %v305, %v344
    %vm511 = vcmp.eq.s32.totalorder %v305, %v347
    %vm512 = vcmp.eq.s32.totalorder %v305, %v350
    %vm513 = vcmp.eq.s32.totalorder %v305, %v353
    %vm514 = vcmp.eq.s32.totalorder %v305, %v356
    %vm515 = vcmp.eq.s32.totalorder %v305, %v359
    %vm516 = vcmp.eq.s32.totalorder %v305, %v362
    %vm517 = vcmp.eq.s32.totalorder %v305, %v365
    %vm518 = vcmp.eq.s32.totalorder %v305, %v368
    %vm519 = vcmp.eq.s32.totalorder %v305, %v371
    %vm520 = vcmp.eq.s32.totalorder %v305, %v374
    %vm521 = vcmp.eq.s32.totalorder %v305, %v377
    %vm522 = vcmp.eq.s32.totalorder %v305, %v380
    %vm523 = vcmp.eq.s32.totalorder %v305, %v383
    %vm524 = vcmp.eq.s32.totalorder %v305, %v386
    %vm525 = vcmp.eq.s32.totalorder %v305, %v389
    %vm526 = vcmp.eq.s32.totalorder %v305, %v392
    %vm527 = vcmp.eq.s32.totalorder %v305, %v395
    %vm528 = vcmp.eq.s32.totalorder %v305, %v398
    %vm529 = vcmp.eq.s32.totalorder %v305, %v401
    %vm530 = vcmp.eq.s32.totalorder %v305, %v404
    %vm531 = vcmp.eq.s32.totalorder %v305, %v407
    %vm532 = vcmp.eq.s32.totalorder %v305, %v410
    %vm533 = vcmp.eq.s32.totalorder %v305, %v413
    %vm534 = vcmp.eq.s32.totalorder %v305, %v416
    %vm535 = vcmp.eq.s32.totalorder %v305, %v419
    %vm536 = vcmp.eq.s32.totalorder %v305, %v422
    %vm537 = vcmp.eq.s32.totalorder %v305, %v425
    %vm538 = vcmp.eq.s32.totalorder %v305, %v428
    %vm539 = vcmp.eq.s32.totalorder %v305, %v431
    %vm540 = vcmp.eq.s32.totalorder %v305, %v434
    %vm541 = vcmp.eq.s32.totalorder %v305, %v437
    %vm542 = vcmp.eq.s32.totalorder %v305, %v440
    %vm543 = vcmp.eq.s32.totalorder %v305, %v443
    %vm544 = vcmp.eq.s32.totalorder %v305, %v446
    %vm545 = vcmp.eq.s32.totalorder %v305, %v449
    %vm546 = vcmp.eq.s32.totalorder %v305, %v452
    %vm547 = vcmp.eq.s32.totalorder %v305, %v455
    %vm548 = vcmp.eq.s32.totalorder %v305, %v458
    %vm549 = vcmp.eq.s32.totalorder %v305, %v461
    %vm550 = vcmp.eq.s32.totalorder %v305, %v464
    %vm551 = vcmp.eq.s32.totalorder %v305, %v467
    %vm552 = vcmp.eq.s32.totalorder %v305, %v470
    %vm553 = vcmp.eq.s32.totalorder %v305, %v473
    %vm554 = vcmp.eq.s32.totalorder %v305, %v476
    %vm555 = vcmp.eq.s32.totalorder %v305, %v479
    %vm556 = vcmp.eq.s32.totalorder %v305, %v482
    %vm557 = vcmp.eq.s32.totalorder %v305, %v485
    %vm558 = vcmp.eq.s32.totalorder %v305, %v488
    %vm559 = vcmp.eq.s32.totalorder %v305, %v491
    %vm560 = vcmp.eq.s32.totalorder %v305, %v494
    %vm561 = vcmp.eq.s32.totalorder %v305, %v497
    %v562 = vsel %vm498, 1, 0
    %v563 = vsel %vm499, 1, 0
    %v564 = vsel %vm500, 1, 0
    %v565 = vsel %vm501, 1, 0
    %v566 = vsel %vm502, 1, 0
    %v567 = vsel %vm503, 1, 0
    %v568 = vsel %vm504, 1, 0
    %v569 = vsel %vm505, 1, 0
    %v570 = vsel %vm506, 1, 0
    %v571 = vsel %vm507, 1, 0
    %v572 = vsel %vm508, 1, 0
    %v573 = vsel %vm509, 1, 0
    %v574 = vsel %vm510, 1, 0
    %v575 = vsel %vm511, 1, 0
    %v576 = vsel %vm512, 1, 0
    %v577 = vsel %vm513, 1, 0
    %v578 = vsel %vm514, 1, 0
    %v579 = vsel %vm515, 1, 0
    %v580 = vsel %vm516, 1, 0
    %v581 = vsel %vm517, 1, 0
    %v582 = vsel %vm518, 1, 0
    %v583 = vsel %vm519, 1, 0
    %v584 = vsel %vm520, 1, 0
    %v585 = vsel %vm521, 1, 0
    %v586 = vsel %vm522, 1, 0
    %v587 = vsel %vm523, 1, 0
    %v588 = vsel %vm524, 1, 0
    %v589 = vsel %vm525, 1, 0
    %v590 = vsel %vm526, 1, 0
    %v591 = vsel %vm527, 1, 0
    %v592 = vsel %vm528, 1, 0
    %v593 = vsel %vm529, 1, 0
    %v594 = vsel %vm530, 1, 0
    %v595 = vsel %vm531, 1, 0
    %v596 = vsel %vm532, 1, 0
    %v597 = vsel %vm533, 1, 0
    %v598 = vsel %vm534, 1, 0
    %v599 = vsel %vm535, 1, 0
    %v600 = vsel %vm536, 1, 0
    %v601 = vsel %vm537, 1, 0
    %v602 = vsel %vm538, 1, 0
    %v603 = vsel %vm539, 1, 0
    %v604 = vsel %vm540, 1, 0
    %v605 = vsel %vm541, 1, 0
    %v606 = vsel %vm542, 1, 0
    %v607 = vsel %vm543, 1, 0
    %v608 = vsel %vm544, 1, 0
    %v609 = vsel %vm545, 1, 0
    %v610 = vsel %vm546, 1, 0
    %v611 = vsel %vm547, 1, 0
    %v612 = vsel %vm548, 1, 0
    %v613 = vsel %vm549, 1, 0
    %v614 = vsel %vm550, 1, 0
    %v615 = vsel %vm551, 1, 0
    %v616 = vsel %vm552, 1, 0
    %v617 = vsel %vm553, 1, 0
    %v618 = vsel %vm554, 1, 0
    %v619 = vsel %vm555, 1, 0
    %v620 = vsel %vm556, 1, 0
    %v621 = vsel %vm557, 1, 0
    %v622 = vsel %vm558, 1, 0
    %v623 = vsel %vm559, 1, 0
    %v624 = vsel %vm560, 1, 0
    %v625 = vsel %vm561, 1, 0
    %v626 = vcvt.s32.f32 %v562
    %v627 = vcvt.s32.f32 %v563
    %v628 = vcvt.s32.f32 %v564
    %v629 = vcvt.s32.f32 %v565
    %v630 = vcvt.s32.f32 %v566
    %v631 = vcvt.s32.f32 %v567
    %v632 = vcvt.s32.f32 %v568
    %v633 = vcvt.s32.f32 %v569
    %v634 = vcvt.s32.f32 %v570
    %v635 = vcvt.s32.f32 %v571
    %v636 = vcvt.s32.f32 %v572
    %v637 = vcvt.s32.f32 %v573
    %v638 = vcvt.s32.f32 %v574
    %v639 = vcvt.s32.f32 %v575
    %v640 = vcvt.s32.f32 %v576
    %v641 = vcvt.s32.f32 %v577
    %v642 = vcvt.s32.f32 %v578
    %v643 = vcvt.s32.f32 %v579
    %v644 = vcvt.s32.f32 %v580
    %v645 = vcvt.s32.f32 %v581
    %v646 = vcvt.s32.f32 %v582
    %v647 = vcvt.s32.f32 %v583
    %v648 = vcvt.s32.f32 %v584
    %v649 = vcvt.s32.f32 %v585
    %v650 = vcvt.s32.f32 %v586
    %v651 = vcvt.s32.f32 %v587
    %v652 = vcvt.s32.f32 %v588
    %v653 = vcvt.s32.f32 %v589
    %v654 = vcvt.s32.f32 %v590
    %v655 = vcvt.s32.f32 %v591
    %v656 = vcvt.s32.f32 %v592
    %v657 = vcvt.s32.f32 %v593
    %v658 = vcvt.s32.f32 %v594
    %v659 = vcvt.s32.f32 %v595
    %v660 = vcvt.s32.f32 %v596
    %v661 = vcvt.s32.f32 %v597
    %v662 = vcvt.s32.f32 %v598
    %v663 = vcvt.s32.f32 %v599
    %v664 = vcvt.s32.f32 %v600
    %v665 = vcvt.s32.f32 %v601
    %v666 = vcvt.s32.f32 %v602
    %v667 = vcvt.s32.f32 %v603
    %v668 = vcvt.s32.f32 %v604
    %v669 = vcvt.s32.f32 %v605
    %v670 = vcvt.s32.f32 %v606
    %v671 = vcvt.s32.f32 %v607
    %v672 = vcvt.s32.f32 %v608
    %v673 = vcvt.s32.f32 %v609
    %v674 = vcvt.s32.f32 %v610
    %v675 = vcvt.s32.f32 %v611
    %v676 = vcvt.s32.f32 %v612
    %v677 = vcvt.s32.f32 %v613
    %v678 = vcvt.s32.f32 %v614
    %v679 = vcvt.s32.f32 %v615
    %v680 = vcvt.s32.f32 %v616
    %v681 = vcvt.s32.f32 %v617
    %v682 = vcvt.s32.f32 %v618
    %v683 = vcvt.s32.f32 %v619
    %v684 = vcvt.s32.f32 %v620
    %v685 = vcvt.s32.f32 %v621
    %v686 = vcvt.s32.f32 %v622
    %v687 = vcvt.s32.f32 %v623
    %v688 = vcvt.s32.f32 %v624
    %v689 = vcvt.s32.f32 %v625
    %v690 = vpack.c.bf16 %v627, %v626
    %v691 = vpack.c.bf16 %v629, %v628
    %v692 = vpack.c.bf16 %v631, %v630
    %v693 = vpack.c.bf16 %v633, %v632
    %v694 = vpack.c.bf16 %v635, %v634
    %v695 = vpack.c.bf16 %v637, %v636
    %v696 = vpack.c.bf16 %v639, %v638
    %v697 = vpack.c.bf16 %v641, %v640
    %v698 = vpack.c.bf16 %v643, %v642
    %v699 = vpack.c.bf16 %v645, %v644
    %v700 = vpack.c.bf16 %v647, %v646
    %v701 = vpack.c.bf16 %v649, %v648
    %v702 = vpack.c.bf16 %v651, %v650
    %v703 = vpack.c.bf16 %v653, %v652
    %v704 = vpack.c.bf16 %v655, %v654
    %v705 = vpack.c.bf16 %v657, %v656
    %v706 = vpack.c.bf16 %v659, %v658
    %v707 = vpack.c.bf16 %v661, %v660
    %v708 = vpack.c.bf16 %v663, %v662
    %v709 = vpack.c.bf16 %v665, %v664
    %v710 = vpack.c.bf16 %v667, %v666
    %v711 = vpack.c.bf16 %v669, %v668
    %v712 = vpack.c.bf16 %v671, %v670
    %v713 = vpack.c.bf16 %v673, %v672
    %v714 = vpack.c.bf16 %v675, %v674
    %v715 = vpack.c.bf16 %v677, %v676
    %v716 = vpack.c.bf16 %v679, %v678
    %v717 = vpack.c.bf16 %v681, %v680
    %v718 = vpack.c.bf16 %v683, %v682
    %v719 = vpack.c.bf16 %v685, %v684
    %v720 = vpack.c.bf16 %v687, %v686
    %v721 = vpack.c.bf16 %v689, %v688
    %722 = vset.pattern.permute.xlu0 1
    %723 = vperm.xlu0 %722, %v240
    %v724 = vpop.permute.xlu0 %723
    %725 = vset.pattern.permute.xlu0 1
    %726 = vperm.xlu0 %725, %v241
    %v727 = vpop.permute.xlu0 %726
    %728 = vset.pattern.permute.xlu0 1
    %729 = vperm.xlu0 %728, %v242
    %v730 = vpop.permute.xlu0 %729
    %731 = vset.pattern.permute.xlu0 1
    %732 = vperm.xlu0 %731, %v243
    %v733 = vpop.permute.xlu0 %732
    %734 = vset.pattern.permute.xlu0 1
    %735 = vperm.xlu0 %734, %v244
    %v736 = vpop.permute.xlu0 %735
    %737 = vset.pattern.permute.xlu0 1
    %738 = vperm.xlu0 %737, %v245
    %v739 = vpop.permute.xlu0 %738
    %740 = vset.pattern.permute.xlu0 1
    %741 = vperm.xlu0 %740, %v246
    %v742 = vpop.permute.xlu0 %741
    %743 = vset.pattern.permute.xlu0 1
    %744 = vperm.xlu0 %743, %v247
    %v745 = vpop.permute.xlu0 %744
    %746 = vset.pattern.permute.xlu0 1
    %747 = vperm.xlu0 %746, %v248
    %v748 = vpop.permute.xlu0 %747
    %749 = vset.pattern.permute.xlu0 1
    %750 = vperm.xlu0 %749, %v249
    %v751 = vpop.permute.xlu0 %750
    %752 = vset.pattern.permute.xlu0 1
    %753 = vperm.xlu0 %752, %v250
    %v754 = vpop.permute.xlu0 %753
    %755 = vset.pattern.permute.xlu0 1
    %756 = vperm.xlu0 %755, %v251
    %v757 = vpop.permute.xlu0 %756
    %758 = vset.pattern.permute.xlu0 1
    %759 = vperm.xlu0 %758, %v252
    %v760 = vpop.permute.xlu0 %759
    %761 = vset.pattern.permute.xlu0 1
    %762 = vperm.xlu0 %761, %v253
    %v763 = vpop.permute.xlu0 %762
    %764 = vset.pattern.permute.xlu0 1
    %765 = vperm.xlu0 %764, %v254
    %v766 = vpop.permute.xlu0 %765
    %767 = vset.pattern.permute.xlu0 1
    %768 = vperm.xlu0 %767, %v255
    %v769 = vpop.permute.xlu0 %768
    %770 = vset.pattern.permute.xlu0 1
    %771 = vperm.xlu0 %770, %v256
    %v772 = vpop.permute.xlu0 %771
    %773 = vset.pattern.permute.xlu0 1
    %774 = vperm.xlu0 %773, %v257
    %v775 = vpop.permute.xlu0 %774
    %776 = vset.pattern.permute.xlu0 1
    %777 = vperm.xlu0 %776, %v258
    %v778 = vpop.permute.xlu0 %777
    %779 = vset.pattern.permute.xlu0 1
    %780 = vperm.xlu0 %779, %v259
    %v781 = vpop.permute.xlu0 %780
    %782 = vset.pattern.permute.xlu0 1
    %783 = vperm.xlu0 %782, %v260
    %v784 = vpop.permute.xlu0 %783
    %785 = vset.pattern.permute.xlu0 1
    %786 = vperm.xlu0 %785, %v261
    %v787 = vpop.permute.xlu0 %786
    %788 = vset.pattern.permute.xlu0 1
    %789 = vperm.xlu0 %788, %v262
    %v790 = vpop.permute.xlu0 %789
    %791 = vset.pattern.permute.xlu0 1
    %792 = vperm.xlu0 %791, %v263
    %v793 = vpop.permute.xlu0 %792
    %794 = vset.pattern.permute.xlu0 1
    %795 = vperm.xlu0 %794, %v264
    %v796 = vpop.permute.xlu0 %795
    %797 = vset.pattern.permute.xlu0 1
    %798 = vperm.xlu0 %797, %v265
    %v799 = vpop.permute.xlu0 %798
    %800 = vset.pattern.permute.xlu0 1
    %801 = vperm.xlu0 %800, %v266
    %v802 = vpop.permute.xlu0 %801
    %803 = vset.pattern.permute.xlu0 1
    %804 = vperm.xlu0 %803, %v267
    %v805 = vpop.permute.xlu0 %804
    %806 = vset.pattern.permute.xlu0 1
    %807 = vperm.xlu0 %806, %v268
    %v808 = vpop.permute.xlu0 %807
    %809 = vset.pattern.permute.xlu0 1
    %810 = vperm.xlu0 %809, %v269
    %v811 = vpop.permute.xlu0 %810
    %812 = vset.pattern.permute.xlu0 1
    %813 = vperm.xlu0 %812, %v270
    %v814 = vpop.permute.xlu0 %813
    %815 = vset.pattern.permute.xlu0 1
    %816 = vperm.xlu0 %815, %v271
    %v817 = vpop.permute.xlu0 %816
    %818 = vset.pattern.permute.xlu0 1
    %819 = vperm.xlu0 %818, %v272
    %v820 = vpop.permute.xlu0 %819
    %821 = vset.pattern.permute.xlu0 1
    %822 = vperm.xlu0 %821, %v273
    %v823 = vpop.permute.xlu0 %822
    %824 = vset.pattern.permute.xlu0 1
    %825 = vperm.xlu0 %824, %v274
    %v826 = vpop.permute.xlu0 %825
    %827 = vset.pattern.permute.xlu0 1
    %828 = vperm.xlu0 %827, %v275
    %v829 = vpop.permute.xlu0 %828
    %830 = vset.pattern.permute.xlu0 1
    %831 = vperm.xlu0 %830, %v276
    %v832 = vpop.permute.xlu0 %831
    %833 = vset.pattern.permute.xlu0 1
    %834 = vperm.xlu0 %833, %v277
    %v835 = vpop.permute.xlu0 %834
    %836 = vset.pattern.permute.xlu0 1
    %837 = vperm.xlu0 %836, %v278
    %v838 = vpop.permute.xlu0 %837
    %839 = vset.pattern.permute.xlu0 1
    %840 = vperm.xlu0 %839, %v279
    %v841 = vpop.permute.xlu0 %840
    %842 = vset.pattern.permute.xlu0 1
    %843 = vperm.xlu0 %842, %v280
    %v844 = vpop.permute.xlu0 %843
    %845 = vset.pattern.permute.xlu0 1
    %846 = vperm.xlu0 %845, %v281
    %v847 = vpop.permute.xlu0 %846
    %848 = vset.pattern.permute.xlu0 1
    %849 = vperm.xlu0 %848, %v282
    %v850 = vpop.permute.xlu0 %849
    %851 = vset.pattern.permute.xlu0 1
    %852 = vperm.xlu0 %851, %v283
    %v853 = vpop.permute.xlu0 %852
    %854 = vset.pattern.permute.xlu0 1
    %855 = vperm.xlu0 %854, %v284
    %v856 = vpop.permute.xlu0 %855
    %857 = vset.pattern.permute.xlu0 1
    %858 = vperm.xlu0 %857, %v285
    %v859 = vpop.permute.xlu0 %858
    %860 = vset.pattern.permute.xlu0 1
    %861 = vperm.xlu0 %860, %v286
    %v862 = vpop.permute.xlu0 %861
    %863 = vset.pattern.permute.xlu0 1
    %864 = vperm.xlu0 %863, %v287
    %v865 = vpop.permute.xlu0 %864
    %866 = vset.pattern.permute.xlu0 1
    %867 = vperm.xlu0 %866, %v288
    %v868 = vpop.permute.xlu0 %867
    %869 = vset.pattern.permute.xlu0 1
    %870 = vperm.xlu0 %869, %v289
    %v871 = vpop.permute.xlu0 %870
    %872 = vset.pattern.permute.xlu0 1
    %873 = vperm.xlu0 %872, %v290
    %v874 = vpop.permute.xlu0 %873
    %875 = vset.pattern.permute.xlu0 1
    %876 = vperm.xlu0 %875, %v291
    %v877 = vpop.permute.xlu0 %876
    %878 = vset.pattern.permute.xlu0 1
    %879 = vperm.xlu0 %878, %v292
    %v880 = vpop.permute.xlu0 %879
    %881 = vset.pattern.permute.xlu0 1
    %882 = vperm.xlu0 %881, %v293
    %v883 = vpop.permute.xlu0 %882
    %884 = vset.pattern.permute.xlu0 1
    %885 = vperm.xlu0 %884, %v294
    %v886 = vpop.permute.xlu0 %885
    %887 = vset.pattern.permute.xlu0 1
    %888 = vperm.xlu0 %887, %v295
    %v889 = vpop.permute.xlu0 %888
    %890 = vset.pattern.permute.xlu0 1
    %891 = vperm.xlu0 %890, %v296
    %v892 = vpop.permute.xlu0 %891
    %893 = vset.pattern.permute.xlu0 1
    %894 = vperm.xlu0 %893, %v297
    %v895 = vpop.permute.xlu0 %894
    %896 = vset.pattern.permute.xlu0 1
    %897 = vperm.xlu0 %896, %v298
    %v898 = vpop.permute.xlu0 %897
    %899 = vset.pattern.permute.xlu0 1
    %900 = vperm.xlu0 %899, %v299
    %v901 = vpop.permute.xlu0 %900
    %902 = vset.pattern.permute.xlu0 1
    %903 = vperm.xlu0 %902, %v300
    %v904 = vpop.permute.xlu0 %903
    %905 = vset.pattern.permute.xlu0 1
    %906 = vperm.xlu0 %905, %v301
    %v907 = vpop.permute.xlu0 %906
    %908 = vset.pattern.permute.xlu0 1
    %909 = vperm.xlu0 %908, %v302
    %v910 = vpop.permute.xlu0 %909
    %911 = vset.pattern.permute.xlu0 1
    %912 = vperm.xlu0 %911, %v303
    %v913 = vpop.permute.xlu0 %912
    %vm914 = vcmp.eq.s32.totalorder %v305, %v724
    %vm915 = vcmp.eq.s32.totalorder %v305, %v727
    %vm916 = vcmp.eq.s32.totalorder %v305, %v730
    %vm917 = vcmp.eq.s32.totalorder %v305, %v733
    %vm918 = vcmp.eq.s32.totalorder %v305, %v736
    %vm919 = vcmp.eq.s32.totalorder %v305, %v739
    %vm920 = vcmp.eq.s32.totalorder %v305, %v742
    %vm921 = vcmp.eq.s32.totalorder %v305, %v745
    %vm922 = vcmp.eq.s32.totalorder %v305, %v748
    %vm923 = vcmp.eq.s32.totalorder %v305, %v751
    %vm924 = vcmp.eq.s32.totalorder %v305, %v754
    %vm925 = vcmp.eq.s32.totalorder %v305, %v757
    %vm926 = vcmp.eq.s32.totalorder %v305, %v760
    %vm927 = vcmp.eq.s32.totalorder %v305, %v763
    %vm928 = vcmp.eq.s32.totalorder %v305, %v766
    %vm929 = vcmp.eq.s32.totalorder %v305, %v769
    %vm930 = vcmp.eq.s32.totalorder %v305, %v772
    %vm931 = vcmp.eq.s32.totalorder %v305, %v775
    %vm932 = vcmp.eq.s32.totalorder %v305, %v778
    %vm933 = vcmp.eq.s32.totalorder %v305, %v781
    %vm934 = vcmp.eq.s32.totalorder %v305, %v784
    %vm935 = vcmp.eq.s32.totalorder %v305, %v787
    %vm936 = vcmp.eq.s32.totalorder %v305, %v790
    %vm937 = vcmp.eq.s32.totalorder %v305, %v793
    %vm938 = vcmp.eq.s32.totalorder %v305, %v796
    %vm939 = vcmp.eq.s32.totalorder %v305, %v799
    %vm940 = vcmp.eq.s32.totalorder %v305, %v802
    %vm941 = vcmp.eq.s32.totalorder %v305, %v805
    %vm942 = vcmp.eq.s32.totalorder %v305, %v808
    %vm943 = vcmp.eq.s32.totalorder %v305, %v811
    %vm944 = vcmp.eq.s32.totalorder %v305, %v814
    %vm945 = vcmp.eq.s32.totalorder %v305, %v817
    %vm946 = vcmp.eq.s32.totalorder %v305, %v820
    %vm947 = vcmp.eq.s32.totalorder %v305, %v823
    %vm948 = vcmp.eq.s32.totalorder %v305, %v826
    %vm949 = vcmp.eq.s32.totalorder %v305, %v829
    %vm950 = vcmp.eq.s32.totalorder %v305, %v832
    %vm951 = vcmp.eq.s32.totalorder %v305, %v835
    %vm952 = vcmp.eq.s32.totalorder %v305, %v838
    %vm953 = vcmp.eq.s32.totalorder %v305, %v841
    %vm954 = vcmp.eq.s32.totalorder %v305, %v844
    %vm955 = vcmp.eq.s32.totalorder %v305, %v847
    %vm956 = vcmp.eq.s32.totalorder %v305, %v850
    %vm957 = vcmp.eq.s32.totalorder %v305, %v853
    %vm958 = vcmp.eq.s32.totalorder %v305, %v856
    %vm959 = vcmp.eq.s32.totalorder %v305, %v859
    %vm960 = vcmp.eq.s32.totalorder %v305, %v862
    %vm961 = vcmp.eq.s32.totalorder %v305, %v865
    %vm962 = vcmp.eq.s32.totalorder %v305, %v868
    %vm963 = vcmp.eq.s32.totalorder %v305, %v871
    %vm964 = vcmp.eq.s32.totalorder %v305, %v874
    %vm965 = vcmp.eq.s32.totalorder %v305, %v877
    %vm966 = vcmp.eq.s32.totalorder %v305, %v880
    %vm967 = vcmp.eq.s32.totalorder %v305, %v883
    %vm968 = vcmp.eq.s32.totalorder %v305, %v886
    %vm969 = vcmp.eq.s32.totalorder %v305, %v889
    %vm970 = vcmp.eq.s32.totalorder %v305, %v892
    %vm971 = vcmp.eq.s32.totalorder %v305, %v895
    %vm972 = vcmp.eq.s32.totalorder %v305, %v898
    %vm973 = vcmp.eq.s32.totalorder %v305, %v901
    %vm974 = vcmp.eq.s32.totalorder %v305, %v904
    %vm975 = vcmp.eq.s32.totalorder %v305, %v907
    %vm976 = vcmp.eq.s32.totalorder %v305, %v910
    %vm977 = vcmp.eq.s32.totalorder %v305, %v913
    %v978 = vsel %vm914, 1, 0
    %v979 = vsel %vm915, 1, 0
    %v980 = vsel %vm916, 1, 0
    %v981 = vsel %vm917, 1, 0
    %v982 = vsel %vm918, 1, 0
    %v983 = vsel %vm919, 1, 0
    %v984 = vsel %vm920, 1, 0
    %v985 = vsel %vm921, 1, 0
    %v986 = vsel %vm922, 1, 0
    %v987 = vsel %vm923, 1, 0
    %v988 = vsel %vm924, 1, 0
    %v989 = vsel %vm925, 1, 0
    %v990 = vsel %vm926, 1, 0
    %v991 = vsel %vm927, 1, 0
    %v992 = vsel %vm928, 1, 0
    %v993 = vsel %vm929, 1, 0
    %v994 = vsel %vm930, 1, 0
    %v995 = vsel %vm931, 1, 0
    %v996 = vsel %vm932, 1, 0
    %v997 = vsel %vm933, 1, 0
    %v998 = vsel %vm934, 1, 0
    %v999 = vsel %vm935, 1, 0
    %v1000 = vsel %vm936, 1, 0
    %v1001 = vsel %vm937, 1, 0
    %v1002 = vsel %vm938, 1, 0
    %v1003 = vsel %vm939, 1, 0
    %v1004 = vsel %vm940, 1, 0
    %v1005 = vsel %vm941, 1, 0
    %v1006 = vsel %vm942, 1, 0
    %v1007 = vsel %vm943, 1, 0
    %v1008 = vsel %vm944, 1, 0
    %v1009 = vsel %vm945, 1, 0
    %v1010 = vsel %vm946, 1, 0
    %v1011 = vsel %vm947, 1, 0
    %v1012 = vsel %vm948, 1, 0
    %v1013 = vsel %vm949, 1, 0
    %v1014 = vsel %vm950, 1, 0
    %v1015 = vsel %vm951, 1, 0
    %v1016 = vsel %vm952, 1, 0
    %v1017 = vsel %vm953, 1, 0
    %v1018 = vsel %vm954, 1, 0
    %v1019 = vsel %vm955, 1, 0
    %v1020 = vsel %vm956, 1, 0
    %v1021 = vsel %vm957, 1, 0
    %v1022 = vsel %vm958, 1, 0
    %v1023 = vsel %vm959, 1, 0
    %v1024 = vsel %vm960, 1, 0
    %v1025 = vsel %vm961, 1, 0
    %v1026 = vsel %vm962, 1, 0
    %v1027 = vsel %vm963, 1, 0
    %v1028 = vsel %vm964, 1, 0
    %v1029 = vsel %vm965, 1, 0
    %v1030 = vsel %vm966, 1, 0
    %v1031 = vsel %vm967, 1, 0
    %v1032 = vsel %vm968, 1, 0
    %v1033 = vsel %vm969, 1, 0
    %v1034 = vsel %vm970, 1, 0
    %v1035 = vsel %vm971, 1, 0
    %v1036 = vsel %vm972, 1, 0
    %v1037 = vsel %vm973, 1, 0
    %v1038 = vsel %vm974, 1, 0
    %v1039 = vsel %vm975, 1, 0
    %v1040 = vsel %vm976, 1, 0
    %v1041 = vsel %vm977, 1, 0
    %v1042 = vcvt.s32.f32 %v978
    %v1043 = vcvt.s32.f32 %v979
    %v1044 = vcvt.s32.f32 %v980
    %v1045 = vcvt.s32.f32 %v981
    %v1046 = vcvt.s32.f32 %v982
    %v1047 = vcvt.s32.f32 %v983
    %v1048 = vcvt.s32.f32 %v984
    %v1049 = vcvt.s32.f32 %v985
    %v1050 = vcvt.s32.f32 %v986
    %v1051 = vcvt.s32.f32 %v987
    %v1052 = vcvt.s32.f32 %v988
    %v1053 = vcvt.s32.f32 %v989
    %v1054 = vcvt.s32.f32 %v990
    %v1055 = vcvt.s32.f32 %v991
    %v1056 = vcvt.s32.f32 %v992
    %v1057 = vcvt.s32.f32 %v993
    %v1058 = vcvt.s32.f32 %v994
    %v1059 = vcvt.s32.f32 %v995
    %v1060 = vcvt.s32.f32 %v996
    %v1061 = vcvt.s32.f32 %v997
    %v1062 = vcvt.s32.f32 %v998
    %v1063 = vcvt.s32.f32 %v999
    %v1064 = vcvt.s32.f32 %v1000
    %v1065 = vcvt.s32.f32 %v1001
    %v1066 = vcvt.s32.f32 %v1002
    %v1067 = vcvt.s32.f32 %v1003
    %v1068 = vcvt.s32.f32 %v1004
    %v1069 = vcvt.s32.f32 %v1005
    %v1070 = vcvt.s32.f32 %v1006
    %v1071 = vcvt.s32.f32 %v1007
    %v1072 = vcvt.s32.f32 %v1008
    %v1073 = vcvt.s32.f32 %v1009
    %v1074 = vcvt.s32.f32 %v1010
    %v1075 = vcvt.s32.f32 %v1011
    %v1076 = vcvt.s32.f32 %v1012
    %v1077 = vcvt.s32.f32 %v1013
    %v1078 = vcvt.s32.f32 %v1014
    %v1079 = vcvt.s32.f32 %v1015
    %v1080 = vcvt.s32.f32 %v1016
    %v1081 = vcvt.s32.f32 %v1017
    %v1082 = vcvt.s32.f32 %v1018
    %v1083 = vcvt.s32.f32 %v1019
    %v1084 = vcvt.s32.f32 %v1020
    %v1085 = vcvt.s32.f32 %v1021
    %v1086 = vcvt.s32.f32 %v1022
    %v1087 = vcvt.s32.f32 %v1023
    %v1088 = vcvt.s32.f32 %v1024
    %v1089 = vcvt.s32.f32 %v1025
    %v1090 = vcvt.s32.f32 %v1026
    %v1091 = vcvt.s32.f32 %v1027
    %v1092 = vcvt.s32.f32 %v1028
    %v1093 = vcvt.s32.f32 %v1029
    %v1094 = vcvt.s32.f32 %v1030
    %v1095 = vcvt.s32.f32 %v1031
    %v1096 = vcvt.s32.f32 %v1032
    %v1097 = vcvt.s32.f32 %v1033
    %v1098 = vcvt.s32.f32 %v1034
    %v1099 = vcvt.s32.f32 %v1035
    %v1100 = vcvt.s32.f32 %v1036
    %v1101 = vcvt.s32.f32 %v1037
    %v1102 = vcvt.s32.f32 %v1038
    %v1103 = vcvt.s32.f32 %v1039
    %v1104 = vcvt.s32.f32 %v1040
    %v1105 = vcvt.s32.f32 %v1041
    %v1106 = vpack.c.bf16 %v1043, %v1042
    %v1107 = vpack.c.bf16 %v1045, %v1044
    %v1108 = vpack.c.bf16 %v1047, %v1046
    %v1109 = vpack.c.bf16 %v1049, %v1048
    %v1110 = vpack.c.bf16 %v1051, %v1050
    %v1111 = vpack.c.bf16 %v1053, %v1052
    %v1112 = vpack.c.bf16 %v1055, %v1054
    %v1113 = vpack.c.bf16 %v1057, %v1056
    %v1114 = vpack.c.bf16 %v1059, %v1058
    %v1115 = vpack.c.bf16 %v1061, %v1060
    %v1116 = vpack.c.bf16 %v1063, %v1062
    %v1117 = vpack.c.bf16 %v1065, %v1064
    %v1118 = vpack.c.bf16 %v1067, %v1066
    %v1119 = vpack.c.bf16 %v1069, %v1068
    %v1120 = vpack.c.bf16 %v1071, %v1070
    %v1121 = vpack.c.bf16 %v1073, %v1072
    %v1122 = vpack.c.bf16 %v1075, %v1074
    %v1123 = vpack.c.bf16 %v1077, %v1076
    %v1124 = vpack.c.bf16 %v1079, %v1078
    %v1125 = vpack.c.bf16 %v1081, %v1080
    %v1126 = vpack.c.bf16 %v1083, %v1082
    %v1127 = vpack.c.bf16 %v1085, %v1084
    %v1128 = vpack.c.bf16 %v1087, %v1086
    %v1129 = vpack.c.bf16 %v1089, %v1088
    %v1130 = vpack.c.bf16 %v1091, %v1090
    %v1131 = vpack.c.bf16 %v1093, %v1092
    %v1132 = vpack.c.bf16 %v1095, %v1094
    %v1133 = vpack.c.bf16 %v1097, %v1096
    %v1134 = vpack.c.bf16 %v1099, %v1098
    %v1135 = vpack.c.bf16 %v1101, %v1100
    %v1136 = vpack.c.bf16 %v1103, %v1102
    %v1137 = vpack.c.bf16 %v1105, %v1104
    %v1138 = vld [vmem:[#allocation2] sm:$0xf]
    %v1139 = vld [vmem:[#allocation3] sm:$0xf]
    %vm1140 = vcmask 64512
    %v1142 = vsel %vm1140, %v1106, 0
    %v1145 = vsel %vm1140, %v1107, 0
    %v1148 = vsel %vm1140, %v1108, 0
    %v1151 = vsel %vm1140, %v1109, 0
    %v1154 = vsel %vm1140, %v1110, 0
    %v1157 = vsel %vm1140, %v1111, 0
    %v1160 = vsel %vm1140, %v1112, 0
    %v1163 = vsel %vm1140, %v1113, 0
    %v1166 = vsel %vm1140, %v1114, 0
    %v1169 = vsel %vm1140, %v1115, 0
    %v1172 = vsel %vm1140, %v1116, 0
    %v1175 = vsel %vm1140, %v1117, 0
    %v1178 = vsel %vm1140, %v1118, 0
    %v1181 = vsel %vm1140, %v1119, 0
    %v1184 = vsel %vm1140, %v1120, 0
    %v1187 = vsel %vm1140, %v1121, 0
    %v1190 = vsel %vm1140, %v1122, 0
    %v1193 = vsel %vm1140, %v1123, 0
    %v1196 = vsel %vm1140, %v1124, 0
    %v1199 = vsel %vm1140, %v1125, 0
    %v1202 = vsel %vm1140, %v1126, 0
    %v1205 = vsel %vm1140, %v1127, 0
    %v1208 = vsel %vm1140, %v1128, 0
    %v1211 = vsel %vm1140, %v1129, 0
    %v1214 = vsel %vm1140, %v1130, 0
    %v1217 = vsel %vm1140, %v1131, 0
    %v1220 = vsel %vm1140, %v1132, 0
    %v1223 = vsel %vm1140, %v1133, 0
    %v1226 = vsel %vm1140, %v1134, 0
    %v1229 = vsel %vm1140, %v1135, 0
    %v1232 = vsel %vm1140, %v1136, 0
    %v1235 = vsel %vm1140, %v1137, 0
    %vm1237 = vcmask 1043456
    %v1239 = vsel %vm1237, %v1139, 0
    %1241 = vmatprep.subr.bf16.mxu0 0
    %1242 = vmatpush1.bf16.msra.mxu0 %v1239
    %1243 = vmatprep.subr.bf16.mxu0 0
    %1244 = vmatpush1.bf16.msra.mxu0 0
    %1245 = vmatprep.subr.bf16.mxu0 0
    %1246 = vmatpush1.bf16.msra.mxu0 0
    %1247 = vmatprep.subr.bf16.mxu0 0
    %1248 = vmatpush1.bf16.msra.mxu0 0
    %1249 = vmatprep.subr.bf16.mxu0 0
    %1250 = vmatpush1.bf16.msra.mxu0 0
    %1251 = vmatprep.subr.bf16.mxu0 0
    %1252 = vmatpush1.bf16.msra.mxu0 0
    %1253 = vmatprep.subr.bf16.mxu0 0
    %1254 = vmatpush1.bf16.msra.mxu0 0
    %1255 = vmatprep.subr.bf16.mxu0 0
    %1256 = vmatpush1.bf16.msra.mxu0 0
    %1257 = vmatprep.subr.bf16.mxu0 0
    %1258 = vmatpush1.bf16.msra.mxu0 0
    %1259 = vmatprep.subr.bf16.mxu0 0
    %1260 = vmatpush1.bf16.msra.mxu0 0
    %1261 = vmatprep.subr.bf16.mxu0 0
    %1262 = vmatpush1.bf16.msra.mxu0 0
    %1263 = vmatprep.subr.bf16.mxu0 0
    %1264 = vmatpush1.bf16.msra.mxu0 0
    %1265 = vmatprep.subr.bf16.mxu0 0
    %1266 = vmatpush1.bf16.msra.mxu0 0
    %1267 = vmatprep.subr.bf16.mxu0 0
    %1268 = vmatpush1.bf16.msra.mxu0 0
    %1269 = vmatprep.subr.bf16.mxu0 0
    %1270 = vmatpush1.bf16.msra.mxu0 0
    %1271 = vmatprep.subr.bf16.mxu0 0
    %1272 = vmatpush1.bf16.msra.mxu0 0
    %1273 = vmatprep.mubr.bf16.mxu0 0
    %1274 = vmatmul.mubr.bf16.gmra.mrb[0].mxu0 %v1142
    %v1275 = vpop.f32.mrb[0].mxu0
    %v1276 = vadd.f32 0.0, %v1275
    %v1277 = vpop.f32.mrb[0].mxu0
    %v1278 = vpop.f32.mrb[0].mxu0
    %v1279 = vadd.f32 0.0, %v1278
    %v1280 = vpop.f32.mrb[0].mxu0
    %1281 = vmatprep.mubr.bf16.mxu0 0
    %1282 = vmatmul.mubr.bf16.gmra.mrb[0].mxu0 %v1145
    %v1283 = vpop.f32.mrb[0].mxu0
    %v1284 = vadd.f32 0.0, %v1283
    %v1285 = vpop.f32.mrb[0].mxu0
    %v1286 = vpop.f32.mrb[0].mxu0
    %v1287 = vadd.f32 0.0, %v1286
    %v1288 = vpop.f32.mrb[0].mxu0
    %1289 = vmatprep.mubr.bf16.mxu0 0
    %1290 = vmatmul.mubr.bf16.gmra.mrb[0].mxu0 %v1148
    %v1291 = vpop.f32.mrb[0].mxu0
    %v1292 = vadd.f32 0.0, %v1291
    %v1293 = vpop.f32.mrb[0].mxu0
    %v1294 = vpop.f32.mrb[0].mxu0
    %v1295 = vadd.f32 0.0, %v1294
    %v1296 = vpop.f32.mrb[0].mxu0
    %1297 = vmatprep.mubr.bf16.mxu0 0
    %1298 = vmatmul.mubr.bf16.gmra.mrb[0].mxu0 %v1151
    %v1299 = vpop.f32.mrb[0].mxu0
    %v1300 = vadd.f32 0.0, %v1299
    %v1301 = vpop.f32.mrb[0].mxu0
    %v1302 = vpop.f32.mrb[0].mxu0
    %v1303 = vadd.f32 0.0, %v1302
    %v1304 = vpop.f32.mrb[0].mxu0
    %1305 = vmatprep.mubr.bf16.mxu0 0
    %1306 = vmatmul.mubr.bf16.gmra.mrb[0].mxu0 %v1154
    %v1307 = vpop.f32.mrb[0].mxu0
    %v1308 = vadd.f32 0.0, %v1307
    %v1309 = vpop.f32.mrb[0].mxu0
    %v1310 = vpop.f32.mrb[0].mxu0
    %v1311 = vadd.f32 0.0, %v1310
    %v1312 = vpop.f32.mrb[0].mxu0
    %1313 = vmatprep.mubr.bf16.mxu0 0
    %1314 = vmatmul.mubr.bf16.gmra.mrb[0].mxu0 %v1157
    %v1315 = vpop.f32.mrb[0].mxu0
    %v1316 = vadd.f32 0.0, %v1315
    %v1317 = vpop.f32.mrb[0].mxu0
    %v1318 = vpop.f32.mrb[0].mxu0
    %v1319 = vadd.f32 0.0, %v1318
    %v1320 = vpop.f32.mrb[0].mxu0
    %1321 = vmatprep.mubr.bf16.mxu0 0
    %1322 = vmatmul.mubr.bf16.gmra.mrb[0].mxu0 %v1160
    %v1323 = vpop.f32.mrb[0].mxu0
    %v1324 = vadd.f32 0.0, %v1323
    %v1325 = vpop.f32.mrb[0].mxu0
    %v1326 = vpop.f32.mrb[0].mxu0
    %v1327 = vadd.f32 0.0, %v1326
    %v1328 = vpop.f32.mrb[0].mxu0
    %1329 = vmatprep.mubr.bf16.mxu0 0
    %1330 = vmatmul.mubr.bf16.gmra.mrb[0].mxu0 %v1163
    %v1331 = vpop.f32.mrb[0].mxu0
    %v1332 = vadd.f32 0.0, %v1331
    %v1333 = vpop.f32.mrb[0].mxu0
    %v1334 = vpop.f32.mrb[0].mxu0
    %v1335 = vadd.f32 0.0, %v1334
    %v1336 = vpop.f32.mrb[0].mxu0
    %1337 = vmatprep.mubr.bf16.mxu0 0
    %1338 = vmatmul.mubr.bf16.gmra.mrb[0].mxu0 %v1166
    %v1339 = vpop.f32.mrb[0].mxu0
    %v1340 = vadd.f32 0.0, %v1339
    %v1341 = vpop.f32.mrb[0].mxu0
    %v1342 = vpop.f32.mrb[0].mxu0
    %v1343 = vadd.f32 0.0, %v1342
    %v1344 = vpop.f32.mrb[0].mxu0
    %1345 = vmatprep.mubr.bf16.mxu0 0
    %1346 = vmatmul.mubr.bf16.gmra.mrb[0].mxu0 %v1169
    %v1347 = vpop.f32.mrb[0].mxu0
    %v1348 = vadd.f32 0.0, %v1347
    %v1349 = vpop.f32.mrb[0].mxu0
    %v1350 = vpop.f32.mrb[0].mxu0
    %v1351 = vadd.f32 0.0, %v1350
    %v1352 = vpop.f32.mrb[0].mxu0
    %1353 = vmatprep.mubr.bf16.mxu0 0
    %1354 = vmatmul.mubr.bf16.gmra.mrb[0].mxu0 %v1172
    %v1355 = vpop.f32.mrb[0].mxu0
    %v1356 = vadd.f32 0.0, %v1355
    %v1357 = vpop.f32.mrb[0].mxu0
    %v1358 = vpop.f32.mrb[0].mxu0
    %v1359 = vadd.f32 0.0, %v1358
    %v1360 = vpop.f32.mrb[0].mxu0
    %1361 = vmatprep.mubr.bf16.mxu0 0
    %1362 = vmatmul.mubr.bf16.gmra.mrb[0].mxu0 %v1175
    %v1363 = vpop.f32.mrb[0].mxu0
    %v1364 = vadd.f32 0.0, %v1363
    %v1365 = vpop.f32.mrb[0].mxu0
    %v1366 = vpop.f32.mrb[0].mxu0
    %v1367 = vadd.f32 0.0, %v1366
    %v1368 = vpop.f32.mrb[0].mxu0
    %1369 = vmatprep.mubr.bf16.mxu0 0
    %1370 = vmatmul.mubr.bf16.gmra.mrb[0].mxu0 %v1178
    %v1371 = vpop.f32.mrb[0].mxu0
    %v1372 = vadd.f32 0.0, %v1371
    %v1373 = vpop.f32.mrb[0].mxu0
    %v1374 = vpop.f32.mrb[0].mxu0
    %v1375 = vadd.f32 0.0, %v1374
    %v1376 = vpop.f32.mrb[0].mxu0
    %1377 = vmatprep.mubr.bf16.mxu0 0
    %1378 = vmatmul.mubr.bf16.gmra.mrb[0].mxu0 %v1181
    %v1379 = vpop.f32.mrb[0].mxu0
    %v1380 = vadd.f32 0.0, %v1379
    %v1381 = vpop.f32.mrb[0].mxu0
    %v1382 = vpop.f32.mrb[0].mxu0
    %v1383 = vadd.f32 0.0, %v1382
    %v1384 = vpop.f32.mrb[0].mxu0
    %1385 = vmatprep.mubr.bf16.mxu0 0
    %1386 = vmatmul.mubr.bf16.gmra.mrb[0].mxu0 %v1184
    %v1387 = vpop.f32.mrb[0].mxu0
    %v1388 = vadd.f32 0.0, %v1387
    %v1389 = vpop.f32.mrb[0].mxu0
    %v1390 = vpop.f32.mrb[0].mxu0
    %v1391 = vadd.f32 0.0, %v1390
    %v1392 = vpop.f32.mrb[0].mxu0
    %1393 = vmatprep.mubr.bf16.mxu0 0
    %1394 = vmatmul.mubr.bf16.gmra.mrb[0].mxu0 %v1187
    %v1395 = vpop.f32.mrb[0].mxu0
    %v1396 = vadd.f32 0.0, %v1395
    %v1397 = vpop.f32.mrb[0].mxu0
    %v1398 = vpop.f32.mrb[0].mxu0
    %v1399 = vadd.f32 0.0, %v1398
    %v1400 = vpop.f32.mrb[0].mxu0
    %1401 = vmatprep.mubr.bf16.mxu0 0
    %1402 = vmatmul.mubr.bf16.gmra.mrb[0].mxu0 %v1190
    %v1403 = vpop.f32.mrb[0].mxu0
    %v1404 = vadd.f32 0.0, %v1403
    %v1405 = vpop.f32.mrb[0].mxu0
    %v1406 = vpop.f32.mrb[0].mxu0
    %v1407 = vadd.f32 0.0, %v1406
    %v1408 = vpop.f32.mrb[0].mxu0
    %1409 = vmatprep.mubr.bf16.mxu0 0
    %1410 = vmatmul.mubr.bf16.gmra.mrb[0].mxu0 %v1193
    %v1411 = vpop.f32.mrb[0].mxu0
    %v1412 = vadd.f32 0.0, %v1411
    %v1413 = vpop.f32.mrb[0].mxu0
    %v1414 = vpop.f32.mrb[0].mxu0
    %v1415 = vadd.f32 0.0, %v1414
    %v1416 = vpop.f32.mrb[0].mxu0
    %1417 = vmatprep.mubr.bf16.mxu0 0
    %1418 = vmatmul.mubr.bf16.gmra.mrb[0].mxu0 %v1196
    %v1419 = vpop.f32.mrb[0].mxu0
    %v1420 = vadd.f32 0.0, %v1419
    %v1421 = vpop.f32.mrb[0].mxu0
    %v1422 = vpop.f32.mrb[0].mxu0
    %v1423 = vadd.f32 0.0, %v1422
    %v1424 = vpop.f32.mrb[0].mxu0
    %1425 = vmatprep.mubr.bf16.mxu0 0
    %1426 = vmatmul.mubr.bf16.gmra.mrb[0].mxu0 %v1199
    %v1427 = vpop.f32.mrb[0].mxu0
    %v1428 = vadd.f32 0.0, %v1427
    %v1429 = vpop.f32.mrb[0].mxu0
    %v1430 = vpop.f32.mrb[0].mxu0
    %v1431 = vadd.f32 0.0, %v1430
    %v1432 = vpop.f32.mrb[0].mxu0
    %1433 = vmatprep.mubr.bf16.mxu0 0
    %1434 = vmatmul.mubr.bf16.gmra.mrb[0].mxu0 %v1202
    %v1435 = vpop.f32.mrb[0].mxu0
    %v1436 = vadd.f32 0.0, %v1435
    %v1437 = vpop.f32.mrb[0].mxu0
    %v1438 = vpop.f32.mrb[0].mxu0
    %v1439 = vadd.f32 0.0, %v1438
    %v1440 = vpop.f32.mrb[0].mxu0
    %1441 = vmatprep.mubr.bf16.mxu0 0
    %1442 = vmatmul.mubr.bf16.gmra.mrb[0].mxu0 %v1205
    %v1443 = vpop.f32.mrb[0].mxu0
    %v1444 = vadd.f32 0.0, %v1443
    %v1445 = vpop.f32.mrb[0].mxu0
    %v1446 = vpop.f32.mrb[0].mxu0
    %v1447 = vadd.f32 0.0, %v1446
    %v1448 = vpop.f32.mrb[0].mxu0
    %1449 = vmatprep.mubr.bf16.mxu0 0
    %1450 = vmatmul.mubr.bf16.gmra.mrb[0].mxu0 %v1208
    %v1451 = vpop.f32.mrb[0].mxu0
    %v1452 = vadd.f32 0.0, %v1451
    %v1453 = vpop.f32.mrb[0].mxu0
    %v1454 = vpop.f32.mrb[0].mxu0
    %v1455 = vadd.f32 0.0, %v1454
    %v1456 = vpop.f32.mrb[0].mxu0
    %1457 = vmatprep.mubr.bf16.mxu0 0
    %1458 = vmatmul.mubr.bf16.gmra.mrb[0].mxu0 %v1211
    %v1459 = vpop.f32.mrb[0].mxu0
    %v1460 = vadd.f32 0.0, %v1459
    %v1461 = vpop.f32.mrb[0].mxu0
    %v1462 = vpop.f32.mrb[0].mxu0
    %v1463 = vadd.f32 0.0, %v1462
    %v1464 = vpop.f32.mrb[0].mxu0
    %1465 = vmatprep.mubr.bf16.mxu0 0
    %1466 = vmatmul.mubr.bf16.gmra.mrb[0].mxu0 %v1214
    %v1467 = vpop.f32.mrb[0].mxu0
    %v1468 = vadd.f32 0.0, %v1467
    %v1469 = vpop.f32.mrb[0].mxu0
    %v1470 = vpop.f32.mrb[0].mxu0
    %v1471 = vadd.f32 0.0, %v1470
    %v1472 = vpop.f32.mrb[0].mxu0
    %1473 = vmatprep.mubr.bf16.mxu0 0
    %1474 = vmatmul.mubr.bf16.gmra.mrb[0].mxu0 %v1217
    %v1475 = vpop.f32.mrb[0].mxu0
    %v1476 = vadd.f32 0.0, %v1475
    %v1477 = vpop.f32.mrb[0].mxu0
    %v1478 = vpop.f32.mrb[0].mxu0
    %v1479 = vadd.f32 0.0, %v1478
    %v1480 = vpop.f32.mrb[0].mxu0
    %1481 = vmatprep.mubr.bf16.mxu0 0
    %1482 = vmatmul.mubr.bf16.gmra.mrb[0].mxu0 %v1220
    %v1483 = vpop.f32.mrb[0].mxu0
    %v1484 = vadd.f32 0.0, %v1483
    %v1485 = vpop.f32.mrb[0].mxu0
    %v1486 = vpop.f32.mrb[0].mxu0
    %v1487 = vadd.f32 0.0, %v1486
    %v1488 = vpop.f32.mrb[0].mxu0
    %1489 = vmatprep.mubr.bf16.mxu0 0
    %1490 = vmatmul.mubr.bf16.gmra.mrb[0].mxu0 %v1223
    %v1491 = vpop.f32.mrb[0].mxu0
    %v1492 = vadd.f32 0.0, %v1491
    %v1493 = vpop.f32.mrb[0].mxu0
    %v1494 = vpop.f32.mrb[0].mxu0
    %v1495 = vadd.f32 0.0, %v1494
    %v1496 = vpop.f32.mrb[0].mxu0
    %1497 = vmatprep.mubr.bf16.mxu0 0
    %1498 = vmatmul.mubr.bf16.gmra.mrb[0].mxu0 %v1226
    %v1499 = vpop.f32.mrb[0].mxu0
    %v1500 = vadd.f32 0.0, %v1499
    %v1501 = vpop.f32.mrb[0].mxu0
    %v1502 = vpop.f32.mrb[0].mxu0
    %v1503 = vadd.f32 0.0, %v1502
    %v1504 = vpop.f32.mrb[0].mxu0
    %1505 = vmatprep.mubr.bf16.mxu0 0
    %1506 = vmatmul.mubr.bf16.gmra.mrb[0].mxu0 %v1229
    %v1507 = vpop.f32.mrb[0].mxu0
    %v1508 = vadd.f32 0.0, %v1507
    %v1509 = vpop.f32.mrb[0].mxu0
    %v1510 = vpop.f32.mrb[0].mxu0
    %v1511 = vadd.f32 0.0, %v1510
    %v1512 = vpop.f32.mrb[0].mxu0
    %1513 = vmatprep.mubr.bf16.mxu0 0
    %1514 = vmatmul.mubr.bf16.gmra.mrb[0].mxu0 %v1232
    %v1515 = vpop.f32.mrb[0].mxu0
    %v1516 = vadd.f32 0.0, %v1515
    %v1517 = vpop.f32.mrb[0].mxu0
    %v1518 = vpop.f32.mrb[0].mxu0
    %v1519 = vadd.f32 0.0, %v1518
    %v1520 = vpop.f32.mrb[0].mxu0
    %1521 = vmatprep.mubr.bf16.mxu0 0
    %1522 = vmatmul.mubr.bf16.gmra.mrb[0].mxu0 %v1235
    %v1523 = vpop.f32.mrb[0].mxu0
    %v1524 = vadd.f32 0.0, %v1523
    %v1525 = vpop.f32.mrb[0].mxu0
    %v1526 = vpop.f32.mrb[0].mxu0
    %v1527 = vadd.f32 0.0, %v1526
    %v1528 = vpop.f32.mrb[0].mxu0
    %1529 = vdwg.mxu0
    %v1531 = vsel %vm1140, %v690, 0
    %v1534 = vsel %vm1140, %v691, 0
    %v1537 = vsel %vm1140, %v692, 0
    %v1540 = vsel %vm1140, %v693, 0
    %v1543 = vsel %vm1140, %v694, 0
    %v1546 = vsel %vm1140, %v695, 0
    %v1549 = vsel %vm1140, %v696, 0
    %v1552 = vsel %vm1140, %v697, 0
    %v1555 = vsel %vm1140, %v698, 0
    %v1558 = vsel %vm1140, %v699, 0
    %v1561 = vsel %vm1140, %v700, 0
    %v1564 = vsel %vm1140, %v701, 0
    %v1567 = vsel %vm1140, %v702, 0
    %v1570 = vsel %vm1140, %v703, 0
    %v1573 = vsel %vm1140, %v704, 0
    %v1576 = vsel %vm1140, %v705, 0
    %v1579 = vsel %vm1140, %v706, 0
    %v1582 = vsel %vm1140, %v707, 0
    %v1585 = vsel %vm1140, %v708, 0
    %v1588 = vsel %vm1140, %v709, 0
    %v1591 = vsel %vm1140, %v710, 0
    %v1594 = vsel %vm1140, %v711, 0
    %v1597 = vsel %vm1140, %v712, 0
    %v1600 = vsel %vm1140, %v713, 0
    %v1603 = vsel %vm1140, %v714, 0
    %v1606 = vsel %vm1140, %v715, 0
    %v1609 = vsel %vm1140, %v716, 0
    %v1612 = vsel %vm1140, %v717, 0
    %v1615 = vsel %vm1140, %v718, 0
    %v1618 = vsel %vm1140, %v719, 0
    %v1621 = vsel %vm1140, %v720, 0
    %v1624 = vsel %vm1140, %v721, 0
    %v1627 = vsel %vm1237, %v1138, 0
    %1629 = vmatprep.subr.bf16.mxu0 0
    %1630 = vmatpush1.bf16.msra.mxu0 %v1627
    %1631 = vmatprep.subr.bf16.mxu0 0
    %1632 = vmatpush1.bf16.msra.mxu0 0
    %1633 = vmatprep.subr.bf16.mxu0 0
    %1634 = vmatpush1.bf16.msra.mxu0 0
    %1635 = vmatprep.subr.bf16.mxu0 0
    %1636 = vmatpush1.bf16.msra.mxu0 0
    %1637 = vmatprep.subr.bf16.mxu0 0
    %1638 = vmatpush1.bf16.msra.mxu0 0
    %1639 = vmatprep.subr.bf16.mxu0 0
    %1640 = vmatpush1.bf16.msra.mxu0 0
    %1641 = vmatprep.subr.bf16.mxu0 0
    %1642 = vmatpush1.bf16.msra.mxu0 0
    %1643 = vmatprep.subr.bf16.mxu0 0
    %1644 = vmatpush1.bf16.msra.mxu0 0
    %1645 = vmatprep.subr.bf16.mxu0 0
    %1646 = vmatpush1.bf16.msra.mxu0 0
    %1647 = vmatprep.subr.bf16.mxu0 0
    %1648 = vmatpush1.bf16.msra.mxu0 0
    %1649 = vmatprep.subr.bf16.mxu0 0
    %1650 = vmatpush1.bf16.msra.mxu0 0
    %1651 = vmatprep.subr.bf16.mxu0 0
    %1652 = vmatpush1.bf16.msra.mxu0 0
    %1653 = vmatprep.subr.bf16.mxu0 0
    %1654 = vmatpush1.bf16.msra.mxu0 0
    %1655 = vmatprep.subr.bf16.mxu0 0
    %1656 = vmatpush1.bf16.msra.mxu0 0
    %1657 = vmatprep.subr.bf16.mxu0 0
    %1658 = vmatpush1.bf16.msra.mxu0 0
    %1659 = vmatprep.subr.bf16.mxu0 0
    %1660 = vmatpush1.bf16.msra.mxu0 0
    %1661 = vmatprep.mubr.bf16.mxu0 0
    %1662 = vmatmul.mubr.bf16.gmra.mrb[0].mxu0 %v1531
    %v1663 = vpop.f32.mrb[0].mxu0
    %v1664 = vadd.f32 %v1276, %v1663
    %v1665 = vpop.f32.mrb[0].mxu0
    %v1666 = vpop.f32.mrb[0].mxu0
    %v1667 = vadd.f32 %v1279, %v1666
    %v1668 = vpop.f32.mrb[0].mxu0
    %1669 = vmatprep.mubr.bf16.mxu0 0
    %1670 = vmatmul.mubr.bf16.gmra.mrb[0].mxu0 %v1534
    %v1671 = vpop.f32.mrb[0].mxu0
    %v1672 = vadd.f32 %v1284, %v1671
    %v1673 = vpop.f32.mrb[0].mxu0
    %v1674 = vpop.f32.mrb[0].mxu0
    %v1675 = vadd.f32 %v1287, %v1674
    %v1676 = vpop.f32.mrb[0].mxu0
    %1677 = vmatprep.mubr.bf16.mxu0 0
    %1678 = vmatmul.mubr.bf16.gmra.mrb[0].mxu0 %v1537
    %v1679 = vpop.f32.mrb[0].mxu0
    %v1680 = vadd.f32 %v1292, %v1679
    %v1681 = vpop.f32.mrb[0].mxu0
    %v1682 = vpop.f32.mrb[0].mxu0
    %v1683 = vadd.f32 %v1295, %v1682
    %v1684 = vpop.f32.mrb[0].mxu0
    %1685 = vmatprep.mubr.bf16.mxu0 0
    %1686 = vmatmul.mubr.bf16.gmra.mrb[0].mxu0 %v1540
    %v1687 = vpop.f32.mrb[0].mxu0
    %v1688 = vadd.f32 %v1300, %v1687
    %v1689 = vpop.f32.mrb[0].mxu0
    %v1690 = vpop.f32.mrb[0].mxu0
    %v1691 = vadd.f32 %v1303, %v1690
    %v1692 = vpop.f32.mrb[0].mxu0
    %1693 = vmatprep.mubr.bf16.mxu0 0
    %1694 = vmatmul.mubr.bf16.gmra.mrb[0].mxu0 %v1543
    %v1695 = vpop.f32.mrb[0].mxu0
    %v1696 = vadd.f32 %v1308, %v1695
    %v1697 = vpop.f32.mrb[0].mxu0
    %v1698 = vpop.f32.mrb[0].mxu0
    %v1699 = vadd.f32 %v1311, %v1698
    %v1700 = vpop.f32.mrb[0].mxu0
    %1701 = vmatprep.mubr.bf16.mxu0 0
    %1702 = vmatmul.mubr.bf16.gmra.mrb[0].mxu0 %v1546
    %v1703 = vpop.f32.mrb[0].mxu0
    %v1704 = vadd.f32 %v1316, %v1703
    %v1705 = vpop.f32.mrb[0].mxu0
    %v1706 = vpop.f32.mrb[0].mxu0
    %v1707 = vadd.f32 %v1319, %v1706
    %v1708 = vpop.f32.mrb[0].mxu0
    %1709 = vmatprep.mubr.bf16.mxu0 0
    %1710 = vmatmul.mubr.bf16.gmra.mrb[0].mxu0 %v1549
    %v1711 = vpop.f32.mrb[0].mxu0
    %v1712 = vadd.f32 %v1324, %v1711
    %v1713 = vpop.f32.mrb[0].mxu0
    %v1714 = vpop.f32.mrb[0].mxu0
    %v1715 = vadd.f32 %v1327, %v1714
    %v1716 = vpop.f32.mrb[0].mxu0
    %1717 = vmatprep.mubr.bf16.mxu0 0
    %1718 = vmatmul.mubr.bf16.gmra.mrb[0].mxu0 %v1552
    %v1719 = vpop.f32.mrb[0].mxu0
    %v1720 = vadd.f32 %v1332, %v1719
    %v1721 = vpop.f32.mrb[0].mxu0
    %v1722 = vpop.f32.mrb[0].mxu0
    %v1723 = vadd.f32 %v1335, %v1722
    %v1724 = vpop.f32.mrb[0].mxu0
    %1725 = vmatprep.mubr.bf16.mxu0 0
    %1726 = vmatmul.mubr.bf16.gmra.mrb[0].mxu0 %v1555
    %v1727 = vpop.f32.mrb[0].mxu0
    %v1728 = vadd.f32 %v1340, %v1727
    %v1729 = vpop.f32.mrb[0].mxu0
    %v1730 = vpop.f32.mrb[0].mxu0
    %v1731 = vadd.f32 %v1343, %v1730
    %v1732 = vpop.f32.mrb[0].mxu0
    %1733 = vmatprep.mubr.bf16.mxu0 0
    %1734 = vmatmul.mubr.bf16.gmra.mrb[0].mxu0 %v1558
    %v1735 = vpop.f32.mrb[0].mxu0
    %v1736 = vadd.f32 %v1348, %v1735
    %v1737 = vpop.f32.mrb[0].mxu0
    %v1738 = vpop.f32.mrb[0].mxu0
    %v1739 = vadd.f32 %v1351, %v1738
    %v1740 = vpop.f32.mrb[0].mxu0
    %1741 = vmatprep.mubr.bf16.mxu0 0
    %1742 = vmatmul.mubr.bf16.gmra.mrb[0].mxu0 %v1561
    %v1743 = vpop.f32.mrb[0].mxu0
    %v1744 = vadd.f32 %v1356, %v1743
    %v1745 = vpop.f32.mrb[0].mxu0
    %v1746 = vpop.f32.mrb[0].mxu0
    %v1747 = vadd.f32 %v1359, %v1746
    %v1748 = vpop.f32.mrb[0].mxu0
    %1749 = vmatprep.mubr.bf16.mxu0 0
    %1750 = vmatmul.mubr.bf16.gmra.mrb[0].mxu0 %v1564
    %v1751 = vpop.f32.mrb[0].mxu0
    %v1752 = vadd.f32 %v1364, %v1751
    %v1753 = vpop.f32.mrb[0].mxu0
    %v1754 = vpop.f32.mrb[0].mxu0
    %v1755 = vadd.f32 %v1367, %v1754
    %v1756 = vpop.f32.mrb[0].mxu0
    %1757 = vmatprep.mubr.bf16.mxu0 0
    %1758 = vmatmul.mubr.bf16.gmra.mrb[0].mxu0 %v1567
    %v1759 = vpop.f32.mrb[0].mxu0
    %v1760 = vadd.f32 %v1372, %v1759
    %v1761 = vpop.f32.mrb[0].mxu0
    %v1762 = vpop.f32.mrb[0].mxu0
    %v1763 = vadd.f32 %v1375, %v1762
    %v1764 = vpop.f32.mrb[0].mxu0
    %1765 = vmatprep.mubr.bf16.mxu0 0
    %1766 = vmatmul.mubr.bf16.gmra.mrb[0].mxu0 %v1570
    %v1767 = vpop.f32.mrb[0].mxu0
    %v1768 = vadd.f32 %v1380, %v1767
    %v1769 = vpop.f32.mrb[0].mxu0
    %v1770 = vpop.f32.mrb[0].mxu0
    %v1771 = vadd.f32 %v1383, %v1770
    %v1772 = vpop.f32.mrb[0].mxu0
    %1773 = vmatprep.mubr.bf16.mxu0 0
    %1774 = vmatmul.mubr.bf16.gmra.mrb[0].mxu0 %v1573
    %v1775 = vpop.f32.mrb[0].mxu0
    %v1776 = vadd.f32 %v1388, %v1775
    %v1777 = vpop.f32.mrb[0].mxu0
    %v1778 = vpop.f32.mrb[0].mxu0
    %v1779 = vadd.f32 %v1391, %v1778
    %v1780 = vpop.f32.mrb[0].mxu0
    %1781 = vmatprep.mubr.bf16.mxu0 0
    %1782 = vmatmul.mubr.bf16.gmra.mrb[0].mxu0 %v1576
    %v1783 = vpop.f32.mrb[0].mxu0
    %v1784 = vadd.f32 %v1396, %v1783
    %v1785 = vpop.f32.mrb[0].mxu0
    %v1786 = vpop.f32.mrb[0].mxu0
    %v1787 = vadd.f32 %v1399, %v1786
    %v1788 = vpop.f32.mrb[0].mxu0
    %1789 = vmatprep.mubr.bf16.mxu0 0
    %1790 = vmatmul.mubr.bf16.gmra.mrb[0].mxu0 %v1579
    %v1791 = vpop.f32.mrb[0].mxu0
    %v1792 = vadd.f32 %v1404, %v1791
    %v1793 = vpop.f32.mrb[0].mxu0
    %v1794 = vpop.f32.mrb[0].mxu0
    %v1795 = vadd.f32 %v1407, %v1794
    %v1796 = vpop.f32.mrb[0].mxu0
    %1797 = vmatprep.mubr.bf16.mxu0 0
    %1798 = vmatmul.mubr.bf16.gmra.mrb[0].mxu0 %v1582
    %v1799 = vpop.f32.mrb[0].mxu0
    %v1800 = vadd.f32 %v1412, %v1799
    %v1801 = vpop.f32.mrb[0].mxu0
    %v1802 = vpop.f32.mrb[0].mxu0
    %v1803 = vadd.f32 %v1415, %v1802
    %v1804 = vpop.f32.mrb[0].mxu0
    %1805 = vmatprep.mubr.bf16.mxu0 0
    %1806 = vmatmul.mubr.bf16.gmra.mrb[0].mxu0 %v1585
    %v1807 = vpop.f32.mrb[0].mxu0
    %v1808 = vadd.f32 %v1420, %v1807
    %v1809 = vpop.f32.mrb[0].mxu0
    %v1810 = vpop.f32.mrb[0].mxu0
    %v1811 = vadd.f32 %v1423, %v1810
    %v1812 = vpop.f32.mrb[0].mxu0
    %1813 = vmatprep.mubr.bf16.mxu0 0
    %1814 = vmatmul.mubr.bf16.gmra.mrb[0].mxu0 %v1588
    %v1815 = vpop.f32.mrb[0].mxu0
    %v1816 = vadd.f32 %v1428, %v1815
    %v1817 = vpop.f32.mrb[0].mxu0
    %v1818 = vpop.f32.mrb[0].mxu0
    %v1819 = vadd.f32 %v1431, %v1818
    %v1820 = vpop.f32.mrb[0].mxu0
    %1821 = vmatprep.mubr.bf16.mxu0 0
    %1822 = vmatmul.mubr.bf16.gmra.mrb[0].mxu0 %v1591
    %v1823 = vpop.f32.mrb[0].mxu0
    %v1824 = vadd.f32 %v1436, %v1823
    %v1825 = vpop.f32.mrb[0].mxu0
    %v1826 = vpop.f32.mrb[0].mxu0
    %v1827 = vadd.f32 %v1439, %v1826
    %v1828 = vpop.f32.mrb[0].mxu0
    %1829 = vmatprep.mubr.bf16.mxu0 0
    %1830 = vmatmul.mubr.bf16.gmra.mrb[0].mxu0 %v1594
    %v1831 = vpop.f32.mrb[0].mxu0
    %v1832 = vadd.f32 %v1444, %v1831
    %v1833 = vpop.f32.mrb[0].mxu0
    %v1834 = vpop.f32.mrb[0].mxu0
    %v1835 = vadd.f32 %v1447, %v1834
    %v1836 = vpop.f32.mrb[0].mxu0
    %1837 = vmatprep.mubr.bf16.mxu0 0
    %1838 = vmatmul.mubr.bf16.gmra.mrb[0].mxu0 %v1597
    %v1839 = vpop.f32.mrb[0].mxu0
    %v1840 = vadd.f32 %v1452, %v1839
    %v1841 = vpop.f32.mrb[0].mxu0
    %v1842 = vpop.f32.mrb[0].mxu0
    %v1843 = vadd.f32 %v1455, %v1842
    %v1844 = vpop.f32.mrb[0].mxu0
    %1845 = vmatprep.mubr.bf16.mxu0 0
    %1846 = vmatmul.mubr.bf16.gmra.mrb[0].mxu0 %v1600
    %v1847 = vpop.f32.mrb[0].mxu0
    %v1848 = vadd.f32 %v1460, %v1847
    %v1849 = vpop.f32.mrb[0].mxu0
    %v1850 = vpop.f32.mrb[0].mxu0
    %v1851 = vadd.f32 %v1463, %v1850
    %v1852 = vpop.f32.mrb[0].mxu0
    %1853 = vmatprep.mubr.bf16.mxu0 0
    %1854 = vmatmul.mubr.bf16.gmra.mrb[0].mxu0 %v1603
    %v1855 = vpop.f32.mrb[0].mxu0
    %v1856 = vadd.f32 %v1468, %v1855
    %v1857 = vpop.f32.mrb[0].mxu0
    %v1858 = vpop.f32.mrb[0].mxu0
    %v1859 = vadd.f32 %v1471, %v1858
    %v1860 = vpop.f32.mrb[0].mxu0
    %1861 = vmatprep.mubr.bf16.mxu0 0
    %1862 = vmatmul.mubr.bf16.gmra.mrb[0].mxu0 %v1606
    %v1863 = vpop.f32.mrb[0].mxu0
    %v1864 = vadd.f32 %v1476, %v1863
    %v1865 = vpop.f32.mrb[0].mxu0
    %v1866 = vpop.f32.mrb[0].mxu0
    %v1867 = vadd.f32 %v1479, %v1866
    %v1868 = vpop.f32.mrb[0].mxu0
    %1869 = vmatprep.mubr.bf16.mxu0 0
    %1870 = vmatmul.mubr.bf16.gmra.mrb[0].mxu0 %v1609
    %v1871 = vpop.f32.mrb[0].mxu0
    %v1872 = vadd.f32 %v1484, %v1871
    %v1873 = vpop.f32.mrb[0].mxu0
    %v1874 = vpop.f32.mrb[0].mxu0
    %v1875 = vadd.f32 %v1487, %v1874
    %v1876 = vpop.f32.mrb[0].mxu0
    %1877 = vmatprep.mubr.bf16.mxu0 0
    %1878 = vmatmul.mubr.bf16.gmra.mrb[0].mxu0 %v1612
    %v1879 = vpop.f32.mrb[0].mxu0
    %v1880 = vadd.f32 %v1492, %v1879
    %v1881 = vpop.f32.mrb[0].mxu0
    %v1882 = vpop.f32.mrb[0].mxu0
    %v1883 = vadd.f32 %v1495, %v1882
    %v1884 = vpop.f32.mrb[0].mxu0
    %1885 = vmatprep.mubr.bf16.mxu0 0
    %1886 = vmatmul.mubr.bf16.gmra.mrb[0].mxu0 %v1615
    %v1887 = vpop.f32.mrb[0].mxu0
    %v1888 = vadd.f32 %v1500, %v1887
    %v1889 = vpop.f32.mrb[0].mxu0
    %v1890 = vpop.f32.mrb[0].mxu0
    %v1891 = vadd.f32 %v1503, %v1890
    %v1892 = vpop.f32.mrb[0].mxu0
    %1893 = vmatprep.mubr.bf16.mxu0 0
    %1894 = vmatmul.mubr.bf16.gmra.mrb[0].mxu0 %v1618
    %v1895 = vpop.f32.mrb[0].mxu0
    %v1896 = vadd.f32 %v1508, %v1895
    %v1897 = vpop.f32.mrb[0].mxu0
    %v1898 = vpop.f32.mrb[0].mxu0
    %v1899 = vadd.f32 %v1511, %v1898
    %v1900 = vpop.f32.mrb[0].mxu0
    %1901 = vmatprep.mubr.bf16.mxu0 0
    %1902 = vmatmul.mubr.bf16.gmra.mrb[0].mxu0 %v1621
    %v1903 = vpop.f32.mrb[0].mxu0
    %v1904 = vadd.f32 %v1516, %v1903
    %v1905 = vpop.f32.mrb[0].mxu0
    %v1906 = vpop.f32.mrb[0].mxu0
    %v1907 = vadd.f32 %v1519, %v1906
    %v1908 = vpop.f32.mrb[0].mxu0
    %1909 = vmatprep.mubr.bf16.mxu0 0
    %1910 = vmatmul.mubr.bf16.gmra.mrb[0].mxu0 %v1624
    %v1911 = vpop.f32.mrb[0].mxu0
    %v1912 = vadd.f32 %v1524, %v1911
    %v1913 = vpop.f32.mrb[0].mxu0
    %v1914 = vpop.f32.mrb[0].mxu0
    %v1915 = vadd.f32 %v1527, %v1914
    %v1916 = vpop.f32.mrb[0].mxu0
    %1917 = vdwg.mxu0
    %v1918 = vld [vmem:[%s2] sm:$0xff]
    %v1919 = vld [vmem:[%s2 + $0x8] sm:$0xff]
    %v1920 = vld [vmem:[%s2 + $0x10] sm:$0xff]
    %v1921 = vld [vmem:[%s2 + $0x18] sm:$0xff]
    %v1922 = vld [vmem:[%s2 + $0x20] sm:$0xff]
    %v1923 = vld [vmem:[%s2 + $0x28] sm:$0xff]
    %v1924 = vld [vmem:[%s2 + $0x30] sm:$0xff]
    %v1925 = vld [vmem:[%s2 + $0x38] sm:$0xff]
    %v1926 = vld [vmem:[%s2 + $0x40] sm:$0xff]
    %v1927 = vld [vmem:[%s2 + $0x48] sm:$0xff]
    %v1928 = vld [vmem:[%s2 + $0x50] sm:$0xff]
    %v1929 = vld [vmem:[%s2 + $0x58] sm:$0xff]
    %v1930 = vld [vmem:[%s2 + $0x60] sm:$0xff]
    %v1931 = vld [vmem:[%s2 + $0x68] sm:$0xff]
    %v1932 = vld [vmem:[%s2 + $0x70] sm:$0xff]
    %v1933 = vld [vmem:[%s2 + $0x78] sm:$0xff]
    %v1934 = vld [vmem:[%s2 + $0x80] sm:$0xff]
    %v1935 = vld [vmem:[%s2 + $0x88] sm:$0xff]
    %v1936 = vld [vmem:[%s2 + $0x90] sm:$0xff]
    %v1937 = vld [vmem:[%s2 + $0x98] sm:$0xff]
    %v1938 = vld [vmem:[%s2 + $0xa0] sm:$0xff]
    %v1939 = vld [vmem:[%s2 + $0xa8] sm:$0xff]
    %v1940 = vld [vmem:[%s2 + $0xb0] sm:$0xff]
    %v1941 = vld [vmem:[%s2 + $0xb8] sm:$0xff]
    %v1942 = vld [vmem:[%s2 + $0xc0] sm:$0xff]
    %v1943 = vld [vmem:[%s2 + $0xc8] sm:$0xff]
    %v1944 = vld [vmem:[%s2 + $0xd0] sm:$0xff]
    %v1945 = vld [vmem:[%s2 + $0xd8] sm:$0xff]
    %v1946 = vld [vmem:[%s2 + $0xe0] sm:$0xff]
    %v1947 = vld [vmem:[%s2 + $0xe8] sm:$0xff]
    %v1948 = vld [vmem:[%s2 + $0xf0] sm:$0xff]
    %v1949 = vld [vmem:[%s2 + $0xf8] sm:$0xff]
    %v1950 = vld [vmem:[%s2 + $0x100] sm:$0xff]
    %v1951 = vld [vmem:[%s2 + $0x108] sm:$0xff]
    %v1952 = vld [vmem:[%s2 + $0x110] sm:$0xff]
    %v1953 = vld [vmem:[%s2 + $0x118] sm:$0xff]
    %v1954 = vld [vmem:[%s2 + $0x120] sm:$0xff]
    %v1955 = vld [vmem:[%s2 + $0x128] sm:$0xff]
    %v1956 = vld [vmem:[%s2 + $0x130] sm:$0xff]
    %v1957 = vld [vmem:[%s2 + $0x138] sm:$0xff]
    %v1958 = vld [vmem:[%s2 + $0x140] sm:$0xff]
    %v1959 = vld [vmem:[%s2 + $0x148] sm:$0xff]
    %v1960 = vld [vmem:[%s2 + $0x150] sm:$0xff]
    %v1961 = vld [vmem:[%s2 + $0x158] sm:$0xff]
    %v1962 = vld [vmem:[%s2 + $0x160] sm:$0xff]
    %v1963 = vld [vmem:[%s2 + $0x168] sm:$0xff]
    %v1964 = vld [vmem:[%s2 + $0x170] sm:$0xff]
    %v1965 = vld [vmem:[%s2 + $0x178] sm:$0xff]
    %v1966 = vld [vmem:[%s2 + $0x180] sm:$0xff]
    %v1967 = vld [vmem:[%s2 + $0x188] sm:$0xff]
    %v1968 = vld [vmem:[%s2 + $0x190] sm:$0xff]
    %v1969 = vld [vmem:[%s2 + $0x198] sm:$0xff]
    %v1970 = vld [vmem:[%s2 + $0x1a0] sm:$0xff]
    %v1971 = vld [vmem:[%s2 + $0x1a8] sm:$0xff]
    %v1972 = vld [vmem:[%s2 + $0x1b0] sm:$0xff]
    %v1973 = vld [vmem:[%s2 + $0x1b8] sm:$0xff]
    %v1974 = vld [vmem:[%s2 + $0x1c0] sm:$0xff]
    %v1975 = vld [vmem:[%s2 + $0x1c8] sm:$0xff]
    %v1976 = vld [vmem:[%s2 + $0x1d0] sm:$0xff]
    %v1977 = vld [vmem:[%s2 + $0x1d8] sm:$0xff]
    %v1978 = vld [vmem:[%s2 + $0x1e0] sm:$0xff]
    %v1979 = vld [vmem:[%s2 + $0x1e8] sm:$0xff]
    %v1980 = vld [vmem:[%s2 + $0x1f0] sm:$0xff]
    %v1981 = vld [vmem:[%s2 + $0x1f8] sm:$0xff]
    %v1982 = vld [vmem:[%s7] sm:$0xff]
    %v1983 = vld [vmem:[%s7 + $0x8] sm:$0xff]
    %vm1984 = vcmask 130048
    %v1986 = vsel %vm1984, %v1918, 0
    %v1989 = vsel %vm1984, %v1919, 0
    %v1992 = vsel %vm1984, %v1920, 0
    %v1995 = vsel %vm1984, %v1921, 0
    %v1998 = vsel %vm1984, %v1922, 0
    %v2001 = vsel %vm1984, %v1923, 0
    %v2004 = vsel %vm1984, %v1924, 0
    %v2007 = vsel %vm1984, %v1925, 0
    %v2010 = vsel %vm1984, %v1926, 0
    %v2013 = vsel %vm1984, %v1927, 0
    %v2016 = vsel %vm1984, %v1928, 0
    %v2019 = vsel %vm1984, %v1929, 0
    %v2022 = vsel %vm1984, %v1930, 0
    %v2025 = vsel %vm1984, %v1931, 0
    %v2028 = vsel %vm1984, %v1932, 0
    %v2031 = vsel %vm1984, %v1933, 0
    %v2034 = vsel %vm1984, %v1934, 0
    %v2037 = vsel %vm1984, %v1935, 0
    %v2040 = vsel %vm1984, %v1936, 0
    %v2043 = vsel %vm1984, %v1937, 0
    %v2046 = vsel %vm1984, %v1938, 0
    %v2049 = vsel %vm1984, %v1939, 0
    %v2052 = vsel %vm1984, %v1940, 0
    %v2055 = vsel %vm1984, %v1941, 0
    %v2058 = vsel %vm1984, %v1942, 0
    %v2061 = vsel %vm1984, %v1943, 0
    %v2064 = vsel %vm1984, %v1944, 0
    %v2067 = vsel %vm1984, %v1945, 0
    %v2070 = vsel %vm1984, %v1946, 0
    %v2073 = vsel %vm1984, %v1947, 0
    %v2076 = vsel %vm1984, %v1948, 0
    %v2079 = vsel %vm1984, %v1949, 0
    %v2082 = vsel %vm1984, %v1950, 0
    %v2085 = vsel %vm1984, %v1951, 0
    %v2088 = vsel %vm1984, %v1952, 0
    %v2091 = vsel %vm1984, %v1953, 0
    %v2094 = vsel %vm1984, %v1954, 0
    %v2097 = vsel %vm1984, %v1955, 0
    %v2100 = vsel %vm1984, %v1956, 0
    %v2103 = vsel %vm1984, %v1957, 0
    %v2106 = vsel %vm1984, %v1958, 0
    %v2109 = vsel %vm1984, %v1959, 0
    %v2112 = vsel %vm1984, %v1960, 0
    %v2115 = vsel %vm1984, %v1961, 0
    %v2118 = vsel %vm1984, %v1962, 0
    %v2121 = vsel %vm1984, %v1963, 0
    %v2124 = vsel %vm1984, %v1964, 0
    %v2127 = vsel %vm1984, %v1965, 0
    %v2130 = vsel %vm1984, %v1966, 0
    %v2133 = vsel %vm1984, %v1967, 0
    %v2136 = vsel %vm1984, %v1968, 0
    %v2139 = vsel %vm1984, %v1969, 0
    %v2142 = vsel %vm1984, %v1970, 0
    %v2145 = vsel %vm1984, %v1971, 0
    %v2148 = vsel %vm1984, %v1972, 0
    %v2151 = vsel %vm1984, %v1973, 0
    %v2154 = vsel %vm1984, %v1974, 0
    %v2157 = vsel %vm1984, %v1975, 0
    %v2160 = vsel %vm1984, %v1976, 0
    %v2163 = vsel %vm1984, %v1977, 0
    %v2166 = vsel %vm1984, %v1978, 0
    %v2169 = vsel %vm1984, %v1979, 0
    %v2172 = vsel %vm1984, %v1980, 0
    %v2175 = vsel %vm1984, %v1981, 0
    %2177 = vmatprep.subr.mxu0 0.0
    %2178 = vmatpush1.msra.mxu0 %v1982
    %2179 = vmatprep.subr.mxu0 0.0
    %2180 = vmatpush1.msra.mxu0 %v1983
    %2181 = vmatprep.subr.mxu0 0.0
    %2182 = vmatpush1.msra.mxu0 0.0
    %2183 = vmatprep.subr.mxu0 0.0
    %2184 = vmatpush1.msra.mxu0 0.0
    %2185 = vmatprep.subr.mxu0 0.0
    %2186 = vmatpush1.msra.mxu0 0.0
    %2187 = vmatprep.subr.mxu0 0.0
    %2188 = vmatpush1.msra.mxu0 0.0
    %2189 = vmatprep.subr.mxu0 0.0
    %2190 = vmatpush1.msra.mxu0 0.0
    %2191 = vmatprep.subr.mxu0 0.0
    %2192 = vmatpush1.msra.mxu0 0.0
    %2193 = vmatprep.subr.mxu0 0.0
    %2194 = vmatpush1.msra.mxu0 0.0
    %2195 = vmatprep.subr.mxu0 0.0
    %2196 = vmatpush1.msra.mxu0 0.0
    %2197 = vmatprep.subr.mxu0 0.0
    %2198 = vmatpush1.msra.mxu0 0.0
    %2199 = vmatprep.subr.mxu0 0.0
    %2200 = vmatpush1.msra.mxu0 0.0
    %2201 = vmatprep.subr.mxu0 0.0
    %2202 = vmatpush1.msra.mxu0 0.0
    %2203 = vmatprep.subr.mxu0 0.0
    %2204 = vmatpush1.msra.mxu0 0.0
    %2205 = vmatprep.subr.mxu0 0.0
    %2206 = vmatpush1.msra.mxu0 0.0
    %2207 = vmatprep.subr.mxu0 0.0
    %2208 = vmatpush1.msra.mxu0 0.0
    %2209 = vmatprep.subr.mxu0 0.0
    %2210 = vmatpush1.msra.mxu0 0.0
    %2211 = vmatprep.subr.mxu0 0.0
    %2212 = vmatpush1.msra.mxu0 0.0
    %2213 = vmatprep.subr.mxu0 0.0
    %2214 = vmatpush1.msra.mxu0 0.0
    %2215 = vmatprep.subr.mxu0 0.0
    %2216 = vmatpush1.msra.mxu0 0.0
    %2217 = vmatprep.subr.mxu0 0.0
    %2218 = vmatpush1.msra.mxu0 0.0
    %2219 = vmatprep.subr.mxu0 0.0
    %2220 = vmatpush1.msra.mxu0 0.0
    %2221 = vmatprep.subr.mxu0 0.0
    %2222 = vmatpush1.msra.mxu0 0.0
    %2223 = vmatprep.subr.mxu0 0.0
    %2224 = vmatpush1.msra.mxu0 0.0
    %2225 = vmatprep.subr.mxu0 0.0
    %2226 = vmatpush1.msra.mxu0 0.0
    %2227 = vmatprep.subr.mxu0 0.0
    %2228 = vmatpush1.msra.mxu0 0.0
    %2229 = vmatprep.subr.mxu0 0.0
    %2230 = vmatpush1.msra.mxu0 0.0
    %2231 = vmatprep.subr.mxu0 0.0
    %2232 = vmatpush1.msra.mxu0 0.0
    %2233 = vmatprep.subr.mxu0 0.0
    %2234 = vmatpush1.msra.mxu0 0.0
    %2235 = vmatprep.subr.mxu0 0.0
    %2236 = vmatpush1.msra.mxu0 0.0
    %2237 = vmatprep.subr.mxu0 0.0
    %2238 = vmatpush1.msra.mxu0 0.0
    %2239 = vmatprep.subr.mxu0 0.0
    %2240 = vmatpush1.msra.mxu0 0.0
    %2241 = vmatprep.mubr.f32.mxu0 0.0
    %2242 = vmatmul.mubr.f32.gmra.mrb[0].mxu0 %v1986
    %v2243 = vpop.f32.mrb[0].mxu0
    %v2244 = vadd.f32 0.0, %v2243
    %v2245 = vpop.f32.mrb[0].mxu0
    %2246 = vmatprep.mubr.f32.mxu0 0.0
    %2247 = vmatmul.mubr.f32.gmra.mrb[0].mxu0 %v1989
    %v2248 = vpop.f32.mrb[0].mxu0
    %v2249 = vadd.f32 0.0, %v2248
    %v2250 = vpop.f32.mrb[0].mxu0
    %2251 = vmatprep.mubr.f32.mxu0 0.0
    %2252 = vmatmul.mubr.f32.gmra.mrb[0].mxu0 %v1992
    %v2253 = vpop.f32.mrb[0].mxu0
    %v2254 = vadd.f32 0.0, %v2253
    %v2255 = vpop.f32.mrb[0].mxu0
    %2256 = vmatprep.mubr.f32.mxu0 0.0
    %2257 = vmatmul.mubr.f32.gmra.mrb[0].mxu0 %v1995
    %v2258 = vpop.f32.mrb[0].mxu0
    %v2259 = vadd.f32 0.0, %v2258
    %v2260 = vpop.f32.mrb[0].mxu0
    %2261 = vmatprep.mubr.f32.mxu0 0.0
    %2262 = vmatmul.mubr.f32.gmra.mrb[0].mxu0 %v1998
    %v2263 = vpop.f32.mrb[0].mxu0
    %v2264 = vadd.f32 0.0, %v2263
    %v2265 = vpop.f32.mrb[0].mxu0
    %2266 = vmatprep.mubr.f32.mxu0 0.0
    %2267 = vmatmul.mubr.f32.gmra.mrb[0].mxu0 %v2001
    %v2268 = vpop.f32.mrb[0].mxu0
    %v2269 = vadd.f32 0.0, %v2268
    %v2270 = vpop.f32.mrb[0].mxu0
    %2271 = vmatprep.mubr.f32.mxu0 0.0
    %2272 = vmatmul.mubr.f32.gmra.mrb[0].mxu0 %v2004
    %v2273 = vpop.f32.mrb[0].mxu0
    %v2274 = vadd.f32 0.0, %v2273
    %v2275 = vpop.f32.mrb[0].mxu0
    %2276 = vmatprep.mubr.f32.mxu0 0.0
    %2277 = vmatmul.mubr.f32.gmra.mrb[0].mxu0 %v2007
    %v2278 = vpop.f32.mrb[0].mxu0
    %v2279 = vadd.f32 0.0, %v2278
    %v2280 = vpop.f32.mrb[0].mxu0
    %2281 = vmatprep.mubr.f32.mxu0 0.0
    %2282 = vmatmul.mubr.f32.gmra.mrb[0].mxu0 %v2010
    %v2283 = vpop.f32.mrb[0].mxu0
    %v2284 = vadd.f32 0.0, %v2283
    %v2285 = vpop.f32.mrb[0].mxu0
    %2286 = vmatprep.mubr.f32.mxu0 0.0
    %2287 = vmatmul.mubr.f32.gmra.mrb[0].mxu0 %v2013
    %v2288 = vpop.f32.mrb[0].mxu0
    %v2289 = vadd.f32 0.0, %v2288
    %v2290 = vpop.f32.mrb[0].mxu0
    %2291 = vmatprep.mubr.f32.mxu0 0.0
    %2292 = vmatmul.mubr.f32.gmra.mrb[0].mxu0 %v2016
    %v2293 = vpop.f32.mrb[0].mxu0
    %v2294 = vadd.f32 0.0, %v2293
    %v2295 = vpop.f32.mrb[0].mxu0
    %2296 = vmatprep.mubr.f32.mxu0 0.0
    %2297 = vmatmul.mubr.f32.gmra.mrb[0].mxu0 %v2019
    %v2298 = vpop.f32.mrb[0].mxu0
    %v2299 = vadd.f32 0.0, %v2298
    %v2300 = vpop.f32.mrb[0].mxu0
    %2301 = vmatprep.mubr.f32.mxu0 0.0
    %2302 = vmatmul.mubr.f32.gmra.mrb[0].mxu0 %v2022
    %v2303 = vpop.f32.mrb[0].mxu0
    %v2304 = vadd.f32 0.0, %v2303
    %v2305 = vpop.f32.mrb[0].mxu0
    %2306 = vmatprep.mubr.f32.mxu0 0.0
    %2307 = vmatmul.mubr.f32.gmra.mrb[0].mxu0 %v2025
    %v2308 = vpop.f32.mrb[0].mxu0
    %v2309 = vadd.f32 0.0, %v2308
    %v2310 = vpop.f32.mrb[0].mxu0
    %2311 = vmatprep.mubr.f32.mxu0 0.0
    %2312 = vmatmul.mubr.f32.gmra.mrb[0].mxu0 %v2028
    %v2313 = vpop.f32.mrb[0].mxu0
    %v2314 = vadd.f32 0.0, %v2313
    %v2315 = vpop.f32.mrb[0].mxu0
    %2316 = vmatprep.mubr.f32.mxu0 0.0
    %2317 = vmatmul.mubr.f32.gmra.mrb[0].mxu0 %v2031
    %v2318 = vpop.f32.mrb[0].mxu0
    %v2319 = vadd.f32 0.0, %v2318
    %v2320 = vpop.f32.mrb[0].mxu0
    %2321 = vmatprep.mubr.f32.mxu0 0.0
    %2322 = vmatmul.mubr.f32.gmra.mrb[0].mxu0 %v2034
    %v2323 = vpop.f32.mrb[0].mxu0
    %v2324 = vadd.f32 0.0, %v2323
    %v2325 = vpop.f32.mrb[0].mxu0
    %2326 = vmatprep.mubr.f32.mxu0 0.0
    %2327 = vmatmul.mubr.f32.gmra.mrb[0].mxu0 %v2037
    %v2328 = vpop.f32.mrb[0].mxu0
    %v2329 = vadd.f32 0.0, %v2328
    %v2330 = vpop.f32.mrb[0].mxu0
    %2331 = vmatprep.mubr.f32.mxu0 0.0
    %2332 = vmatmul.mubr.f32.gmra.mrb[0].mxu0 %v2040
    %v2333 = vpop.f32.mrb[0].mxu0
    %v2334 = vadd.f32 0.0, %v2333
    %v2335 = vpop.f32.mrb[0].mxu0
    %2336 = vmatprep.mubr.f32.mxu0 0.0
    %2337 = vmatmul.mubr.f32.gmra.mrb[0].mxu0 %v2043
    %v2338 = vpop.f32.mrb[0].mxu0
    %v2339 = vadd.f32 0.0, %v2338
    %v2340 = vpop.f32.mrb[0].mxu0
    %2341 = vmatprep.mubr.f32.mxu0 0.0
    %2342 = vmatmul.mubr.f32.gmra.mrb[0].mxu0 %v2046
    %v2343 = vpop.f32.mrb[0].mxu0
    %v2344 = vadd.f32 0.0, %v2343
    %v2345 = vpop.f32.mrb[0].mxu0
    %2346 = vmatprep.mubr.f32.mxu0 0.0
    %2347 = vmatmul.mubr.f32.gmra.mrb[0].mxu0 %v2049
    %v2348 = vpop.f32.mrb[0].mxu0
    %v2349 = vadd.f32 0.0, %v2348
    %v2350 = vpop.f32.mrb[0].mxu0
    %2351 = vmatprep.mubr.f32.mxu0 0.0
    %2352 = vmatmul.mubr.f32.gmra.mrb[0].mxu0 %v2052
    %v2353 = vpop.f32.mrb[0].mxu0
    %v2354 = vadd.f32 0.0, %v2353
    %v2355 = vpop.f32.mrb[0].mxu0
    %2356 = vmatprep.mubr.f32.mxu0 0.0
    %2357 = vmatmul.mubr.f32.gmra.mrb[0].mxu0 %v2055
    %v2358 = vpop.f32.mrb[0].mxu0
    %v2359 = vadd.f32 0.0, %v2358
    %v2360 = vpop.f32.mrb[0].mxu0
    %2361 = vmatprep.mubr.f32.mxu0 0.0
    %2362 = vmatmul.mubr.f32.gmra.mrb[0].mxu0 %v2058
    %v2363 = vpop.f32.mrb[0].mxu0
    %v2364 = vadd.f32 0.0, %v2363
    %v2365 = vpop.f32.mrb[0].mxu0
    %2366 = vmatprep.mubr.f32.mxu0 0.0
    %2367 = vmatmul.mubr.f32.gmra.mrb[0].mxu0 %v2061
    %v2368 = vpop.f32.mrb[0].mxu0
    %v2369 = vadd.f32 0.0, %v2368
    %v2370 = vpop.f32.mrb[0].mxu0
    %2371 = vmatprep.mubr.f32.mxu0 0.0
    %2372 = vmatmul.mubr.f32.gmra.mrb[0].mxu0 %v2064
    %v2373 = vpop.f32.mrb[0].mxu0
    %v2374 = vadd.f32 0.0, %v2373
    %v2375 = vpop.f32.mrb[0].mxu0
    %2376 = vmatprep.mubr.f32.mxu0 0.0
    %2377 = vmatmul.mubr.f32.gmra.mrb[0].mxu0 %v2067
    %v2378 = vpop.f32.mrb[0].mxu0
    %v2379 = vadd.f32 0.0, %v2378
    %v2380 = vpop.f32.mrb[0].mxu0
    %2381 = vmatprep.mubr.f32.mxu0 0.0
    %2382 = vmatmul.mubr.f32.gmra.mrb[0].mxu0 %v2070
    %v2383 = vpop.f32.mrb[0].mxu0
    %v2384 = vadd.f32 0.0, %v2383
    %v2385 = vpop.f32.mrb[0].mxu0
    %2386 = vmatprep.mubr.f32.mxu0 0.0
    %2387 = vmatmul.mubr.f32.gmra.mrb[0].mxu0 %v2073
    %v2388 = vpop.f32.mrb[0].mxu0
    %v2389 = vadd.f32 0.0, %v2388
    %v2390 = vpop.f32.mrb[0].mxu0
    %2391 = vmatprep.mubr.f32.mxu0 0.0
    %2392 = vmatmul.mubr.f32.gmra.mrb[0].mxu0 %v2076
    %v2393 = vpop.f32.mrb[0].mxu0
    %v2394 = vadd.f32 0.0, %v2393
    %v2395 = vpop.f32.mrb[0].mxu0
    %2396 = vmatprep.mubr.f32.mxu0 0.0
    %2397 = vmatmul.mubr.f32.gmra.mrb[0].mxu0 %v2079
    %v2398 = vpop.f32.mrb[0].mxu0
    %v2399 = vadd.f32 0.0, %v2398
    %v2400 = vpop.f32.mrb[0].mxu0
    %2401 = vmatprep.mubr.f32.mxu0 0.0
    %2402 = vmatmul.mubr.f32.gmra.mrb[0].mxu0 %v2082
    %v2403 = vpop.f32.mrb[0].mxu0
    %v2404 = vadd.f32 0.0, %v2403
    %v2405 = vpop.f32.mrb[0].mxu0
    %2406 = vmatprep.mubr.f32.mxu0 0.0
    %2407 = vmatmul.mubr.f32.gmra.mrb[0].mxu0 %v2085
    %v2408 = vpop.f32.mrb[0].mxu0
    %v2409 = vadd.f32 0.0, %v2408
    %v2410 = vpop.f32.mrb[0].mxu0
    %2411 = vmatprep.mubr.f32.mxu0 0.0
    %2412 = vmatmul.mubr.f32.gmra.mrb[0].mxu0 %v2088
    %v2413 = vpop.f32.mrb[0].mxu0
    %v2414 = vadd.f32 0.0, %v2413
    %v2415 = vpop.f32.mrb[0].mxu0
    %2416 = vmatprep.mubr.f32.mxu0 0.0
    %2417 = vmatmul.mubr.f32.gmra.mrb[0].mxu0 %v2091
    %v2418 = vpop.f32.mrb[0].mxu0
    %v2419 = vadd.f32 0.0, %v2418
    %v2420 = vpop.f32.mrb[0].mxu0
    %2421 = vmatprep.mubr.f32.mxu0 0.0
    %2422 = vmatmul.mubr.f32.gmra.mrb[0].mxu0 %v2094
    %v2423 = vpop.f32.mrb[0].mxu0
    %v2424 = vadd.f32 0.0, %v2423
    %v2425 = vpop.f32.mrb[0].mxu0
    %2426 = vmatprep.mubr.f32.mxu0 0.0
    %2427 = vmatmul.mubr.f32.gmra.mrb[0].mxu0 %v2097
    %v2428 = vpop.f32.mrb[0].mxu0
    %v2429 = vadd.f32 0.0, %v2428
    %v2430 = vpop.f32.mrb[0].mxu0
    %2431 = vmatprep.mubr.f32.mxu0 0.0
    %2432 = vmatmul.mubr.f32.gmra.mrb[0].mxu0 %v2100
    %v2433 = vpop.f32.mrb[0].mxu0
    %v2434 = vadd.f32 0.0, %v2433
    %v2435 = vpop.f32.mrb[0].mxu0
    %2436 = vmatprep.mubr.f32.mxu0 0.0
    %2437 = vmatmul.mubr.f32.gmra.mrb[0].mxu0 %v2103
    %v2438 = vpop.f32.mrb[0].mxu0
    %v2439 = vadd.f32 0.0, %v2438
    %v2440 = vpop.f32.mrb[0].mxu0
    %2441 = vmatprep.mubr.f32.mxu0 0.0
    %2442 = vmatmul.mubr.f32.gmra.mrb[0].mxu0 %v2106
    %v2443 = vpop.f32.mrb[0].mxu0
    %v2444 = vadd.f32 0.0, %v2443
    %v2445 = vpop.f32.mrb[0].mxu0
    %2446 = vmatprep.mubr.f32.mxu0 0.0
    %2447 = vmatmul.mubr.f32.gmra.mrb[0].mxu0 %v2109
    %v2448 = vpop.f32.mrb[0].mxu0
    %v2449 = vadd.f32 0.0, %v2448
    %v2450 = vpop.f32.mrb[0].mxu0
    %2451 = vmatprep.mubr.f32.mxu0 0.0
    %2452 = vmatmul.mubr.f32.gmra.mrb[0].mxu0 %v2112
    %v2453 = vpop.f32.mrb[0].mxu0
    %v2454 = vadd.f32 0.0, %v2453
    %v2455 = vpop.f32.mrb[0].mxu0
    %2456 = vmatprep.mubr.f32.mxu0 0.0
    %2457 = vmatmul.mubr.f32.gmra.mrb[0].mxu0 %v2115
    %v2458 = vpop.f32.mrb[0].mxu0
    %v2459 = vadd.f32 0.0, %v2458
    %v2460 = vpop.f32.mrb[0].mxu0
    %2461 = vmatprep.mubr.f32.mxu0 0.0
    %2462 = vmatmul.mubr.f32.gmra.mrb[0].mxu0 %v2118
    %v2463 = vpop.f32.mrb[0].mxu0
    %v2464 = vadd.f32 0.0, %v2463
    %v2465 = vpop.f32.mrb[0].mxu0
    %2466 = vmatprep.mubr.f32.mxu0 0.0
    %2467 = vmatmul.mubr.f32.gmra.mrb[0].mxu0 %v2121
    %v2468 = vpop.f32.mrb[0].mxu0
    %v2469 = vadd.f32 0.0, %v2468
    %v2470 = vpop.f32.mrb[0].mxu0
    %2471 = vmatprep.mubr.f32.mxu0 0.0
    %2472 = vmatmul.mubr.f32.gmra.mrb[0].mxu0 %v2124
    %v2473 = vpop.f32.mrb[0].mxu0
    %v2474 = vadd.f32 0.0, %v2473
    %v2475 = vpop.f32.mrb[0].mxu0
    %2476 = vmatprep.mubr.f32.mxu0 0.0
    %2477 = vmatmul.mubr.f32.gmra.mrb[0].mxu0 %v2127
    %v2478 = vpop.f32.mrb[0].mxu0
    %v2479 = vadd.f32 0.0, %v2478
    %v2480 = vpop.f32.mrb[0].mxu0
    %2481 = vmatprep.mubr.f32.mxu0 0.0
    %2482 = vmatmul.mubr.f32.gmra.mrb[0].mxu0 %v2130
    %v2483 = vpop.f32.mrb[0].mxu0
    %v2484 = vadd.f32 0.0, %v2483
    %v2485 = vpop.f32.mrb[0].mxu0
    %2486 = vmatprep.mubr.f32.mxu0 0.0
    %2487 = vmatmul.mubr.f32.gmra.mrb[0].mxu0 %v2133
    %v2488 = vpop.f32.mrb[0].mxu0
    %v2489 = vadd.f32 0.0, %v2488
    %v2490 = vpop.f32.mrb[0].mxu0
    %2491 = vmatprep.mubr.f32.mxu0 0.0
    %2492 = vmatmul.mubr.f32.gmra.mrb[0].mxu0 %v2136
    %v2493 = vpop.f32.mrb[0].mxu0
    %v2494 = vadd.f32 0.0, %v2493
    %v2495 = vpop.f32.mrb[0].mxu0
    %2496 = vmatprep.mubr.f32.mxu0 0.0
    %2497 = vmatmul.mubr.f32.gmra.mrb[0].mxu0 %v2139
    %v2498 = vpop.f32.mrb[0].mxu0
    %v2499 = vadd.f32 0.0, %v2498
    %v2500 = vpop.f32.mrb[0].mxu0
    %2501 = vmatprep.mubr.f32.mxu0 0.0
    %2502 = vmatmul.mubr.f32.gmra.mrb[0].mxu0 %v2142
    %v2503 = vpop.f32.mrb[0].mxu0
    %v2504 = vadd.f32 0.0, %v2503
    %v2505 = vpop.f32.mrb[0].mxu0
    %2506 = vmatprep.mubr.f32.mxu0 0.0
    %2507 = vmatmul.mubr.f32.gmra.mrb[0].mxu0 %v2145
    %v2508 = vpop.f32.mrb[0].mxu0
    %v2509 = vadd.f32 0.0, %v2508
    %v2510 = vpop.f32.mrb[0].mxu0
    %2511 = vmatprep.mubr.f32.mxu0 0.0
    %2512 = vmatmul.mubr.f32.gmra.mrb[0].mxu0 %v2148
    %v2513 = vpop.f32.mrb[0].mxu0
    %v2514 = vadd.f32 0.0, %v2513
    %v2515 = vpop.f32.mrb[0].mxu0
    %2516 = vmatprep.mubr.f32.mxu0 0.0
    %2517 = vmatmul.mubr.f32.gmra.mrb[0].mxu0 %v2151
    %v2518 = vpop.f32.mrb[0].mxu0
    %v2519 = vadd.f32 0.0, %v2518
    %v2520 = vpop.f32.mrb[0].mxu0
    %2521 = vmatprep.mubr.f32.mxu0 0.0
    %2522 = vmatmul.mubr.f32.gmra.mrb[0].mxu0 %v2154
    %v2523 = vpop.f32.mrb[0].mxu0
    %v2524 = vadd.f32 0.0, %v2523
    %v2525 = vpop.f32.mrb[0].mxu0
    %2526 = vmatprep.mubr.f32.mxu0 0.0
    %2527 = vmatmul.mubr.f32.gmra.mrb[0].mxu0 %v2157
    %v2528 = vpop.f32.mrb[0].mxu0
    %v2529 = vadd.f32 0.0, %v2528
    %v2530 = vpop.f32.mrb[0].mxu0
    %2531 = vmatprep.mubr.f32.mxu0 0.0
    %2532 = vmatmul.mubr.f32.gmra.mrb[0].mxu0 %v2160
    %v2533 = vpop.f32.mrb[0].mxu0
    %v2534 = vadd.f32 0.0, %v2533
    %v2535 = vpop.f32.mrb[0].mxu0
    %2536 = vmatprep.mubr.f32.mxu0 0.0
    %2537 = vmatmul.mubr.f32.gmra.mrb[0].mxu0 %v2163
    %v2538 = vpop.f32.mrb[0].mxu0
    %v2539 = vadd.f32 0.0, %v2538
    %v2540 = vpop.f32.mrb[0].mxu0
    %2541 = vmatprep.mubr.f32.mxu0 0.0
    %2542 = vmatmul.mubr.f32.gmra.mrb[0].mxu0 %v2166
    %v2543 = vpop.f32.mrb[0].mxu0
    %v2544 = vadd.f32 0.0, %v2543
    %v2545 = vpop.f32.mrb[0].mxu0
    %2546 = vmatprep.mubr.f32.mxu0 0.0
    %2547 = vmatmul.mubr.f32.gmra.mrb[0].mxu0 %v2169
    %v2548 = vpop.f32.mrb[0].mxu0
    %v2549 = vadd.f32 0.0, %v2548
    %v2550 = vpop.f32.mrb[0].mxu0
    %2551 = vmatprep.mubr.f32.mxu0 0.0
    %2552 = vmatmul.mubr.f32.gmra.mrb[0].mxu0 %v2172
    %v2553 = vpop.f32.mrb[0].mxu0
    %v2554 = vadd.f32 0.0, %v2553
    %v2555 = vpop.f32.mrb[0].mxu0
    %2556 = vmatprep.mubr.f32.mxu0 0.0
    %2557 = vmatmul.mubr.f32.gmra.mrb[0].mxu0 %v2175
    %v2558 = vpop.f32.mrb[0].mxu0
    %v2559 = vadd.f32 0.0, %v2558
    %v2560 = vpop.f32.mrb[0].mxu0
    %2561 = vdwg.mxu0
    %v2562 = vsel %vm1984, %v2244, 0.0
    %2563 = vadd.xlane.f32.xlu0 %v2562
    %v2564 = vpop.xlane.xlu0 %2563
    %v2565 = vsel %vm1984, %v2249, 0.0
    %2566 = vadd.xlane.f32.xlu0 %v2565
    %v2567 = vpop.xlane.xlu0 %2566
    %v2568 = vsel %vm1984, %v2254, 0.0
    %2569 = vadd.xlane.f32.xlu0 %v2568
    %v2570 = vpop.xlane.xlu0 %2569
    %v2571 = vsel %vm1984, %v2259, 0.0
    %2572 = vadd.xlane.f32.xlu0 %v2571
    %v2573 = vpop.xlane.xlu0 %2572
    %v2574 = vsel %vm1984, %v2264, 0.0
    %2575 = vadd.xlane.f32.xlu0 %v2574
    %v2576 = vpop.xlane.xlu0 %2575
    %v2577 = vsel %vm1984, %v2269, 0.0
    %2578 = vadd.xlane.f32.xlu0 %v2577
    %v2579 = vpop.xlane.xlu0 %2578
    %v2580 = vsel %vm1984, %v2274, 0.0
    %2581 = vadd.xlane.f32.xlu0 %v2580
    %v2582 = vpop.xlane.xlu0 %2581
    %v2583 = vsel %vm1984, %v2279, 0.0
    %2584 = vadd.xlane.f32.xlu0 %v2583
    %v2585 = vpop.xlane.xlu0 %2584
    %v2586 = vsel %vm1984, %v2284, 0.0
    %2587 = vadd.xlane.f32.xlu0 %v2586
    %v2588 = vpop.xlane.xlu0 %2587
    %v2589 = vsel %vm1984, %v2289, 0.0
    %2590 = vadd.xlane.f32.xlu0 %v2589
    %v2591 = vpop.xlane.xlu0 %2590
    %v2592 = vsel %vm1984, %v2294, 0.0
    %2593 = vadd.xlane.f32.xlu0 %v2592
    %v2594 = vpop.xlane.xlu0 %2593
    %v2595 = vsel %vm1984, %v2299, 0.0
    %2596 = vadd.xlane.f32.xlu0 %v2595
    %v2597 = vpop.xlane.xlu0 %2596
    %v2598 = vsel %vm1984, %v2304, 0.0
    %2599 = vadd.xlane.f32.xlu0 %v2598
    %v2600 = vpop.xlane.xlu0 %2599
    %v2601 = vsel %vm1984, %v2309, 0.0
    %2602 = vadd.xlane.f32.xlu0 %v2601
    %v2603 = vpop.xlane.xlu0 %2602
    %v2604 = vsel %vm1984, %v2314, 0.0
    %2605 = vadd.xlane.f32.xlu0 %v2604
    %v2606 = vpop.xlane.xlu0 %2605
    %v2607 = vsel %vm1984, %v2319, 0.0
    %2608 = vadd.xlane.f32.xlu0 %v2607
    %v2609 = vpop.xlane.xlu0 %2608
    %v2610 = vsel %vm1984, %v2324, 0.0
    %2611 = vadd.xlane.f32.xlu0 %v2610
    %v2612 = vpop.xlane.xlu0 %2611
    %v2613 = vsel %vm1984, %v2329, 0.0
    %2614 = vadd.xlane.f32.xlu0 %v2613
    %v2615 = vpop.xlane.xlu0 %2614
    %v2616 = vsel %vm1984, %v2334, 0.0
    %2617 = vadd.xlane.f32.xlu0 %v2616
    %v2618 = vpop.xlane.xlu0 %2617
    %v2619 = vsel %vm1984, %v2339, 0.0
    %2620 = vadd.xlane.f32.xlu0 %v2619
    %v2621 = vpop.xlane.xlu0 %2620
    %v2622 = vsel %vm1984, %v2344, 0.0
    %2623 = vadd.xlane.f32.xlu0 %v2622
    %v2624 = vpop.xlane.xlu0 %2623
    %v2625 = vsel %vm1984, %v2349, 0.0
    %2626 = vadd.xlane.f32.xlu0 %v2625
    %v2627 = vpop.xlane.xlu0 %2626
    %v2628 = vsel %vm1984, %v2354, 0.0
    %2629 = vadd.xlane.f32.xlu0 %v2628
    %v2630 = vpop.xlane.xlu0 %2629
    %v2631 = vsel %vm1984, %v2359, 0.0
    %2632 = vadd.xlane.f32.xlu0 %v2631
    %v2633 = vpop.xlane.xlu0 %2632
    %v2634 = vsel %vm1984, %v2364, 0.0
    %2635 = vadd.xlane.f32.xlu0 %v2634
    %v2636 = vpop.xlane.xlu0 %2635
    %v2637 = vsel %vm1984, %v2369, 0.0
    %2638 = vadd.xlane.f32.xlu0 %v2637
    %v2639 = vpop.xlane.xlu0 %2638
    %v2640 = vsel %vm1984, %v2374, 0.0
    %2641 = vadd.xlane.f32.xlu0 %v2640
    %v2642 = vpop.xlane.xlu0 %2641
    %v2643 = vsel %vm1984, %v2379, 0.0
    %2644 = vadd.xlane.f32.xlu0 %v2643
    %v2645 = vpop.xlane.xlu0 %2644
    %v2646 = vsel %vm1984, %v2384, 0.0
    %2647 = vadd.xlane.f32.xlu0 %v2646
    %v2648 = vpop.xlane.xlu0 %2647
    %v2649 = vsel %vm1984, %v2389, 0.0
    %2650 = vadd.xlane.f32.xlu0 %v2649
    %v2651 = vpop.xlane.xlu0 %2650
    %v2652 = vsel %vm1984, %v2394, 0.0
    %2653 = vadd.xlane.f32.xlu0 %v2652
    %v2654 = vpop.xlane.xlu0 %2653
    %v2655 = vsel %vm1984, %v2399, 0.0
    %2656 = vadd.xlane.f32.xlu0 %v2655
    %v2657 = vpop.xlane.xlu0 %2656
    %v2658 = vsel %vm1984, %v2404, 0.0
    %2659 = vadd.xlane.f32.xlu0 %v2658
    %v2660 = vpop.xlane.xlu0 %2659
    %v2661 = vsel %vm1984, %v2409, 0.0
    %2662 = vadd.xlane.f32.xlu0 %v2661
    %v2663 = vpop.xlane.xlu0 %2662
    %v2664 = vsel %vm1984, %v2414, 0.0
    %2665 = vadd.xlane.f32.xlu0 %v2664
    %v2666 = vpop.xlane.xlu0 %2665
    %v2667 = vsel %vm1984, %v2419, 0.0
    %2668 = vadd.xlane.f32.xlu0 %v2667
    %v2669 = vpop.xlane.xlu0 %2668
    %v2670 = vsel %vm1984, %v2424, 0.0
    %2671 = vadd.xlane.f32.xlu0 %v2670
    %v2672 = vpop.xlane.xlu0 %2671
    %v2673 = vsel %vm1984, %v2429, 0.0
    %2674 = vadd.xlane.f32.xlu0 %v2673
    %v2675 = vpop.xlane.xlu0 %2674
    %v2676 = vsel %vm1984, %v2434, 0.0
    %2677 = vadd.xlane.f32.xlu0 %v2676
    %v2678 = vpop.xlane.xlu0 %2677
    %v2679 = vsel %vm1984, %v2439, 0.0
    %2680 = vadd.xlane.f32.xlu0 %v2679
    %v2681 = vpop.xlane.xlu0 %2680
    %v2682 = vsel %vm1984, %v2444, 0.0
    %2683 = vadd.xlane.f32.xlu0 %v2682
    %v2684 = vpop.xlane.xlu0 %2683
    %v2685 = vsel %vm1984, %v2449, 0.0
    %2686 = vadd.xlane.f32.xlu0 %v2685
    %v2687 = vpop.xlane.xlu0 %2686
    %v2688 = vsel %vm1984, %v2454, 0.0
    %2689 = vadd.xlane.f32.xlu0 %v2688
    %v2690 = vpop.xlane.xlu0 %2689
    %v2691 = vsel %vm1984, %v2459, 0.0
    %2692 = vadd.xlane.f32.xlu0 %v2691
    %v2693 = vpop.xlane.xlu0 %2692
    %v2694 = vsel %vm1984, %v2464, 0.0
    %2695 = vadd.xlane.f32.xlu0 %v2694
    %v2696 = vpop.xlane.xlu0 %2695
    %v2697 = vsel %vm1984, %v2469, 0.0
    %2698 = vadd.xlane.f32.xlu0 %v2697
    %v2699 = vpop.xlane.xlu0 %2698
    %v2700 = vsel %vm1984, %v2474, 0.0
    %2701 = vadd.xlane.f32.xlu0 %v2700
    %v2702 = vpop.xlane.xlu0 %2701
    %v2703 = vsel %vm1984, %v2479, 0.0
    %2704 = vadd.xlane.f32.xlu0 %v2703
    %v2705 = vpop.xlane.xlu0 %2704
    %v2706 = vsel %vm1984, %v2484, 0.0
    %2707 = vadd.xlane.f32.xlu0 %v2706
    %v2708 = vpop.xlane.xlu0 %2707
    %v2709 = vsel %vm1984, %v2489, 0.0
    %2710 = vadd.xlane.f32.xlu0 %v2709
    %v2711 = vpop.xlane.xlu0 %2710
    %v2712 = vsel %vm1984, %v2494, 0.0
    %2713 = vadd.xlane.f32.xlu0 %v2712
    %v2714 = vpop.xlane.xlu0 %2713
    %v2715 = vsel %vm1984, %v2499, 0.0
    %2716 = vadd.xlane.f32.xlu0 %v2715
    %v2717 = vpop.xlane.xlu0 %2716
    %v2718 = vsel %vm1984, %v2504, 0.0
    %2719 = vadd.xlane.f32.xlu0 %v2718
    %v2720 = vpop.xlane.xlu0 %2719
    %v2721 = vsel %vm1984, %v2509, 0.0
    %2722 = vadd.xlane.f32.xlu0 %v2721
    %v2723 = vpop.xlane.xlu0 %2722
    %v2724 = vsel %vm1984, %v2514, 0.0
    %2725 = vadd.xlane.f32.xlu0 %v2724
    %v2726 = vpop.xlane.xlu0 %2725
    %v2727 = vsel %vm1984, %v2519, 0.0
    %2728 = vadd.xlane.f32.xlu0 %v2727
    %v2729 = vpop.xlane.xlu0 %2728
    %v2730 = vsel %vm1984, %v2524, 0.0
    %2731 = vadd.xlane.f32.xlu0 %v2730
    %v2732 = vpop.xlane.xlu0 %2731
    %v2733 = vsel %vm1984, %v2529, 0.0
    %2734 = vadd.xlane.f32.xlu0 %v2733
    %v2735 = vpop.xlane.xlu0 %2734
    %v2736 = vsel %vm1984, %v2534, 0.0
    %2737 = vadd.xlane.f32.xlu0 %v2736
    %v2738 = vpop.xlane.xlu0 %2737
    %v2739 = vsel %vm1984, %v2539, 0.0
    %2740 = vadd.xlane.f32.xlu0 %v2739
    %v2741 = vpop.xlane.xlu0 %2740
    %v2742 = vsel %vm1984, %v2544, 0.0
    %2743 = vadd.xlane.f32.xlu0 %v2742
    %v2744 = vpop.xlane.xlu0 %2743
    %v2745 = vsel %vm1984, %v2549, 0.0
    %2746 = vadd.xlane.f32.xlu0 %v2745
    %v2747 = vpop.xlane.xlu0 %2746
    %v2748 = vsel %vm1984, %v2554, 0.0
    %2749 = vadd.xlane.f32.xlu0 %v2748
    %v2750 = vpop.xlane.xlu0 %2749
    %v2751 = vsel %vm1984, %v2559, 0.0
    %2752 = vadd.xlane.f32.xlu0 %v2751
    %v2753 = vpop.xlane.xlu0 %2752
    %v2754 = vrcp.pop 16.0
    %v2755 = vmul.f32 %v2564, %v2754
    %v2756 = vmul.f32 %v2567, %v2754
    %v2757 = vmul.f32 %v2570, %v2754
    %v2758 = vmul.f32 %v2573, %v2754
    %v2759 = vmul.f32 %v2576, %v2754
    %v2760 = vmul.f32 %v2579, %v2754
    %v2761 = vmul.f32 %v2582, %v2754
    %v2762 = vmul.f32 %v2585, %v2754
    %v2763 = vmul.f32 %v2588, %v2754
    %v2764 = vmul.f32 %v2591, %v2754
    %v2765 = vmul.f32 %v2594, %v2754
    %v2766 = vmul.f32 %v2597, %v2754
    %v2767 = vmul.f32 %v2600, %v2754
    %v2768 = vmul.f32 %v2603, %v2754
    %v2769 = vmul.f32 %v2606, %v2754
    %v2770 = vmul.f32 %v2609, %v2754
    %v2771 = vmul.f32 %v2612, %v2754
    %v2772 = vmul.f32 %v2615, %v2754
    %v2773 = vmul.f32 %v2618, %v2754
    %v2774 = vmul.f32 %v2621, %v2754
    %v2775 = vmul.f32 %v2624, %v2754
    %v2776 = vmul.f32 %v2627, %v2754
    %v2777 = vmul.f32 %v2630, %v2754
    %v2778 = vmul.f32 %v2633, %v2754
    %v2779 = vmul.f32 %v2636, %v2754
    %v2780 = vmul.f32 %v2639, %v2754
    %v2781 = vmul.f32 %v2642, %v2754
    %v2782 = vmul.f32 %v2645, %v2754
    %v2783 = vmul.f32 %v2648, %v2754
    %v2784 = vmul.f32 %v2651, %v2754
    %v2785 = vmul.f32 %v2654, %v2754
    %v2786 = vmul.f32 %v2657, %v2754
    %v2787 = vmul.f32 %v2660, %v2754
    %v2788 = vmul.f32 %v2663, %v2754
    %v2789 = vmul.f32 %v2666, %v2754
    %v2790 = vmul.f32 %v2669, %v2754
    %v2791 = vmul.f32 %v2672, %v2754
    %v2792 = vmul.f32 %v2675, %v2754
    %v2793 = vmul.f32 %v2678, %v2754
    %v2794 = vmul.f32 %v2681, %v2754
    %v2795 = vmul.f32 %v2684, %v2754
    %v2796 = vmul.f32 %v2687, %v2754
    %v2797 = vmul.f32 %v2690, %v2754
    %v2798 = vmul.f32 %v2693, %v2754
    %v2799 = vmul.f32 %v2696, %v2754
    %v2800 = vmul.f32 %v2699, %v2754
    %v2801 = vmul.f32 %v2702, %v2754
    %v2802 = vmul.f32 %v2705, %v2754
    %v2803 = vmul.f32 %v2708, %v2754
    %v2804 = vmul.f32 %v2711, %v2754
    %v2805 = vmul.f32 %v2714, %v2754
    %v2806 = vmul.f32 %v2717, %v2754
    %v2807 = vmul.f32 %v2720, %v2754
    %v2808 = vmul.f32 %v2723, %v2754
    %v2809 = vmul.f32 %v2726, %v2754
    %v2810 = vmul.f32 %v2729, %v2754
    %v2811 = vmul.f32 %v2732, %v2754
    %v2812 = vmul.f32 %v2735, %v2754
    %v2813 = vmul.f32 %v2738, %v2754
    %v2814 = vmul.f32 %v2741, %v2754
    %v2815 = vmul.f32 %v2744, %v2754
    %v2816 = vmul.f32 %v2747, %v2754
    %v2817 = vmul.f32 %v2750, %v2754
    %v2818 = vmul.f32 %v2753, %v2754
    %v2819 = vsub.f32 %v2244, %v2755
    %v2820 = vsub.f32 %v2249, %v2756
    %v2821 = vsub.f32 %v2254, %v2757
    %v2822 = vsub.f32 %v2259, %v2758
    %v2823 = vsub.f32 %v2264, %v2759
    %v2824 = vsub.f32 %v2269, %v2760
    %v2825 = vsub.f32 %v2274, %v2761
    %v2826 = vsub.f32 %v2279, %v2762
    %v2827 = vsub.f32 %v2284, %v2763
    %v2828 = vsub.f32 %v2289, %v2764
    %v2829 = vsub.f32 %v2294, %v2765
    %v2830 = vsub.f32 %v2299, %v2766
    %v2831 = vsub.f32 %v2304, %v2767
    %v2832 = vsub.f32 %v2309, %v2768
    %v2833 = vsub.f32 %v2314, %v2769
    %v2834 = vsub.f32 %v2319, %v2770
    %v2835 = vsub.f32 %v2324, %v2771
    %v2836 = vsub.f32 %v2329, %v2772
    %v2837 = vsub.f32 %v2334, %v2773
    %v2838 = vsub.f32 %v2339, %v2774
    %v2839 = vsub.f32 %v2344, %v2775
    %v2840 = vsub.f32 %v2349, %v2776
    %v2841 = vsub.f32 %v2354, %v2777
    %v2842 = vsub.f32 %v2359, %v2778
    %v2843 = vsub.f32 %v2364, %v2779
    %v2844 = vsub.f32 %v2369, %v2780
    %v2845 = vsub.f32 %v2374, %v2781
    %v2846 = vsub.f32 %v2379, %v2782
    %v2847 = vsub.f32 %v2384, %v2783
    %v2848 = vsub.f32 %v2389, %v2784
    %v2849 = vsub.f32 %v2394, %v2785
    %v2850 = vsub.f32 %v2399, %v2786
    %v2851 = vsub.f32 %v2404, %v2787
    %v2852 = vsub.f32 %v2409, %v2788
    %v2853 = vsub.f32 %v2414, %v2789
    %v2854 = vsub.f32 %v2419, %v2790
    %v2855 = vsub.f32 %v2424, %v2791
    %v2856 = vsub.f32 %v2429, %v2792
    %v2857 = vsub.f32 %v2434, %v2793
    %v2858 = vsub.f32 %v2439, %v2794
    %v2859 = vsub.f32 %v2444, %v2795
    %v2860 = vsub.f32 %v2449, %v2796
    %v2861 = vsub.f32 %v2454, %v2797
    %v2862 = vsub.f32 %v2459, %v2798
    %v2863 = vsub.f32 %v2464, %v2799
    %v2864 = vsub.f32 %v2469, %v2800
    %v2865 = vsub.f32 %v2474, %v2801
    %v2866 = vsub.f32 %v2479, %v2802
    %v2867 = vsub.f32 %v2484, %v2803
    %v2868 = vsub.f32 %v2489, %v2804
    %v2869 = vsub.f32 %v2494, %v2805
    %v2870 = vsub.f32 %v2499, %v2806
    %v2871 = vsub.f32 %v2504, %v2807
    %v2872 = vsub.f32 %v2509, %v2808
    %v2873 = vsub.f32 %v2514, %v2809
    %v2874 = vsub.f32 %v2519, %v2810
    %v2875 = vsub.f32 %v2524, %v2811
    %v2876 = vsub.f32 %v2529, %v2812
    %v2877 = vsub.f32 %v2534, %v2813
    %v2878 = vsub.f32 %v2539, %v2814
    %v2879 = vsub.f32 %v2544, %v2815
    %v2880 = vsub.f32 %v2549, %v2816
    %v2881 = vsub.f32 %v2554, %v2817
    %v2882 = vsub.f32 %v2559, %v2818
    %v2883 = vmul.f32 %v2819, %v2819
    %v2884 = vmul.f32 %v2820, %v2820
    %v2885 = vmul.f32 %v2821, %v2821
    %v2886 = vmul.f32 %v2822, %v2822
    %v2887 = vmul.f32 %v2823, %v2823
    %v2888 = vmul.f32 %v2824, %v2824
    %v2889 = vmul.f32 %v2825, %v2825
    %v2890 = vmul.f32 %v2826, %v2826
    %v2891 = vmul.f32 %v2827, %v2827
    %v2892 = vmul.f32 %v2828, %v2828
    %v2893 = vmul.f32 %v2829, %v2829
    %v2894 = vmul.f32 %v2830, %v2830
    %v2895 = vmul.f32 %v2831, %v2831
    %v2896 = vmul.f32 %v2832, %v2832
    %v2897 = vmul.f32 %v2833, %v2833
    %v2898 = vmul.f32 %v2834, %v2834
    %v2899 = vmul.f32 %v2835, %v2835
    %v2900 = vmul.f32 %v2836, %v2836
    %v2901 = vmul.f32 %v2837, %v2837
    %v2902 = vmul.f32 %v2838, %v2838
    %v2903 = vmul.f32 %v2839, %v2839
    %v2904 = vmul.f32 %v2840, %v2840
    %v2905 = vmul.f32 %v2841, %v2841
    %v2906 = vmul.f32 %v2842, %v2842
    %v2907 = vmul.f32 %v2843, %v2843
    %v2908 = vmul.f32 %v2844, %v2844
    %v2909 = vmul.f32 %v2845, %v2845
    %v2910 = vmul.f32 %v2846, %v2846
    %v2911 = vmul.f32 %v2847, %v2847
    %v2912 = vmul.f32 %v2848, %v2848
    %v2913 = vmul.f32 %v2849, %v2849
    %v2914 = vmul.f32 %v2850, %v2850
    %v2915 = vmul.f32 %v2851, %v2851
    %v2916 = vmul.f32 %v2852, %v2852
    %v2917 = vmul.f32 %v2853, %v2853
    %v2918 = vmul.f32 %v2854, %v2854
    %v2919 = vmul.f32 %v2855, %v2855
    %v2920 = vmul.f32 %v2856, %v2856
    %v2921 = vmul.f32 %v2857, %v2857
    %v2922 = vmul.f32 %v2858, %v2858
    %v2923 = vmul.f32 %v2859, %v2859
    %v2924 = vmul.f32 %v2860, %v2860
    %v2925 = vmul.f32 %v2861, %v2861
    %v2926 = vmul.f32 %v2862, %v2862
    %v2927 = vmul.f32 %v2863, %v2863
    %v2928 = vmul.f32 %v2864, %v2864
    %v2929 = vmul.f32 %v2865, %v2865
    %v2930 = vmul.f32 %v2866, %v2866
    %v2931 = vmul.f32 %v2867, %v2867
    %v2932 = vmul.f32 %v2868, %v2868
    %v2933 = vmul.f32 %v2869, %v2869
    %v2934 = vmul.f32 %v2870, %v2870
    %v2935 = vmul.f32 %v2871, %v2871
    %v2936 = vmul.f32 %v2872, %v2872
    %v2937 = vmul.f32 %v2873, %v2873
    %v2938 = vmul.f32 %v2874, %v2874
    %v2939 = vmul.f32 %v2875, %v2875
    %v2940 = vmul.f32 %v2876, %v2876
    %v2941 = vmul.f32 %v2877, %v2877
    %v2942 = vmul.f32 %v2878, %v2878
    %v2943 = vmul.f32 %v2879, %v2879
    %v2944 = vmul.f32 %v2880, %v2880
    %v2945 = vmul.f32 %v2881, %v2881
    %v2946 = vmul.f32 %v2882, %v2882
    %v2947 = vsel %vm1984, %v2883, 0.0
    %2948 = vadd.xlane.f32.xlu0 %v2947
    %v2949 = vpop.xlane.xlu0 %2948
    %v2950 = vsel %vm1984, %v2884, 0.0
    %2951 = vadd.xlane.f32.xlu0 %v2950
    %v2952 = vpop.xlane.xlu0 %2951
    %v2953 = vsel %vm1984, %v2885, 0.0
    %2954 = vadd.xlane.f32.xlu0 %v2953
    %v2955 = vpop.xlane.xlu0 %2954
    %v2956 = vsel %vm1984, %v2886, 0.0
    %2957 = vadd.xlane.f32.xlu0 %v2956
    %v2958 = vpop.xlane.xlu0 %2957
    %v2959 = vsel %vm1984, %v2887, 0.0
    %2960 = vadd.xlane.f32.xlu0 %v2959
    %v2961 = vpop.xlane.xlu0 %2960
    %v2962 = vsel %vm1984, %v2888, 0.0
    %2963 = vadd.xlane.f32.xlu0 %v2962
    %v2964 = vpop.xlane.xlu0 %2963
    %v2965 = vsel %vm1984, %v2889, 0.0
    %2966 = vadd.xlane.f32.xlu0 %v2965
    %v2967 = vpop.xlane.xlu0 %2966
    %v2968 = vsel %vm1984, %v2890, 0.0
    %2969 = vadd.xlane.f32.xlu0 %v2968
    %v2970 = vpop.xlane.xlu0 %2969
    %v2971 = vsel %vm1984, %v2891, 0.0
    %2972 = vadd.xlane.f32.xlu0 %v2971
    %v2973 = vpop.xlane.xlu0 %2972
    %v2974 = vsel %vm1984, %v2892, 0.0
    %2975 = vadd.xlane.f32.xlu0 %v2974
    %v2976 = vpop.xlane.xlu0 %2975
    %v2977 = vsel %vm1984, %v2893, 0.0
    %2978 = vadd.xlane.f32.xlu0 %v2977
    %v2979 = vpop.xlane.xlu0 %2978
    %v2980 = vsel %vm1984, %v2894, 0.0
    %2981 = vadd.xlane.f32.xlu0 %v2980
    %v2982 = vpop.xlane.xlu0 %2981
    %v2983 = vsel %vm1984, %v2895, 0.0
    %2984 = vadd.xlane.f32.xlu0 %v2983
    %v2985 = vpop.xlane.xlu0 %2984
    %v2986 = vsel %vm1984, %v2896, 0.0
    %2987 = vadd.xlane.f32.xlu0 %v2986
    %v2988 = vpop.xlane.xlu0 %2987
    %v2989 = vsel %vm1984, %v2897, 0.0
    %2990 = vadd.xlane.f32.xlu0 %v2989
    %v2991 = vpop.xlane.xlu0 %2990
    %v2992 = vsel %vm1984, %v2898, 0.0
    %2993 = vadd.xlane.f32.xlu0 %v2992
    %v2994 = vpop.xlane.xlu0 %2993
    %v2995 = vsel %vm1984, %v2899, 0.0
    %2996 = vadd.xlane.f32.xlu0 %v2995
    %v2997 = vpop.xlane.xlu0 %2996
    %v2998 = vsel %vm1984, %v2900, 0.0
    %2999 = vadd.xlane.f32.xlu0 %v2998
    %v3000 = vpop.xlane.xlu0 %2999
    %v3001 = vsel %vm1984, %v2901, 0.0
    %3002 = vadd.xlane.f32.xlu0 %v3001
    %v3003 = vpop.xlane.xlu0 %3002
    %v3004 = vsel %vm1984, %v2902, 0.0
    %3005 = vadd.xlane.f32.xlu0 %v3004
    %v3006 = vpop.xlane.xlu0 %3005
    %v3007 = vsel %vm1984, %v2903, 0.0
    %3008 = vadd.xlane.f32.xlu0 %v3007
    %v3009 = vpop.xlane.xlu0 %3008
    %v3010 = vsel %vm1984, %v2904, 0.0
    %3011 = vadd.xlane.f32.xlu0 %v3010
    %v3012 = vpop.xlane.xlu0 %3011
    %v3013 = vsel %vm1984, %v2905, 0.0
    %3014 = vadd.xlane.f32.xlu0 %v3013
    %v3015 = vpop.xlane.xlu0 %3014
    %v3016 = vsel %vm1984, %v2906, 0.0
    %3017 = vadd.xlane.f32.xlu0 %v3016
    %v3018 = vpop.xlane.xlu0 %3017
    %v3019 = vsel %vm1984, %v2907, 0.0
    %3020 = vadd.xlane.f32.xlu0 %v3019
    %v3021 = vpop.xlane.xlu0 %3020
    %v3022 = vsel %vm1984, %v2908, 0.0
    %3023 = vadd.xlane.f32.xlu0 %v3022
    %v3024 = vpop.xlane.xlu0 %3023
    %v3025 = vsel %vm1984, %v2909, 0.0
    %3026 = vadd.xlane.f32.xlu0 %v3025
    %v3027 = vpop.xlane.xlu0 %3026
    %v3028 = vsel %vm1984, %v2910, 0.0
    %3029 = vadd.xlane.f32.xlu0 %v3028
    %v3030 = vpop.xlane.xlu0 %3029
    %v3031 = vsel %vm1984, %v2911, 0.0
    %3032 = vadd.xlane.f32.xlu0 %v3031
    %v3033 = vpop.xlane.xlu0 %3032
    %v3034 = vsel %vm1984, %v2912, 0.0
    %3035 = vadd.xlane.f32.xlu0 %v3034
    %v3036 = vpop.xlane.xlu0 %3035
    %v3037 = vsel %vm1984, %v2913, 0.0
    %3038 = vadd.xlane.f32.xlu0 %v3037
    %v3039 = vpop.xlane.xlu0 %3038
    %v3040 = vsel %vm1984, %v2914, 0.0
    %3041 = vadd.xlane.f32.xlu0 %v3040
    %v3042 = vpop.xlane.xlu0 %3041
    %v3043 = vsel %vm1984, %v2915, 0.0
    %3044 = vadd.xlane.f32.xlu0 %v3043
    %v3045 = vpop.xlane.xlu0 %3044
    %v3046 = vsel %vm1984, %v2916, 0.0
    %3047 = vadd.xlane.f32.xlu0 %v3046
    %v3048 = vpop.xlane.xlu0 %3047
    %v3049 = vsel %vm1984, %v2917, 0.0
    %3050 = vadd.xlane.f32.xlu0 %v3049
    %v3051 = vpop.xlane.xlu0 %3050
    %v3052 = vsel %vm1984, %v2918, 0.0
    %3053 = vadd.xlane.f32.xlu0 %v3052
    %v3054 = vpop.xlane.xlu0 %3053
    %v3055 = vsel %vm1984, %v2919, 0.0
    %3056 = vadd.xlane.f32.xlu0 %v3055
    %v3057 = vpop.xlane.xlu0 %3056
    %v3058 = vsel %vm1984, %v2920, 0.0
    %3059 = vadd.xlane.f32.xlu0 %v3058
    %v3060 = vpop.xlane.xlu0 %3059
    %v3061 = vsel %vm1984, %v2921, 0.0
    %3062 = vadd.xlane.f32.xlu0 %v3061
    %v3063 = vpop.xlane.xlu0 %3062
    %v3064 = vsel %vm1984, %v2922, 0.0
    %3065 = vadd.xlane.f32.xlu0 %v3064
    %v3066 = vpop.xlane.xlu0 %3065
    %v3067 = vsel %vm1984, %v2923, 0.0
    %3068 = vadd.xlane.f32.xlu0 %v3067
    %v3069 = vpop.xlane.xlu0 %3068
    %v3070 = vsel %vm1984, %v2924, 0.0
    %3071 = vadd.xlane.f32.xlu0 %v3070
    %v3072 = vpop.xlane.xlu0 %3071
    %v3073 = vsel %vm1984, %v2925, 0.0
    %3074 = vadd.xlane.f32.xlu0 %v3073
    %v3075 = vpop.xlane.xlu0 %3074
    %v3076 = vsel %vm1984, %v2926, 0.0
    %3077 = vadd.xlane.f32.xlu0 %v3076
    %v3078 = vpop.xlane.xlu0 %3077
    %v3079 = vsel %vm1984, %v2927, 0.0
    %3080 = vadd.xlane.f32.xlu0 %v3079
    %v3081 = vpop.xlane.xlu0 %3080
    %v3082 = vsel %vm1984, %v2928, 0.0
    %3083 = vadd.xlane.f32.xlu0 %v3082
    %v3084 = vpop.xlane.xlu0 %3083
    %v3085 = vsel %vm1984, %v2929, 0.0
    %3086 = vadd.xlane.f32.xlu0 %v3085
    %v3087 = vpop.xlane.xlu0 %3086
    %v3088 = vsel %vm1984, %v2930, 0.0
    %3089 = vadd.xlane.f32.xlu0 %v3088
    %v3090 = vpop.xlane.xlu0 %3089
    %v3091 = vsel %vm1984, %v2931, 0.0
    %3092 = vadd.xlane.f32.xlu0 %v3091
    %v3093 = vpop.xlane.xlu0 %3092
    %v3094 = vsel %vm1984, %v2932, 0.0
    %3095 = vadd.xlane.f32.xlu0 %v3094
    %v3096 = vpop.xlane.xlu0 %3095
    %v3097 = vsel %vm1984, %v2933, 0.0
    %3098 = vadd.xlane.f32.xlu0 %v3097
    %v3099 = vpop.xlane.xlu0 %3098
    %v3100 = vsel %vm1984, %v2934, 0.0
    %3101 = vadd.xlane.f32.xlu0 %v3100
    %v3102 = vpop.xlane.xlu0 %3101
    %v3103 = vsel %vm1984, %v2935, 0.0
    %3104 = vadd.xlane.f32.xlu0 %v3103
    %v3105 = vpop.xlane.xlu0 %3104
    %v3106 = vsel %vm1984, %v2936, 0.0
    %3107 = vadd.xlane.f32.xlu0 %v3106
    %v3108 = vpop.xlane.xlu0 %3107
    %v3109 = vsel %vm1984, %v2937, 0.0
    %3110 = vadd.xlane.f32.xlu0 %v3109
    %v3111 = vpop.xlane.xlu0 %3110
    %v3112 = vsel %vm1984, %v2938, 0.0
    %3113 = vadd.xlane.f32.xlu0 %v3112
    %v3114 = vpop.xlane.xlu0 %3113
    %v3115 = vsel %vm1984, %v2939, 0.0
    %3116 = vadd.xlane.f32.xlu0 %v3115
    %v3117 = vpop.xlane.xlu0 %3116
    %v3118 = vsel %vm1984, %v2940, 0.0
    %3119 = vadd.xlane.f32.xlu0 %v3118
    %v3120 = vpop.xlane.xlu0 %3119
    %v3121 = vsel %vm1984, %v2941, 0.0
    %3122 = vadd.xlane.f32.xlu0 %v3121
    %v3123 = vpop.xlane.xlu0 %3122
    %v3124 = vsel %vm1984, %v2942, 0.0
    %3125 = vadd.xlane.f32.xlu0 %v3124
    %v3126 = vpop.xlane.xlu0 %3125
    %v3127 = vsel %vm1984, %v2943, 0.0
    %3128 = vadd.xlane.f32.xlu0 %v3127
    %v3129 = vpop.xlane.xlu0 %3128
    %v3130 = vsel %vm1984, %v2944, 0.0
    %3131 = vadd.xlane.f32.xlu0 %v3130
    %v3132 = vpop.xlane.xlu0 %3131
    %v3133 = vsel %vm1984, %v2945, 0.0
    %3134 = vadd.xlane.f32.xlu0 %v3133
    %v3135 = vpop.xlane.xlu0 %3134
    %v3136 = vsel %vm1984, %v2946, 0.0
    %3137 = vadd.xlane.f32.xlu0 %v3136
    %v3138 = vpop.xlane.xlu0 %3137
    %v3139 = vmul.f32 %v2949, %v2754
    %v3140 = vmul.f32 %v2952, %v2754
    %v3141 = vmul.f32 %v2955, %v2754
    %v3142 = vmul.f32 %v2958, %v2754
    %v3143 = vmul.f32 %v2961, %v2754
    %v3144 = vmul.f32 %v2964, %v2754
    %v3145 = vmul.f32 %v2967, %v2754
    %v3146 = vmul.f32 %v2970, %v2754
    %v3147 = vmul.f32 %v2973, %v2754
    %v3148 = vmul.f32 %v2976, %v2754
    %v3149 = vmul.f32 %v2979, %v2754
    %v3150 = vmul.f32 %v2982, %v2754
    %v3151 = vmul.f32 %v2985, %v2754
    %v3152 = vmul.f32 %v2988, %v2754
    %v3153 = vmul.f32 %v2991, %v2754
    %v3154 = vmul.f32 %v2994, %v2754
    %v3155 = vmul.f32 %v2997, %v2754
    %v3156 = vmul.f32 %v3000, %v2754
    %v3157 = vmul.f32 %v3003, %v2754
    %v3158 = vmul.f32 %v3006, %v2754
    %v3159 = vmul.f32 %v3009, %v2754
    %v3160 = vmul.f32 %v3012, %v2754
    %v3161 = vmul.f32 %v3015, %v2754
    %v3162 = vmul.f32 %v3018, %v2754
    %v3163 = vmul.f32 %v3021, %v2754
    %v3164 = vmul.f32 %v3024, %v2754
    %v3165 = vmul.f32 %v3027, %v2754
    %v3166 = vmul.f32 %v3030, %v2754
    %v3167 = vmul.f32 %v3033, %v2754
    %v3168 = vmul.f32 %v3036, %v2754
    %v3169 = vmul.f32 %v3039, %v2754
    %v3170 = vmul.f32 %v3042, %v2754
    %v3171 = vmul.f32 %v3045, %v2754
    %v3172 = vmul.f32 %v3048, %v2754
    %v3173 = vmul.f32 %v3051, %v2754
    %v3174 = vmul.f32 %v3054, %v2754
    %v3175 = vmul.f32 %v3057, %v2754
    %v3176 = vmul.f32 %v3060, %v2754
    %v3177 = vmul.f32 %v3063, %v2754
    %v3178 = vmul.f32 %v3066, %v2754
    %v3179 = vmul.f32 %v3069, %v2754
    %v3180 = vmul.f32 %v3072, %v2754
    %v3181 = vmul.f32 %v3075, %v2754
    %v3182 = vmul.f32 %v3078, %v2754
    %v3183 = vmul.f32 %v3081, %v2754
    %v3184 = vmul.f32 %v3084, %v2754
    %v3185 = vmul.f32 %v3087, %v2754
    %v3186 = vmul.f32 %v3090, %v2754
    %v3187 = vmul.f32 %v3093, %v2754
    %v3188 = vmul.f32 %v3096, %v2754
    %v3189 = vmul.f32 %v3099, %v2754
    %v3190 = vmul.f32 %v3102, %v2754
    %v3191 = vmul.f32 %v3105, %v2754
    %v3192 = vmul.f32 %v3108, %v2754
    %v3193 = vmul.f32 %v3111, %v2754
    %v3194 = vmul.f32 %v3114, %v2754
    %v3195 = vmul.f32 %v3117, %v2754
    %v3196 = vmul.f32 %v3120, %v2754
    %v3197 = vmul.f32 %v3123, %v2754
    %v3198 = vmul.f32 %v3126, %v2754
    %v3199 = vmul.f32 %v3129, %v2754
    %v3200 = vmul.f32 %v3132, %v2754
    %v3201 = vmul.f32 %v3135, %v2754
    %v3202 = vmul.f32 %v3138, %v2754
    %v3203 = vadd.f32 %v3139, 1e-05
    %v3204 = vadd.f32 %v3140, 1e-05
    %v3205 = vadd.f32 %v3141, 1e-05
    %v3206 = vadd.f32 %v3142, 1e-05
    %v3207 = vadd.f32 %v3143, 1e-05
    %v3208 = vadd.f32 %v3144, 1e-05
    %v3209 = vadd.f32 %v3145, 1e-05
    %v3210 = vadd.f32 %v3146, 1e-05
    %v3211 = vadd.f32 %v3147, 1e-05
    %v3212 = vadd.f32 %v3148, 1e-05
    %v3213 = vadd.f32 %v3149, 1e-05
    %v3214 = vadd.f32 %v3150, 1e-05
    %v3215 = vadd.f32 %v3151, 1e-05
    %v3216 = vadd.f32 %v3152, 1e-05
    %v3217 = vadd.f32 %v3153, 1e-05
    %v3218 = vadd.f32 %v3154, 1e-05
    %v3219 = vadd.f32 %v3155, 1e-05
    %v3220 = vadd.f32 %v3156, 1e-05
    %v3221 = vadd.f32 %v3157, 1e-05
    %v3222 = vadd.f32 %v3158, 1e-05
    %v3223 = vadd.f32 %v3159, 1e-05
    %v3224 = vadd.f32 %v3160, 1e-05
    %v3225 = vadd.f32 %v3161, 1e-05
    %v3226 = vadd.f32 %v3162, 1e-05
    %v3227 = vadd.f32 %v3163, 1e-05
    %v3228 = vadd.f32 %v3164, 1e-05
    %v3229 = vadd.f32 %v3165, 1e-05
    %v3230 = vadd.f32 %v3166, 1e-05
    %v3231 = vadd.f32 %v3167, 1e-05
    %v3232 = vadd.f32 %v3168, 1e-05
    %v3233 = vadd.f32 %v3169, 1e-05
    %v3234 = vadd.f32 %v3170, 1e-05
    %v3235 = vadd.f32 %v3171, 1e-05
    %v3236 = vadd.f32 %v3172, 1e-05
    %v3237 = vadd.f32 %v3173, 1e-05
    %v3238 = vadd.f32 %v3174, 1e-05
    %v3239 = vadd.f32 %v3175, 1e-05
    %v3240 = vadd.f32 %v3176, 1e-05
    %v3241 = vadd.f32 %v3177, 1e-05
    %v3242 = vadd.f32 %v3178, 1e-05
    %v3243 = vadd.f32 %v3179, 1e-05
    %v3244 = vadd.f32 %v3180, 1e-05
    %v3245 = vadd.f32 %v3181, 1e-05
    %v3246 = vadd.f32 %v3182, 1e-05
    %v3247 = vadd.f32 %v3183, 1e-05
    %v3248 = vadd.f32 %v3184, 1e-05
    %v3249 = vadd.f32 %v3185, 1e-05
    %v3250 = vadd.f32 %v3186, 1e-05
    %v3251 = vadd.f32 %v3187, 1e-05
    %v3252 = vadd.f32 %v3188, 1e-05
    %v3253 = vadd.f32 %v3189, 1e-05
    %v3254 = vadd.f32 %v3190, 1e-05
    %v3255 = vadd.f32 %v3191, 1e-05
    %v3256 = vadd.f32 %v3192, 1e-05
    %v3257 = vadd.f32 %v3193, 1e-05
    %v3258 = vadd.f32 %v3194, 1e-05
    %v3259 = vadd.f32 %v3195, 1e-05
    %v3260 = vadd.f32 %v3196, 1e-05
    %v3261 = vadd.f32 %v3197, 1e-05
    %v3262 = vadd.f32 %v3198, 1e-05
    %v3263 = vadd.f32 %v3199, 1e-05
    %v3264 = vadd.f32 %v3200, 1e-05
    %v3265 = vadd.f32 %v3201, 1e-05
    %v3266 = vadd.f32 %v3202, 1e-05
    %v3267 = vrsqrt.pop %v3203
    %v3268 = vrsqrt.pop %v3204
    %v3269 = vrsqrt.pop %v3205
    %v3270 = vrsqrt.pop %v3206
    %v3271 = vrsqrt.pop %v3207
    %v3272 = vrsqrt.pop %v3208
    %v3273 = vrsqrt.pop %v3209
    %v3274 = vrsqrt.pop %v3210
    %v3275 = vrsqrt.pop %v3211
    %v3276 = vrsqrt.pop %v3212
    %v3277 = vrsqrt.pop %v3213
    %v3278 = vrsqrt.pop %v3214
    %v3279 = vrsqrt.pop %v3215
    %v3280 = vrsqrt.pop %v3216
    %v3281 = vrsqrt.pop %v3217
    %v3282 = vrsqrt.pop %v3218
    %v3283 = vrsqrt.pop %v3219
    %v3284 = vrsqrt.pop %v3220
    %v3285 = vrsqrt.pop %v3221
    %v3286 = vrsqrt.pop %v3222
    %v3287 = vrsqrt.pop %v3223
    %v3288 = vrsqrt.pop %v3224
    %v3289 = vrsqrt.pop %v3225
    %v3290 = vrsqrt.pop %v3226
    %v3291 = vrsqrt.pop %v3227
    %v3292 = vrsqrt.pop %v3228
    %v3293 = vrsqrt.pop %v3229
    %v3294 = vrsqrt.pop %v3230
    %v3295 = vrsqrt.pop %v3231
    %v3296 = vrsqrt.pop %v3232
    %v3297 = vrsqrt.pop %v3233
    %v3298 = vrsqrt.pop %v3234
    %v3299 = vrsqrt.pop %v3235
    %v3300 = vrsqrt.pop %v3236
    %v3301 = vrsqrt.pop %v3237
    %v3302 = vrsqrt.pop %v3238
    %v3303 = vrsqrt.pop %v3239
    %v3304 = vrsqrt.pop %v3240
    %v3305 = vrsqrt.pop %v3241
    %v3306 = vrsqrt.pop %v3242
    %v3307 = vrsqrt.pop %v3243
    %v3308 = vrsqrt.pop %v3244
    %v3309 = vrsqrt.pop %v3245
    %v3310 = vrsqrt.pop %v3246
    %v3311 = vrsqrt.pop %v3247
    %v3312 = vrsqrt.pop %v3248
    %v3313 = vrsqrt.pop %v3249
    %v3314 = vrsqrt.pop %v3250
    %v3315 = vrsqrt.pop %v3251
    %v3316 = vrsqrt.pop %v3252
    %v3317 = vrsqrt.pop %v3253
    %v3318 = vrsqrt.pop %v3254
    %v3319 = vrsqrt.pop %v3255
    %v3320 = vrsqrt.pop %v3256
    %v3321 = vrsqrt.pop %v3257
    %v3322 = vrsqrt.pop %v3258
    %v3323 = vrsqrt.pop %v3259
    %v3324 = vrsqrt.pop %v3260
    %v3325 = vrsqrt.pop %v3261
    %v3326 = vrsqrt.pop %v3262
    %v3327 = vrsqrt.pop %v3263
    %v3328 = vrsqrt.pop %v3264
    %v3329 = vrsqrt.pop %v3265
    %v3330 = vrsqrt.pop %v3266
    %v3331 = vmul.f32 %v2819, %v3267
    %v3332 = vmul.f32 %v2820, %v3268
    %v3333 = vmul.f32 %v2821, %v3269
    %v3334 = vmul.f32 %v2822, %v3270
    %v3335 = vmul.f32 %v2823, %v3271
    %v3336 = vmul.f32 %v2824, %v3272
    %v3337 = vmul.f32 %v2825, %v3273
    %v3338 = vmul.f32 %v2826, %v3274
    %v3339 = vmul.f32 %v2827, %v3275
    %v3340 = vmul.f32 %v2828, %v3276
    %v3341 = vmul.f32 %v2829, %v3277
    %v3342 = vmul.f32 %v2830, %v3278
    %v3343 = vmul.f32 %v2831, %v3279
    %v3344 = vmul.f32 %v2832, %v3280
    %v3345 = vmul.f32 %v2833, %v3281
    %v3346 = vmul.f32 %v2834, %v3282
    %v3347 = vmul.f32 %v2835, %v3283
    %v3348 = vmul.f32 %v2836, %v3284
    %v3349 = vmul.f32 %v2837, %v3285
    %v3350 = vmul.f32 %v2838, %v3286
    %v3351 = vmul.f32 %v2839, %v3287
    %v3352 = vmul.f32 %v2840, %v3288
    %v3353 = vmul.f32 %v2841, %v3289
    %v3354 = vmul.f32 %v2842, %v3290
    %v3355 = vmul.f32 %v2843, %v3291
    %v3356 = vmul.f32 %v2844, %v3292
    %v3357 = vmul.f32 %v2845, %v3293
    %v3358 = vmul.f32 %v2846, %v3294
    %v3359 = vmul.f32 %v2847, %v3295
    %v3360 = vmul.f32 %v2848, %v3296
    %v3361 = vmul.f32 %v2849, %v3297
    %v3362 = vmul.f32 %v2850, %v3298
    %v3363 = vmul.f32 %v2851, %v3299
    %v3364 = vmul.f32 %v2852, %v3300
    %v3365 = vmul.f32 %v2853, %v3301
    %v3366 = vmul.f32 %v2854, %v3302
    %v3367 = vmul.f32 %v2855, %v3303
    %v3368 = vmul.f32 %v2856, %v3304
    %v3369 = vmul.f32 %v2857, %v3305
    %v3370 = vmul.f32 %v2858, %v3306
    %v3371 = vmul.f32 %v2859, %v3307
    %v3372 = vmul.f32 %v2860, %v3308
    %v3373 = vmul.f32 %v2861, %v3309
    %v3374 = vmul.f32 %v2862, %v3310
    %v3375 = vmul.f32 %v2863, %v3311
    %v3376 = vmul.f32 %v2864, %v3312
    %v3377 = vmul.f32 %v2865, %v3313
    %v3378 = vmul.f32 %v2866, %v3314
    %v3379 = vmul.f32 %v2867, %v3315
    %v3380 = vmul.f32 %v2868, %v3316
    %v3381 = vmul.f32 %v2869, %v3317
    %v3382 = vmul.f32 %v2870, %v3318
    %v3383 = vmul.f32 %v2871, %v3319
    %v3384 = vmul.f32 %v2872, %v3320
    %v3385 = vmul.f32 %v2873, %v3321
    %v3386 = vmul.f32 %v2874, %v3322
    %v3387 = vmul.f32 %v2875, %v3323
    %v3388 = vmul.f32 %v2876, %v3324
    %v3389 = vmul.f32 %v2877, %v3325
    %v3390 = vmul.f32 %v2878, %v3326
    %v3391 = vmul.f32 %v2879, %v3327
    %v3392 = vmul.f32 %v2880, %v3328
    %v3393 = vmul.f32 %v2881, %v3329
    %v3394 = vmul.f32 %v2882, %v3330
    %v3395 = vld [vmem:[%s8] sm:$0x1]
    %v3397 = vlaneseq
    %v3398 = vshrl.u32 %v3397, 7
    %v3399 = vsub.s32 0, %v3398
    %v3400 = vrot.slane %v3395, %v3399
    %v3402 = vmul.f32 %v3331, %v3400
    %v3403 = vmul.f32 %v3332, %v3400
    %v3404 = vmul.f32 %v3333, %v3400
    %v3405 = vmul.f32 %v3334, %v3400
    %v3406 = vmul.f32 %v3335, %v3400
    %v3407 = vmul.f32 %v3336, %v3400
    %v3408 = vmul.f32 %v3337, %v3400
    %v3409 = vmul.f32 %v3338, %v3400
    %v3410 = vmul.f32 %v3339, %v3400
    %v3411 = vmul.f32 %v3340, %v3400
    %v3412 = vmul.f32 %v3341, %v3400
    %v3413 = vmul.f32 %v3342, %v3400
    %v3414 = vmul.f32 %v3343, %v3400
    %v3415 = vmul.f32 %v3344, %v3400
    %v3416 = vmul.f32 %v3345, %v3400
    %v3417 = vmul.f32 %v3346, %v3400
    %v3418 = vmul.f32 %v3347, %v3400
    %v3419 = vmul.f32 %v3348, %v3400
    %v3420 = vmul.f32 %v3349, %v3400
    %v3421 = vmul.f32 %v3350, %v3400
    %v3422 = vmul.f32 %v3351, %v3400
    %v3423 = vmul.f32 %v3352, %v3400
    %v3424 = vmul.f32 %v3353, %v3400
    %v3425 = vmul.f32 %v3354, %v3400
    %v3426 = vmul.f32 %v3355, %v3400
    %v3427 = vmul.f32 %v3356, %v3400
    %v3428 = vmul.f32 %v3357, %v3400
    %v3429 = vmul.f32 %v3358, %v3400
    %v3430 = vmul.f32 %v3359, %v3400
    %v3431 = vmul.f32 %v3360, %v3400
    %v3432 = vmul.f32 %v3361, %v3400
    %v3433 = vmul.f32 %v3362, %v3400
    %v3434 = vmul.f32 %v3363, %v3400
    %v3435 = vmul.f32 %v3364, %v3400
    %v3436 = vmul.f32 %v3365, %v3400
    %v3437 = vmul.f32 %v3366, %v3400
    %v3438 = vmul.f32 %v3367, %v3400
    %v3439 = vmul.f32 %v3368, %v3400
    %v3440 = vmul.f32 %v3369, %v3400
    %v3441 = vmul.f32 %v3370, %v3400
    %v3442 = vmul.f32 %v3371, %v3400
    %v3443 = vmul.f32 %v3372, %v3400
    %v3444 = vmul.f32 %v3373, %v3400
    %v3445 = vmul.f32 %v3374, %v3400
    %v3446 = vmul.f32 %v3375, %v3400
    %v3447 = vmul.f32 %v3376, %v3400
    %v3448 = vmul.f32 %v3377, %v3400
    %v3449 = vmul.f32 %v3378, %v3400
    %v3450 = vmul.f32 %v3379, %v3400
    %v3451 = vmul.f32 %v3380, %v3400
    %v3452 = vmul.f32 %v3381, %v3400
    %v3453 = vmul.f32 %v3382, %v3400
    %v3454 = vmul.f32 %v3383, %v3400
    %v3455 = vmul.f32 %v3384, %v3400
    %v3456 = vmul.f32 %v3385, %v3400
    %v3457 = vmul.f32 %v3386, %v3400
    %v3458 = vmul.f32 %v3387, %v3400
    %v3459 = vmul.f32 %v3388, %v3400
    %v3460 = vmul.f32 %v3389, %v3400
    %v3461 = vmul.f32 %v3390, %v3400
    %v3462 = vmul.f32 %v3391, %v3400
    %v3463 = vmul.f32 %v3392, %v3400
    %v3464 = vmul.f32 %v3393, %v3400
    %v3465 = vmul.f32 %v3394, %v3400
    %v3466 = vld [vmem:[%s9] sm:$0x1]
    %v3468 = vlaneseq
    %v3469 = vshrl.u32 %v3468, 7
    %v3470 = vsub.s32 0, %v3469
    %v3471 = vrot.slane %v3466, %v3470
    %v3473 = vadd.f32 %v3402, %v3471
    %v3474 = vadd.f32 %v3403, %v3471
    %v3475 = vadd.f32 %v3404, %v3471
    %v3476 = vadd.f32 %v3405, %v3471
    %v3477 = vadd.f32 %v3406, %v3471
    %v3478 = vadd.f32 %v3407, %v3471
    %v3479 = vadd.f32 %v3408, %v3471
    %v3480 = vadd.f32 %v3409, %v3471
    %v3481 = vadd.f32 %v3410, %v3471
    %v3482 = vadd.f32 %v3411, %v3471
    %v3483 = vadd.f32 %v3412, %v3471
    %v3484 = vadd.f32 %v3413, %v3471
    %v3485 = vadd.f32 %v3414, %v3471
    %v3486 = vadd.f32 %v3415, %v3471
    %v3487 = vadd.f32 %v3416, %v3471
    %v3488 = vadd.f32 %v3417, %v3471
    %v3489 = vadd.f32 %v3418, %v3471
    %v3490 = vadd.f32 %v3419, %v3471
    %v3491 = vadd.f32 %v3420, %v3471
    %v3492 = vadd.f32 %v3421, %v3471
    %v3493 = vadd.f32 %v3422, %v3471
    %v3494 = vadd.f32 %v3423, %v3471
    %v3495 = vadd.f32 %v3424, %v3471
    %v3496 = vadd.f32 %v3425, %v3471
    %v3497 = vadd.f32 %v3426, %v3471
    %v3498 = vadd.f32 %v3427, %v3471
    %v3499 = vadd.f32 %v3428, %v3471
    %v3500 = vadd.f32 %v3429, %v3471
    %v3501 = vadd.f32 %v3430, %v3471
    %v3502 = vadd.f32 %v3431, %v3471
    %v3503 = vadd.f32 %v3432, %v3471
    %v3504 = vadd.f32 %v3433, %v3471
    %v3505 = vadd.f32 %v3434, %v3471
    %v3506 = vadd.f32 %v3435, %v3471
    %v3507 = vadd.f32 %v3436, %v3471
    %v3508 = vadd.f32 %v3437, %v3471
    %v3509 = vadd.f32 %v3438, %v3471
    %v3510 = vadd.f32 %v3439, %v3471
    %v3511 = vadd.f32 %v3440, %v3471
    %v3512 = vadd.f32 %v3441, %v3471
    %v3513 = vadd.f32 %v3442, %v3471
    %v3514 = vadd.f32 %v3443, %v3471
    %v3515 = vadd.f32 %v3444, %v3471
    %v3516 = vadd.f32 %v3445, %v3471
    %v3517 = vadd.f32 %v3446, %v3471
    %v3518 = vadd.f32 %v3447, %v3471
    %v3519 = vadd.f32 %v3448, %v3471
    %v3520 = vadd.f32 %v3449, %v3471
    %v3521 = vadd.f32 %v3450, %v3471
    %v3522 = vadd.f32 %v3451, %v3471
    %v3523 = vadd.f32 %v3452, %v3471
    %v3524 = vadd.f32 %v3453, %v3471
    %v3525 = vadd.f32 %v3454, %v3471
    %v3526 = vadd.f32 %v3455, %v3471
    %v3527 = vadd.f32 %v3456, %v3471
    %v3528 = vadd.f32 %v3457, %v3471
    %v3529 = vadd.f32 %v3458, %v3471
    %v3530 = vadd.f32 %v3459, %v3471
    %v3531 = vadd.f32 %v3460, %v3471
    %v3532 = vadd.f32 %v3461, %v3471
    %v3533 = vadd.f32 %v3462, %v3471
    %v3534 = vadd.f32 %v3463, %v3471
    %v3535 = vadd.f32 %v3464, %v3471
    %v3536 = vadd.f32 %v3465, %v3471
    %v3537 = vxor.u32 %v3473, 2147483648
    %v3538 = vxor.u32 %v3474, 2147483648
    %v3539 = vxor.u32 %v3475, 2147483648
    %v3540 = vxor.u32 %v3476, 2147483648
    %v3541 = vxor.u32 %v3477, 2147483648
    %v3542 = vxor.u32 %v3478, 2147483648
    %v3543 = vxor.u32 %v3479, 2147483648
    %v3544 = vxor.u32 %v3480, 2147483648
    %v3545 = vxor.u32 %v3481, 2147483648
    %v3546 = vxor.u32 %v3482, 2147483648
    %v3547 = vxor.u32 %v3483, 2147483648
    %v3548 = vxor.u32 %v3484, 2147483648
    %v3549 = vxor.u32 %v3485, 2147483648
    %v3550 = vxor.u32 %v3486, 2147483648
    %v3551 = vxor.u32 %v3487, 2147483648
    %v3552 = vxor.u32 %v3488, 2147483648
    %v3553 = vxor.u32 %v3489, 2147483648
    %v3554 = vxor.u32 %v3490, 2147483648
    %v3555 = vxor.u32 %v3491, 2147483648
    %v3556 = vxor.u32 %v3492, 2147483648
    %v3557 = vxor.u32 %v3493, 2147483648
    %v3558 = vxor.u32 %v3494, 2147483648
    %v3559 = vxor.u32 %v3495, 2147483648
    %v3560 = vxor.u32 %v3496, 2147483648
    %v3561 = vxor.u32 %v3497, 2147483648
    %v3562 = vxor.u32 %v3498, 2147483648
    %v3563 = vxor.u32 %v3499, 2147483648
    %v3564 = vxor.u32 %v3500, 2147483648
    %v3565 = vxor.u32 %v3501, 2147483648
    %v3566 = vxor.u32 %v3502, 2147483648
    %v3567 = vxor.u32 %v3503, 2147483648
    %v3568 = vxor.u32 %v3504, 2147483648
    %v3569 = vxor.u32 %v3505, 2147483648
    %v3570 = vxor.u32 %v3506, 2147483648
    %v3571 = vxor.u32 %v3507, 2147483648
    %v3572 = vxor.u32 %v3508, 2147483648
    %v3573 = vxor.u32 %v3509, 2147483648
    %v3574 = vxor.u32 %v3510, 2147483648
    %v3575 = vxor.u32 %v3511, 2147483648
    %v3576 = vxor.u32 %v3512, 2147483648
    %v3577 = vxor.u32 %v3513, 2147483648
    %v3578 = vxor.u32 %v3514, 2147483648
    %v3579 = vxor.u32 %v3515, 2147483648
    %v3580 = vxor.u32 %v3516, 2147483648
    %v3581 = vxor.u32 %v3517, 2147483648
    %v3582 = vxor.u32 %v3518, 2147483648
    %v3583 = vxor.u32 %v3519, 2147483648
    %v3584 = vxor.u32 %v3520, 2147483648
    %v3585 = vxor.u32 %v3521, 2147483648
    %v3586 = vxor.u32 %v3522, 2147483648
    %v3587 = vxor.u32 %v3523, 2147483648
    %v3588 = vxor.u32 %v3524, 2147483648
    %v3589 = vxor.u32 %v3525, 2147483648
    %v3590 = vxor.u32 %v3526, 2147483648
    %v3591 = vxor.u32 %v3527, 2147483648
    %v3592 = vxor.u32 %v3528, 2147483648
    %v3593 = vxor.u32 %v3529, 2147483648
    %v3594 = vxor.u32 %v3530, 2147483648
    %v3595 = vxor.u32 %v3531, 2147483648
    %v3596 = vxor.u32 %v3532, 2147483648
    %v3597 = vxor.u32 %v3533, 2147483648
    %v3598 = vxor.u32 %v3534, 2147483648
    %v3599 = vxor.u32 %v3535, 2147483648
    %v3600 = vxor.u32 %v3536, 2147483648
    %v3601 = vmul.f32 %v3537, 1.442695
    %v3602 = vpow.pop %v3601
    %v3603 = vmul.f32 %v3538, 1.442695
    %v3604 = vpow.pop %v3603
    %v3605 = vmul.f32 %v3539, 1.442695
    %v3606 = vpow.pop %v3605
    %v3607 = vmul.f32 %v3540, 1.442695
    %v3608 = vpow.pop %v3607
    %v3609 = vmul.f32 %v3541, 1.442695
    %v3610 = vpow.pop %v3609
    %v3611 = vmul.f32 %v3542, 1.442695
    %v3612 = vpow.pop %v3611
    %v3613 = vmul.f32 %v3543, 1.442695
    %v3614 = vpow.pop %v3613
    %v3615 = vmul.f32 %v3544, 1.442695
    %v3616 = vpow.pop %v3615
    %v3617 = vmul.f32 %v3545, 1.442695
    %v3618 = vpow.pop %v3617
    %v3619 = vmul.f32 %v3546, 1.442695
    %v3620 = vpow.pop %v3619
    %v3621 = vmul.f32 %v3547, 1.442695
    %v3622 = vpow.pop %v3621
    %v3623 = vmul.f32 %v3548, 1.442695
    %v3624 = vpow.pop %v3623
    %v3625 = vmul.f32 %v3549, 1.442695
    %v3626 = vpow.pop %v3625
    %v3627 = vmul.f32 %v3550, 1.442695
    %v3628 = vpow.pop %v3627
    %v3629 = vmul.f32 %v3551, 1.442695
    %v3630 = vpow.pop %v3629
    %v3631 = vmul.f32 %v3552, 1.442695
    %v3632 = vpow.pop %v3631
    %v3633 = vmul.f32 %v3553, 1.442695
    %v3634 = vpow.pop %v3633
    %v3635 = vmul.f32 %v3554, 1.442695
    %v3636 = vpow.pop %v3635
    %v3637 = vmul.f32 %v3555, 1.442695
    %v3638 = vpow.pop %v3637
    %v3639 = vmul.f32 %v3556, 1.442695
    %v3640 = vpow.pop %v3639
    %v3641 = vmul.f32 %v3557, 1.442695
    %v3642 = vpow.pop %v3641
    %v3643 = vmul.f32 %v3558, 1.442695
    %v3644 = vpow.pop %v3643
    %v3645 = vmul.f32 %v3559, 1.442695
    %v3646 = vpow.pop %v3645
    %v3647 = vmul.f32 %v3560, 1.442695
    %v3648 = vpow.pop %v3647
    %v3649 = vmul.f32 %v3561, 1.442695
    %v3650 = vpow.pop %v3649
    %v3651 = vmul.f32 %v3562, 1.442695
    %v3652 = vpow.pop %v3651
    %v3653 = vmul.f32 %v3563, 1.442695
    %v3654 = vpow.pop %v3653
    %v3655 = vmul.f32 %v3564, 1.442695
    %v3656 = vpow.pop %v3655
    %v3657 = vmul.f32 %v3565, 1.442695
    %v3658 = vpow.pop %v3657
    %v3659 = vmul.f32 %v3566, 1.442695
    %v3660 = vpow.pop %v3659
    %v3661 = vmul.f32 %v3567, 1.442695
    %v3662 = vpow.pop %v3661
    %v3663 = vmul.f32 %v3568, 1.442695
    %v3664 = vpow.pop %v3663
    %v3665 = vmul.f32 %v3569, 1.442695
    %v3666 = vpow.pop %v3665
    %v3667 = vmul.f32 %v3570, 1.442695
    %v3668 = vpow.pop %v3667
    %v3669 = vmul.f32 %v3571, 1.442695
    %v3670 = vpow.pop %v3669
    %v3671 = vmul.f32 %v3572, 1.442695
    %v3672 = vpow.pop %v3671
    %v3673 = vmul.f32 %v3573, 1.442695
    %v3674 = vpow.pop %v3673
    %v3675 = vmul.f32 %v3574, 1.442695
    %v3676 = vpow.pop %v3675
    %v3677 = vmul.f32 %v3575, 1.442695
    %v3678 = vpow.pop %v3677
    %v3679 = vmul.f32 %v3576, 1.442695
    %v3680 = vpow.pop %v3679
    %v3681 = vmul.f32 %v3577, 1.442695
    %v3682 = vpow.pop %v3681
    %v3683 = vmul.f32 %v3578, 1.442695
    %v3684 = vpow.pop %v3683
    %v3685 = vmul.f32 %v3579, 1.442695
    %v3686 = vpow.pop %v3685
    %v3687 = vmul.f32 %v3580, 1.442695
    %v3688 = vpow.pop %v3687
    %v3689 = vmul.f32 %v3581, 1.442695
    %v3690 = vpow.pop %v3689
    %v3691 = vmul.f32 %v3582, 1.442695
    %v3692 = vpow.pop %v3691
    %v3693 = vmul.f32 %v3583, 1.442695
    %v3694 = vpow.pop %v3693
    %v3695 = vmul.f32 %v3584, 1.442695
    %v3696 = vpow.pop %v3695
    %v3697 = vmul.f32 %v3585, 1.442695
    %v3698 = vpow.pop %v3697
    %v3699 = vmul.f32 %v3586, 1.442695
    %v3700 = vpow.pop %v3699
    %v3701 = vmul.f32 %v3587, 1.442695
    %v3702 = vpow.pop %v3701
    %v3703 = vmul.f32 %v3588, 1.442695
    %v3704 = vpow.pop %v3703
    %v3705 = vmul.f32 %v3589, 1.442695
    %v3706 = vpow.pop %v3705
    %v3707 = vmul.f32 %v3590, 1.442695
    %v3708 = vpow.pop %v3707
    %v3709 = vmul.f32 %v3591, 1.442695
    %v3710 = vpow.pop %v3709
    %v3711 = vmul.f32 %v3592, 1.442695
    %v3712 = vpow.pop %v3711
    %v3713 = vmul.f32 %v3593, 1.442695
    %v3714 = vpow.pop %v3713
    %v3715 = vmul.f32 %v3594, 1.442695
    %v3716 = vpow.pop %v3715
    %v3717 = vmul.f32 %v3595, 1.442695
    %v3718 = vpow.pop %v3717
    %v3719 = vmul.f32 %v3596, 1.442695
    %v3720 = vpow.pop %v3719
    %v3721 = vmul.f32 %v3597, 1.442695
    %v3722 = vpow.pop %v3721
    %v3723 = vmul.f32 %v3598, 1.442695
    %v3724 = vpow.pop %v3723
    %v3725 = vmul.f32 %v3599, 1.442695
    %v3726 = vpow.pop %v3725
    %v3727 = vmul.f32 %v3600, 1.442695
    %v3728 = vpow.pop %v3727
    %v3729 = vadd.f32 %v3602, 1.0
    %v3730 = vadd.f32 %v3604, 1.0
    %v3731 = vadd.f32 %v3606, 1.0
    %v3732 = vadd.f32 %v3608, 1.0
    %v3733 = vadd.f32 %v3610, 1.0
    %v3734 = vadd.f32 %v3612, 1.0
    %v3735 = vadd.f32 %v3614, 1.0
    %v3736 = vadd.f32 %v3616, 1.0
    %v3737 = vadd.f32 %v3618, 1.0
    %v3738 = vadd.f32 %v3620, 1.0
    %v3739 = vadd.f32 %v3622, 1.0
    %v3740 = vadd.f32 %v3624, 1.0
    %v3741 = vadd.f32 %v3626, 1.0
    %v3742 = vadd.f32 %v3628, 1.0
    %v3743 = vadd.f32 %v3630, 1.0
    %v3744 = vadd.f32 %v3632, 1.0
    %v3745 = vadd.f32 %v3634, 1.0
    %v3746 = vadd.f32 %v3636, 1.0
    %v3747 = vadd.f32 %v3638, 1.0
    %v3748 = vadd.f32 %v3640, 1.0
    %v3749 = vadd.f32 %v3642, 1.0
    %v3750 = vadd.f32 %v3644, 1.0
    %v3751 = vadd.f32 %v3646, 1.0
    %v3752 = vadd.f32 %v3648, 1.0
    %v3753 = vadd.f32 %v3650, 1.0
    %v3754 = vadd.f32 %v3652, 1.0
    %v3755 = vadd.f32 %v3654, 1.0
    %v3756 = vadd.f32 %v3656, 1.0
    %v3757 = vadd.f32 %v3658, 1.0
    %v3758 = vadd.f32 %v3660, 1.0
    %v3759 = vadd.f32 %v3662, 1.0
    %v3760 = vadd.f32 %v3664, 1.0
    %v3761 = vadd.f32 %v3666, 1.0
    %v3762 = vadd.f32 %v3668, 1.0
    %v3763 = vadd.f32 %v3670, 1.0
    %v3764 = vadd.f32 %v3672, 1.0
    %v3765 = vadd.f32 %v3674, 1.0
    %v3766 = vadd.f32 %v3676, 1.0
    %v3767 = vadd.f32 %v3678, 1.0
    %v3768 = vadd.f32 %v3680, 1.0
    %v3769 = vadd.f32 %v3682, 1.0
    %v3770 = vadd.f32 %v3684, 1.0
    %v3771 = vadd.f32 %v3686, 1.0
    %v3772 = vadd.f32 %v3688, 1.0
    %v3773 = vadd.f32 %v3690, 1.0
    %v3774 = vadd.f32 %v3692, 1.0
    %v3775 = vadd.f32 %v3694, 1.0
    %v3776 = vadd.f32 %v3696, 1.0
    %v3777 = vadd.f32 %v3698, 1.0
    %v3778 = vadd.f32 %v3700, 1.0
    %v3779 = vadd.f32 %v3702, 1.0
    %v3780 = vadd.f32 %v3704, 1.0
    %v3781 = vadd.f32 %v3706, 1.0
    %v3782 = vadd.f32 %v3708, 1.0
    %v3783 = vadd.f32 %v3710, 1.0
    %v3784 = vadd.f32 %v3712, 1.0
    %v3785 = vadd.f32 %v3714, 1.0
    %v3786 = vadd.f32 %v3716, 1.0
    %v3787 = vadd.f32 %v3718, 1.0
    %v3788 = vadd.f32 %v3720, 1.0
    %v3789 = vadd.f32 %v3722, 1.0
    %v3790 = vadd.f32 %v3724, 1.0
    %v3791 = vadd.f32 %v3726, 1.0
    %v3792 = vadd.f32 %v3728, 1.0
    %v3793 = vrcp.pop %v3729
    %v3794 = vmul.f32 1.0, %v3793
    %v3795 = vrcp.pop %v3730
    %v3796 = vmul.f32 1.0, %v3795
    %v3797 = vrcp.pop %v3731
    %v3798 = vmul.f32 1.0, %v3797
    %v3799 = vrcp.pop %v3732
    %v3800 = vmul.f32 1.0, %v3799
    %v3801 = vrcp.pop %v3733
    %v3802 = vmul.f32 1.0, %v3801
    %v3803 = vrcp.pop %v3734
    %v3804 = vmul.f32 1.0, %v3803
    %v3805 = vrcp.pop %v3735
    %v3806 = vmul.f32 1.0, %v3805
    %v3807 = vrcp.pop %v3736
    %v3808 = vmul.f32 1.0, %v3807
    %v3809 = vrcp.pop %v3737
    %v3810 = vmul.f32 1.0, %v3809
    %v3811 = vrcp.pop %v3738
    %v3812 = vmul.f32 1.0, %v3811
    %v3813 = vrcp.pop %v3739
    %v3814 = vmul.f32 1.0, %v3813
    %v3815 = vrcp.pop %v3740
    %v3816 = vmul.f32 1.0, %v3815
    %v3817 = vrcp.pop %v3741
    %v3818 = vmul.f32 1.0, %v3817
    %v3819 = vrcp.pop %v3742
    %v3820 = vmul.f32 1.0, %v3819
    %v3821 = vrcp.pop %v3743
    %v3822 = vmul.f32 1.0, %v3821
    %v3823 = vrcp.pop %v3744
    %v3824 = vmul.f32 1.0, %v3823
    %v3825 = vrcp.pop %v3745
    %v3826 = vmul.f32 1.0, %v3825
    %v3827 = vrcp.pop %v3746
    %v3828 = vmul.f32 1.0, %v3827
    %v3829 = vrcp.pop %v3747
    %v3830 = vmul.f32 1.0, %v3829
    %v3831 = vrcp.pop %v3748
    %v3832 = vmul.f32 1.0, %v3831
    %v3833 = vrcp.pop %v3749
    %v3834 = vmul.f32 1.0, %v3833
    %v3835 = vrcp.pop %v3750
    %v3836 = vmul.f32 1.0, %v3835
    %v3837 = vrcp.pop %v3751
    %v3838 = vmul.f32 1.0, %v3837
    %v3839 = vrcp.pop %v3752
    %v3840 = vmul.f32 1.0, %v3839
    %v3841 = vrcp.pop %v3753
    %v3842 = vmul.f32 1.0, %v3841
    %v3843 = vrcp.pop %v3754
    %v3844 = vmul.f32 1.0, %v3843
    %v3845 = vrcp.pop %v3755
    %v3846 = vmul.f32 1.0, %v3845
    %v3847 = vrcp.pop %v3756
    %v3848 = vmul.f32 1.0, %v3847
    %v3849 = vrcp.pop %v3757
    %v3850 = vmul.f32 1.0, %v3849
    %v3851 = vrcp.pop %v3758
    %v3852 = vmul.f32 1.0, %v3851
    %v3853 = vrcp.pop %v3759
    %v3854 = vmul.f32 1.0, %v3853
    %v3855 = vrcp.pop %v3760
    %v3856 = vmul.f32 1.0, %v3855
    %v3857 = vrcp.pop %v3761
    %v3858 = vmul.f32 1.0, %v3857
    %v3859 = vrcp.pop %v3762
    %v3860 = vmul.f32 1.0, %v3859
    %v3861 = vrcp.pop %v3763
    %v3862 = vmul.f32 1.0, %v3861
    %v3863 = vrcp.pop %v3764
    %v3864 = vmul.f32 1.0, %v3863
    %v3865 = vrcp.pop %v3765
    %v3866 = vmul.f32 1.0, %v3865
    %v3867 = vrcp.pop %v3766
    %v3868 = vmul.f32 1.0, %v3867
    %v3869 = vrcp.pop %v3767
    %v3870 = vmul.f32 1.0, %v3869
    %v3871 = vrcp.pop %v3768
    %v3872 = vmul.f32 1.0, %v3871
    %v3873 = vrcp.pop %v3769
    %v3874 = vmul.f32 1.0, %v3873
    %v3875 = vrcp.pop %v3770
    %v3876 = vmul.f32 1.0, %v3875
    %v3877 = vrcp.pop %v3771
    %v3878 = vmul.f32 1.0, %v3877
    %v3879 = vrcp.pop %v3772
    %v3880 = vmul.f32 1.0, %v3879
    %v3881 = vrcp.pop %v3773
    %v3882 = vmul.f32 1.0, %v3881
    %v3883 = vrcp.pop %v3774
    %v3884 = vmul.f32 1.0, %v3883
    %v3885 = vrcp.pop %v3775
    %v3886 = vmul.f32 1.0, %v3885
    %v3887 = vrcp.pop %v3776
    %v3888 = vmul.f32 1.0, %v3887
    %v3889 = vrcp.pop %v3777
    %v3890 = vmul.f32 1.0, %v3889
    %v3891 = vrcp.pop %v3778
    %v3892 = vmul.f32 1.0, %v3891
    %v3893 = vrcp.pop %v3779
    %v3894 = vmul.f32 1.0, %v3893
    %v3895 = vrcp.pop %v3780
    %v3896 = vmul.f32 1.0, %v3895
    %v3897 = vrcp.pop %v3781
    %v3898 = vmul.f32 1.0, %v3897
    %v3899 = vrcp.pop %v3782
    %v3900 = vmul.f32 1.0, %v3899
    %v3901 = vrcp.pop %v3783
    %v3902 = vmul.f32 1.0, %v3901
    %v3903 = vrcp.pop %v3784
    %v3904 = vmul.f32 1.0, %v3903
    %v3905 = vrcp.pop %v3785
    %v3906 = vmul.f32 1.0, %v3905
    %v3907 = vrcp.pop %v3786
    %v3908 = vmul.f32 1.0, %v3907
    %v3909 = vrcp.pop %v3787
    %v3910 = vmul.f32 1.0, %v3909
    %v3911 = vrcp.pop %v3788
    %v3912 = vmul.f32 1.0, %v3911
    %v3913 = vrcp.pop %v3789
    %v3914 = vmul.f32 1.0, %v3913
    %v3915 = vrcp.pop %v3790
    %v3916 = vmul.f32 1.0, %v3915
    %v3917 = vrcp.pop %v3791
    %v3918 = vmul.f32 1.0, %v3917
    %v3919 = vrcp.pop %v3792
    %v3920 = vmul.f32 1.0, %v3919
    %v3921 = vmul.f32 %v3473, %v3794
    %v3922 = vmul.f32 %v3474, %v3796
    %v3923 = vmul.f32 %v3475, %v3798
    %v3924 = vmul.f32 %v3476, %v3800
    %v3925 = vmul.f32 %v3477, %v3802
    %v3926 = vmul.f32 %v3478, %v3804
    %v3927 = vmul.f32 %v3479, %v3806
    %v3928 = vmul.f32 %v3480, %v3808
    %v3929 = vmul.f32 %v3481, %v3810
    %v3930 = vmul.f32 %v3482, %v3812
    %v3931 = vmul.f32 %v3483, %v3814
    %v3932 = vmul.f32 %v3484, %v3816
    %v3933 = vmul.f32 %v3485, %v3818
    %v3934 = vmul.f32 %v3486, %v3820
    %v3935 = vmul.f32 %v3487, %v3822
    %v3936 = vmul.f32 %v3488, %v3824
    %v3937 = vmul.f32 %v3489, %v3826
    %v3938 = vmul.f32 %v3490, %v3828
    %v3939 = vmul.f32 %v3491, %v3830
    %v3940 = vmul.f32 %v3492, %v3832
    %v3941 = vmul.f32 %v3493, %v3834
    %v3942 = vmul.f32 %v3494, %v3836
    %v3943 = vmul.f32 %v3495, %v3838
    %v3944 = vmul.f32 %v3496, %v3840
    %v3945 = vmul.f32 %v3497, %v3842
    %v3946 = vmul.f32 %v3498, %v3844
    %v3947 = vmul.f32 %v3499, %v3846
    %v3948 = vmul.f32 %v3500, %v3848
    %v3949 = vmul.f32 %v3501, %v3850
    %v3950 = vmul.f32 %v3502, %v3852
    %v3951 = vmul.f32 %v3503, %v3854
    %v3952 = vmul.f32 %v3504, %v3856
    %v3953 = vmul.f32 %v3505, %v3858
    %v3954 = vmul.f32 %v3506, %v3860
    %v3955 = vmul.f32 %v3507, %v3862
    %v3956 = vmul.f32 %v3508, %v3864
    %v3957 = vmul.f32 %v3509, %v3866
    %v3958 = vmul.f32 %v3510, %v3868
    %v3959 = vmul.f32 %v3511, %v3870
    %v3960 = vmul.f32 %v3512, %v3872
    %v3961 = vmul.f32 %v3513, %v3874
    %v3962 = vmul.f32 %v3514, %v3876
    %v3963 = vmul.f32 %v3515, %v3878
    %v3964 = vmul.f32 %v3516, %v3880
    %v3965 = vmul.f32 %v3517, %v3882
    %v3966 = vmul.f32 %v3518, %v3884
    %v3967 = vmul.f32 %v3519, %v3886
    %v3968 = vmul.f32 %v3520, %v3888
    %v3969 = vmul.f32 %v3521, %v3890
    %v3970 = vmul.f32 %v3522, %v3892
    %v3971 = vmul.f32 %v3523, %v3894
    %v3972 = vmul.f32 %v3524, %v3896
    %v3973 = vmul.f32 %v3525, %v3898
    %v3974 = vmul.f32 %v3526, %v3900
    %v3975 = vmul.f32 %v3527, %v3902
    %v3976 = vmul.f32 %v3528, %v3904
    %v3977 = vmul.f32 %v3529, %v3906
    %v3978 = vmul.f32 %v3530, %v3908
    %v3979 = vmul.f32 %v3531, %v3910
    %v3980 = vmul.f32 %v3532, %v3912
    %v3981 = vmul.f32 %v3533, %v3914
    %v3982 = vmul.f32 %v3534, %v3916
    %v3983 = vmul.f32 %v3535, %v3918
    %v3984 = vmul.f32 %v3536, %v3920
    %v3985 = vld [vmem:[%s10] sm:$0xff]
    %v3986 = vld [vmem:[%s10 + $0x8] sm:$0xff]
    %v3987 = vld [vmem:[%s11] sm:$0x1]
    %v3989 = vlaneseq
    %v3990 = vshrl.u32 %v3989, 7
    %v3991 = vsub.s32 0, %v3990
    %v3992 = vrot.slane %v3987, %v3991
    %v3995 = vsel %vm1984, %v3921, 0
    %v3998 = vsel %vm1984, %v3922, 0
    %v4001 = vsel %vm1984, %v3923, 0
    %v4004 = vsel %vm1984, %v3924, 0
    %v4007 = vsel %vm1984, %v3925, 0
    %v4010 = vsel %vm1984, %v3926, 0
    %v4013 = vsel %vm1984, %v3927, 0
    %v4016 = vsel %vm1984, %v3928, 0
    %v4019 = vsel %vm1984, %v3929, 0
    %v4022 = vsel %vm1984, %v3930, 0
    %v4025 = vsel %vm1984, %v3931, 0
    %v4028 = vsel %vm1984, %v3932, 0
    %v4031 = vsel %vm1984, %v3933, 0
    %v4034 = vsel %vm1984, %v3934, 0
    %v4037 = vsel %vm1984, %v3935, 0
    %v4040 = vsel %vm1984, %v3936, 0
    %v4043 = vsel %vm1984, %v3937, 0
    %v4046 = vsel %vm1984, %v3938, 0
    %v4049 = vsel %vm1984, %v3939, 0
    %v4052 = vsel %vm1984, %v3940, 0
    %v4055 = vsel %vm1984, %v3941, 0
    %v4058 = vsel %vm1984, %v3942, 0
    %v4061 = vsel %vm1984, %v3943, 0
    %v4064 = vsel %vm1984, %v3944, 0
    %v4067 = vsel %vm1984, %v3945, 0
    %v4070 = vsel %vm1984, %v3946, 0
    %v4073 = vsel %vm1984, %v3947, 0
    %v4076 = vsel %vm1984, %v3948, 0
    %v4079 = vsel %vm1984, %v3949, 0
    %v4082 = vsel %vm1984, %v3950, 0
    %v4085 = vsel %vm1984, %v3951, 0
    %v4088 = vsel %vm1984, %v3952, 0
    %v4091 = vsel %vm1984, %v3953, 0
    %v4094 = vsel %vm1984, %v3954, 0
    %v4097 = vsel %vm1984, %v3955, 0
    %v4100 = vsel %vm1984, %v3956, 0
    %v4103 = vsel %vm1984, %v3957, 0
    %v4106 = vsel %vm1984, %v3958, 0
    %v4109 = vsel %vm1984, %v3959, 0
    %v4112 = vsel %vm1984, %v3960, 0
    %v4115 = vsel %vm1984, %v3961, 0
    %v4118 = vsel %vm1984, %v3962, 0
    %v4121 = vsel %vm1984, %v3963, 0
    %v4124 = vsel %vm1984, %v3964, 0
    %v4127 = vsel %vm1984, %v3965, 0
    %v4130 = vsel %vm1984, %v3966, 0
    %v4133 = vsel %vm1984, %v3967, 0
    %v4136 = vsel %vm1984, %v3968, 0
    %v4139 = vsel %vm1984, %v3969, 0
    %v4142 = vsel %vm1984, %v3970, 0
    %v4145 = vsel %vm1984, %v3971, 0
    %v4148 = vsel %vm1984, %v3972, 0
    %v4151 = vsel %vm1984, %v3973, 0
    %v4154 = vsel %vm1984, %v3974, 0
    %v4157 = vsel %vm1984, %v3975, 0
    %v4160 = vsel %vm1984, %v3976, 0
    %v4163 = vsel %vm1984, %v3977, 0
    %v4166 = vsel %vm1984, %v3978, 0
    %v4169 = vsel %vm1984, %v3979, 0
    %v4172 = vsel %vm1984, %v3980, 0
    %v4175 = vsel %vm1984, %v3981, 0
    %v4178 = vsel %vm1984, %v3982, 0
    %v4181 = vsel %vm1984, %v3983, 0
    %v4184 = vsel %vm1984, %v3984, 0
    %4186 = vmatprep.subr.mxu0 0.0
    %4187 = vmatpush1.msra.mxu0 %v3985
    %4188 = vmatprep.subr.mxu0 0.0
    %4189 = vmatpush1.msra.mxu0 %v3986
    %4190 = vmatprep.subr.mxu0 0.0
    %4191 = vmatpush1.msra.mxu0 0.0
    %4192 = vmatprep.subr.mxu0 0.0
    %4193 = vmatpush1.msra.mxu0 0.0
    %4194 = vmatprep.subr.mxu0 0.0
    %4195 = vmatpush1.msra.mxu0 0.0
    %4196 = vmatprep.subr.mxu0 0.0
    %4197 = vmatpush1.msra.mxu0 0.0
    %4198 = vmatprep.subr.mxu0 0.0
    %4199 = vmatpush1.msra.mxu0 0.0
    %4200 = vmatprep.subr.mxu0 0.0
    %4201 = vmatpush1.msra.mxu0 0.0
    %4202 = vmatprep.subr.mxu0 0.0
    %4203 = vmatpush1.msra.mxu0 0.0
    %4204 = vmatprep.subr.mxu0 0.0
    %4205 = vmatpush1.msra.mxu0 0.0
    %4206 = vmatprep.subr.mxu0 0.0
    %4207 = vmatpush1.msra.mxu0 0.0
    %4208 = vmatprep.subr.mxu0 0.0
    %4209 = vmatpush1.msra.mxu0 0.0
    %4210 = vmatprep.subr.mxu0 0.0
    %4211 = vmatpush1.msra.mxu0 0.0
    %4212 = vmatprep.subr.mxu0 0.0
    %4213 = vmatpush1.msra.mxu0 0.0
    %4214 = vmatprep.subr.mxu0 0.0
    %4215 = vmatpush1.msra.mxu0 0.0
    %4216 = vmatprep.subr.mxu0 0.0
    %4217 = vmatpush1.msra.mxu0 0.0
    %4218 = vmatprep.subr.mxu0 0.0
    %4219 = vmatpush1.msra.mxu0 0.0
    %4220 = vmatprep.subr.mxu0 0.0
    %4221 = vmatpush1.msra.mxu0 0.0
    %4222 = vmatprep.subr.mxu0 0.0
    %4223 = vmatpush1.msra.mxu0 0.0
    %4224 = vmatprep.subr.mxu0 0.0
    %4225 = vmatpush1.msra.mxu0 0.0
    %4226 = vmatprep.subr.mxu0 0.0
    %4227 = vmatpush1.msra.mxu0 0.0
    %4228 = vmatprep.subr.mxu0 0.0
    %4229 = vmatpush1.msra.mxu0 0.0
    %4230 = vmatprep.subr.mxu0 0.0
    %4231 = vmatpush1.msra.mxu0 0.0
    %4232 = vmatprep.subr.mxu0 0.0
    %4233 = vmatpush1.msra.mxu0 0.0
    %4234 = vmatprep.subr.mxu0 0.0
    %4235 = vmatpush1.msra.mxu0 0.0
    %4236 = vmatprep.subr.mxu0 0.0
    %4237 = vmatpush1.msra.mxu0 0.0
    %4238 = vmatprep.subr.mxu0 0.0
    %4239 = vmatpush1.msra.mxu0 0.0
    %4240 = vmatprep.subr.mxu0 0.0
    %4241 = vmatpush1.msra.mxu0 0.0
    %4242 = vmatprep.subr.mxu0 0.0
    %4243 = vmatpush1.msra.mxu0 0.0
    %4244 = vmatprep.subr.mxu0 0.0
    %4245 = vmatpush1.msra.mxu0 0.0
    %4246 = vmatprep.subr.mxu0 0.0
    %4247 = vmatpush1.msra.mxu0 0.0
    %4248 = vmatprep.subr.mxu0 0.0
    %4249 = vmatpush1.msra.mxu0 0.0
    %4250 = vmatprep.mubr.f32.mxu0 0.0
    %4251 = vmatmul.mubr.f32.gmra.mrb[0].mxu0 %v3995
    %v4252 = vpop.f32.mrb[0].mxu0
    %v4253 = vadd.f32 %v3992, %v4252
    %v4254 = vpop.f32.mrb[0].mxu0
    %4255 = vmatprep.mubr.f32.mxu0 0.0
    %4256 = vmatmul.mubr.f32.gmra.mrb[0].mxu0 %v3998
    %v4257 = vpop.f32.mrb[0].mxu0
    %v4258 = vadd.f32 %v3992, %v4257
    %v4259 = vpop.f32.mrb[0].mxu0
    %4260 = vmatprep.mubr.f32.mxu0 0.0
    %4261 = vmatmul.mubr.f32.gmra.mrb[0].mxu0 %v4001
    %v4262 = vpop.f32.mrb[0].mxu0
    %v4263 = vadd.f32 %v3992, %v4262
    %v4264 = vpop.f32.mrb[0].mxu0
    %4265 = vmatprep.mubr.f32.mxu0 0.0
    %4266 = vmatmul.mubr.f32.gmra.mrb[0].mxu0 %v4004
    %v4267 = vpop.f32.mrb[0].mxu0
    %v4268 = vadd.f32 %v3992, %v4267
    %v4269 = vpop.f32.mrb[0].mxu0
    %4270 = vmatprep.mubr.f32.mxu0 0.0
    %4271 = vmatmul.mubr.f32.gmra.mrb[0].mxu0 %v4007
    %v4272 = vpop.f32.mrb[0].mxu0
    %v4273 = vadd.f32 %v3992, %v4272
    %v4274 = vpop.f32.mrb[0].mxu0
    %4275 = vmatprep.mubr.f32.mxu0 0.0
    %4276 = vmatmul.mubr.f32.gmra.mrb[0].mxu0 %v4010
    %v4277 = vpop.f32.mrb[0].mxu0
    %v4278 = vadd.f32 %v3992, %v4277
    %v4279 = vpop.f32.mrb[0].mxu0
    %4280 = vmatprep.mubr.f32.mxu0 0.0
    %4281 = vmatmul.mubr.f32.gmra.mrb[0].mxu0 %v4013
    %v4282 = vpop.f32.mrb[0].mxu0
    %v4283 = vadd.f32 %v3992, %v4282
    %v4284 = vpop.f32.mrb[0].mxu0
    %4285 = vmatprep.mubr.f32.mxu0 0.0
    %4286 = vmatmul.mubr.f32.gmra.mrb[0].mxu0 %v4016
    %v4287 = vpop.f32.mrb[0].mxu0
    %v4288 = vadd.f32 %v3992, %v4287
    %v4289 = vpop.f32.mrb[0].mxu0
    %4290 = vmatprep.mubr.f32.mxu0 0.0
    %4291 = vmatmul.mubr.f32.gmra.mrb[0].mxu0 %v4019
    %v4292 = vpop.f32.mrb[0].mxu0
    %v4293 = vadd.f32 %v3992, %v4292
    %v4294 = vpop.f32.mrb[0].mxu0
    %4295 = vmatprep.mubr.f32.mxu0 0.0
    %4296 = vmatmul.mubr.f32.gmra.mrb[0].mxu0 %v4022
    %v4297 = vpop.f32.mrb[0].mxu0
    %v4298 = vadd.f32 %v3992, %v4297
    %v4299 = vpop.f32.mrb[0].mxu0
    %4300 = vmatprep.mubr.f32.mxu0 0.0
    %4301 = vmatmul.mubr.f32.gmra.mrb[0].mxu0 %v4025
    %v4302 = vpop.f32.mrb[0].mxu0
    %v4303 = vadd.f32 %v3992, %v4302
    %v4304 = vpop.f32.mrb[0].mxu0
    %4305 = vmatprep.mubr.f32.mxu0 0.0
    %4306 = vmatmul.mubr.f32.gmra.mrb[0].mxu0 %v4028
    %v4307 = vpop.f32.mrb[0].mxu0
    %v4308 = vadd.f32 %v3992, %v4307
    %v4309 = vpop.f32.mrb[0].mxu0
    %4310 = vmatprep.mubr.f32.mxu0 0.0
    %4311 = vmatmul.mubr.f32.gmra.mrb[0].mxu0 %v4031
    %v4312 = vpop.f32.mrb[0].mxu0
    %v4313 = vadd.f32 %v3992, %v4312
    %v4314 = vpop.f32.mrb[0].mxu0
    %4315 = vmatprep.mubr.f32.mxu0 0.0
    %4316 = vmatmul.mubr.f32.gmra.mrb[0].mxu0 %v4034
    %v4317 = vpop.f32.mrb[0].mxu0
    %v4318 = vadd.f32 %v3992, %v4317
    %v4319 = vpop.f32.mrb[0].mxu0
    %4320 = vmatprep.mubr.f32.mxu0 0.0
    %4321 = vmatmul.mubr.f32.gmra.mrb[0].mxu0 %v4037
    %v4322 = vpop.f32.mrb[0].mxu0
    %v4323 = vadd.f32 %v3992, %v4322
    %v4324 = vpop.f32.mrb[0].mxu0
    %4325 = vmatprep.mubr.f32.mxu0 0.0
    %4326 = vmatmul.mubr.f32.gmra.mrb[0].mxu0 %v4040
    %v4327 = vpop.f32.mrb[0].mxu0
    %v4328 = vadd.f32 %v3992, %v4327
    %v4329 = vpop.f32.mrb[0].mxu0
    %4330 = vmatprep.mubr.f32.mxu0 0.0
    %4331 = vmatmul.mubr.f32.gmra.mrb[0].mxu0 %v4043
    %v4332 = vpop.f32.mrb[0].mxu0
    %v4333 = vadd.f32 %v3992, %v4332
    %v4334 = vpop.f32.mrb[0].mxu0
    %4335 = vmatprep.mubr.f32.mxu0 0.0
    %4336 = vmatmul.mubr.f32.gmra.mrb[0].mxu0 %v4046
    %v4337 = vpop.f32.mrb[0].mxu0
    %v4338 = vadd.f32 %v3992, %v4337
    %v4339 = vpop.f32.mrb[0].mxu0
    %4340 = vmatprep.mubr.f32.mxu0 0.0
    %4341 = vmatmul.mubr.f32.gmra.mrb[0].mxu0 %v4049
    %v4342 = vpop.f32.mrb[0].mxu0
    %v4343 = vadd.f32 %v3992, %v4342
    %v4344 = vpop.f32.mrb[0].mxu0
    %4345 = vmatprep.mubr.f32.mxu0 0.0
    %4346 = vmatmul.mubr.f32.gmra.mrb[0].mxu0 %v4052
    %v4347 = vpop.f32.mrb[0].mxu0
    %v4348 = vadd.f32 %v3992, %v4347
    %v4349 = vpop.f32.mrb[0].mxu0
    %4350 = vmatprep.mubr.f32.mxu0 0.0
    %4351 = vmatmul.mubr.f32.gmra.mrb[0].mxu0 %v4055
    %v4352 = vpop.f32.mrb[0].mxu0
    %v4353 = vadd.f32 %v3992, %v4352
    %v4354 = vpop.f32.mrb[0].mxu0
    %4355 = vmatprep.mubr.f32.mxu0 0.0
    %4356 = vmatmul.mubr.f32.gmra.mrb[0].mxu0 %v4058
    %v4357 = vpop.f32.mrb[0].mxu0
    %v4358 = vadd.f32 %v3992, %v4357
    %v4359 = vpop.f32.mrb[0].mxu0
    %4360 = vmatprep.mubr.f32.mxu0 0.0
    %4361 = vmatmul.mubr.f32.gmra.mrb[0].mxu0 %v4061
    %v4362 = vpop.f32.mrb[0].mxu0
    %v4363 = vadd.f32 %v3992, %v4362
    %v4364 = vpop.f32.mrb[0].mxu0
    %4365 = vmatprep.mubr.f32.mxu0 0.0
    %4366 = vmatmul.mubr.f32.gmra.mrb[0].mxu0 %v4064
    %v4367 = vpop.f32.mrb[0].mxu0
    %v4368 = vadd.f32 %v3992, %v4367
    %v4369 = vpop.f32.mrb[0].mxu0
    %4370 = vmatprep.mubr.f32.mxu0 0.0
    %4371 = vmatmul.mubr.f32.gmra.mrb[0].mxu0 %v4067
    %v4372 = vpop.f32.mrb[0].mxu0
    %v4373 = vadd.f32 %v3992, %v4372
    %v4374 = vpop.f32.mrb[0].mxu0
    %4375 = vmatprep.mubr.f32.mxu0 0.0
    %4376 = vmatmul.mubr.f32.gmra.mrb[0].mxu0 %v4070
    %v4377 = vpop.f32.mrb[0].mxu0
    %v4378 = vadd.f32 %v3992, %v4377
    %v4379 = vpop.f32.mrb[0].mxu0
    %4380 = vmatprep.mubr.f32.mxu0 0.0
    %4381 = vmatmul.mubr.f32.gmra.mrb[0].mxu0 %v4073
    %v4382 = vpop.f32.mrb[0].mxu0
    %v4383 = vadd.f32 %v3992, %v4382
    %v4384 = vpop.f32.mrb[0].mxu0
    %4385 = vmatprep.mubr.f32.mxu0 0.0
    %4386 = vmatmul.mubr.f32.gmra.mrb[0].mxu0 %v4076
    %v4387 = vpop.f32.mrb[0].mxu0
    %v4388 = vadd.f32 %v3992, %v4387
    %v4389 = vpop.f32.mrb[0].mxu0
    %4390 = vmatprep.mubr.f32.mxu0 0.0
    %4391 = vmatmul.mubr.f32.gmra.mrb[0].mxu0 %v4079
    %v4392 = vpop.f32.mrb[0].mxu0
    %v4393 = vadd.f32 %v3992, %v4392
    %v4394 = vpop.f32.mrb[0].mxu0
    %4395 = vmatprep.mubr.f32.mxu0 0.0
    %4396 = vmatmul.mubr.f32.gmra.mrb[0].mxu0 %v4082
    %v4397 = vpop.f32.mrb[0].mxu0
    %v4398 = vadd.f32 %v3992, %v4397
    %v4399 = vpop.f32.mrb[0].mxu0
    %4400 = vmatprep.mubr.f32.mxu0 0.0
    %4401 = vmatmul.mubr.f32.gmra.mrb[0].mxu0 %v4085
    %v4402 = vpop.f32.mrb[0].mxu0
    %v4403 = vadd.f32 %v3992, %v4402
    %v4404 = vpop.f32.mrb[0].mxu0
    %4405 = vmatprep.mubr.f32.mxu0 0.0
    %4406 = vmatmul.mubr.f32.gmra.mrb[0].mxu0 %v4088
    %v4407 = vpop.f32.mrb[0].mxu0
    %v4408 = vadd.f32 %v3992, %v4407
    %v4409 = vpop.f32.mrb[0].mxu0
    %4410 = vmatprep.mubr.f32.mxu0 0.0
    %4411 = vmatmul.mubr.f32.gmra.mrb[0].mxu0 %v4091
    %v4412 = vpop.f32.mrb[0].mxu0
    %v4413 = vadd.f32 %v3992, %v4412
    %v4414 = vpop.f32.mrb[0].mxu0
    %4415 = vmatprep.mubr.f32.mxu0 0.0
    %4416 = vmatmul.mubr.f32.gmra.mrb[0].mxu0 %v4094
    %v4417 = vpop.f32.mrb[0].mxu0
    %v4418 = vadd.f32 %v3992, %v4417
    %v4419 = vpop.f32.mrb[0].mxu0
    %4420 = vmatprep.mubr.f32.mxu0 0.0
    %4421 = vmatmul.mubr.f32.gmra.mrb[0].mxu0 %v4097
    %v4422 = vpop.f32.mrb[0].mxu0
    %v4423 = vadd.f32 %v3992, %v4422
    %v4424 = vpop.f32.mrb[0].mxu0
    %4425 = vmatprep.mubr.f32.mxu0 0.0
    %4426 = vmatmul.mubr.f32.gmra.mrb[0].mxu0 %v4100
    %v4427 = vpop.f32.mrb[0].mxu0
    %v4428 = vadd.f32 %v3992, %v4427
    %v4429 = vpop.f32.mrb[0].mxu0
    %4430 = vmatprep.mubr.f32.mxu0 0.0
    %4431 = vmatmul.mubr.f32.gmra.mrb[0].mxu0 %v4103
    %v4432 = vpop.f32.mrb[0].mxu0
    %v4433 = vadd.f32 %v3992, %v4432
    %v4434 = vpop.f32.mrb[0].mxu0
    %4435 = vmatprep.mubr.f32.mxu0 0.0
    %4436 = vmatmul.mubr.f32.gmra.mrb[0].mxu0 %v4106
    %v4437 = vpop.f32.mrb[0].mxu0
    %v4438 = vadd.f32 %v3992, %v4437
    %v4439 = vpop.f32.mrb[0].mxu0
    %4440 = vmatprep.mubr.f32.mxu0 0.0
    %4441 = vmatmul.mubr.f32.gmra.mrb[0].mxu0 %v4109
    %v4442 = vpop.f32.mrb[0].mxu0
    %v4443 = vadd.f32 %v3992, %v4442
    %v4444 = vpop.f32.mrb[0].mxu0
    %4445 = vmatprep.mubr.f32.mxu0 0.0
    %4446 = vmatmul.mubr.f32.gmra.mrb[0].mxu0 %v4112
    %v4447 = vpop.f32.mrb[0].mxu0
    %v4448 = vadd.f32 %v3992, %v4447
    %v4449 = vpop.f32.mrb[0].mxu0
    %4450 = vmatprep.mubr.f32.mxu0 0.0
    %4451 = vmatmul.mubr.f32.gmra.mrb[0].mxu0 %v4115
    %v4452 = vpop.f32.mrb[0].mxu0
    %v4453 = vadd.f32 %v3992, %v4452
    %v4454 = vpop.f32.mrb[0].mxu0
    %4455 = vmatprep.mubr.f32.mxu0 0.0
    %4456 = vmatmul.mubr.f32.gmra.mrb[0].mxu0 %v4118
    %v4457 = vpop.f32.mrb[0].mxu0
    %v4458 = vadd.f32 %v3992, %v4457
    %v4459 = vpop.f32.mrb[0].mxu0
    %4460 = vmatprep.mubr.f32.mxu0 0.0
    %4461 = vmatmul.mubr.f32.gmra.mrb[0].mxu0 %v4121
    %v4462 = vpop.f32.mrb[0].mxu0
    %v4463 = vadd.f32 %v3992, %v4462
    %v4464 = vpop.f32.mrb[0].mxu0
    %4465 = vmatprep.mubr.f32.mxu0 0.0
    %4466 = vmatmul.mubr.f32.gmra.mrb[0].mxu0 %v4124
    %v4467 = vpop.f32.mrb[0].mxu0
    %v4468 = vadd.f32 %v3992, %v4467
    %v4469 = vpop.f32.mrb[0].mxu0
    %4470 = vmatprep.mubr.f32.mxu0 0.0
    %4471 = vmatmul.mubr.f32.gmra.mrb[0].mxu0 %v4127
    %v4472 = vpop.f32.mrb[0].mxu0
    %v4473 = vadd.f32 %v3992, %v4472
    %v4474 = vpop.f32.mrb[0].mxu0
    %4475 = vmatprep.mubr.f32.mxu0 0.0
    %4476 = vmatmul.mubr.f32.gmra.mrb[0].mxu0 %v4130
    %v4477 = vpop.f32.mrb[0].mxu0
    %v4478 = vadd.f32 %v3992, %v4477
    %v4479 = vpop.f32.mrb[0].mxu0
    %4480 = vmatprep.mubr.f32.mxu0 0.0
    %4481 = vmatmul.mubr.f32.gmra.mrb[0].mxu0 %v4133
    %v4482 = vpop.f32.mrb[0].mxu0
    %v4483 = vadd.f32 %v3992, %v4482
    %v4484 = vpop.f32.mrb[0].mxu0
    %4485 = vmatprep.mubr.f32.mxu0 0.0
    %4486 = vmatmul.mubr.f32.gmra.mrb[0].mxu0 %v4136
    %v4487 = vpop.f32.mrb[0].mxu0
    %v4488 = vadd.f32 %v3992, %v4487
    %v4489 = vpop.f32.mrb[0].mxu0
    %4490 = vmatprep.mubr.f32.mxu0 0.0
    %4491 = vmatmul.mubr.f32.gmra.mrb[0].mxu0 %v4139
    %v4492 = vpop.f32.mrb[0].mxu0
    %v4493 = vadd.f32 %v3992, %v4492
    %v4494 = vpop.f32.mrb[0].mxu0
    %4495 = vmatprep.mubr.f32.mxu0 0.0
    %4496 = vmatmul.mubr.f32.gmra.mrb[0].mxu0 %v4142
    %v4497 = vpop.f32.mrb[0].mxu0
    %v4498 = vadd.f32 %v3992, %v4497
    %v4499 = vpop.f32.mrb[0].mxu0
    %4500 = vmatprep.mubr.f32.mxu0 0.0
    %4501 = vmatmul.mubr.f32.gmra.mrb[0].mxu0 %v4145
    %v4502 = vpop.f32.mrb[0].mxu0
    %v4503 = vadd.f32 %v3992, %v4502
    %v4504 = vpop.f32.mrb[0].mxu0
    %4505 = vmatprep.mubr.f32.mxu0 0.0
    %4506 = vmatmul.mubr.f32.gmra.mrb[0].mxu0 %v4148
    %v4507 = vpop.f32.mrb[0].mxu0
    %v4508 = vadd.f32 %v3992, %v4507
    %v4509 = vpop.f32.mrb[0].mxu0
    %4510 = vmatprep.mubr.f32.mxu0 0.0
    %4511 = vmatmul.mubr.f32.gmra.mrb[0].mxu0 %v4151
    %v4512 = vpop.f32.mrb[0].mxu0
    %v4513 = vadd.f32 %v3992, %v4512
    %v4514 = vpop.f32.mrb[0].mxu0
    %4515 = vmatprep.mubr.f32.mxu0 0.0
    %4516 = vmatmul.mubr.f32.gmra.mrb[0].mxu0 %v4154
    %v4517 = vpop.f32.mrb[0].mxu0
    %v4518 = vadd.f32 %v3992, %v4517
    %v4519 = vpop.f32.mrb[0].mxu0
    %4520 = vmatprep.mubr.f32.mxu0 0.0
    %4521 = vmatmul.mubr.f32.gmra.mrb[0].mxu0 %v4157
    %v4522 = vpop.f32.mrb[0].mxu0
    %v4523 = vadd.f32 %v3992, %v4522
    %v4524 = vpop.f32.mrb[0].mxu0
    %4525 = vmatprep.mubr.f32.mxu0 0.0
    %4526 = vmatmul.mubr.f32.gmra.mrb[0].mxu0 %v4160
    %v4527 = vpop.f32.mrb[0].mxu0
    %v4528 = vadd.f32 %v3992, %v4527
    %v4529 = vpop.f32.mrb[0].mxu0
    %4530 = vmatprep.mubr.f32.mxu0 0.0
    %4531 = vmatmul.mubr.f32.gmra.mrb[0].mxu0 %v4163
    %v4532 = vpop.f32.mrb[0].mxu0
    %v4533 = vadd.f32 %v3992, %v4532
    %v4534 = vpop.f32.mrb[0].mxu0
    %4535 = vmatprep.mubr.f32.mxu0 0.0
    %4536 = vmatmul.mubr.f32.gmra.mrb[0].mxu0 %v4166
    %v4537 = vpop.f32.mrb[0].mxu0
    %v4538 = vadd.f32 %v3992, %v4537
    %v4539 = vpop.f32.mrb[0].mxu0
    %4540 = vmatprep.mubr.f32.mxu0 0.0
    %4541 = vmatmul.mubr.f32.gmra.mrb[0].mxu0 %v4169
    %v4542 = vpop.f32.mrb[0].mxu0
    %v4543 = vadd.f32 %v3992, %v4542
    %v4544 = vpop.f32.mrb[0].mxu0
    %4545 = vmatprep.mubr.f32.mxu0 0.0
    %4546 = vmatmul.mubr.f32.gmra.mrb[0].mxu0 %v4172
    %v4547 = vpop.f32.mrb[0].mxu0
    %v4548 = vadd.f32 %v3992, %v4547
    %v4549 = vpop.f32.mrb[0].mxu0
    %4550 = vmatprep.mubr.f32.mxu0 0.0
    %4551 = vmatmul.mubr.f32.gmra.mrb[0].mxu0 %v4175
    %v4552 = vpop.f32.mrb[0].mxu0
    %v4553 = vadd.f32 %v3992, %v4552
    %v4554 = vpop.f32.mrb[0].mxu0
    %4555 = vmatprep.mubr.f32.mxu0 0.0
    %4556 = vmatmul.mubr.f32.gmra.mrb[0].mxu0 %v4178
    %v4557 = vpop.f32.mrb[0].mxu0
    %v4558 = vadd.f32 %v3992, %v4557
    %v4559 = vpop.f32.mrb[0].mxu0
    %4560 = vmatprep.mubr.f32.mxu0 0.0
    %4561 = vmatmul.mubr.f32.gmra.mrb[0].mxu0 %v4181
    %v4562 = vpop.f32.mrb[0].mxu0
    %v4563 = vadd.f32 %v3992, %v4562
    %v4564 = vpop.f32.mrb[0].mxu0
    %4565 = vmatprep.mubr.f32.mxu0 0.0
    %4566 = vmatmul.mubr.f32.gmra.mrb[0].mxu0 %v4184
    %v4567 = vpop.f32.mrb[0].mxu0
    %v4568 = vadd.f32 %v3992, %v4567
    %v4569 = vpop.f32.mrb[0].mxu0
    %4570 = vdwg.mxu0
    %v4571 = vld [vmem:[%s12] sm:$0xff]
    %v4572 = vld [vmem:[%s12 + $0x8] sm:$0xff]
    %4573 = vmatprep.subr.mxu0 0.0
    %4574 = vmatpush1.msra.mxu0 %v4571
    %4575 = vmatprep.subr.mxu0 0.0
    %4576 = vmatpush1.msra.mxu0 %v4572
    %4577 = vmatprep.subr.mxu0 0.0
    %4578 = vmatpush1.msra.mxu0 0.0
    %4579 = vmatprep.subr.mxu0 0.0
    %4580 = vmatpush1.msra.mxu0 0.0
    %4581 = vmatprep.subr.mxu0 0.0
    %4582 = vmatpush1.msra.mxu0 0.0
    %4583 = vmatprep.subr.mxu0 0.0
    %4584 = vmatpush1.msra.mxu0 0.0
    %4585 = vmatprep.subr.mxu0 0.0
    %4586 = vmatpush1.msra.mxu0 0.0
    %4587 = vmatprep.subr.mxu0 0.0
    %4588 = vmatpush1.msra.mxu0 0.0
    %4589 = vmatprep.subr.mxu0 0.0
    %4590 = vmatpush1.msra.mxu0 0.0
    %4591 = vmatprep.subr.mxu0 0.0
    %4592 = vmatpush1.msra.mxu0 0.0
    %4593 = vmatprep.subr.mxu0 0.0
    %4594 = vmatpush1.msra.mxu0 0.0
    %4595 = vmatprep.subr.mxu0 0.0
    %4596 = vmatpush1.msra.mxu0 0.0
    %4597 = vmatprep.subr.mxu0 0.0
    %4598 = vmatpush1.msra.mxu0 0.0
    %4599 = vmatprep.subr.mxu0 0.0
    %4600 = vmatpush1.msra.mxu0 0.0
    %4601 = vmatprep.subr.mxu0 0.0
    %4602 = vmatpush1.msra.mxu0 0.0
    %4603 = vmatprep.subr.mxu0 0.0
    %4604 = vmatpush1.msra.mxu0 0.0
    %4605 = vmatprep.subr.mxu0 0.0
    %4606 = vmatpush1.msra.mxu0 0.0
    %4607 = vmatprep.subr.mxu0 0.0
    %4608 = vmatpush1.msra.mxu0 0.0
    %4609 = vmatprep.subr.mxu0 0.0
    %4610 = vmatpush1.msra.mxu0 0.0
    %4611 = vmatprep.subr.mxu0 0.0
    %4612 = vmatpush1.msra.mxu0 0.0
    %4613 = vmatprep.subr.mxu0 0.0
    %4614 = vmatpush1.msra.mxu0 0.0
    %4615 = vmatprep.subr.mxu0 0.0
    %4616 = vmatpush1.msra.mxu0 0.0
    %4617 = vmatprep.subr.mxu0 0.0
    %4618 = vmatpush1.msra.mxu0 0.0
    %4619 = vmatprep.subr.mxu0 0.0
    %4620 = vmatpush1.msra.mxu0 0.0
    %4621 = vmatprep.subr.mxu0 0.0
    %4622 = vmatpush1.msra.mxu0 0.0
    %4623 = vmatprep.subr.mxu0 0.0
    %4624 = vmatpush1.msra.mxu0 0.0
    %4625 = vmatprep.subr.mxu0 0.0
    %4626 = vmatpush1.msra.mxu0 0.0
    %4627 = vmatprep.subr.mxu0 0.0
    %4628 = vmatpush1.msra.mxu0 0.0
    %4629 = vmatprep.subr.mxu0 0.0
    %4630 = vmatpush1.msra.mxu0 0.0
    %4631 = vmatprep.subr.mxu0 0.0
    %4632 = vmatpush1.msra.mxu0 0.0
    %4633 = vmatprep.subr.mxu0 0.0
    %4634 = vmatpush1.msra.mxu0 0.0
    %4635 = vmatprep.subr.mxu0 0.0
    %4636 = vmatpush1.msra.mxu0 0.0
    %4637 = vmatprep.mubr.f32.mxu0 0.0
    %4638 = vmatmul.mubr.f32.gmra.mrb[0].mxu0 %v1986
    %v4639 = vpop.f32.mrb[0].mxu0
    %v4640 = vadd.f32 0.0, %v4639
    %v4641 = vpop.f32.mrb[0].mxu0
    %4642 = vmatprep.mubr.f32.mxu0 0.0
    %4643 = vmatmul.mubr.f32.gmra.mrb[0].mxu0 %v1989
    %v4644 = vpop.f32.mrb[0].mxu0
    %v4645 = vadd.f32 0.0, %v4644
    %v4646 = vpop.f32.mrb[0].mxu0
    %4647 = vmatprep.mubr.f32.mxu0 0.0
    %4648 = vmatmul.mubr.f32.gmra.mrb[0].mxu0 %v1992
    %v4649 = vpop.f32.mrb[0].mxu0
    %v4650 = vadd.f32 0.0, %v4649
    %v4651 = vpop.f32.mrb[0].mxu0
    %4652 = vmatprep.mubr.f32.mxu0 0.0
    %4653 = vmatmul.mubr.f32.gmra.mrb[0].mxu0 %v1995
    %v4654 = vpop.f32.mrb[0].mxu0
    %v4655 = vadd.f32 0.0, %v4654
    %v4656 = vpop.f32.mrb[0].mxu0
    %4657 = vmatprep.mubr.f32.mxu0 0.0
    %4658 = vmatmul.mubr.f32.gmra.mrb[0].mxu0 %v1998
    %v4659 = vpop.f32.mrb[0].mxu0
    %v4660 = vadd.f32 0.0, %v4659
    %v4661 = vpop.f32.mrb[0].mxu0
    %4662 = vmatprep.mubr.f32.mxu0 0.0
    %4663 = vmatmul.mubr.f32.gmra.mrb[0].mxu0 %v2001
    %v4664 = vpop.f32.mrb[0].mxu0
    %v4665 = vadd.f32 0.0, %v4664
    %v4666 = vpop.f32.mrb[0].mxu0
    %4667 = vmatprep.mubr.f32.mxu0 0.0
    %4668 = vmatmul.mubr.f32.gmra.mrb[0].mxu0 %v2004
    %v4669 = vpop.f32.mrb[0].mxu0
    %v4670 = vadd.f32 0.0, %v4669
    %v4671 = vpop.f32.mrb[0].mxu0
    %4672 = vmatprep.mubr.f32.mxu0 0.0
    %4673 = vmatmul.mubr.f32.gmra.mrb[0].mxu0 %v2007
    %v4674 = vpop.f32.mrb[0].mxu0
    %v4675 = vadd.f32 0.0, %v4674
    %v4676 = vpop.f32.mrb[0].mxu0
    %4677 = vmatprep.mubr.f32.mxu0 0.0
    %4678 = vmatmul.mubr.f32.gmra.mrb[0].mxu0 %v2010
    %v4679 = vpop.f32.mrb[0].mxu0
    %v4680 = vadd.f32 0.0, %v4679
    %v4681 = vpop.f32.mrb[0].mxu0
    %4682 = vmatprep.mubr.f32.mxu0 0.0
    %4683 = vmatmul.mubr.f32.gmra.mrb[0].mxu0 %v2013
    %v4684 = vpop.f32.mrb[0].mxu0
    %v4685 = vadd.f32 0.0, %v4684
    %v4686 = vpop.f32.mrb[0].mxu0
    %4687 = vmatprep.mubr.f32.mxu0 0.0
    %4688 = vmatmul.mubr.f32.gmra.mrb[0].mxu0 %v2016
    %v4689 = vpop.f32.mrb[0].mxu0
    %v4690 = vadd.f32 0.0, %v4689
    %v4691 = vpop.f32.mrb[0].mxu0
    %4692 = vmatprep.mubr.f32.mxu0 0.0
    %4693 = vmatmul.mubr.f32.gmra.mrb[0].mxu0 %v2019
    %v4694 = vpop.f32.mrb[0].mxu0
    %v4695 = vadd.f32 0.0, %v4694
    %v4696 = vpop.f32.mrb[0].mxu0
    %4697 = vmatprep.mubr.f32.mxu0 0.0
    %4698 = vmatmul.mubr.f32.gmra.mrb[0].mxu0 %v2022
    %v4699 = vpop.f32.mrb[0].mxu0
    %v4700 = vadd.f32 0.0, %v4699
    %v4701 = vpop.f32.mrb[0].mxu0
    %4702 = vmatprep.mubr.f32.mxu0 0.0
    %4703 = vmatmul.mubr.f32.gmra.mrb[0].mxu0 %v2025
    %v4704 = vpop.f32.mrb[0].mxu0
    %v4705 = vadd.f32 0.0, %v4704
    %v4706 = vpop.f32.mrb[0].mxu0
    %4707 = vmatprep.mubr.f32.mxu0 0.0
    %4708 = vmatmul.mubr.f32.gmra.mrb[0].mxu0 %v2028
    %v4709 = vpop.f32.mrb[0].mxu0
    %v4710 = vadd.f32 0.0, %v4709
    %v4711 = vpop.f32.mrb[0].mxu0
    %4712 = vmatprep.mubr.f32.mxu0 0.0
    %4713 = vmatmul.mubr.f32.gmra.mrb[0].mxu0 %v2031
    %v4714 = vpop.f32.mrb[0].mxu0
    %v4715 = vadd.f32 0.0, %v4714
    %v4716 = vpop.f32.mrb[0].mxu0
    %4717 = vmatprep.mubr.f32.mxu0 0.0
    %4718 = vmatmul.mubr.f32.gmra.mrb[0].mxu0 %v2034
    %v4719 = vpop.f32.mrb[0].mxu0
    %v4720 = vadd.f32 0.0, %v4719
    %v4721 = vpop.f32.mrb[0].mxu0
    %4722 = vmatprep.mubr.f32.mxu0 0.0
    %4723 = vmatmul.mubr.f32.gmra.mrb[0].mxu0 %v2037
    %v4724 = vpop.f32.mrb[0].mxu0
    %v4725 = vadd.f32 0.0, %v4724
    %v4726 = vpop.f32.mrb[0].mxu0
    %4727 = vmatprep.mubr.f32.mxu0 0.0
    %4728 = vmatmul.mubr.f32.gmra.mrb[0].mxu0 %v2040
    %v4729 = vpop.f32.mrb[0].mxu0
    %v4730 = vadd.f32 0.0, %v4729
    %v4731 = vpop.f32.mrb[0].mxu0
    %4732 = vmatprep.mubr.f32.mxu0 0.0
    %4733 = vmatmul.mubr.f32.gmra.mrb[0].mxu0 %v2043
    %v4734 = vpop.f32.mrb[0].mxu0
    %v4735 = vadd.f32 0.0, %v4734
    %v4736 = vpop.f32.mrb[0].mxu0
    %4737 = vmatprep.mubr.f32.mxu0 0.0
    %4738 = vmatmul.mubr.f32.gmra.mrb[0].mxu0 %v2046
    %v4739 = vpop.f32.mrb[0].mxu0
    %v4740 = vadd.f32 0.0, %v4739
    %v4741 = vpop.f32.mrb[0].mxu0
    %4742 = vmatprep.mubr.f32.mxu0 0.0
    %4743 = vmatmul.mubr.f32.gmra.mrb[0].mxu0 %v2049
    %v4744 = vpop.f32.mrb[0].mxu0
    %v4745 = vadd.f32 0.0, %v4744
    %v4746 = vpop.f32.mrb[0].mxu0
    %4747 = vmatprep.mubr.f32.mxu0 0.0
    %4748 = vmatmul.mubr.f32.gmra.mrb[0].mxu0 %v2052
    %v4749 = vpop.f32.mrb[0].mxu0
    %v4750 = vadd.f32 0.0, %v4749
    %v4751 = vpop.f32.mrb[0].mxu0
    %4752 = vmatprep.mubr.f32.mxu0 0.0
    %4753 = vmatmul.mubr.f32.gmra.mrb[0].mxu0 %v2055
    %v4754 = vpop.f32.mrb[0].mxu0
    %v4755 = vadd.f32 0.0, %v4754
    %v4756 = vpop.f32.mrb[0].mxu0
    %4757 = vmatprep.mubr.f32.mxu0 0.0
    %4758 = vmatmul.mubr.f32.gmra.mrb[0].mxu0 %v2058
    %v4759 = vpop.f32.mrb[0].mxu0
    %v4760 = vadd.f32 0.0, %v4759
    %v4761 = vpop.f32.mrb[0].mxu0
    %4762 = vmatprep.mubr.f32.mxu0 0.0
    %4763 = vmatmul.mubr.f32.gmra.mrb[0].mxu0 %v2061
    %v4764 = vpop.f32.mrb[0].mxu0
    %v4765 = vadd.f32 0.0, %v4764
    %v4766 = vpop.f32.mrb[0].mxu0
    %4767 = vmatprep.mubr.f32.mxu0 0.0
    %4768 = vmatmul.mubr.f32.gmra.mrb[0].mxu0 %v2064
    %v4769 = vpop.f32.mrb[0].mxu0
    %v4770 = vadd.f32 0.0, %v4769
    %v4771 = vpop.f32.mrb[0].mxu0
    %4772 = vmatprep.mubr.f32.mxu0 0.0
    %4773 = vmatmul.mubr.f32.gmra.mrb[0].mxu0 %v2067
    %v4774 = vpop.f32.mrb[0].mxu0
    %v4775 = vadd.f32 0.0, %v4774
    %v4776 = vpop.f32.mrb[0].mxu0
    %4777 = vmatprep.mubr.f32.mxu0 0.0
    %4778 = vmatmul.mubr.f32.gmra.mrb[0].mxu0 %v2070
    %v4779 = vpop.f32.mrb[0].mxu0
    %v4780 = vadd.f32 0.0, %v4779
    %v4781 = vpop.f32.mrb[0].mxu0
    %4782 = vmatprep.mubr.f32.mxu0 0.0
    %4783 = vmatmul.mubr.f32.gmra.mrb[0].mxu0 %v2073
    %v4784 = vpop.f32.mrb[0].mxu0
    %v4785 = vadd.f32 0.0, %v4784
    %v4786 = vpop.f32.mrb[0].mxu0
    %4787 = vmatprep.mubr.f32.mxu0 0.0
    %4788 = vmatmul.mubr.f32.gmra.mrb[0].mxu0 %v2076
    %v4789 = vpop.f32.mrb[0].mxu0
    %v4790 = vadd.f32 0.0, %v4789
    %v4791 = vpop.f32.mrb[0].mxu0
    %4792 = vmatprep.mubr.f32.mxu0 0.0
    %4793 = vmatmul.mubr.f32.gmra.mrb[0].mxu0 %v2079
    %v4794 = vpop.f32.mrb[0].mxu0
    %v4795 = vadd.f32 0.0, %v4794
    %v4796 = vpop.f32.mrb[0].mxu0
    %4797 = vmatprep.mubr.f32.mxu0 0.0
    %4798 = vmatmul.mubr.f32.gmra.mrb[0].mxu0 %v2082
    %v4799 = vpop.f32.mrb[0].mxu0
    %v4800 = vadd.f32 0.0, %v4799
    %v4801 = vpop.f32.mrb[0].mxu0
    %4802 = vmatprep.mubr.f32.mxu0 0.0
    %4803 = vmatmul.mubr.f32.gmra.mrb[0].mxu0 %v2085
    %v4804 = vpop.f32.mrb[0].mxu0
    %v4805 = vadd.f32 0.0, %v4804
    %v4806 = vpop.f32.mrb[0].mxu0
    %4807 = vmatprep.mubr.f32.mxu0 0.0
    %4808 = vmatmul.mubr.f32.gmra.mrb[0].mxu0 %v2088
    %v4809 = vpop.f32.mrb[0].mxu0
    %v4810 = vadd.f32 0.0, %v4809
    %v4811 = vpop.f32.mrb[0].mxu0
    %4812 = vmatprep.mubr.f32.mxu0 0.0
    %4813 = vmatmul.mubr.f32.gmra.mrb[0].mxu0 %v2091
    %v4814 = vpop.f32.mrb[0].mxu0
    %v4815 = vadd.f32 0.0, %v4814
    %v4816 = vpop.f32.mrb[0].mxu0
    %4817 = vmatprep.mubr.f32.mxu0 0.0
    %4818 = vmatmul.mubr.f32.gmra.mrb[0].mxu0 %v2094
    %v4819 = vpop.f32.mrb[0].mxu0
    %v4820 = vadd.f32 0.0, %v4819
    %v4821 = vpop.f32.mrb[0].mxu0
    %4822 = vmatprep.mubr.f32.mxu0 0.0
    %4823 = vmatmul.mubr.f32.gmra.mrb[0].mxu0 %v2097
    %v4824 = vpop.f32.mrb[0].mxu0
    %v4825 = vadd.f32 0.0, %v4824
    %v4826 = vpop.f32.mrb[0].mxu0
    %4827 = vmatprep.mubr.f32.mxu0 0.0
    %4828 = vmatmul.mubr.f32.gmra.mrb[0].mxu0 %v2100
    %v4829 = vpop.f32.mrb[0].mxu0
    %v4830 = vadd.f32 0.0, %v4829
    %v4831 = vpop.f32.mrb[0].mxu0
    %4832 = vmatprep.mubr.f32.mxu0 0.0
    %4833 = vmatmul.mubr.f32.gmra.mrb[0].mxu0 %v2103
    %v4834 = vpop.f32.mrb[0].mxu0
    %v4835 = vadd.f32 0.0, %v4834
    %v4836 = vpop.f32.mrb[0].mxu0
    %4837 = vmatprep.mubr.f32.mxu0 0.0
    %4838 = vmatmul.mubr.f32.gmra.mrb[0].mxu0 %v2106
    %v4839 = vpop.f32.mrb[0].mxu0
    %v4840 = vadd.f32 0.0, %v4839
    %v4841 = vpop.f32.mrb[0].mxu0
    %4842 = vmatprep.mubr.f32.mxu0 0.0
    %4843 = vmatmul.mubr.f32.gmra.mrb[0].mxu0 %v2109
    %v4844 = vpop.f32.mrb[0].mxu0
    %v4845 = vadd.f32 0.0, %v4844
    %v4846 = vpop.f32.mrb[0].mxu0
    %4847 = vmatprep.mubr.f32.mxu0 0.0
    %4848 = vmatmul.mubr.f32.gmra.mrb[0].mxu0 %v2112
    %v4849 = vpop.f32.mrb[0].mxu0
    %v4850 = vadd.f32 0.0, %v4849
    %v4851 = vpop.f32.mrb[0].mxu0
    %4852 = vmatprep.mubr.f32.mxu0 0.0
    %4853 = vmatmul.mubr.f32.gmra.mrb[0].mxu0 %v2115
    %v4854 = vpop.f32.mrb[0].mxu0
    %v4855 = vadd.f32 0.0, %v4854
    %v4856 = vpop.f32.mrb[0].mxu0
    %4857 = vmatprep.mubr.f32.mxu0 0.0
    %4858 = vmatmul.mubr.f32.gmra.mrb[0].mxu0 %v2118
    %v4859 = vpop.f32.mrb[0].mxu0
    %v4860 = vadd.f32 0.0, %v4859
    %v4861 = vpop.f32.mrb[0].mxu0
    %4862 = vmatprep.mubr.f32.mxu0 0.0
    %4863 = vmatmul.mubr.f32.gmra.mrb[0].mxu0 %v2121
    %v4864 = vpop.f32.mrb[0].mxu0
    %v4865 = vadd.f32 0.0, %v4864
    %v4866 = vpop.f32.mrb[0].mxu0
    %4867 = vmatprep.mubr.f32.mxu0 0.0
    %4868 = vmatmul.mubr.f32.gmra.mrb[0].mxu0 %v2124
    %v4869 = vpop.f32.mrb[0].mxu0
    %v4870 = vadd.f32 0.0, %v4869
    %v4871 = vpop.f32.mrb[0].mxu0
    %4872 = vmatprep.mubr.f32.mxu0 0.0
    %4873 = vmatmul.mubr.f32.gmra.mrb[0].mxu0 %v2127
    %v4874 = vpop.f32.mrb[0].mxu0
    %v4875 = vadd.f32 0.0, %v4874
    %v4876 = vpop.f32.mrb[0].mxu0
    %4877 = vmatprep.mubr.f32.mxu0 0.0
    %4878 = vmatmul.mubr.f32.gmra.mrb[0].mxu0 %v2130
    %v4879 = vpop.f32.mrb[0].mxu0
    %v4880 = vadd.f32 0.0, %v4879
    %v4881 = vpop.f32.mrb[0].mxu0
    %4882 = vmatprep.mubr.f32.mxu0 0.0
    %4883 = vmatmul.mubr.f32.gmra.mrb[0].mxu0 %v2133
    %v4884 = vpop.f32.mrb[0].mxu0
    %v4885 = vadd.f32 0.0, %v4884
    %v4886 = vpop.f32.mrb[0].mxu0
    %4887 = vmatprep.mubr.f32.mxu0 0.0
    %4888 = vmatmul.mubr.f32.gmra.mrb[0].mxu0 %v2136
    %v4889 = vpop.f32.mrb[0].mxu0
    %v4890 = vadd.f32 0.0, %v4889
    %v4891 = vpop.f32.mrb[0].mxu0
    %4892 = vmatprep.mubr.f32.mxu0 0.0
    %4893 = vmatmul.mubr.f32.gmra.mrb[0].mxu0 %v2139
    %v4894 = vpop.f32.mrb[0].mxu0
    %v4895 = vadd.f32 0.0, %v4894
    %v4896 = vpop.f32.mrb[0].mxu0
    %4897 = vmatprep.mubr.f32.mxu0 0.0
    %4898 = vmatmul.mubr.f32.gmra.mrb[0].mxu0 %v2142
    %v4899 = vpop.f32.mrb[0].mxu0
    %v4900 = vadd.f32 0.0, %v4899
    %v4901 = vpop.f32.mrb[0].mxu0
    %4902 = vmatprep.mubr.f32.mxu0 0.0
    %4903 = vmatmul.mubr.f32.gmra.mrb[0].mxu0 %v2145
    %v4904 = vpop.f32.mrb[0].mxu0
    %v4905 = vadd.f32 0.0, %v4904
    %v4906 = vpop.f32.mrb[0].mxu0
    %4907 = vmatprep.mubr.f32.mxu0 0.0
    %4908 = vmatmul.mubr.f32.gmra.mrb[0].mxu0 %v2148
    %v4909 = vpop.f32.mrb[0].mxu0
    %v4910 = vadd.f32 0.0, %v4909
    %v4911 = vpop.f32.mrb[0].mxu0
    %4912 = vmatprep.mubr.f32.mxu0 0.0
    %4913 = vmatmul.mubr.f32.gmra.mrb[0].mxu0 %v2151
    %v4914 = vpop.f32.mrb[0].mxu0
    %v4915 = vadd.f32 0.0, %v4914
    %v4916 = vpop.f32.mrb[0].mxu0
    %4917 = vmatprep.mubr.f32.mxu0 0.0
    %4918 = vmatmul.mubr.f32.gmra.mrb[0].mxu0 %v2154
    %v4919 = vpop.f32.mrb[0].mxu0
    %v4920 = vadd.f32 0.0, %v4919
    %v4921 = vpop.f32.mrb[0].mxu0
    %4922 = vmatprep.mubr.f32.mxu0 0.0
    %4923 = vmatmul.mubr.f32.gmra.mrb[0].mxu0 %v2157
    %v4924 = vpop.f32.mrb[0].mxu0
    %v4925 = vadd.f32 0.0, %v4924
    %v4926 = vpop.f32.mrb[0].mxu0
    %4927 = vmatprep.mubr.f32.mxu0 0.0
    %4928 = vmatmul.mubr.f32.gmra.mrb[0].mxu0 %v2160
    %v4929 = vpop.f32.mrb[0].mxu0
    %v4930 = vadd.f32 0.0, %v4929
    %v4931 = vpop.f32.mrb[0].mxu0
    %4932 = vmatprep.mubr.f32.mxu0 0.0
    %4933 = vmatmul.mubr.f32.gmra.mrb[0].mxu0 %v2163
    %v4934 = vpop.f32.mrb[0].mxu0
    %v4935 = vadd.f32 0.0, %v4934
    %v4936 = vpop.f32.mrb[0].mxu0
    %4937 = vmatprep.mubr.f32.mxu0 0.0
    %4938 = vmatmul.mubr.f32.gmra.mrb[0].mxu0 %v2166
    %v4939 = vpop.f32.mrb[0].mxu0
    %v4940 = vadd.f32 0.0, %v4939
    %v4941 = vpop.f32.mrb[0].mxu0
    %4942 = vmatprep.mubr.f32.mxu0 0.0
    %4943 = vmatmul.mubr.f32.gmra.mrb[0].mxu0 %v2169
    %v4944 = vpop.f32.mrb[0].mxu0
    %v4945 = vadd.f32 0.0, %v4944
    %v4946 = vpop.f32.mrb[0].mxu0
    %4947 = vmatprep.mubr.f32.mxu0 0.0
    %4948 = vmatmul.mubr.f32.gmra.mrb[0].mxu0 %v2172
    %v4949 = vpop.f32.mrb[0].mxu0
    %v4950 = vadd.f32 0.0, %v4949
    %v4951 = vpop.f32.mrb[0].mxu0
    %4952 = vmatprep.mubr.f32.mxu0 0.0
    %4953 = vmatmul.mubr.f32.gmra.mrb[0].mxu0 %v2175
    %v4954 = vpop.f32.mrb[0].mxu0
    %v4955 = vadd.f32 0.0, %v4954
    %v4956 = vpop.f32.mrb[0].mxu0
    %4957 = vdwg.mxu0
    %v4958 = vmul.f32 %v1664, %v4640
    %v4959 = vmul.f32 %v1667, %v4645
    %v4960 = vmul.f32 %v1672, %v4650
    %v4961 = vmul.f32 %v1675, %v4655
    %v4962 = vmul.f32 %v1680, %v4660
    %v4963 = vmul.f32 %v1683, %v4665
    %v4964 = vmul.f32 %v1688, %v4670
    %v4965 = vmul.f32 %v1691, %v4675
    %v4966 = vmul.f32 %v1696, %v4680
    %v4967 = vmul.f32 %v1699, %v4685
    %v4968 = vmul.f32 %v1704, %v4690
    %v4969 = vmul.f32 %v1707, %v4695
    %v4970 = vmul.f32 %v1712, %v4700
    %v4971 = vmul.f32 %v1715, %v4705
    %v4972 = vmul.f32 %v1720, %v4710
    %v4973 = vmul.f32 %v1723, %v4715
    %v4974 = vmul.f32 %v1728, %v4720
    %v4975 = vmul.f32 %v1731, %v4725
    %v4976 = vmul.f32 %v1736, %v4730
    %v4977 = vmul.f32 %v1739, %v4735
    %v4978 = vmul.f32 %v1744, %v4740
    %v4979 = vmul.f32 %v1747, %v4745
    %v4980 = vmul.f32 %v1752, %v4750
    %v4981 = vmul.f32 %v1755, %v4755
    %v4982 = vmul.f32 %v1760, %v4760
    %v4983 = vmul.f32 %v1763, %v4765
    %v4984 = vmul.f32 %v1768, %v4770
    %v4985 = vmul.f32 %v1771, %v4775
    %v4986 = vmul.f32 %v1776, %v4780
    %v4987 = vmul.f32 %v1779, %v4785
    %v4988 = vmul.f32 %v1784, %v4790
    %v4989 = vmul.f32 %v1787, %v4795
    %v4990 = vmul.f32 %v1792, %v4800
    %v4991 = vmul.f32 %v1795, %v4805
    %v4992 = vmul.f32 %v1800, %v4810
    %v4993 = vmul.f32 %v1803, %v4815
    %v4994 = vmul.f32 %v1808, %v4820
    %v4995 = vmul.f32 %v1811, %v4825
    %v4996 = vmul.f32 %v1816, %v4830
    %v4997 = vmul.f32 %v1819, %v4835
    %v4998 = vmul.f32 %v1824, %v4840
    %v4999 = vmul.f32 %v1827, %v4845
    %v5000 = vmul.f32 %v1832, %v4850
    %v5001 = vmul.f32 %v1835, %v4855
    %v5002 = vmul.f32 %v1840, %v4860
    %v5003 = vmul.f32 %v1843, %v4865
    %v5004 = vmul.f32 %v1848, %v4870
    %v5005 = vmul.f32 %v1851, %v4875
    %v5006 = vmul.f32 %v1856, %v4880
    %v5007 = vmul.f32 %v1859, %v4885
    %v5008 = vmul.f32 %v1864, %v4890
    %v5009 = vmul.f32 %v1867, %v4895
    %v5010 = vmul.f32 %v1872, %v4900
    %v5011 = vmul.f32 %v1875, %v4905
    %v5012 = vmul.f32 %v1880, %v4910
    %v5013 = vmul.f32 %v1883, %v4915
    %v5014 = vmul.f32 %v1888, %v4920
    %v5015 = vmul.f32 %v1891, %v4925
    %v5016 = vmul.f32 %v1896, %v4930
    %v5017 = vmul.f32 %v1899, %v4935
    %v5018 = vmul.f32 %v1904, %v4940
    %v5019 = vmul.f32 %v1907, %v4945
    %v5020 = vmul.f32 %v1912, %v4950
    %v5021 = vmul.f32 %v1915, %v4955
    %v5022 = vmul.f32 %v4958, %v4253
    %v5023 = vmul.f32 %v4959, %v4258
    %v5024 = vmul.f32 %v4960, %v4263
    %v5025 = vmul.f32 %v4961, %v4268
    %v5026 = vmul.f32 %v4962, %v4273
    %v5027 = vmul.f32 %v4963, %v4278
    %v5028 = vmul.f32 %v4964, %v4283
    %v5029 = vmul.f32 %v4965, %v4288
    %v5030 = vmul.f32 %v4966, %v4293
    %v5031 = vmul.f32 %v4967, %v4298
    %v5032 = vmul.f32 %v4968, %v4303
    %v5033 = vmul.f32 %v4969, %v4308
    %v5034 = vmul.f32 %v4970, %v4313
    %v5035 = vmul.f32 %v4971, %v4318
    %v5036 = vmul.f32 %v4972, %v4323
    %v5037 = vmul.f32 %v4973, %v4328
    %v5038 = vmul.f32 %v4974, %v4333
    %v5039 = vmul.f32 %v4975, %v4338
    %v5040 = vmul.f32 %v4976, %v4343
    %v5041 = vmul.f32 %v4977, %v4348
    %v5042 = vmul.f32 %v4978, %v4353
    %v5043 = vmul.f32 %v4979, %v4358
    %v5044 = vmul.f32 %v4980, %v4363
    %v5045 = vmul.f32 %v4981, %v4368
    %v5046 = vmul.f32 %v4982, %v4373
    %v5047 = vmul.f32 %v4983, %v4378
    %v5048 = vmul.f32 %v4984, %v4383
    %v5049 = vmul.f32 %v4985, %v4388
    %v5050 = vmul.f32 %v4986, %v4393
    %v5051 = vmul.f32 %v4987, %v4398
    %v5052 = vmul.f32 %v4988, %v4403
    %v5053 = vmul.f32 %v4989, %v4408
    %v5054 = vmul.f32 %v4990, %v4413
    %v5055 = vmul.f32 %v4991, %v4418
    %v5056 = vmul.f32 %v4992, %v4423
    %v5057 = vmul.f32 %v4993, %v4428
    %v5058 = vmul.f32 %v4994, %v4433
    %v5059 = vmul.f32 %v4995, %v4438
    %v5060 = vmul.f32 %v4996, %v4443
    %v5061 = vmul.f32 %v4997, %v4448
    %v5062 = vmul.f32 %v4998, %v4453
    %v5063 = vmul.f32 %v4999, %v4458
    %v5064 = vmul.f32 %v5000, %v4463
    %v5065 = vmul.f32 %v5001, %v4468
    %v5066 = vmul.f32 %v5002, %v4473
    %v5067 = vmul.f32 %v5003, %v4478
    %v5068 = vmul.f32 %v5004, %v4483
    %v5069 = vmul.f32 %v5005, %v4488
    %v5070 = vmul.f32 %v5006, %v4493
    %v5071 = vmul.f32 %v5007, %v4498
    %v5072 = vmul.f32 %v5008, %v4503
    %v5073 = vmul.f32 %v5009, %v4508
    %v5074 = vmul.f32 %v5010, %v4513
    %v5075 = vmul.f32 %v5011, %v4518
    %v5076 = vmul.f32 %v5012, %v4523
    %v5077 = vmul.f32 %v5013, %v4528
    %v5078 = vmul.f32 %v5014, %v4533
    %v5079 = vmul.f32 %v5015, %v4538
    %v5080 = vmul.f32 %v5016, %v4543
    %v5081 = vmul.f32 %v5017, %v4548
    %v5082 = vmul.f32 %v5018, %v4553
    %v5083 = vmul.f32 %v5019, %v4558
    %v5084 = vmul.f32 %v5020, %v4563
    %v5085 = vmul.f32 %v5021, %v4568
    %v5086 = vld [vmem:[%s13] sm:$0xff]
    %v5087 = vld [vmem:[%s13 + $0x8] sm:$0xff]
    %v5088 = vld [vmem:[%s14] sm:$0x1]
    %v5090 = vlaneseq
    %v5091 = vshrl.u32 %v5090, 7
    %v5092 = vsub.s32 0, %v5091
    %v5093 = vrot.slane %v5088, %v5092
    %v5096 = vsel %vm1984, %v5022, 0
    %v5099 = vsel %vm1984, %v5023, 0
    %v5102 = vsel %vm1984, %v5024, 0
    %v5105 = vsel %vm1984, %v5025, 0
    %v5108 = vsel %vm1984, %v5026, 0
    %v5111 = vsel %vm1984, %v5027, 0
    %v5114 = vsel %vm1984, %v5028, 0
    %v5117 = vsel %vm1984, %v5029, 0
    %v5120 = vsel %vm1984, %v5030, 0
    %v5123 = vsel %vm1984, %v5031, 0
    %v5126 = vsel %vm1984, %v5032, 0
    %v5129 = vsel %vm1984, %v5033, 0
    %v5132 = vsel %vm1984, %v5034, 0
    %v5135 = vsel %vm1984, %v5035, 0
    %v5138 = vsel %vm1984, %v5036, 0
    %v5141 = vsel %vm1984, %v5037, 0
    %v5144 = vsel %vm1984, %v5038, 0
    %v5147 = vsel %vm1984, %v5039, 0
    %v5150 = vsel %vm1984, %v5040, 0
    %v5153 = vsel %vm1984, %v5041, 0
    %v5156 = vsel %vm1984, %v5042, 0
    %v5159 = vsel %vm1984, %v5043, 0
    %v5162 = vsel %vm1984, %v5044, 0
    %v5165 = vsel %vm1984, %v5045, 0
    %v5168 = vsel %vm1984, %v5046, 0
    %v5171 = vsel %vm1984, %v5047, 0
    %v5174 = vsel %vm1984, %v5048, 0
    %v5177 = vsel %vm1984, %v5049, 0
    %v5180 = vsel %vm1984, %v5050, 0
    %v5183 = vsel %vm1984, %v5051, 0
    %v5186 = vsel %vm1984, %v5052, 0
    %v5189 = vsel %vm1984, %v5053, 0
    %v5192 = vsel %vm1984, %v5054, 0
    %v5195 = vsel %vm1984, %v5055, 0
    %v5198 = vsel %vm1984, %v5056, 0
    %v5201 = vsel %vm1984, %v5057, 0
    %v5204 = vsel %vm1984, %v5058, 0
    %v5207 = vsel %vm1984, %v5059, 0
    %v5210 = vsel %vm1984, %v5060, 0
    %v5213 = vsel %vm1984, %v5061, 0
    %v5216 = vsel %vm1984, %v5062, 0
    %v5219 = vsel %vm1984, %v5063, 0
    %v5222 = vsel %vm1984, %v5064, 0
    %v5225 = vsel %vm1984, %v5065, 0
    %v5228 = vsel %vm1984, %v5066, 0
    %v5231 = vsel %vm1984, %v5067, 0
    %v5234 = vsel %vm1984, %v5068, 0
    %v5237 = vsel %vm1984, %v5069, 0
    %v5240 = vsel %vm1984, %v5070, 0
    %v5243 = vsel %vm1984, %v5071, 0
    %v5246 = vsel %vm1984, %v5072, 0
    %v5249 = vsel %vm1984, %v5073, 0
    %v5252 = vsel %vm1984, %v5074, 0
    %v5255 = vsel %vm1984, %v5075, 0
    %v5258 = vsel %vm1984, %v5076, 0
    %v5261 = vsel %vm1984, %v5077, 0
    %v5264 = vsel %vm1984, %v5078, 0
    %v5267 = vsel %vm1984, %v5079, 0
    %v5270 = vsel %vm1984, %v5080, 0
    %v5273 = vsel %vm1984, %v5081, 0
    %v5276 = vsel %vm1984, %v5082, 0
    %v5279 = vsel %vm1984, %v5083, 0
    %v5282 = vsel %vm1984, %v5084, 0
    %v5285 = vsel %vm1984, %v5085, 0
    %5287 = vmatprep.subr.mxu0 0.0
    %5288 = vmatpush1.msra.mxu0 %v5086
    %5289 = vmatprep.subr.mxu0 0.0
    %5290 = vmatpush1.msra.mxu0 %v5087
    %5291 = vmatprep.subr.mxu0 0.0
    %5292 = vmatpush1.msra.mxu0 0.0
    %5293 = vmatprep.subr.mxu0 0.0
    %5294 = vmatpush1.msra.mxu0 0.0
    %5295 = vmatprep.subr.mxu0 0.0
    %5296 = vmatpush1.msra.mxu0 0.0
    %5297 = vmatprep.subr.mxu0 0.0
    %5298 = vmatpush1.msra.mxu0 0.0
    %5299 = vmatprep.subr.mxu0 0.0
    %5300 = vmatpush1.msra.mxu0 0.0
    %5301 = vmatprep.subr.mxu0 0.0
    %5302 = vmatpush1.msra.mxu0 0.0
    %5303 = vmatprep.subr.mxu0 0.0
    %5304 = vmatpush1.msra.mxu0 0.0
    %5305 = vmatprep.subr.mxu0 0.0
    %5306 = vmatpush1.msra.mxu0 0.0
    %5307 = vmatprep.subr.mxu0 0.0
    %5308 = vmatpush1.msra.mxu0 0.0
    %5309 = vmatprep.subr.mxu0 0.0
    %5310 = vmatpush1.msra.mxu0 0.0
    %5311 = vmatprep.subr.mxu0 0.0
    %5312 = vmatpush1.msra.mxu0 0.0
    %5313 = vmatprep.subr.mxu0 0.0
    %5314 = vmatpush1.msra.mxu0 0.0
    %5315 = vmatprep.subr.mxu0 0.0
    %5316 = vmatpush1.msra.mxu0 0.0
    %5317 = vmatprep.subr.mxu0 0.0
    %5318 = vmatpush1.msra.mxu0 0.0
    %5319 = vmatprep.subr.mxu0 0.0
    %5320 = vmatpush1.msra.mxu0 0.0
    %5321 = vmatprep.subr.mxu0 0.0
    %5322 = vmatpush1.msra.mxu0 0.0
    %5323 = vmatprep.subr.mxu0 0.0
    %5324 = vmatpush1.msra.mxu0 0.0
    %5325 = vmatprep.subr.mxu0 0.0
    %5326 = vmatpush1.msra.mxu0 0.0
    %5327 = vmatprep.subr.mxu0 0.0
    %5328 = vmatpush1.msra.mxu0 0.0
    %5329 = vmatprep.subr.mxu0 0.0
    %5330 = vmatpush1.msra.mxu0 0.0
    %5331 = vmatprep.subr.mxu0 0.0
    %5332 = vmatpush1.msra.mxu0 0.0
    %5333 = vmatprep.subr.mxu0 0.0
    %5334 = vmatpush1.msra.mxu0 0.0
    %5335 = vmatprep.subr.mxu0 0.0
    %5336 = vmatpush1.msra.mxu0 0.0
    %5337 = vmatprep.subr.mxu0 0.0
    %5338 = vmatpush1.msra.mxu0 0.0
    %5339 = vmatprep.subr.mxu0 0.0
    %5340 = vmatpush1.msra.mxu0 0.0
    %5341 = vmatprep.subr.mxu0 0.0
    %5342 = vmatpush1.msra.mxu0 0.0
    %5343 = vmatprep.subr.mxu0 0.0
    %5344 = vmatpush1.msra.mxu0 0.0
    %5345 = vmatprep.subr.mxu0 0.0
    %5346 = vmatpush1.msra.mxu0 0.0
    %5347 = vmatprep.subr.mxu0 0.0
    %5348 = vmatpush1.msra.mxu0 0.0
    %5349 = vmatprep.subr.mxu0 0.0
    %5350 = vmatpush1.msra.mxu0 0.0
    %5351 = vmatprep.mubr.f32.mxu0 0.0
    %5352 = vmatmul.mubr.f32.gmra.mrb[0].mxu0 %v5096
    %v5353 = vpop.f32.mrb[0].mxu0
    %v5354 = vadd.f32 %v5093, %v5353
    %v5355 = vpop.f32.mrb[0].mxu0
    %5356 = vmatprep.mubr.f32.mxu0 0.0
    %5357 = vmatmul.mubr.f32.gmra.mrb[0].mxu0 %v5099
    %v5358 = vpop.f32.mrb[0].mxu0
    %v5359 = vadd.f32 %v5093, %v5358
    %v5360 = vpop.f32.mrb[0].mxu0
    %5361 = vmatprep.mubr.f32.mxu0 0.0
    %5362 = vmatmul.mubr.f32.gmra.mrb[0].mxu0 %v5102
    %v5363 = vpop.f32.mrb[0].mxu0
    %v5364 = vadd.f32 %v5093, %v5363
    %v5365 = vpop.f32.mrb[0].mxu0
    %5366 = vmatprep.mubr.f32.mxu0 0.0
    %5367 = vmatmul.mubr.f32.gmra.mrb[0].mxu0 %v5105
    %v5368 = vpop.f32.mrb[0].mxu0
    %v5369 = vadd.f32 %v5093, %v5368
    %v5370 = vpop.f32.mrb[0].mxu0
    %5371 = vmatprep.mubr.f32.mxu0 0.0
    %5372 = vmatmul.mubr.f32.gmra.mrb[0].mxu0 %v5108
    %v5373 = vpop.f32.mrb[0].mxu0
    %v5374 = vadd.f32 %v5093, %v5373
    %v5375 = vpop.f32.mrb[0].mxu0
    %5376 = vmatprep.mubr.f32.mxu0 0.0
    %5377 = vmatmul.mubr.f32.gmra.mrb[0].mxu0 %v5111
    %v5378 = vpop.f32.mrb[0].mxu0
    %v5379 = vadd.f32 %v5093, %v5378
    %v5380 = vpop.f32.mrb[0].mxu0
    %5381 = vmatprep.mubr.f32.mxu0 0.0
    %5382 = vmatmul.mubr.f32.gmra.mrb[0].mxu0 %v5114
    %v5383 = vpop.f32.mrb[0].mxu0
    %v5384 = vadd.f32 %v5093, %v5383
    %v5385 = vpop.f32.mrb[0].mxu0
    %5386 = vmatprep.mubr.f32.mxu0 0.0
    %5387 = vmatmul.mubr.f32.gmra.mrb[0].mxu0 %v5117
    %v5388 = vpop.f32.mrb[0].mxu0
    %v5389 = vadd.f32 %v5093, %v5388
    %v5390 = vpop.f32.mrb[0].mxu0
    %5391 = vmatprep.mubr.f32.mxu0 0.0
    %5392 = vmatmul.mubr.f32.gmra.mrb[0].mxu0 %v5120
    %v5393 = vpop.f32.mrb[0].mxu0
    %v5394 = vadd.f32 %v5093, %v5393
    %v5395 = vpop.f32.mrb[0].mxu0
    %5396 = vmatprep.mubr.f32.mxu0 0.0
    %5397 = vmatmul.mubr.f32.gmra.mrb[0].mxu0 %v5123
    %v5398 = vpop.f32.mrb[0].mxu0
    %v5399 = vadd.f32 %v5093, %v5398
    %v5400 = vpop.f32.mrb[0].mxu0
    %5401 = vmatprep.mubr.f32.mxu0 0.0
    %5402 = vmatmul.mubr.f32.gmra.mrb[0].mxu0 %v5126
    %v5403 = vpop.f32.mrb[0].mxu0
    %v5404 = vadd.f32 %v5093, %v5403
    %v5405 = vpop.f32.mrb[0].mxu0
    %5406 = vmatprep.mubr.f32.mxu0 0.0
    %5407 = vmatmul.mubr.f32.gmra.mrb[0].mxu0 %v5129
    %v5408 = vpop.f32.mrb[0].mxu0
    %v5409 = vadd.f32 %v5093, %v5408
    %v5410 = vpop.f32.mrb[0].mxu0
    %5411 = vmatprep.mubr.f32.mxu0 0.0
    %5412 = vmatmul.mubr.f32.gmra.mrb[0].mxu0 %v5132
    %v5413 = vpop.f32.mrb[0].mxu0
    %v5414 = vadd.f32 %v5093, %v5413
    %v5415 = vpop.f32.mrb[0].mxu0
    %5416 = vmatprep.mubr.f32.mxu0 0.0
    %5417 = vmatmul.mubr.f32.gmra.mrb[0].mxu0 %v5135
    %v5418 = vpop.f32.mrb[0].mxu0
    %v5419 = vadd.f32 %v5093, %v5418
    %v5420 = vpop.f32.mrb[0].mxu0
    %5421 = vmatprep.mubr.f32.mxu0 0.0
    %5422 = vmatmul.mubr.f32.gmra.mrb[0].mxu0 %v5138
    %v5423 = vpop.f32.mrb[0].mxu0
    %v5424 = vadd.f32 %v5093, %v5423
    %v5425 = vpop.f32.mrb[0].mxu0
    %5426 = vmatprep.mubr.f32.mxu0 0.0
    %5427 = vmatmul.mubr.f32.gmra.mrb[0].mxu0 %v5141
    %v5428 = vpop.f32.mrb[0].mxu0
    %v5429 = vadd.f32 %v5093, %v5428
    %v5430 = vpop.f32.mrb[0].mxu0
    %5431 = vmatprep.mubr.f32.mxu0 0.0
    %5432 = vmatmul.mubr.f32.gmra.mrb[0].mxu0 %v5144
    %v5433 = vpop.f32.mrb[0].mxu0
    %v5434 = vadd.f32 %v5093, %v5433
    %v5435 = vpop.f32.mrb[0].mxu0
    %5436 = vmatprep.mubr.f32.mxu0 0.0
    %5437 = vmatmul.mubr.f32.gmra.mrb[0].mxu0 %v5147
    %v5438 = vpop.f32.mrb[0].mxu0
    %v5439 = vadd.f32 %v5093, %v5438
    %v5440 = vpop.f32.mrb[0].mxu0
    %5441 = vmatprep.mubr.f32.mxu0 0.0
    %5442 = vmatmul.mubr.f32.gmra.mrb[0].mxu0 %v5150
    %v5443 = vpop.f32.mrb[0].mxu0
    %v5444 = vadd.f32 %v5093, %v5443
    %v5445 = vpop.f32.mrb[0].mxu0
    %5446 = vmatprep.mubr.f32.mxu0 0.0
    %5447 = vmatmul.mubr.f32.gmra.mrb[0].mxu0 %v5153
    %v5448 = vpop.f32.mrb[0].mxu0
    %v5449 = vadd.f32 %v5093, %v5448
    %v5450 = vpop.f32.mrb[0].mxu0
    %5451 = vmatprep.mubr.f32.mxu0 0.0
    %5452 = vmatmul.mubr.f32.gmra.mrb[0].mxu0 %v5156
    %v5453 = vpop.f32.mrb[0].mxu0
    %v5454 = vadd.f32 %v5093, %v5453
    %v5455 = vpop.f32.mrb[0].mxu0
    %5456 = vmatprep.mubr.f32.mxu0 0.0
    %5457 = vmatmul.mubr.f32.gmra.mrb[0].mxu0 %v5159
    %v5458 = vpop.f32.mrb[0].mxu0
    %v5459 = vadd.f32 %v5093, %v5458
    %v5460 = vpop.f32.mrb[0].mxu0
    %5461 = vmatprep.mubr.f32.mxu0 0.0
    %5462 = vmatmul.mubr.f32.gmra.mrb[0].mxu0 %v5162
    %v5463 = vpop.f32.mrb[0].mxu0
    %v5464 = vadd.f32 %v5093, %v5463
    %v5465 = vpop.f32.mrb[0].mxu0
    %5466 = vmatprep.mubr.f32.mxu0 0.0
    %5467 = vmatmul.mubr.f32.gmra.mrb[0].mxu0 %v5165
    %v5468 = vpop.f32.mrb[0].mxu0
    %v5469 = vadd.f32 %v5093, %v5468
    %v5470 = vpop.f32.mrb[0].mxu0
    %5471 = vmatprep.mubr.f32.mxu0 0.0
    %5472 = vmatmul.mubr.f32.gmra.mrb[0].mxu0 %v5168
    %v5473 = vpop.f32.mrb[0].mxu0
    %v5474 = vadd.f32 %v5093, %v5473
    %v5475 = vpop.f32.mrb[0].mxu0
    %5476 = vmatprep.mubr.f32.mxu0 0.0
    %5477 = vmatmul.mubr.f32.gmra.mrb[0].mxu0 %v5171
    %v5478 = vpop.f32.mrb[0].mxu0
    %v5479 = vadd.f32 %v5093, %v5478
    %v5480 = vpop.f32.mrb[0].mxu0
    %5481 = vmatprep.mubr.f32.mxu0 0.0
    %5482 = vmatmul.mubr.f32.gmra.mrb[0].mxu0 %v5174
    %v5483 = vpop.f32.mrb[0].mxu0
    %v5484 = vadd.f32 %v5093, %v5483
    %v5485 = vpop.f32.mrb[0].mxu0
    %5486 = vmatprep.mubr.f32.mxu0 0.0
    %5487 = vmatmul.mubr.f32.gmra.mrb[0].mxu0 %v5177
    %v5488 = vpop.f32.mrb[0].mxu0
    %v5489 = vadd.f32 %v5093, %v5488
    %v5490 = vpop.f32.mrb[0].mxu0
    %5491 = vmatprep.mubr.f32.mxu0 0.0
    %5492 = vmatmul.mubr.f32.gmra.mrb[0].mxu0 %v5180
    %v5493 = vpop.f32.mrb[0].mxu0
    %v5494 = vadd.f32 %v5093, %v5493
    %v5495 = vpop.f32.mrb[0].mxu0
    %5496 = vmatprep.mubr.f32.mxu0 0.0
    %5497 = vmatmul.mubr.f32.gmra.mrb[0].mxu0 %v5183
    %v5498 = vpop.f32.mrb[0].mxu0
    %v5499 = vadd.f32 %v5093, %v5498
    %v5500 = vpop.f32.mrb[0].mxu0
    %5501 = vmatprep.mubr.f32.mxu0 0.0
    %5502 = vmatmul.mubr.f32.gmra.mrb[0].mxu0 %v5186
    %v5503 = vpop.f32.mrb[0].mxu0
    %v5504 = vadd.f32 %v5093, %v5503
    %v5505 = vpop.f32.mrb[0].mxu0
    %5506 = vmatprep.mubr.f32.mxu0 0.0
    %5507 = vmatmul.mubr.f32.gmra.mrb[0].mxu0 %v5189
    %v5508 = vpop.f32.mrb[0].mxu0
    %v5509 = vadd.f32 %v5093, %v5508
    %v5510 = vpop.f32.mrb[0].mxu0
    %5511 = vmatprep.mubr.f32.mxu0 0.0
    %5512 = vmatmul.mubr.f32.gmra.mrb[0].mxu0 %v5192
    %v5513 = vpop.f32.mrb[0].mxu0
    %v5514 = vadd.f32 %v5093, %v5513
    %v5515 = vpop.f32.mrb[0].mxu0
    %5516 = vmatprep.mubr.f32.mxu0 0.0
    %5517 = vmatmul.mubr.f32.gmra.mrb[0].mxu0 %v5195
    %v5518 = vpop.f32.mrb[0].mxu0
    %v5519 = vadd.f32 %v5093, %v5518
    %v5520 = vpop.f32.mrb[0].mxu0
    %5521 = vmatprep.mubr.f32.mxu0 0.0
    %5522 = vmatmul.mubr.f32.gmra.mrb[0].mxu0 %v5198
    %v5523 = vpop.f32.mrb[0].mxu0
    %v5524 = vadd.f32 %v5093, %v5523
    %v5525 = vpop.f32.mrb[0].mxu0
    %5526 = vmatprep.mubr.f32.mxu0 0.0
    %5527 = vmatmul.mubr.f32.gmra.mrb[0].mxu0 %v5201
    %v5528 = vpop.f32.mrb[0].mxu0
    %v5529 = vadd.f32 %v5093, %v5528
    %v5530 = vpop.f32.mrb[0].mxu0
    %5531 = vmatprep.mubr.f32.mxu0 0.0
    %5532 = vmatmul.mubr.f32.gmra.mrb[0].mxu0 %v5204
    %v5533 = vpop.f32.mrb[0].mxu0
    %v5534 = vadd.f32 %v5093, %v5533
    %v5535 = vpop.f32.mrb[0].mxu0
    %5536 = vmatprep.mubr.f32.mxu0 0.0
    %5537 = vmatmul.mubr.f32.gmra.mrb[0].mxu0 %v5207
    %v5538 = vpop.f32.mrb[0].mxu0
    %v5539 = vadd.f32 %v5093, %v5538
    %v5540 = vpop.f32.mrb[0].mxu0
    %5541 = vmatprep.mubr.f32.mxu0 0.0
    %5542 = vmatmul.mubr.f32.gmra.mrb[0].mxu0 %v5210
    %v5543 = vpop.f32.mrb[0].mxu0
    %v5544 = vadd.f32 %v5093, %v5543
    %v5545 = vpop.f32.mrb[0].mxu0
    %5546 = vmatprep.mubr.f32.mxu0 0.0
    %5547 = vmatmul.mubr.f32.gmra.mrb[0].mxu0 %v5213
    %v5548 = vpop.f32.mrb[0].mxu0
    %v5549 = vadd.f32 %v5093, %v5548
    %v5550 = vpop.f32.mrb[0].mxu0
    %5551 = vmatprep.mubr.f32.mxu0 0.0
    %5552 = vmatmul.mubr.f32.gmra.mrb[0].mxu0 %v5216
    %v5553 = vpop.f32.mrb[0].mxu0
    %v5554 = vadd.f32 %v5093, %v5553
    %v5555 = vpop.f32.mrb[0].mxu0
    %5556 = vmatprep.mubr.f32.mxu0 0.0
    %5557 = vmatmul.mubr.f32.gmra.mrb[0].mxu0 %v5219
    %v5558 = vpop.f32.mrb[0].mxu0
    %v5559 = vadd.f32 %v5093, %v5558
    %v5560 = vpop.f32.mrb[0].mxu0
    %5561 = vmatprep.mubr.f32.mxu0 0.0
    %5562 = vmatmul.mubr.f32.gmra.mrb[0].mxu0 %v5222
    %v5563 = vpop.f32.mrb[0].mxu0
    %v5564 = vadd.f32 %v5093, %v5563
    %v5565 = vpop.f32.mrb[0].mxu0
    %5566 = vmatprep.mubr.f32.mxu0 0.0
    %5567 = vmatmul.mubr.f32.gmra.mrb[0].mxu0 %v5225
    %v5568 = vpop.f32.mrb[0].mxu0
    %v5569 = vadd.f32 %v5093, %v5568
    %v5570 = vpop.f32.mrb[0].mxu0
    %5571 = vmatprep.mubr.f32.mxu0 0.0
    %5572 = vmatmul.mubr.f32.gmra.mrb[0].mxu0 %v5228
    %v5573 = vpop.f32.mrb[0].mxu0
    %v5574 = vadd.f32 %v5093, %v5573
    %v5575 = vpop.f32.mrb[0].mxu0
    %5576 = vmatprep.mubr.f32.mxu0 0.0
    %5577 = vmatmul.mubr.f32.gmra.mrb[0].mxu0 %v5231
    %v5578 = vpop.f32.mrb[0].mxu0
    %v5579 = vadd.f32 %v5093, %v5578
    %v5580 = vpop.f32.mrb[0].mxu0
    %5581 = vmatprep.mubr.f32.mxu0 0.0
    %5582 = vmatmul.mubr.f32.gmra.mrb[0].mxu0 %v5234
    %v5583 = vpop.f32.mrb[0].mxu0
    %v5584 = vadd.f32 %v5093, %v5583
    %v5585 = vpop.f32.mrb[0].mxu0
    %5586 = vmatprep.mubr.f32.mxu0 0.0
    %5587 = vmatmul.mubr.f32.gmra.mrb[0].mxu0 %v5237
    %v5588 = vpop.f32.mrb[0].mxu0
    %v5589 = vadd.f32 %v5093, %v5588
    %v5590 = vpop.f32.mrb[0].mxu0
    %5591 = vmatprep.mubr.f32.mxu0 0.0
    %5592 = vmatmul.mubr.f32.gmra.mrb[0].mxu0 %v5240
    %v5593 = vpop.f32.mrb[0].mxu0
    %v5594 = vadd.f32 %v5093, %v5593
    %v5595 = vpop.f32.mrb[0].mxu0
    %5596 = vmatprep.mubr.f32.mxu0 0.0
    %5597 = vmatmul.mubr.f32.gmra.mrb[0].mxu0 %v5243
    %v5598 = vpop.f32.mrb[0].mxu0
    %v5599 = vadd.f32 %v5093, %v5598
    %v5600 = vpop.f32.mrb[0].mxu0
    %5601 = vmatprep.mubr.f32.mxu0 0.0
    %5602 = vmatmul.mubr.f32.gmra.mrb[0].mxu0 %v5246
    %v5603 = vpop.f32.mrb[0].mxu0
    %v5604 = vadd.f32 %v5093, %v5603
    %v5605 = vpop.f32.mrb[0].mxu0
    %5606 = vmatprep.mubr.f32.mxu0 0.0
    %5607 = vmatmul.mubr.f32.gmra.mrb[0].mxu0 %v5249
    %v5608 = vpop.f32.mrb[0].mxu0
    %v5609 = vadd.f32 %v5093, %v5608
    %v5610 = vpop.f32.mrb[0].mxu0
    %5611 = vmatprep.mubr.f32.mxu0 0.0
    %5612 = vmatmul.mubr.f32.gmra.mrb[0].mxu0 %v5252
    %v5613 = vpop.f32.mrb[0].mxu0
    %v5614 = vadd.f32 %v5093, %v5613
    %v5615 = vpop.f32.mrb[0].mxu0
    %5616 = vmatprep.mubr.f32.mxu0 0.0
    %5617 = vmatmul.mubr.f32.gmra.mrb[0].mxu0 %v5255
    %v5618 = vpop.f32.mrb[0].mxu0
    %v5619 = vadd.f32 %v5093, %v5618
    %v5620 = vpop.f32.mrb[0].mxu0
    %5621 = vmatprep.mubr.f32.mxu0 0.0
    %5622 = vmatmul.mubr.f32.gmra.mrb[0].mxu0 %v5258
    %v5623 = vpop.f32.mrb[0].mxu0
    %v5624 = vadd.f32 %v5093, %v5623
    %v5625 = vpop.f32.mrb[0].mxu0
    %5626 = vmatprep.mubr.f32.mxu0 0.0
    %5627 = vmatmul.mubr.f32.gmra.mrb[0].mxu0 %v5261
    %v5628 = vpop.f32.mrb[0].mxu0
    %v5629 = vadd.f32 %v5093, %v5628
    %v5630 = vpop.f32.mrb[0].mxu0
    %5631 = vmatprep.mubr.f32.mxu0 0.0
    %5632 = vmatmul.mubr.f32.gmra.mrb[0].mxu0 %v5264
    %v5633 = vpop.f32.mrb[0].mxu0
    %v5634 = vadd.f32 %v5093, %v5633
    %v5635 = vpop.f32.mrb[0].mxu0
    %5636 = vmatprep.mubr.f32.mxu0 0.0
    %5637 = vmatmul.mubr.f32.gmra.mrb[0].mxu0 %v5267
    %v5638 = vpop.f32.mrb[0].mxu0
    %v5639 = vadd.f32 %v5093, %v5638
    %v5640 = vpop.f32.mrb[0].mxu0
    %5641 = vmatprep.mubr.f32.mxu0 0.0
    %5642 = vmatmul.mubr.f32.gmra.mrb[0].mxu0 %v5270
    %v5643 = vpop.f32.mrb[0].mxu0
    %v5644 = vadd.f32 %v5093, %v5643
    %v5645 = vpop.f32.mrb[0].mxu0
    %5646 = vmatprep.mubr.f32.mxu0 0.0
    %5647 = vmatmul.mubr.f32.gmra.mrb[0].mxu0 %v5273
    %v5648 = vpop.f32.mrb[0].mxu0
    %v5649 = vadd.f32 %v5093, %v5648
    %v5650 = vpop.f32.mrb[0].mxu0
    %5651 = vmatprep.mubr.f32.mxu0 0.0
    %5652 = vmatmul.mubr.f32.gmra.mrb[0].mxu0 %v5276
    %v5653 = vpop.f32.mrb[0].mxu0
    %v5654 = vadd.f32 %v5093, %v5653
    %v5655 = vpop.f32.mrb[0].mxu0
    %5656 = vmatprep.mubr.f32.mxu0 0.0
    %5657 = vmatmul.mubr.f32.gmra.mrb[0].mxu0 %v5279
    %v5658 = vpop.f32.mrb[0].mxu0
    %v5659 = vadd.f32 %v5093, %v5658
    %v5660 = vpop.f32.mrb[0].mxu0
    %5661 = vmatprep.mubr.f32.mxu0 0.0
    %5662 = vmatmul.mubr.f32.gmra.mrb[0].mxu0 %v5282
    %v5663 = vpop.f32.mrb[0].mxu0
    %v5664 = vadd.f32 %v5093, %v5663
    %v5665 = vpop.f32.mrb[0].mxu0
    %5666 = vmatprep.mubr.f32.mxu0 0.0
    %5667 = vmatmul.mubr.f32.gmra.mrb[0].mxu0 %v5285
    %v5668 = vpop.f32.mrb[0].mxu0
    %v5669 = vadd.f32 %v5093, %v5668
    %v5670 = vpop.f32.mrb[0].mxu0
    %5671 = vdwg.mxu0
    %v5672 = vld [vmem:[%s15] sm:$0xff]
    %v5673 = vld [vmem:[%s15 + $0x8] sm:$0xff]
    %v5674 = vld [vmem:[%s16] sm:$0x1]
    %v5676 = vlaneseq
    %v5677 = vshrl.u32 %v5676, 7
    %v5678 = vsub.s32 0, %v5677
    %v5679 = vrot.slane %v5674, %v5678
    %5681 = vmatprep.subr.mxu0 0.0
    %5682 = vmatpush1.msra.mxu0 %v5672
    %5683 = vmatprep.subr.mxu0 0.0
    %5684 = vmatpush1.msra.mxu0 %v5673
    %5685 = vmatprep.subr.mxu0 0.0
    %5686 = vmatpush1.msra.mxu0 0.0
    %5687 = vmatprep.subr.mxu0 0.0
    %5688 = vmatpush1.msra.mxu0 0.0
    %5689 = vmatprep.subr.mxu0 0.0
    %5690 = vmatpush1.msra.mxu0 0.0
    %5691 = vmatprep.subr.mxu0 0.0
    %5692 = vmatpush1.msra.mxu0 0.0
    %5693 = vmatprep.subr.mxu0 0.0
    %5694 = vmatpush1.msra.mxu0 0.0
    %5695 = vmatprep.subr.mxu0 0.0
    %5696 = vmatpush1.msra.mxu0 0.0
    %5697 = vmatprep.subr.mxu0 0.0
    %5698 = vmatpush1.msra.mxu0 0.0
    %5699 = vmatprep.subr.mxu0 0.0
    %5700 = vmatpush1.msra.mxu0 0.0
    %5701 = vmatprep.subr.mxu0 0.0
    %5702 = vmatpush1.msra.mxu0 0.0
    %5703 = vmatprep.subr.mxu0 0.0
    %5704 = vmatpush1.msra.mxu0 0.0
    %5705 = vmatprep.subr.mxu0 0.0
    %5706 = vmatpush1.msra.mxu0 0.0
    %5707 = vmatprep.subr.mxu0 0.0
    %5708 = vmatpush1.msra.mxu0 0.0
    %5709 = vmatprep.subr.mxu0 0.0
    %5710 = vmatpush1.msra.mxu0 0.0
    %5711 = vmatprep.subr.mxu0 0.0
    %5712 = vmatpush1.msra.mxu0 0.0
    %5713 = vmatprep.subr.mxu0 0.0
    %5714 = vmatpush1.msra.mxu0 0.0
    %5715 = vmatprep.subr.mxu0 0.0
    %5716 = vmatpush1.msra.mxu0 0.0
    %5717 = vmatprep.subr.mxu0 0.0
    %5718 = vmatpush1.msra.mxu0 0.0
    %5719 = vmatprep.subr.mxu0 0.0
    %5720 = vmatpush1.msra.mxu0 0.0
    %5721 = vmatprep.subr.mxu0 0.0
    %5722 = vmatpush1.msra.mxu0 0.0
    %5723 = vmatprep.subr.mxu0 0.0
    %5724 = vmatpush1.msra.mxu0 0.0
    %5725 = vmatprep.subr.mxu0 0.0
    %5726 = vmatpush1.msra.mxu0 0.0
    %5727 = vmatprep.subr.mxu0 0.0
    %5728 = vmatpush1.msra.mxu0 0.0
    %5729 = vmatprep.subr.mxu0 0.0
    %5730 = vmatpush1.msra.mxu0 0.0
    %5731 = vmatprep.subr.mxu0 0.0
    %5732 = vmatpush1.msra.mxu0 0.0
    %5733 = vmatprep.subr.mxu0 0.0
    %5734 = vmatpush1.msra.mxu0 0.0
    %5735 = vmatprep.subr.mxu0 0.0
    %5736 = vmatpush1.msra.mxu0 0.0
    %5737 = vmatprep.subr.mxu0 0.0
    %5738 = vmatpush1.msra.mxu0 0.0
    %5739 = vmatprep.subr.mxu0 0.0
    %5740 = vmatpush1.msra.mxu0 0.0
    %5741 = vmatprep.subr.mxu0 0.0
    %5742 = vmatpush1.msra.mxu0 0.0
    %5743 = vmatprep.subr.mxu0 0.0
    %5744 = vmatpush1.msra.mxu0 0.0
    %5745 = vmatprep.mubr.f32.mxu0 0.0
    %5746 = vmatmul.mubr.f32.gmra.mrb[0].mxu0 %v5096
    %v5747 = vpop.f32.mrb[0].mxu0
    %v5748 = vadd.f32 %v5679, %v5747
    %v5749 = vpop.f32.mrb[0].mxu0
    %5750 = vmatprep.mubr.f32.mxu0 0.0
    %5751 = vmatmul.mubr.f32.gmra.mrb[0].mxu0 %v5099
    %v5752 = vpop.f32.mrb[0].mxu0
    %v5753 = vadd.f32 %v5679, %v5752
    %v5754 = vpop.f32.mrb[0].mxu0
    %5755 = vmatprep.mubr.f32.mxu0 0.0
    %5756 = vmatmul.mubr.f32.gmra.mrb[0].mxu0 %v5102
    %v5757 = vpop.f32.mrb[0].mxu0
    %v5758 = vadd.f32 %v5679, %v5757
    %v5759 = vpop.f32.mrb[0].mxu0
    %5760 = vmatprep.mubr.f32.mxu0 0.0
    %5761 = vmatmul.mubr.f32.gmra.mrb[0].mxu0 %v5105
    %v5762 = vpop.f32.mrb[0].mxu0
    %v5763 = vadd.f32 %v5679, %v5762
    %v5764 = vpop.f32.mrb[0].mxu0
    %5765 = vmatprep.mubr.f32.mxu0 0.0
    %5766 = vmatmul.mubr.f32.gmra.mrb[0].mxu0 %v5108
    %v5767 = vpop.f32.mrb[0].mxu0
    %v5768 = vadd.f32 %v5679, %v5767
    %v5769 = vpop.f32.mrb[0].mxu0
    %5770 = vmatprep.mubr.f32.mxu0 0.0
    %5771 = vmatmul.mubr.f32.gmra.mrb[0].mxu0 %v5111
    %v5772 = vpop.f32.mrb[0].mxu0
    %v5773 = vadd.f32 %v5679, %v5772
    %v5774 = vpop.f32.mrb[0].mxu0
    %5775 = vmatprep.mubr.f32.mxu0 0.0
    %5776 = vmatmul.mubr.f32.gmra.mrb[0].mxu0 %v5114
    %v5777 = vpop.f32.mrb[0].mxu0
    %v5778 = vadd.f32 %v5679, %v5777
    %v5779 = vpop.f32.mrb[0].mxu0
    %5780 = vmatprep.mubr.f32.mxu0 0.0
    %5781 = vmatmul.mubr.f32.gmra.mrb[0].mxu0 %v5117
    %v5782 = vpop.f32.mrb[0].mxu0
    %v5783 = vadd.f32 %v5679, %v5782
    %v5784 = vpop.f32.mrb[0].mxu0
    %5785 = vmatprep.mubr.f32.mxu0 0.0
    %5786 = vmatmul.mubr.f32.gmra.mrb[0].mxu0 %v5120
    %v5787 = vpop.f32.mrb[0].mxu0
    %v5788 = vadd.f32 %v5679, %v5787
    %v5789 = vpop.f32.mrb[0].mxu0
    %5790 = vmatprep.mubr.f32.mxu0 0.0
    %5791 = vmatmul.mubr.f32.gmra.mrb[0].mxu0 %v5123
    %v5792 = vpop.f32.mrb[0].mxu0
    %v5793 = vadd.f32 %v5679, %v5792
    %v5794 = vpop.f32.mrb[0].mxu0
    %5795 = vmatprep.mubr.f32.mxu0 0.0
    %5796 = vmatmul.mubr.f32.gmra.mrb[0].mxu0 %v5126
    %v5797 = vpop.f32.mrb[0].mxu0
    %v5798 = vadd.f32 %v5679, %v5797
    %v5799 = vpop.f32.mrb[0].mxu0
    %5800 = vmatprep.mubr.f32.mxu0 0.0
    %5801 = vmatmul.mubr.f32.gmra.mrb[0].mxu0 %v5129
    %v5802 = vpop.f32.mrb[0].mxu0
    %v5803 = vadd.f32 %v5679, %v5802
    %v5804 = vpop.f32.mrb[0].mxu0
    %5805 = vmatprep.mubr.f32.mxu0 0.0
    %5806 = vmatmul.mubr.f32.gmra.mrb[0].mxu0 %v5132
    %v5807 = vpop.f32.mrb[0].mxu0
    %v5808 = vadd.f32 %v5679, %v5807
    %v5809 = vpop.f32.mrb[0].mxu0
    %5810 = vmatprep.mubr.f32.mxu0 0.0
    %5811 = vmatmul.mubr.f32.gmra.mrb[0].mxu0 %v5135
    %v5812 = vpop.f32.mrb[0].mxu0
    %v5813 = vadd.f32 %v5679, %v5812
    %v5814 = vpop.f32.mrb[0].mxu0
    %5815 = vmatprep.mubr.f32.mxu0 0.0
    %5816 = vmatmul.mubr.f32.gmra.mrb[0].mxu0 %v5138
    %v5817 = vpop.f32.mrb[0].mxu0
    %v5818 = vadd.f32 %v5679, %v5817
    %v5819 = vpop.f32.mrb[0].mxu0
    %5820 = vmatprep.mubr.f32.mxu0 0.0
    %5821 = vmatmul.mubr.f32.gmra.mrb[0].mxu0 %v5141
    %v5822 = vpop.f32.mrb[0].mxu0
    %v5823 = vadd.f32 %v5679, %v5822
    %v5824 = vpop.f32.mrb[0].mxu0
    %5825 = vmatprep.mubr.f32.mxu0 0.0
    %5826 = vmatmul.mubr.f32.gmra.mrb[0].mxu0 %v5144
    %v5827 = vpop.f32.mrb[0].mxu0
    %v5828 = vadd.f32 %v5679, %v5827
    %v5829 = vpop.f32.mrb[0].mxu0
    %5830 = vmatprep.mubr.f32.mxu0 0.0
    %5831 = vmatmul.mubr.f32.gmra.mrb[0].mxu0 %v5147
    %v5832 = vpop.f32.mrb[0].mxu0
    %v5833 = vadd.f32 %v5679, %v5832
    %v5834 = vpop.f32.mrb[0].mxu0
    %5835 = vmatprep.mubr.f32.mxu0 0.0
    %5836 = vmatmul.mubr.f32.gmra.mrb[0].mxu0 %v5150
    %v5837 = vpop.f32.mrb[0].mxu0
    %v5838 = vadd.f32 %v5679, %v5837
    %v5839 = vpop.f32.mrb[0].mxu0
    %5840 = vmatprep.mubr.f32.mxu0 0.0
    %5841 = vmatmul.mubr.f32.gmra.mrb[0].mxu0 %v5153
    %v5842 = vpop.f32.mrb[0].mxu0
    %v5843 = vadd.f32 %v5679, %v5842
    %v5844 = vpop.f32.mrb[0].mxu0
    %5845 = vmatprep.mubr.f32.mxu0 0.0
    %5846 = vmatmul.mubr.f32.gmra.mrb[0].mxu0 %v5156
    %v5847 = vpop.f32.mrb[0].mxu0
    %v5848 = vadd.f32 %v5679, %v5847
    %v5849 = vpop.f32.mrb[0].mxu0
    %5850 = vmatprep.mubr.f32.mxu0 0.0
    %5851 = vmatmul.mubr.f32.gmra.mrb[0].mxu0 %v5159
    %v5852 = vpop.f32.mrb[0].mxu0
    %v5853 = vadd.f32 %v5679, %v5852
    %v5854 = vpop.f32.mrb[0].mxu0
    %5855 = vmatprep.mubr.f32.mxu0 0.0
    %5856 = vmatmul.mubr.f32.gmra.mrb[0].mxu0 %v5162
    %v5857 = vpop.f32.mrb[0].mxu0
    %v5858 = vadd.f32 %v5679, %v5857
    %v5859 = vpop.f32.mrb[0].mxu0
    %5860 = vmatprep.mubr.f32.mxu0 0.0
    %5861 = vmatmul.mubr.f32.gmra.mrb[0].mxu0 %v5165
    %v5862 = vpop.f32.mrb[0].mxu0
    %v5863 = vadd.f32 %v5679, %v5862
    %v5864 = vpop.f32.mrb[0].mxu0
    %5865 = vmatprep.mubr.f32.mxu0 0.0
    %5866 = vmatmul.mubr.f32.gmra.mrb[0].mxu0 %v5168
    %v5867 = vpop.f32.mrb[0].mxu0
    %v5868 = vadd.f32 %v5679, %v5867
    %v5869 = vpop.f32.mrb[0].mxu0
    %5870 = vmatprep.mubr.f32.mxu0 0.0
    %5871 = vmatmul.mubr.f32.gmra.mrb[0].mxu0 %v5171
    %v5872 = vpop.f32.mrb[0].mxu0
    %v5873 = vadd.f32 %v5679, %v5872
    %v5874 = vpop.f32.mrb[0].mxu0
    %5875 = vmatprep.mubr.f32.mxu0 0.0
    %5876 = vmatmul.mubr.f32.gmra.mrb[0].mxu0 %v5174
    %v5877 = vpop.f32.mrb[0].mxu0
    %v5878 = vadd.f32 %v5679, %v5877
    %v5879 = vpop.f32.mrb[0].mxu0
    %5880 = vmatprep.mubr.f32.mxu0 0.0
    %5881 = vmatmul.mubr.f32.gmra.mrb[0].mxu0 %v5177
    %v5882 = vpop.f32.mrb[0].mxu0
    %v5883 = vadd.f32 %v5679, %v5882
    %v5884 = vpop.f32.mrb[0].mxu0
    %5885 = vmatprep.mubr.f32.mxu0 0.0
    %5886 = vmatmul.mubr.f32.gmra.mrb[0].mxu0 %v5180
    %v5887 = vpop.f32.mrb[0].mxu0
    %v5888 = vadd.f32 %v5679, %v5887
    %v5889 = vpop.f32.mrb[0].mxu0
    %5890 = vmatprep.mubr.f32.mxu0 0.0
    %5891 = vmatmul.mubr.f32.gmra.mrb[0].mxu0 %v5183
    %v5892 = vpop.f32.mrb[0].mxu0
    %v5893 = vadd.f32 %v5679, %v5892
    %v5894 = vpop.f32.mrb[0].mxu0
    %5895 = vmatprep.mubr.f32.mxu0 0.0
    %5896 = vmatmul.mubr.f32.gmra.mrb[0].mxu0 %v5186
    %v5897 = vpop.f32.mrb[0].mxu0
    %v5898 = vadd.f32 %v5679, %v5897
    %v5899 = vpop.f32.mrb[0].mxu0
    %5900 = vmatprep.mubr.f32.mxu0 0.0
    %5901 = vmatmul.mubr.f32.gmra.mrb[0].mxu0 %v5189
    %v5902 = vpop.f32.mrb[0].mxu0
    %v5903 = vadd.f32 %v5679, %v5902
    %v5904 = vpop.f32.mrb[0].mxu0
    %5905 = vmatprep.mubr.f32.mxu0 0.0
    %5906 = vmatmul.mubr.f32.gmra.mrb[0].mxu0 %v5192
    %v5907 = vpop.f32.mrb[0].mxu0
    %v5908 = vadd.f32 %v5679, %v5907
    %v5909 = vpop.f32.mrb[0].mxu0
    %5910 = vmatprep.mubr.f32.mxu0 0.0
    %5911 = vmatmul.mubr.f32.gmra.mrb[0].mxu0 %v5195
    %v5912 = vpop.f32.mrb[0].mxu0
    %v5913 = vadd.f32 %v5679, %v5912
    %v5914 = vpop.f32.mrb[0].mxu0
    %5915 = vmatprep.mubr.f32.mxu0 0.0
    %5916 = vmatmul.mubr.f32.gmra.mrb[0].mxu0 %v5198
    %v5917 = vpop.f32.mrb[0].mxu0
    %v5918 = vadd.f32 %v5679, %v5917
    %v5919 = vpop.f32.mrb[0].mxu0
    %5920 = vmatprep.mubr.f32.mxu0 0.0
    %5921 = vmatmul.mubr.f32.gmra.mrb[0].mxu0 %v5201
    %v5922 = vpop.f32.mrb[0].mxu0
    %v5923 = vadd.f32 %v5679, %v5922
    %v5924 = vpop.f32.mrb[0].mxu0
    %5925 = vmatprep.mubr.f32.mxu0 0.0
    %5926 = vmatmul.mubr.f32.gmra.mrb[0].mxu0 %v5204
    %v5927 = vpop.f32.mrb[0].mxu0
    %v5928 = vadd.f32 %v5679, %v5927
    %v5929 = vpop.f32.mrb[0].mxu0
    %5930 = vmatprep.mubr.f32.mxu0 0.0
    %5931 = vmatmul.mubr.f32.gmra.mrb[0].mxu0 %v5207
    %v5932 = vpop.f32.mrb[0].mxu0
    %v5933 = vadd.f32 %v5679, %v5932
    %v5934 = vpop.f32.mrb[0].mxu0
    %5935 = vmatprep.mubr.f32.mxu0 0.0
    %5936 = vmatmul.mubr.f32.gmra.mrb[0].mxu0 %v5210
    %v5937 = vpop.f32.mrb[0].mxu0
    %v5938 = vadd.f32 %v5679, %v5937
    %v5939 = vpop.f32.mrb[0].mxu0
    %5940 = vmatprep.mubr.f32.mxu0 0.0
    %5941 = vmatmul.mubr.f32.gmra.mrb[0].mxu0 %v5213
    %v5942 = vpop.f32.mrb[0].mxu0
    %v5943 = vadd.f32 %v5679, %v5942
    %v5944 = vpop.f32.mrb[0].mxu0
    %5945 = vmatprep.mubr.f32.mxu0 0.0
    %5946 = vmatmul.mubr.f32.gmra.mrb[0].mxu0 %v5216
    %v5947 = vpop.f32.mrb[0].mxu0
    %v5948 = vadd.f32 %v5679, %v5947
    %v5949 = vpop.f32.mrb[0].mxu0
    %5950 = vmatprep.mubr.f32.mxu0 0.0
    %5951 = vmatmul.mubr.f32.gmra.mrb[0].mxu0 %v5219
    %v5952 = vpop.f32.mrb[0].mxu0
    %v5953 = vadd.f32 %v5679, %v5952
    %v5954 = vpop.f32.mrb[0].mxu0
    %5955 = vmatprep.mubr.f32.mxu0 0.0
    %5956 = vmatmul.mubr.f32.gmra.mrb[0].mxu0 %v5222
    %v5957 = vpop.f32.mrb[0].mxu0
    %v5958 = vadd.f32 %v5679, %v5957
    %v5959 = vpop.f32.mrb[0].mxu0
    %5960 = vmatprep.mubr.f32.mxu0 0.0
    %5961 = vmatmul.mubr.f32.gmra.mrb[0].mxu0 %v5225
    %v5962 = vpop.f32.mrb[0].mxu0
    %v5963 = vadd.f32 %v5679, %v5962
    %v5964 = vpop.f32.mrb[0].mxu0
    %5965 = vmatprep.mubr.f32.mxu0 0.0
    %5966 = vmatmul.mubr.f32.gmra.mrb[0].mxu0 %v5228
    %v5967 = vpop.f32.mrb[0].mxu0
    %v5968 = vadd.f32 %v5679, %v5967
    %v5969 = vpop.f32.mrb[0].mxu0
    %5970 = vmatprep.mubr.f32.mxu0 0.0
    %5971 = vmatmul.mubr.f32.gmra.mrb[0].mxu0 %v5231
    %v5972 = vpop.f32.mrb[0].mxu0
    %v5973 = vadd.f32 %v5679, %v5972
    %v5974 = vpop.f32.mrb[0].mxu0
    %5975 = vmatprep.mubr.f32.mxu0 0.0
    %5976 = vmatmul.mubr.f32.gmra.mrb[0].mxu0 %v5234
    %v5977 = vpop.f32.mrb[0].mxu0
    %v5978 = vadd.f32 %v5679, %v5977
    %v5979 = vpop.f32.mrb[0].mxu0
    %5980 = vmatprep.mubr.f32.mxu0 0.0
    %5981 = vmatmul.mubr.f32.gmra.mrb[0].mxu0 %v5237
    %v5982 = vpop.f32.mrb[0].mxu0
    %v5983 = vadd.f32 %v5679, %v5982
    %v5984 = vpop.f32.mrb[0].mxu0
    %5985 = vmatprep.mubr.f32.mxu0 0.0
    %5986 = vmatmul.mubr.f32.gmra.mrb[0].mxu0 %v5240
    %v5987 = vpop.f32.mrb[0].mxu0
    %v5988 = vadd.f32 %v5679, %v5987
    %v5989 = vpop.f32.mrb[0].mxu0
    %5990 = vmatprep.mubr.f32.mxu0 0.0
    %5991 = vmatmul.mubr.f32.gmra.mrb[0].mxu0 %v5243
    %v5992 = vpop.f32.mrb[0].mxu0
    %v5993 = vadd.f32 %v5679, %v5992
    %v5994 = vpop.f32.mrb[0].mxu0
    %5995 = vmatprep.mubr.f32.mxu0 0.0
    %5996 = vmatmul.mubr.f32.gmra.mrb[0].mxu0 %v5246
    %v5997 = vpop.f32.mrb[0].mxu0
    %v5998 = vadd.f32 %v5679, %v5997
    %v5999 = vpop.f32.mrb[0].mxu0
    %6000 = vmatprep.mubr.f32.mxu0 0.0
    %6001 = vmatmul.mubr.f32.gmra.mrb[0].mxu0 %v5249
    %v6002 = vpop.f32.mrb[0].mxu0
    %v6003 = vadd.f32 %v5679, %v6002
    %v6004 = vpop.f32.mrb[0].mxu0
    %6005 = vmatprep.mubr.f32.mxu0 0.0
    %6006 = vmatmul.mubr.f32.gmra.mrb[0].mxu0 %v5252
    %v6007 = vpop.f32.mrb[0].mxu0
    %v6008 = vadd.f32 %v5679, %v6007
    %v6009 = vpop.f32.mrb[0].mxu0
    %6010 = vmatprep.mubr.f32.mxu0 0.0
    %6011 = vmatmul.mubr.f32.gmra.mrb[0].mxu0 %v5255
    %v6012 = vpop.f32.mrb[0].mxu0
    %v6013 = vadd.f32 %v5679, %v6012
    %v6014 = vpop.f32.mrb[0].mxu0
    %6015 = vmatprep.mubr.f32.mxu0 0.0
    %6016 = vmatmul.mubr.f32.gmra.mrb[0].mxu0 %v5258
    %v6017 = vpop.f32.mrb[0].mxu0
    %v6018 = vadd.f32 %v5679, %v6017
    %v6019 = vpop.f32.mrb[0].mxu0
    %6020 = vmatprep.mubr.f32.mxu0 0.0
    %6021 = vmatmul.mubr.f32.gmra.mrb[0].mxu0 %v5261
    %v6022 = vpop.f32.mrb[0].mxu0
    %v6023 = vadd.f32 %v5679, %v6022
    %v6024 = vpop.f32.mrb[0].mxu0
    %6025 = vmatprep.mubr.f32.mxu0 0.0
    %6026 = vmatmul.mubr.f32.gmra.mrb[0].mxu0 %v5264
    %v6027 = vpop.f32.mrb[0].mxu0
    %v6028 = vadd.f32 %v5679, %v6027
    %v6029 = vpop.f32.mrb[0].mxu0
    %6030 = vmatprep.mubr.f32.mxu0 0.0
    %6031 = vmatmul.mubr.f32.gmra.mrb[0].mxu0 %v5267
    %v6032 = vpop.f32.mrb[0].mxu0
    %v6033 = vadd.f32 %v5679, %v6032
    %v6034 = vpop.f32.mrb[0].mxu0
    %6035 = vmatprep.mubr.f32.mxu0 0.0
    %6036 = vmatmul.mubr.f32.gmra.mrb[0].mxu0 %v5270
    %v6037 = vpop.f32.mrb[0].mxu0
    %v6038 = vadd.f32 %v5679, %v6037
    %v6039 = vpop.f32.mrb[0].mxu0
    %6040 = vmatprep.mubr.f32.mxu0 0.0
    %6041 = vmatmul.mubr.f32.gmra.mrb[0].mxu0 %v5273
    %v6042 = vpop.f32.mrb[0].mxu0
    %v6043 = vadd.f32 %v5679, %v6042
    %v6044 = vpop.f32.mrb[0].mxu0
    %6045 = vmatprep.mubr.f32.mxu0 0.0
    %6046 = vmatmul.mubr.f32.gmra.mrb[0].mxu0 %v5276
    %v6047 = vpop.f32.mrb[0].mxu0
    %v6048 = vadd.f32 %v5679, %v6047
    %v6049 = vpop.f32.mrb[0].mxu0
    %6050 = vmatprep.mubr.f32.mxu0 0.0
    %6051 = vmatmul.mubr.f32.gmra.mrb[0].mxu0 %v5279
    %v6052 = vpop.f32.mrb[0].mxu0
    %v6053 = vadd.f32 %v5679, %v6052
    %v6054 = vpop.f32.mrb[0].mxu0
    %6055 = vmatprep.mubr.f32.mxu0 0.0
    %6056 = vmatmul.mubr.f32.gmra.mrb[0].mxu0 %v5282
    %v6057 = vpop.f32.mrb[0].mxu0
    %v6058 = vadd.f32 %v5679, %v6057
    %v6059 = vpop.f32.mrb[0].mxu0
    %6060 = vmatprep.mubr.f32.mxu0 0.0
    %6061 = vmatmul.mubr.f32.gmra.mrb[0].mxu0 %v5285
    %v6062 = vpop.f32.mrb[0].mxu0
    %v6063 = vadd.f32 %v5679, %v6062
    %v6064 = vpop.f32.mrb[0].mxu0
    %6065 = vdwg.mxu0
    %v6066 = vmul.f32 %v5354, 0.6
    %v6067 = vmul.f32 %v5359, 0.6
    %v6068 = vmul.f32 %v5364, 0.6
    %v6069 = vmul.f32 %v5369, 0.6
    %v6070 = vmul.f32 %v5374, 0.6
    %v6071 = vmul.f32 %v5379, 0.6
    %v6072 = vmul.f32 %v5384, 0.6
    %v6073 = vmul.f32 %v5389, 0.6
    %v6074 = vmul.f32 %v5394, 0.6
    %v6075 = vmul.f32 %v5399, 0.6
    %v6076 = vmul.f32 %v5404, 0.6
    %v6077 = vmul.f32 %v5409, 0.6
    %v6078 = vmul.f32 %v5414, 0.6
    %v6079 = vmul.f32 %v5419, 0.6
    %v6080 = vmul.f32 %v5424, 0.6
    %v6081 = vmul.f32 %v5429, 0.6
    %v6082 = vmul.f32 %v5434, 0.6
    %v6083 = vmul.f32 %v5439, 0.6
    %v6084 = vmul.f32 %v5444, 0.6
    %v6085 = vmul.f32 %v5449, 0.6
    %v6086 = vmul.f32 %v5454, 0.6
    %v6087 = vmul.f32 %v5459, 0.6
    %v6088 = vmul.f32 %v5464, 0.6
    %v6089 = vmul.f32 %v5469, 0.6
    %v6090 = vmul.f32 %v5474, 0.6
    %v6091 = vmul.f32 %v5479, 0.6
    %v6092 = vmul.f32 %v5484, 0.6
    %v6093 = vmul.f32 %v5489, 0.6
    %v6094 = vmul.f32 %v5494, 0.6
    %v6095 = vmul.f32 %v5499, 0.6
    %v6096 = vmul.f32 %v5504, 0.6
    %v6097 = vmul.f32 %v5509, 0.6
    %v6098 = vmul.f32 %v5514, 0.6
    %v6099 = vmul.f32 %v5519, 0.6
    %v6100 = vmul.f32 %v5524, 0.6
    %v6101 = vmul.f32 %v5529, 0.6
    %v6102 = vmul.f32 %v5534, 0.6
    %v6103 = vmul.f32 %v5539, 0.6
    %v6104 = vmul.f32 %v5544, 0.6
    %v6105 = vmul.f32 %v5549, 0.6
    %v6106 = vmul.f32 %v5554, 0.6
    %v6107 = vmul.f32 %v5559, 0.6
    %v6108 = vmul.f32 %v5564, 0.6
    %v6109 = vmul.f32 %v5569, 0.6
    %v6110 = vmul.f32 %v5574, 0.6
    %v6111 = vmul.f32 %v5579, 0.6
    %v6112 = vmul.f32 %v5584, 0.6
    %v6113 = vmul.f32 %v5589, 0.6
    %v6114 = vmul.f32 %v5594, 0.6
    %v6115 = vmul.f32 %v5599, 0.6
    %v6116 = vmul.f32 %v5604, 0.6
    %v6117 = vmul.f32 %v5609, 0.6
    %v6118 = vmul.f32 %v5614, 0.6
    %v6119 = vmul.f32 %v5619, 0.6
    %v6120 = vmul.f32 %v5624, 0.6
    %v6121 = vmul.f32 %v5629, 0.6
    %v6122 = vmul.f32 %v5634, 0.6
    %v6123 = vmul.f32 %v5639, 0.6
    %v6124 = vmul.f32 %v5644, 0.6
    %v6125 = vmul.f32 %v5649, 0.6
    %v6126 = vmul.f32 %v5654, 0.6
    %v6127 = vmul.f32 %v5659, 0.6
    %v6128 = vmul.f32 %v5664, 0.6
    %v6129 = vmul.f32 %v5669, 0.6
    %v6130 = vmul.f32 %v5354, 0.4
    %v6131 = vmul.f32 %v5359, 0.4
    %v6132 = vmul.f32 %v5364, 0.4
    %v6133 = vmul.f32 %v5369, 0.4
    %v6134 = vmul.f32 %v5374, 0.4
    %v6135 = vmul.f32 %v5379, 0.4
    %v6136 = vmul.f32 %v5384, 0.4
    %v6137 = vmul.f32 %v5389, 0.4
    %v6138 = vmul.f32 %v5394, 0.4
    %v6139 = vmul.f32 %v5399, 0.4
    %v6140 = vmul.f32 %v5404, 0.4
    %v6141 = vmul.f32 %v5409, 0.4
    %v6142 = vmul.f32 %v5414, 0.4
    %v6143 = vmul.f32 %v5419, 0.4
    %v6144 = vmul.f32 %v5424, 0.4
    %v6145 = vmul.f32 %v5429, 0.4
    %v6146 = vmul.f32 %v5434, 0.4
    %v6147 = vmul.f32 %v5439, 0.4
    %v6148 = vmul.f32 %v5444, 0.4
    %v6149 = vmul.f32 %v5449, 0.4
    %v6150 = vmul.f32 %v5454, 0.4
    %v6151 = vmul.f32 %v5459, 0.4
    %v6152 = vmul.f32 %v5464, 0.4
    %v6153 = vmul.f32 %v5469, 0.4
    %v6154 = vmul.f32 %v5474, 0.4
    %v6155 = vmul.f32 %v5479, 0.4
    %v6156 = vmul.f32 %v5484, 0.4
    %v6157 = vmul.f32 %v5489, 0.4
    %v6158 = vmul.f32 %v5494, 0.4
    %v6159 = vmul.f32 %v5499, 0.4
    %v6160 = vmul.f32 %v5504, 0.4
    %v6161 = vmul.f32 %v5509, 0.4
    %v6162 = vmul.f32 %v5514, 0.4
    %v6163 = vmul.f32 %v5519, 0.4
    %v6164 = vmul.f32 %v5524, 0.4
    %v6165 = vmul.f32 %v5529, 0.4
    %v6166 = vmul.f32 %v5534, 0.4
    %v6167 = vmul.f32 %v5539, 0.4
    %v6168 = vmul.f32 %v5544, 0.4
    %v6169 = vmul.f32 %v5549, 0.4
    %v6170 = vmul.f32 %v5554, 0.4
    %v6171 = vmul.f32 %v5559, 0.4
    %v6172 = vmul.f32 %v5564, 0.4
    %v6173 = vmul.f32 %v5569, 0.4
    %v6174 = vmul.f32 %v5574, 0.4
    %v6175 = vmul.f32 %v5579, 0.4
    %v6176 = vmul.f32 %v5584, 0.4
    %v6177 = vmul.f32 %v5589, 0.4
    %v6178 = vmul.f32 %v5594, 0.4
    %v6179 = vmul.f32 %v5599, 0.4
    %v6180 = vmul.f32 %v5604, 0.4
    %v6181 = vmul.f32 %v5609, 0.4
    %v6182 = vmul.f32 %v5614, 0.4
    %v6183 = vmul.f32 %v5619, 0.4
    %v6184 = vmul.f32 %v5624, 0.4
    %v6185 = vmul.f32 %v5629, 0.4
    %v6186 = vmul.f32 %v5634, 0.4
    %v6187 = vmul.f32 %v5639, 0.4
    %v6188 = vmul.f32 %v5644, 0.4
    %v6189 = vmul.f32 %v5649, 0.4
    %v6190 = vmul.f32 %v5654, 0.4
    %v6191 = vmul.f32 %v5659, 0.4
    %v6192 = vmul.f32 %v5664, 0.4
    %v6193 = vmul.f32 %v5669, 0.4
    %v6194 = vxor.u32 %v5354, 2147483648
    %v6195 = vxor.u32 %v5359, 2147483648
    %v6196 = vxor.u32 %v5364, 2147483648
    %v6197 = vxor.u32 %v5369, 2147483648
    %v6198 = vxor.u32 %v5374, 2147483648
    %v6199 = vxor.u32 %v5379, 2147483648
    %v6200 = vxor.u32 %v5384, 2147483648
    %v6201 = vxor.u32 %v5389, 2147483648
    %v6202 = vxor.u32 %v5394, 2147483648
    %v6203 = vxor.u32 %v5399, 2147483648
    %v6204 = vxor.u32 %v5404, 2147483648
    %v6205 = vxor.u32 %v5409, 2147483648
    %v6206 = vxor.u32 %v5414, 2147483648
    %v6207 = vxor.u32 %v5419, 2147483648
    %v6208 = vxor.u32 %v5424, 2147483648
    %v6209 = vxor.u32 %v5429, 2147483648
    %v6210 = vxor.u32 %v5434, 2147483648
    %v6211 = vxor.u32 %v5439, 2147483648
    %v6212 = vxor.u32 %v5444, 2147483648
    %v6213 = vxor.u32 %v5449, 2147483648
    %v6214 = vxor.u32 %v5454, 2147483648
    %v6215 = vxor.u32 %v5459, 2147483648
    %v6216 = vxor.u32 %v5464, 2147483648
    %v6217 = vxor.u32 %v5469, 2147483648
    %v6218 = vxor.u32 %v5474, 2147483648
    %v6219 = vxor.u32 %v5479, 2147483648
    %v6220 = vxor.u32 %v5484, 2147483648
    %v6221 = vxor.u32 %v5489, 2147483648
    %v6222 = vxor.u32 %v5494, 2147483648
    %v6223 = vxor.u32 %v5499, 2147483648
    %v6224 = vxor.u32 %v5504, 2147483648
    %v6225 = vxor.u32 %v5509, 2147483648
    %v6226 = vxor.u32 %v5514, 2147483648
    %v6227 = vxor.u32 %v5519, 2147483648
    %v6228 = vxor.u32 %v5524, 2147483648
    %v6229 = vxor.u32 %v5529, 2147483648
    %v6230 = vxor.u32 %v5534, 2147483648
    %v6231 = vxor.u32 %v5539, 2147483648
    %v6232 = vxor.u32 %v5544, 2147483648
    %v6233 = vxor.u32 %v5549, 2147483648
    %v6234 = vxor.u32 %v5554, 2147483648
    %v6235 = vxor.u32 %v5559, 2147483648
    %v6236 = vxor.u32 %v5564, 2147483648
    %v6237 = vxor.u32 %v5569, 2147483648
    %v6238 = vxor.u32 %v5574, 2147483648
    %v6239 = vxor.u32 %v5579, 2147483648
    %v6240 = vxor.u32 %v5584, 2147483648
    %v6241 = vxor.u32 %v5589, 2147483648
    %v6242 = vxor.u32 %v5594, 2147483648
    %v6243 = vxor.u32 %v5599, 2147483648
    %v6244 = vxor.u32 %v5604, 2147483648
    %v6245 = vxor.u32 %v5609, 2147483648
    %v6246 = vxor.u32 %v5614, 2147483648
    %v6247 = vxor.u32 %v5619, 2147483648
    %v6248 = vxor.u32 %v5624, 2147483648
    %v6249 = vxor.u32 %v5629, 2147483648
    %v6250 = vxor.u32 %v5634, 2147483648
    %v6251 = vxor.u32 %v5639, 2147483648
    %v6252 = vxor.u32 %v5644, 2147483648
    %v6253 = vxor.u32 %v5649, 2147483648
    %v6254 = vxor.u32 %v5654, 2147483648
    %v6255 = vxor.u32 %v5659, 2147483648
    %v6256 = vxor.u32 %v5664, 2147483648
    %v6257 = vxor.u32 %v5669, 2147483648
    %v6258 = vmul.f32 %v6194, 1.442695
    %v6259 = vpow.pop %v6258
    %v6260 = vmul.f32 %v6195, 1.442695
    %v6261 = vpow.pop %v6260
    %v6262 = vmul.f32 %v6196, 1.442695
    %v6263 = vpow.pop %v6262
    %v6264 = vmul.f32 %v6197, 1.442695
    %v6265 = vpow.pop %v6264
    %v6266 = vmul.f32 %v6198, 1.442695
    %v6267 = vpow.pop %v6266
    %v6268 = vmul.f32 %v6199, 1.442695
    %v6269 = vpow.pop %v6268
    %v6270 = vmul.f32 %v6200, 1.442695
    %v6271 = vpow.pop %v6270
    %v6272 = vmul.f32 %v6201, 1.442695
    %v6273 = vpow.pop %v6272
    %v6274 = vmul.f32 %v6202, 1.442695
    %v6275 = vpow.pop %v6274
    %v6276 = vmul.f32 %v6203, 1.442695
    %v6277 = vpow.pop %v6276
    %v6278 = vmul.f32 %v6204, 1.442695
    %v6279 = vpow.pop %v6278
    %v6280 = vmul.f32 %v6205, 1.442695
    %v6281 = vpow.pop %v6280
    %v6282 = vmul.f32 %v6206, 1.442695
    %v6283 = vpow.pop %v6282
    %v6284 = vmul.f32 %v6207, 1.442695
    %v6285 = vpow.pop %v6284
    %v6286 = vmul.f32 %v6208, 1.442695
    %v6287 = vpow.pop %v6286
    %v6288 = vmul.f32 %v6209, 1.442695
    %v6289 = vpow.pop %v6288
    %v6290 = vmul.f32 %v6210, 1.442695
    %v6291 = vpow.pop %v6290
    %v6292 = vmul.f32 %v6211, 1.442695
    %v6293 = vpow.pop %v6292
    %v6294 = vmul.f32 %v6212, 1.442695
    %v6295 = vpow.pop %v6294
    %v6296 = vmul.f32 %v6213, 1.442695
    %v6297 = vpow.pop %v6296
    %v6298 = vmul.f32 %v6214, 1.442695
    %v6299 = vpow.pop %v6298
    %v6300 = vmul.f32 %v6215, 1.442695
    %v6301 = vpow.pop %v6300
    %v6302 = vmul.f32 %v6216, 1.442695
    %v6303 = vpow.pop %v6302
    %v6304 = vmul.f32 %v6217, 1.442695
    %v6305 = vpow.pop %v6304
    %v6306 = vmul.f32 %v6218, 1.442695
    %v6307 = vpow.pop %v6306
    %v6308 = vmul.f32 %v6219, 1.442695
    %v6309 = vpow.pop %v6308
    %v6310 = vmul.f32 %v6220, 1.442695
    %v6311 = vpow.pop %v6310
    %v6312 = vmul.f32 %v6221, 1.442695
    %v6313 = vpow.pop %v6312
    %v6314 = vmul.f32 %v6222, 1.442695
    %v6315 = vpow.pop %v6314
    %v6316 = vmul.f32 %v6223, 1.442695
    %v6317 = vpow.pop %v6316
    %v6318 = vmul.f32 %v6224, 1.442695
    %v6319 = vpow.pop %v6318
    %v6320 = vmul.f32 %v6225, 1.442695
    %v6321 = vpow.pop %v6320
    %v6322 = vmul.f32 %v6226, 1.442695
    %v6323 = vpow.pop %v6322
    %v6324 = vmul.f32 %v6227, 1.442695
    %v6325 = vpow.pop %v6324
    %v6326 = vmul.f32 %v6228, 1.442695
    %v6327 = vpow.pop %v6326
    %v6328 = vmul.f32 %v6229, 1.442695
    %v6329 = vpow.pop %v6328
    %v6330 = vmul.f32 %v6230, 1.442695
    %v6331 = vpow.pop %v6330
    %v6332 = vmul.f32 %v6231, 1.442695
    %v6333 = vpow.pop %v6332
    %v6334 = vmul.f32 %v6232, 1.442695
    %v6335 = vpow.pop %v6334
    %v6336 = vmul.f32 %v6233, 1.442695
    %v6337 = vpow.pop %v6336
    %v6338 = vmul.f32 %v6234, 1.442695
    %v6339 = vpow.pop %v6338
    %v6340 = vmul.f32 %v6235, 1.442695
    %v6341 = vpow.pop %v6340
    %v6342 = vmul.f32 %v6236, 1.442695
    %v6343 = vpow.pop %v6342
    %v6344 = vmul.f32 %v6237, 1.442695
    %v6345 = vpow.pop %v6344
    %v6346 = vmul.f32 %v6238, 1.442695
    %v6347 = vpow.pop %v6346
    %v6348 = vmul.f32 %v6239, 1.442695
    %v6349 = vpow.pop %v6348
    %v6350 = vmul.f32 %v6240, 1.442695
    %v6351 = vpow.pop %v6350
    %v6352 = vmul.f32 %v6241, 1.442695
    %v6353 = vpow.pop %v6352
    %v6354 = vmul.f32 %v6242, 1.442695
    %v6355 = vpow.pop %v6354
    %v6356 = vmul.f32 %v6243, 1.442695
    %v6357 = vpow.pop %v6356
    %v6358 = vmul.f32 %v6244, 1.442695
    %v6359 = vpow.pop %v6358
    %v6360 = vmul.f32 %v6245, 1.442695
    %v6361 = vpow.pop %v6360
    %v6362 = vmul.f32 %v6246, 1.442695
    %v6363 = vpow.pop %v6362
    %v6364 = vmul.f32 %v6247, 1.442695
    %v6365 = vpow.pop %v6364
    %v6366 = vmul.f32 %v6248, 1.442695
    %v6367 = vpow.pop %v6366
    %v6368 = vmul.f32 %v6249, 1.442695
    %v6369 = vpow.pop %v6368
    %v6370 = vmul.f32 %v6250, 1.442695
    %v6371 = vpow.pop %v6370
    %v6372 = vmul.f32 %v6251, 1.442695
    %v6373 = vpow.pop %v6372
    %v6374 = vmul.f32 %v6252, 1.442695
    %v6375 = vpow.pop %v6374
    %v6376 = vmul.f32 %v6253, 1.442695
    %v6377 = vpow.pop %v6376
    %v6378 = vmul.f32 %v6254, 1.442695
    %v6379 = vpow.pop %v6378
    %v6380 = vmul.f32 %v6255, 1.442695
    %v6381 = vpow.pop %v6380
    %v6382 = vmul.f32 %v6256, 1.442695
    %v6383 = vpow.pop %v6382
    %v6384 = vmul.f32 %v6257, 1.442695
    %v6385 = vpow.pop %v6384
    %v6386 = vadd.f32 %v6259, 1.0
    %v6387 = vadd.f32 %v6261, 1.0
    %v6388 = vadd.f32 %v6263, 1.0
    %v6389 = vadd.f32 %v6265, 1.0
    %v6390 = vadd.f32 %v6267, 1.0
    %v6391 = vadd.f32 %v6269, 1.0
    %v6392 = vadd.f32 %v6271, 1.0
    %v6393 = vadd.f32 %v6273, 1.0
    %v6394 = vadd.f32 %v6275, 1.0
    %v6395 = vadd.f32 %v6277, 1.0
    %v6396 = vadd.f32 %v6279, 1.0
    %v6397 = vadd.f32 %v6281, 1.0
    %v6398 = vadd.f32 %v6283, 1.0
    %v6399 = vadd.f32 %v6285, 1.0
    %v6400 = vadd.f32 %v6287, 1.0
    %v6401 = vadd.f32 %v6289, 1.0
    %v6402 = vadd.f32 %v6291, 1.0
    %v6403 = vadd.f32 %v6293, 1.0
    %v6404 = vadd.f32 %v6295, 1.0
    %v6405 = vadd.f32 %v6297, 1.0
    %v6406 = vadd.f32 %v6299, 1.0
    %v6407 = vadd.f32 %v6301, 1.0
    %v6408 = vadd.f32 %v6303, 1.0
    %v6409 = vadd.f32 %v6305, 1.0
    %v6410 = vadd.f32 %v6307, 1.0
    %v6411 = vadd.f32 %v6309, 1.0
    %v6412 = vadd.f32 %v6311, 1.0
    %v6413 = vadd.f32 %v6313, 1.0
    %v6414 = vadd.f32 %v6315, 1.0
    %v6415 = vadd.f32 %v6317, 1.0
    %v6416 = vadd.f32 %v6319, 1.0
    %v6417 = vadd.f32 %v6321, 1.0
    %v6418 = vadd.f32 %v6323, 1.0
    %v6419 = vadd.f32 %v6325, 1.0
    %v6420 = vadd.f32 %v6327, 1.0
    %v6421 = vadd.f32 %v6329, 1.0
    %v6422 = vadd.f32 %v6331, 1.0
    %v6423 = vadd.f32 %v6333, 1.0
    %v6424 = vadd.f32 %v6335, 1.0
    %v6425 = vadd.f32 %v6337, 1.0
    %v6426 = vadd.f32 %v6339, 1.0
    %v6427 = vadd.f32 %v6341, 1.0
    %v6428 = vadd.f32 %v6343, 1.0
    %v6429 = vadd.f32 %v6345, 1.0
    %v6430 = vadd.f32 %v6347, 1.0
    %v6431 = vadd.f32 %v6349, 1.0
    %v6432 = vadd.f32 %v6351, 1.0
    %v6433 = vadd.f32 %v6353, 1.0
    %v6434 = vadd.f32 %v6355, 1.0
    %v6435 = vadd.f32 %v6357, 1.0
    %v6436 = vadd.f32 %v6359, 1.0
    %v6437 = vadd.f32 %v6361, 1.0
    %v6438 = vadd.f32 %v6363, 1.0
    %v6439 = vadd.f32 %v6365, 1.0
    %v6440 = vadd.f32 %v6367, 1.0
    %v6441 = vadd.f32 %v6369, 1.0
    %v6442 = vadd.f32 %v6371, 1.0
    %v6443 = vadd.f32 %v6373, 1.0
    %v6444 = vadd.f32 %v6375, 1.0
    %v6445 = vadd.f32 %v6377, 1.0
    %v6446 = vadd.f32 %v6379, 1.0
    %v6447 = vadd.f32 %v6381, 1.0
    %v6448 = vadd.f32 %v6383, 1.0
    %v6449 = vadd.f32 %v6385, 1.0
    %v6450 = vrcp.pop %v6386
    %v6451 = vmul.f32 1.0, %v6450
    %v6452 = vrcp.pop %v6387
    %v6453 = vmul.f32 1.0, %v6452
    %v6454 = vrcp.pop %v6388
    %v6455 = vmul.f32 1.0, %v6454
    %v6456 = vrcp.pop %v6389
    %v6457 = vmul.f32 1.0, %v6456
    %v6458 = vrcp.pop %v6390
    %v6459 = vmul.f32 1.0, %v6458
    %v6460 = vrcp.pop %v6391
    %v6461 = vmul.f32 1.0, %v6460
    %v6462 = vrcp.pop %v6392
    %v6463 = vmul.f32 1.0, %v6462
    %v6464 = vrcp.pop %v6393
    %v6465 = vmul.f32 1.0, %v6464
    %v6466 = vrcp.pop %v6394
    %v6467 = vmul.f32 1.0, %v6466
    %v6468 = vrcp.pop %v6395
    %v6469 = vmul.f32 1.0, %v6468
    %v6470 = vrcp.pop %v6396
    %v6471 = vmul.f32 1.0, %v6470
    %v6472 = vrcp.pop %v6397
    %v6473 = vmul.f32 1.0, %v6472
    %v6474 = vrcp.pop %v6398
    %v6475 = vmul.f32 1.0, %v6474
    %v6476 = vrcp.pop %v6399
    %v6477 = vmul.f32 1.0, %v6476
    %v6478 = vrcp.pop %v6400
    %v6479 = vmul.f32 1.0, %v6478
    %v6480 = vrcp.pop %v6401
    %v6481 = vmul.f32 1.0, %v6480
    %v6482 = vrcp.pop %v6402
    %v6483 = vmul.f32 1.0, %v6482
    %v6484 = vrcp.pop %v6403
    %v6485 = vmul.f32 1.0, %v6484
    %v6486 = vrcp.pop %v6404
    %v6487 = vmul.f32 1.0, %v6486
    %v6488 = vrcp.pop %v6405
    %v6489 = vmul.f32 1.0, %v6488
    %v6490 = vrcp.pop %v6406
    %v6491 = vmul.f32 1.0, %v6490
    %v6492 = vrcp.pop %v6407
    %v6493 = vmul.f32 1.0, %v6492
    %v6494 = vrcp.pop %v6408
    %v6495 = vmul.f32 1.0, %v6494
    %v6496 = vrcp.pop %v6409
    %v6497 = vmul.f32 1.0, %v6496
    %v6498 = vrcp.pop %v6410
    %v6499 = vmul.f32 1.0, %v6498
    %v6500 = vrcp.pop %v6411
    %v6501 = vmul.f32 1.0, %v6500
    %v6502 = vrcp.pop %v6412
    %v6503 = vmul.f32 1.0, %v6502
    %v6504 = vrcp.pop %v6413
    %v6505 = vmul.f32 1.0, %v6504
    %v6506 = vrcp.pop %v6414
    %v6507 = vmul.f32 1.0, %v6506
    %v6508 = vrcp.pop %v6415
    %v6509 = vmul.f32 1.0, %v6508
    %v6510 = vrcp.pop %v6416
    %v6511 = vmul.f32 1.0, %v6510
    %v6512 = vrcp.pop %v6417
    %v6513 = vmul.f32 1.0, %v6512
    %v6514 = vrcp.pop %v6418
    %v6515 = vmul.f32 1.0, %v6514
    %v6516 = vrcp.pop %v6419
    %v6517 = vmul.f32 1.0, %v6516
    %v6518 = vrcp.pop %v6420
    %v6519 = vmul.f32 1.0, %v6518
    %v6520 = vrcp.pop %v6421
    %v6521 = vmul.f32 1.0, %v6520
    %v6522 = vrcp.pop %v6422
    %v6523 = vmul.f32 1.0, %v6522
    %v6524 = vrcp.pop %v6423
    %v6525 = vmul.f32 1.0, %v6524
    %v6526 = vrcp.pop %v6424
    %v6527 = vmul.f32 1.0, %v6526
    %v6528 = vrcp.pop %v6425
    %v6529 = vmul.f32 1.0, %v6528
    %v6530 = vrcp.pop %v6426
    %v6531 = vmul.f32 1.0, %v6530
    %v6532 = vrcp.pop %v6427
    %v6533 = vmul.f32 1.0, %v6532
    %v6534 = vrcp.pop %v6428
    %v6535 = vmul.f32 1.0, %v6534
    %v6536 = vrcp.pop %v6429
    %v6537 = vmul.f32 1.0, %v6536
    %v6538 = vrcp.pop %v6430
    %v6539 = vmul.f32 1.0, %v6538
    %v6540 = vrcp.pop %v6431
    %v6541 = vmul.f32 1.0, %v6540
    %v6542 = vrcp.pop %v6432
    %v6543 = vmul.f32 1.0, %v6542
    %v6544 = vrcp.pop %v6433
    %v6545 = vmul.f32 1.0, %v6544
    %v6546 = vrcp.pop %v6434
    %v6547 = vmul.f32 1.0, %v6546
    %v6548 = vrcp.pop %v6435
    %v6549 = vmul.f32 1.0, %v6548
    %v6550 = vrcp.pop %v6436
    %v6551 = vmul.f32 1.0, %v6550
    %v6552 = vrcp.pop %v6437
    %v6553 = vmul.f32 1.0, %v6552
    %v6554 = vrcp.pop %v6438
    %v6555 = vmul.f32 1.0, %v6554
    %v6556 = vrcp.pop %v6439
    %v6557 = vmul.f32 1.0, %v6556
    %v6558 = vrcp.pop %v6440
    %v6559 = vmul.f32 1.0, %v6558
    %v6560 = vrcp.pop %v6441
    %v6561 = vmul.f32 1.0, %v6560
    %v6562 = vrcp.pop %v6442
    %v6563 = vmul.f32 1.0, %v6562
    %v6564 = vrcp.pop %v6443
    %v6565 = vmul.f32 1.0, %v6564
    %v6566 = vrcp.pop %v6444
    %v6567 = vmul.f32 1.0, %v6566
    %v6568 = vrcp.pop %v6445
    %v6569 = vmul.f32 1.0, %v6568
    %v6570 = vrcp.pop %v6446
    %v6571 = vmul.f32 1.0, %v6570
    %v6572 = vrcp.pop %v6447
    %v6573 = vmul.f32 1.0, %v6572
    %v6574 = vrcp.pop %v6448
    %v6575 = vmul.f32 1.0, %v6574
    %v6576 = vrcp.pop %v6449
    %v6577 = vmul.f32 1.0, %v6576
    %v6578 = vmul.f32 %v6451, 2.0
    %v6579 = vmul.f32 %v6453, 2.0
    %v6580 = vmul.f32 %v6455, 2.0
    %v6581 = vmul.f32 %v6457, 2.0
    %v6582 = vmul.f32 %v6459, 2.0
    %v6583 = vmul.f32 %v6461, 2.0
    %v6584 = vmul.f32 %v6463, 2.0
    %v6585 = vmul.f32 %v6465, 2.0
    %v6586 = vmul.f32 %v6467, 2.0
    %v6587 = vmul.f32 %v6469, 2.0
    %v6588 = vmul.f32 %v6471, 2.0
    %v6589 = vmul.f32 %v6473, 2.0
    %v6590 = vmul.f32 %v6475, 2.0
    %v6591 = vmul.f32 %v6477, 2.0
    %v6592 = vmul.f32 %v6479, 2.0
    %v6593 = vmul.f32 %v6481, 2.0
    %v6594 = vmul.f32 %v6483, 2.0
    %v6595 = vmul.f32 %v6485, 2.0
    %v6596 = vmul.f32 %v6487, 2.0
    %v6597 = vmul.f32 %v6489, 2.0
    %v6598 = vmul.f32 %v6491, 2.0
    %v6599 = vmul.f32 %v6493, 2.0
    %v6600 = vmul.f32 %v6495, 2.0
    %v6601 = vmul.f32 %v6497, 2.0
    %v6602 = vmul.f32 %v6499, 2.0
    %v6603 = vmul.f32 %v6501, 2.0
    %v6604 = vmul.f32 %v6503, 2.0
    %v6605 = vmul.f32 %v6505, 2.0
    %v6606 = vmul.f32 %v6507, 2.0
    %v6607 = vmul.f32 %v6509, 2.0
    %v6608 = vmul.f32 %v6511, 2.0
    %v6609 = vmul.f32 %v6513, 2.0
    %v6610 = vmul.f32 %v6515, 2.0
    %v6611 = vmul.f32 %v6517, 2.0
    %v6612 = vmul.f32 %v6519, 2.0
    %v6613 = vmul.f32 %v6521, 2.0
    %v6614 = vmul.f32 %v6523, 2.0
    %v6615 = vmul.f32 %v6525, 2.0
    %v6616 = vmul.f32 %v6527, 2.0
    %v6617 = vmul.f32 %v6529, 2.0
    %v6618 = vmul.f32 %v6531, 2.0
    %v6619 = vmul.f32 %v6533, 2.0
    %v6620 = vmul.f32 %v6535, 2.0
    %v6621 = vmul.f32 %v6537, 2.0
    %v6622 = vmul.f32 %v6539, 2.0
    %v6623 = vmul.f32 %v6541, 2.0
    %v6624 = vmul.f32 %v6543, 2.0
    %v6625 = vmul.f32 %v6545, 2.0
    %v6626 = vmul.f32 %v6547, 2.0
    %v6627 = vmul.f32 %v6549, 2.0
    %v6628 = vmul.f32 %v6551, 2.0
    %v6629 = vmul.f32 %v6553, 2.0
    %v6630 = vmul.f32 %v6555, 2.0
    %v6631 = vmul.f32 %v6557, 2.0
    %v6632 = vmul.f32 %v6559, 2.0
    %v6633 = vmul.f32 %v6561, 2.0
    %v6634 = vmul.f32 %v6563, 2.0
    %v6635 = vmul.f32 %v6565, 2.0
    %v6636 = vmul.f32 %v6567, 2.0
    %v6637 = vmul.f32 %v6569, 2.0
    %v6638 = vmul.f32 %v6571, 2.0
    %v6639 = vmul.f32 %v6573, 2.0
    %v6640 = vmul.f32 %v6575, 2.0
    %v6641 = vmul.f32 %v6577, 2.0
    %v6642 = vsub.f32 %v6578, 1.0
    %v6643 = vsub.f32 %v6579, 1.0
    %v6644 = vsub.f32 %v6580, 1.0
    %v6645 = vsub.f32 %v6581, 1.0
    %v6646 = vsub.f32 %v6582, 1.0
    %v6647 = vsub.f32 %v6583, 1.0
    %v6648 = vsub.f32 %v6584, 1.0
    %v6649 = vsub.f32 %v6585, 1.0
    %v6650 = vsub.f32 %v6586, 1.0
    %v6651 = vsub.f32 %v6587, 1.0
    %v6652 = vsub.f32 %v6588, 1.0
    %v6653 = vsub.f32 %v6589, 1.0
    %v6654 = vsub.f32 %v6590, 1.0
    %v6655 = vsub.f32 %v6591, 1.0
    %v6656 = vsub.f32 %v6592, 1.0
    %v6657 = vsub.f32 %v6593, 1.0
    %v6658 = vsub.f32 %v6594, 1.0
    %v6659 = vsub.f32 %v6595, 1.0
    %v6660 = vsub.f32 %v6596, 1.0
    %v6661 = vsub.f32 %v6597, 1.0
    %v6662 = vsub.f32 %v6598, 1.0
    %v6663 = vsub.f32 %v6599, 1.0
    %v6664 = vsub.f32 %v6600, 1.0
    %v6665 = vsub.f32 %v6601, 1.0
    %v6666 = vsub.f32 %v6602, 1.0
    %v6667 = vsub.f32 %v6603, 1.0
    %v6668 = vsub.f32 %v6604, 1.0
    %v6669 = vsub.f32 %v6605, 1.0
    %v6670 = vsub.f32 %v6606, 1.0
    %v6671 = vsub.f32 %v6607, 1.0
    %v6672 = vsub.f32 %v6608, 1.0
    %v6673 = vsub.f32 %v6609, 1.0
    %v6674 = vsub.f32 %v6610, 1.0
    %v6675 = vsub.f32 %v6611, 1.0
    %v6676 = vsub.f32 %v6612, 1.0
    %v6677 = vsub.f32 %v6613, 1.0
    %v6678 = vsub.f32 %v6614, 1.0
    %v6679 = vsub.f32 %v6615, 1.0
    %v6680 = vsub.f32 %v6616, 1.0
    %v6681 = vsub.f32 %v6617, 1.0
    %v6682 = vsub.f32 %v6618, 1.0
    %v6683 = vsub.f32 %v6619, 1.0
    %v6684 = vsub.f32 %v6620, 1.0
    %v6685 = vsub.f32 %v6621, 1.0
    %v6686 = vsub.f32 %v6622, 1.0
    %v6687 = vsub.f32 %v6623, 1.0
    %v6688 = vsub.f32 %v6624, 1.0
    %v6689 = vsub.f32 %v6625, 1.0
    %v6690 = vsub.f32 %v6626, 1.0
    %v6691 = vsub.f32 %v6627, 1.0
    %v6692 = vsub.f32 %v6628, 1.0
    %v6693 = vsub.f32 %v6629, 1.0
    %v6694 = vsub.f32 %v6630, 1.0
    %v6695 = vsub.f32 %v6631, 1.0
    %v6696 = vsub.f32 %v6632, 1.0
    %v6697 = vsub.f32 %v6633, 1.0
    %v6698 = vsub.f32 %v6634, 1.0
    %v6699 = vsub.f32 %v6635, 1.0
    %v6700 = vsub.f32 %v6636, 1.0
    %v6701 = vsub.f32 %v6637, 1.0
    %v6702 = vsub.f32 %v6638, 1.0
    %v6703 = vsub.f32 %v6639, 1.0
    %v6704 = vsub.f32 %v6640, 1.0
    %v6705 = vsub.f32 %v6641, 1.0
    %v6706 = vmul.f32 %v6130, %v6642
    %v6707 = vmul.f32 %v6131, %v6643
    %v6708 = vmul.f32 %v6132, %v6644
    %v6709 = vmul.f32 %v6133, %v6645
    %v6710 = vmul.f32 %v6134, %v6646
    %v6711 = vmul.f32 %v6135, %v6647
    %v6712 = vmul.f32 %v6136, %v6648
    %v6713 = vmul.f32 %v6137, %v6649
    %v6714 = vmul.f32 %v6138, %v6650
    %v6715 = vmul.f32 %v6139, %v6651
    %v6716 = vmul.f32 %v6140, %v6652
    %v6717 = vmul.f32 %v6141, %v6653
    %v6718 = vmul.f32 %v6142, %v6654
    %v6719 = vmul.f32 %v6143, %v6655
    %v6720 = vmul.f32 %v6144, %v6656
    %v6721 = vmul.f32 %v6145, %v6657
    %v6722 = vmul.f32 %v6146, %v6658
    %v6723 = vmul.f32 %v6147, %v6659
    %v6724 = vmul.f32 %v6148, %v6660
    %v6725 = vmul.f32 %v6149, %v6661
    %v6726 = vmul.f32 %v6150, %v6662
    %v6727 = vmul.f32 %v6151, %v6663
    %v6728 = vmul.f32 %v6152, %v6664
    %v6729 = vmul.f32 %v6153, %v6665
    %v6730 = vmul.f32 %v6154, %v6666
    %v6731 = vmul.f32 %v6155, %v6667
    %v6732 = vmul.f32 %v6156, %v6668
    %v6733 = vmul.f32 %v6157, %v6669
    %v6734 = vmul.f32 %v6158, %v6670
    %v6735 = vmul.f32 %v6159, %v6671
    %v6736 = vmul.f32 %v6160, %v6672
    %v6737 = vmul.f32 %v6161, %v6673
    %v6738 = vmul.f32 %v6162, %v6674
    %v6739 = vmul.f32 %v6163, %v6675
    %v6740 = vmul.f32 %v6164, %v6676
    %v6741 = vmul.f32 %v6165, %v6677
    %v6742 = vmul.f32 %v6166, %v6678
    %v6743 = vmul.f32 %v6167, %v6679
    %v6744 = vmul.f32 %v6168, %v6680
    %v6745 = vmul.f32 %v6169, %v6681
    %v6746 = vmul.f32 %v6170, %v6682
    %v6747 = vmul.f32 %v6171, %v6683
    %v6748 = vmul.f32 %v6172, %v6684
    %v6749 = vmul.f32 %v6173, %v6685
    %v6750 = vmul.f32 %v6174, %v6686
    %v6751 = vmul.f32 %v6175, %v6687
    %v6752 = vmul.f32 %v6176, %v6688
    %v6753 = vmul.f32 %v6177, %v6689
    %v6754 = vmul.f32 %v6178, %v6690
    %v6755 = vmul.f32 %v6179, %v6691
    %v6756 = vmul.f32 %v6180, %v6692
    %v6757 = vmul.f32 %v6181, %v6693
    %v6758 = vmul.f32 %v6182, %v6694
    %v6759 = vmul.f32 %v6183, %v6695
    %v6760 = vmul.f32 %v6184, %v6696
    %v6761 = vmul.f32 %v6185, %v6697
    %v6762 = vmul.f32 %v6186, %v6698
    %v6763 = vmul.f32 %v6187, %v6699
    %v6764 = vmul.f32 %v6188, %v6700
    %v6765 = vmul.f32 %v6189, %v6701
    %v6766 = vmul.f32 %v6190, %v6702
    %v6767 = vmul.f32 %v6191, %v6703
    %v6768 = vmul.f32 %v6192, %v6704
    %v6769 = vmul.f32 %v6193, %v6705
    %v6770 = vadd.f32 %v6066, %v6706
    %v6771 = vadd.f32 %v6067, %v6707
    %v6772 = vadd.f32 %v6068, %v6708
    %v6773 = vadd.f32 %v6069, %v6709
    %v6774 = vadd.f32 %v6070, %v6710
    %v6775 = vadd.f32 %v6071, %v6711
    %v6776 = vadd.f32 %v6072, %v6712
    %v6777 = vadd.f32 %v6073, %v6713
    %v6778 = vadd.f32 %v6074, %v6714
    %v6779 = vadd.f32 %v6075, %v6715
    %v6780 = vadd.f32 %v6076, %v6716
    %v6781 = vadd.f32 %v6077, %v6717
    %v6782 = vadd.f32 %v6078, %v6718
    %v6783 = vadd.f32 %v6079, %v6719
    %v6784 = vadd.f32 %v6080, %v6720
    %v6785 = vadd.f32 %v6081, %v6721
    %v6786 = vadd.f32 %v6082, %v6722
    %v6787 = vadd.f32 %v6083, %v6723
    %v6788 = vadd.f32 %v6084, %v6724
    %v6789 = vadd.f32 %v6085, %v6725
    %v6790 = vadd.f32 %v6086, %v6726
    %v6791 = vadd.f32 %v6087, %v6727
    %v6792 = vadd.f32 %v6088, %v6728
    %v6793 = vadd.f32 %v6089, %v6729
    %v6794 = vadd.f32 %v6090, %v6730
    %v6795 = vadd.f32 %v6091, %v6731
    %v6796 = vadd.f32 %v6092, %v6732
    %v6797 = vadd.f32 %v6093, %v6733
    %v6798 = vadd.f32 %v6094, %v6734
    %v6799 = vadd.f32 %v6095, %v6735
    %v6800 = vadd.f32 %v6096, %v6736
    %v6801 = vadd.f32 %v6097, %v6737
    %v6802 = vadd.f32 %v6098, %v6738
    %v6803 = vadd.f32 %v6099, %v6739
    %v6804 = vadd.f32 %v6100, %v6740
    %v6805 = vadd.f32 %v6101, %v6741
    %v6806 = vadd.f32 %v6102, %v6742
    %v6807 = vadd.f32 %v6103, %v6743
    %v6808 = vadd.f32 %v6104, %v6744
    %v6809 = vadd.f32 %v6105, %v6745
    %v6810 = vadd.f32 %v6106, %v6746
    %v6811 = vadd.f32 %v6107, %v6747
    %v6812 = vadd.f32 %v6108, %v6748
    %v6813 = vadd.f32 %v6109, %v6749
    %v6814 = vadd.f32 %v6110, %v6750
    %v6815 = vadd.f32 %v6111, %v6751
    %v6816 = vadd.f32 %v6112, %v6752
    %v6817 = vadd.f32 %v6113, %v6753
    %v6818 = vadd.f32 %v6114, %v6754
    %v6819 = vadd.f32 %v6115, %v6755
    %v6820 = vadd.f32 %v6116, %v6756
    %v6821 = vadd.f32 %v6117, %v6757
    %v6822 = vadd.f32 %v6118, %v6758
    %v6823 = vadd.f32 %v6119, %v6759
    %v6824 = vadd.f32 %v6120, %v6760
    %v6825 = vadd.f32 %v6121, %v6761
    %v6826 = vadd.f32 %v6122, %v6762
    %v6827 = vadd.f32 %v6123, %v6763
    %v6828 = vadd.f32 %v6124, %v6764
    %v6829 = vadd.f32 %v6125, %v6765
    %v6830 = vadd.f32 %v6126, %v6766
    %v6831 = vadd.f32 %v6127, %v6767
    %v6832 = vadd.f32 %v6128, %v6768
    %v6833 = vadd.f32 %v6129, %v6769
    %v6834 = vld [vmem:[%s17] sm:$0xff]
    %v6835 = vld [vmem:[%s17 + $0x8] sm:$0xff]
    %v6837 = vsel %vm1984, %v6770, 0
    %v6840 = vsel %vm1984, %v6771, 0
    %v6843 = vsel %vm1984, %v6772, 0
    %v6846 = vsel %vm1984, %v6773, 0
    %v6849 = vsel %vm1984, %v6774, 0
    %v6852 = vsel %vm1984, %v6775, 0
    %v6855 = vsel %vm1984, %v6776, 0
    %v6858 = vsel %vm1984, %v6777, 0
    %v6861 = vsel %vm1984, %v6778, 0
    %v6864 = vsel %vm1984, %v6779, 0
    %v6867 = vsel %vm1984, %v6780, 0
    %v6870 = vsel %vm1984, %v6781, 0
    %v6873 = vsel %vm1984, %v6782, 0
    %v6876 = vsel %vm1984, %v6783, 0
    %v6879 = vsel %vm1984, %v6784, 0
    %v6882 = vsel %vm1984, %v6785, 0
    %v6885 = vsel %vm1984, %v6786, 0
    %v6888 = vsel %vm1984, %v6787, 0
    %v6891 = vsel %vm1984, %v6788, 0
    %v6894 = vsel %vm1984, %v6789, 0
    %v6897 = vsel %vm1984, %v6790, 0
    %v6900 = vsel %vm1984, %v6791, 0
    %v6903 = vsel %vm1984, %v6792, 0
    %v6906 = vsel %vm1984, %v6793, 0
    %v6909 = vsel %vm1984, %v6794, 0
    %v6912 = vsel %vm1984, %v6795, 0
    %v6915 = vsel %vm1984, %v6796, 0
    %v6918 = vsel %vm1984, %v6797, 0
    %v6921 = vsel %vm1984, %v6798, 0
    %v6924 = vsel %vm1984, %v6799, 0
    %v6927 = vsel %vm1984, %v6800, 0
    %v6930 = vsel %vm1984, %v6801, 0
    %v6933 = vsel %vm1984, %v6802, 0
    %v6936 = vsel %vm1984, %v6803, 0
    %v6939 = vsel %vm1984, %v6804, 0
    %v6942 = vsel %vm1984, %v6805, 0
    %v6945 = vsel %vm1984, %v6806, 0
    %v6948 = vsel %vm1984, %v6807, 0
    %v6951 = vsel %vm1984, %v6808, 0
    %v6954 = vsel %vm1984, %v6809, 0
    %v6957 = vsel %vm1984, %v6810, 0
    %v6960 = vsel %vm1984, %v6811, 0
    %v6963 = vsel %vm1984, %v6812, 0
    %v6966 = vsel %vm1984, %v6813, 0
    %v6969 = vsel %vm1984, %v6814, 0
    %v6972 = vsel %vm1984, %v6815, 0
    %v6975 = vsel %vm1984, %v6816, 0
    %v6978 = vsel %vm1984, %v6817, 0
    %v6981 = vsel %vm1984, %v6818, 0
    %v6984 = vsel %vm1984, %v6819, 0
    %v6987 = vsel %vm1984, %v6820, 0
    %v6990 = vsel %vm1984, %v6821, 0
    %v6993 = vsel %vm1984, %v6822, 0
    %v6996 = vsel %vm1984, %v6823, 0
    %v6999 = vsel %vm1984, %v6824, 0
    %v7002 = vsel %vm1984, %v6825, 0
    %v7005 = vsel %vm1984, %v6826, 0
    %v7008 = vsel %vm1984, %v6827, 0
    %v7011 = vsel %vm1984, %v6828, 0
    %v7014 = vsel %vm1984, %v6829, 0
    %v7017 = vsel %vm1984, %v6830, 0
    %v7020 = vsel %vm1984, %v6831, 0
    %v7023 = vsel %vm1984, %v6832, 0
    %v7026 = vsel %vm1984, %v6833, 0
    %7028 = vmatprep.subr.mxu0 0.0
    %7029 = vmatpush1.msra.mxu0 %v6834
    %7030 = vmatprep.subr.mxu0 0.0
    %7031 = vmatpush1.msra.mxu0 %v6835
    %7032 = vmatprep.subr.mxu0 0.0
    %7033 = vmatpush1.msra.mxu0 0.0
    %7034 = vmatprep.subr.mxu0 0.0
    %7035 = vmatpush1.msra.mxu0 0.0
    %7036 = vmatprep.subr.mxu0 0.0
    %7037 = vmatpush1.msra.mxu0 0.0
    %7038 = vmatprep.subr.mxu0 0.0
    %7039 = vmatpush1.msra.mxu0 0.0
    %7040 = vmatprep.subr.mxu0 0.0
    %7041 = vmatpush1.msra.mxu0 0.0
    %7042 = vmatprep.subr.mxu0 0.0
    %7043 = vmatpush1.msra.mxu0 0.0
    %7044 = vmatprep.subr.mxu0 0.0
    %7045 = vmatpush1.msra.mxu0 0.0
    %7046 = vmatprep.subr.mxu0 0.0
    %7047 = vmatpush1.msra.mxu0 0.0
    %7048 = vmatprep.subr.mxu0 0.0
    %7049 = vmatpush1.msra.mxu0 0.0
    %7050 = vmatprep.subr.mxu0 0.0
    %7051 = vmatpush1.msra.mxu0 0.0
    %7052 = vmatprep.subr.mxu0 0.0
    %7053 = vmatpush1.msra.mxu0 0.0
    %7054 = vmatprep.subr.mxu0 0.0
    %7055 = vmatpush1.msra.mxu0 0.0
    %7056 = vmatprep.subr.mxu0 0.0
    %7057 = vmatpush1.msra.mxu0 0.0
    %7058 = vmatprep.subr.mxu0 0.0
    %7059 = vmatpush1.msra.mxu0 0.0
    %7060 = vmatprep.subr.mxu0 0.0
    %7061 = vmatpush1.msra.mxu0 0.0
    %7062 = vmatprep.subr.mxu0 0.0
    %7063 = vmatpush1.msra.mxu0 0.0
    %7064 = vmatprep.subr.mxu0 0.0
    %7065 = vmatpush1.msra.mxu0 0.0
    %7066 = vmatprep.subr.mxu0 0.0
    %7067 = vmatpush1.msra.mxu0 0.0
    %7068 = vmatprep.subr.mxu0 0.0
    %7069 = vmatpush1.msra.mxu0 0.0
    %7070 = vmatprep.subr.mxu0 0.0
    %7071 = vmatpush1.msra.mxu0 0.0
    %7072 = vmatprep.subr.mxu0 0.0
    %7073 = vmatpush1.msra.mxu0 0.0
    %7074 = vmatprep.subr.mxu0 0.0
    %7075 = vmatpush1.msra.mxu0 0.0
    %7076 = vmatprep.subr.mxu0 0.0
    %7077 = vmatpush1.msra.mxu0 0.0
    %7078 = vmatprep.subr.mxu0 0.0
    %7079 = vmatpush1.msra.mxu0 0.0
    %7080 = vmatprep.subr.mxu0 0.0
    %7081 = vmatpush1.msra.mxu0 0.0
    %7082 = vmatprep.subr.mxu0 0.0
    %7083 = vmatpush1.msra.mxu0 0.0
    %7084 = vmatprep.subr.mxu0 0.0
    %7085 = vmatpush1.msra.mxu0 0.0
    %7086 = vmatprep.subr.mxu0 0.0
    %7087 = vmatpush1.msra.mxu0 0.0
    %7088 = vmatprep.subr.mxu0 0.0
    %7089 = vmatpush1.msra.mxu0 0.0
    %7090 = vmatprep.subr.mxu0 0.0
    %7091 = vmatpush1.msra.mxu0 0.0
    %7092 = vmatprep.mubr.f32.mxu0 0.0
    %7093 = vmatmul.mubr.f32.gmra.mrb[0].mxu0 %v6837
    %v7094 = vpop.f32.mrb[0].mxu0
    %v7095 = vadd.f32 0.0, %v7094
    %v7096 = vpop.f32.mrb[0].mxu0
    %7097 = vmatprep.mubr.f32.mxu0 0.0
    %7098 = vmatmul.mubr.f32.gmra.mrb[0].mxu0 %v6840
    %v7099 = vpop.f32.mrb[0].mxu0
    %v7100 = vadd.f32 0.0, %v7099
    %v7101 = vpop.f32.mrb[0].mxu0
    %7102 = vmatprep.mubr.f32.mxu0 0.0
    %7103 = vmatmul.mubr.f32.gmra.mrb[0].mxu0 %v6843
    %v7104 = vpop.f32.mrb[0].mxu0
    %v7105 = vadd.f32 0.0, %v7104
    %v7106 = vpop.f32.mrb[0].mxu0
    %7107 = vmatprep.mubr.f32.mxu0 0.0
    %7108 = vmatmul.mubr.f32.gmra.mrb[0].mxu0 %v6846
    %v7109 = vpop.f32.mrb[0].mxu0
    %v7110 = vadd.f32 0.0, %v7109
    %v7111 = vpop.f32.mrb[0].mxu0
    %7112 = vmatprep.mubr.f32.mxu0 0.0
    %7113 = vmatmul.mubr.f32.gmra.mrb[0].mxu0 %v6849
    %v7114 = vpop.f32.mrb[0].mxu0
    %v7115 = vadd.f32 0.0, %v7114
    %v7116 = vpop.f32.mrb[0].mxu0
    %7117 = vmatprep.mubr.f32.mxu0 0.0
    %7118 = vmatmul.mubr.f32.gmra.mrb[0].mxu0 %v6852
    %v7119 = vpop.f32.mrb[0].mxu0
    %v7120 = vadd.f32 0.0, %v7119
    %v7121 = vpop.f32.mrb[0].mxu0
    %7122 = vmatprep.mubr.f32.mxu0 0.0
    %7123 = vmatmul.mubr.f32.gmra.mrb[0].mxu0 %v6855
    %v7124 = vpop.f32.mrb[0].mxu0
    %v7125 = vadd.f32 0.0, %v7124
    %v7126 = vpop.f32.mrb[0].mxu0
    %7127 = vmatprep.mubr.f32.mxu0 0.0
    %7128 = vmatmul.mubr.f32.gmra.mrb[0].mxu0 %v6858
    %v7129 = vpop.f32.mrb[0].mxu0
    %v7130 = vadd.f32 0.0, %v7129
    %v7131 = vpop.f32.mrb[0].mxu0
    %7132 = vmatprep.mubr.f32.mxu0 0.0
    %7133 = vmatmul.mubr.f32.gmra.mrb[0].mxu0 %v6861
    %v7134 = vpop.f32.mrb[0].mxu0
    %v7135 = vadd.f32 0.0, %v7134
    %v7136 = vpop.f32.mrb[0].mxu0
    %7137 = vmatprep.mubr.f32.mxu0 0.0
    %7138 = vmatmul.mubr.f32.gmra.mrb[0].mxu0 %v6864
    %v7139 = vpop.f32.mrb[0].mxu0
    %v7140 = vadd.f32 0.0, %v7139
    %v7141 = vpop.f32.mrb[0].mxu0
    %7142 = vmatprep.mubr.f32.mxu0 0.0
    %7143 = vmatmul.mubr.f32.gmra.mrb[0].mxu0 %v6867
    %v7144 = vpop.f32.mrb[0].mxu0
    %v7145 = vadd.f32 0.0, %v7144
    %v7146 = vpop.f32.mrb[0].mxu0
    %7147 = vmatprep.mubr.f32.mxu0 0.0
    %7148 = vmatmul.mubr.f32.gmra.mrb[0].mxu0 %v6870
    %v7149 = vpop.f32.mrb[0].mxu0
    %v7150 = vadd.f32 0.0, %v7149
    %v7151 = vpop.f32.mrb[0].mxu0
    %7152 = vmatprep.mubr.f32.mxu0 0.0
    %7153 = vmatmul.mubr.f32.gmra.mrb[0].mxu0 %v6873
    %v7154 = vpop.f32.mrb[0].mxu0
    %v7155 = vadd.f32 0.0, %v7154
    %v7156 = vpop.f32.mrb[0].mxu0
    %7157 = vmatprep.mubr.f32.mxu0 0.0
    %7158 = vmatmul.mubr.f32.gmra.mrb[0].mxu0 %v6876
    %v7159 = vpop.f32.mrb[0].mxu0
    %v7160 = vadd.f32 0.0, %v7159
    %v7161 = vpop.f32.mrb[0].mxu0
    %7162 = vmatprep.mubr.f32.mxu0 0.0
    %7163 = vmatmul.mubr.f32.gmra.mrb[0].mxu0 %v6879
    %v7164 = vpop.f32.mrb[0].mxu0
    %v7165 = vadd.f32 0.0, %v7164
    %v7166 = vpop.f32.mrb[0].mxu0
    %7167 = vmatprep.mubr.f32.mxu0 0.0
    %7168 = vmatmul.mubr.f32.gmra.mrb[0].mxu0 %v6882
    %v7169 = vpop.f32.mrb[0].mxu0
    %v7170 = vadd.f32 0.0, %v7169
    %v7171 = vpop.f32.mrb[0].mxu0
    %7172 = vmatprep.mubr.f32.mxu0 0.0
    %7173 = vmatmul.mubr.f32.gmra.mrb[0].mxu0 %v6885
    %v7174 = vpop.f32.mrb[0].mxu0
    %v7175 = vadd.f32 0.0, %v7174
    %v7176 = vpop.f32.mrb[0].mxu0
    %7177 = vmatprep.mubr.f32.mxu0 0.0
    %7178 = vmatmul.mubr.f32.gmra.mrb[0].mxu0 %v6888
    %v7179 = vpop.f32.mrb[0].mxu0
    %v7180 = vadd.f32 0.0, %v7179
    %v7181 = vpop.f32.mrb[0].mxu0
    %7182 = vmatprep.mubr.f32.mxu0 0.0
    %7183 = vmatmul.mubr.f32.gmra.mrb[0].mxu0 %v6891
    %v7184 = vpop.f32.mrb[0].mxu0
    %v7185 = vadd.f32 0.0, %v7184
    %v7186 = vpop.f32.mrb[0].mxu0
    %7187 = vmatprep.mubr.f32.mxu0 0.0
    %7188 = vmatmul.mubr.f32.gmra.mrb[0].mxu0 %v6894
    %v7189 = vpop.f32.mrb[0].mxu0
    %v7190 = vadd.f32 0.0, %v7189
    %v7191 = vpop.f32.mrb[0].mxu0
    %7192 = vmatprep.mubr.f32.mxu0 0.0
    %7193 = vmatmul.mubr.f32.gmra.mrb[0].mxu0 %v6897
    %v7194 = vpop.f32.mrb[0].mxu0
    %v7195 = vadd.f32 0.0, %v7194
    %v7196 = vpop.f32.mrb[0].mxu0
    %7197 = vmatprep.mubr.f32.mxu0 0.0
    %7198 = vmatmul.mubr.f32.gmra.mrb[0].mxu0 %v6900
    %v7199 = vpop.f32.mrb[0].mxu0
    %v7200 = vadd.f32 0.0, %v7199
    %v7201 = vpop.f32.mrb[0].mxu0
    %7202 = vmatprep.mubr.f32.mxu0 0.0
    %7203 = vmatmul.mubr.f32.gmra.mrb[0].mxu0 %v6903
    %v7204 = vpop.f32.mrb[0].mxu0
    %v7205 = vadd.f32 0.0, %v7204
    %v7206 = vpop.f32.mrb[0].mxu0
    %7207 = vmatprep.mubr.f32.mxu0 0.0
    %7208 = vmatmul.mubr.f32.gmra.mrb[0].mxu0 %v6906
    %v7209 = vpop.f32.mrb[0].mxu0
    %v7210 = vadd.f32 0.0, %v7209
    %v7211 = vpop.f32.mrb[0].mxu0
    %7212 = vmatprep.mubr.f32.mxu0 0.0
    %7213 = vmatmul.mubr.f32.gmra.mrb[0].mxu0 %v6909
    %v7214 = vpop.f32.mrb[0].mxu0
    %v7215 = vadd.f32 0.0, %v7214
    %v7216 = vpop.f32.mrb[0].mxu0
    %7217 = vmatprep.mubr.f32.mxu0 0.0
    %7218 = vmatmul.mubr.f32.gmra.mrb[0].mxu0 %v6912
    %v7219 = vpop.f32.mrb[0].mxu0
    %v7220 = vadd.f32 0.0, %v7219
    %v7221 = vpop.f32.mrb[0].mxu0
    %7222 = vmatprep.mubr.f32.mxu0 0.0
    %7223 = vmatmul.mubr.f32.gmra.mrb[0].mxu0 %v6915
    %v7224 = vpop.f32.mrb[0].mxu0
    %v7225 = vadd.f32 0.0, %v7224
    %v7226 = vpop.f32.mrb[0].mxu0
    %7227 = vmatprep.mubr.f32.mxu0 0.0
    %7228 = vmatmul.mubr.f32.gmra.mrb[0].mxu0 %v6918
    %v7229 = vpop.f32.mrb[0].mxu0
    %v7230 = vadd.f32 0.0, %v7229
    %v7231 = vpop.f32.mrb[0].mxu0
    %7232 = vmatprep.mubr.f32.mxu0 0.0
    %7233 = vmatmul.mubr.f32.gmra.mrb[0].mxu0 %v6921
    %v7234 = vpop.f32.mrb[0].mxu0
    %v7235 = vadd.f32 0.0, %v7234
    %v7236 = vpop.f32.mrb[0].mxu0
    %7237 = vmatprep.mubr.f32.mxu0 0.0
    %7238 = vmatmul.mubr.f32.gmra.mrb[0].mxu0 %v6924
    %v7239 = vpop.f32.mrb[0].mxu0
    %v7240 = vadd.f32 0.0, %v7239
    %v7241 = vpop.f32.mrb[0].mxu0
    %7242 = vmatprep.mubr.f32.mxu0 0.0
    %7243 = vmatmul.mubr.f32.gmra.mrb[0].mxu0 %v6927
    %v7244 = vpop.f32.mrb[0].mxu0
    %v7245 = vadd.f32 0.0, %v7244
    %v7246 = vpop.f32.mrb[0].mxu0
    %7247 = vmatprep.mubr.f32.mxu0 0.0
    %7248 = vmatmul.mubr.f32.gmra.mrb[0].mxu0 %v6930
    %v7249 = vpop.f32.mrb[0].mxu0
    %v7250 = vadd.f32 0.0, %v7249
    %v7251 = vpop.f32.mrb[0].mxu0
    %7252 = vmatprep.mubr.f32.mxu0 0.0
    %7253 = vmatmul.mubr.f32.gmra.mrb[0].mxu0 %v6933
    %v7254 = vpop.f32.mrb[0].mxu0
    %v7255 = vadd.f32 0.0, %v7254
    %v7256 = vpop.f32.mrb[0].mxu0
    %7257 = vmatprep.mubr.f32.mxu0 0.0
    %7258 = vmatmul.mubr.f32.gmra.mrb[0].mxu0 %v6936
    %v7259 = vpop.f32.mrb[0].mxu0
    %v7260 = vadd.f32 0.0, %v7259
    %v7261 = vpop.f32.mrb[0].mxu0
    %7262 = vmatprep.mubr.f32.mxu0 0.0
    %7263 = vmatmul.mubr.f32.gmra.mrb[0].mxu0 %v6939
    %v7264 = vpop.f32.mrb[0].mxu0
    %v7265 = vadd.f32 0.0, %v7264
    %v7266 = vpop.f32.mrb[0].mxu0
    %7267 = vmatprep.mubr.f32.mxu0 0.0
    %7268 = vmatmul.mubr.f32.gmra.mrb[0].mxu0 %v6942
    %v7269 = vpop.f32.mrb[0].mxu0
    %v7270 = vadd.f32 0.0, %v7269
    %v7271 = vpop.f32.mrb[0].mxu0
    %7272 = vmatprep.mubr.f32.mxu0 0.0
    %7273 = vmatmul.mubr.f32.gmra.mrb[0].mxu0 %v6945
    %v7274 = vpop.f32.mrb[0].mxu0
    %v7275 = vadd.f32 0.0, %v7274
    %v7276 = vpop.f32.mrb[0].mxu0
    %7277 = vmatprep.mubr.f32.mxu0 0.0
    %7278 = vmatmul.mubr.f32.gmra.mrb[0].mxu0 %v6948
    %v7279 = vpop.f32.mrb[0].mxu0
    %v7280 = vadd.f32 0.0, %v7279
    %v7281 = vpop.f32.mrb[0].mxu0
    %7282 = vmatprep.mubr.f32.mxu0 0.0
    %7283 = vmatmul.mubr.f32.gmra.mrb[0].mxu0 %v6951
    %v7284 = vpop.f32.mrb[0].mxu0
    %v7285 = vadd.f32 0.0, %v7284
    %v7286 = vpop.f32.mrb[0].mxu0
    %7287 = vmatprep.mubr.f32.mxu0 0.0
    %7288 = vmatmul.mubr.f32.gmra.mrb[0].mxu0 %v6954
    %v7289 = vpop.f32.mrb[0].mxu0
    %v7290 = vadd.f32 0.0, %v7289
    %v7291 = vpop.f32.mrb[0].mxu0
    %7292 = vmatprep.mubr.f32.mxu0 0.0
    %7293 = vmatmul.mubr.f32.gmra.mrb[0].mxu0 %v6957
    %v7294 = vpop.f32.mrb[0].mxu0
    %v7295 = vadd.f32 0.0, %v7294
    %v7296 = vpop.f32.mrb[0].mxu0
    %7297 = vmatprep.mubr.f32.mxu0 0.0
    %7298 = vmatmul.mubr.f32.gmra.mrb[0].mxu0 %v6960
    %v7299 = vpop.f32.mrb[0].mxu0
    %v7300 = vadd.f32 0.0, %v7299
    %v7301 = vpop.f32.mrb[0].mxu0
    %7302 = vmatprep.mubr.f32.mxu0 0.0
    %7303 = vmatmul.mubr.f32.gmra.mrb[0].mxu0 %v6963
    %v7304 = vpop.f32.mrb[0].mxu0
    %v7305 = vadd.f32 0.0, %v7304
    %v7306 = vpop.f32.mrb[0].mxu0
    %7307 = vmatprep.mubr.f32.mxu0 0.0
    %7308 = vmatmul.mubr.f32.gmra.mrb[0].mxu0 %v6966
    %v7309 = vpop.f32.mrb[0].mxu0
    %v7310 = vadd.f32 0.0, %v7309
    %v7311 = vpop.f32.mrb[0].mxu0
    %7312 = vmatprep.mubr.f32.mxu0 0.0
    %7313 = vmatmul.mubr.f32.gmra.mrb[0].mxu0 %v6969
    %v7314 = vpop.f32.mrb[0].mxu0
    %v7315 = vadd.f32 0.0, %v7314
    %v7316 = vpop.f32.mrb[0].mxu0
    %7317 = vmatprep.mubr.f32.mxu0 0.0
    %7318 = vmatmul.mubr.f32.gmra.mrb[0].mxu0 %v6972
    %v7319 = vpop.f32.mrb[0].mxu0
    %v7320 = vadd.f32 0.0, %v7319
    %v7321 = vpop.f32.mrb[0].mxu0
    %7322 = vmatprep.mubr.f32.mxu0 0.0
    %7323 = vmatmul.mubr.f32.gmra.mrb[0].mxu0 %v6975
    %v7324 = vpop.f32.mrb[0].mxu0
    %v7325 = vadd.f32 0.0, %v7324
    %v7326 = vpop.f32.mrb[0].mxu0
    %7327 = vmatprep.mubr.f32.mxu0 0.0
    %7328 = vmatmul.mubr.f32.gmra.mrb[0].mxu0 %v6978
    %v7329 = vpop.f32.mrb[0].mxu0
    %v7330 = vadd.f32 0.0, %v7329
    %v7331 = vpop.f32.mrb[0].mxu0
    %7332 = vmatprep.mubr.f32.mxu0 0.0
    %7333 = vmatmul.mubr.f32.gmra.mrb[0].mxu0 %v6981
    %v7334 = vpop.f32.mrb[0].mxu0
    %v7335 = vadd.f32 0.0, %v7334
    %v7336 = vpop.f32.mrb[0].mxu0
    %7337 = vmatprep.mubr.f32.mxu0 0.0
    %7338 = vmatmul.mubr.f32.gmra.mrb[0].mxu0 %v6984
    %v7339 = vpop.f32.mrb[0].mxu0
    %v7340 = vadd.f32 0.0, %v7339
    %v7341 = vpop.f32.mrb[0].mxu0
    %7342 = vmatprep.mubr.f32.mxu0 0.0
    %7343 = vmatmul.mubr.f32.gmra.mrb[0].mxu0 %v6987
    %v7344 = vpop.f32.mrb[0].mxu0
    %v7345 = vadd.f32 0.0, %v7344
    %v7346 = vpop.f32.mrb[0].mxu0
    %7347 = vmatprep.mubr.f32.mxu0 0.0
    %7348 = vmatmul.mubr.f32.gmra.mrb[0].mxu0 %v6990
    %v7349 = vpop.f32.mrb[0].mxu0
    %v7350 = vadd.f32 0.0, %v7349
    %v7351 = vpop.f32.mrb[0].mxu0
    %7352 = vmatprep.mubr.f32.mxu0 0.0
    %7353 = vmatmul.mubr.f32.gmra.mrb[0].mxu0 %v6993
    %v7354 = vpop.f32.mrb[0].mxu0
    %v7355 = vadd.f32 0.0, %v7354
    %v7356 = vpop.f32.mrb[0].mxu0
    %7357 = vmatprep.mubr.f32.mxu0 0.0
    %7358 = vmatmul.mubr.f32.gmra.mrb[0].mxu0 %v6996
    %v7359 = vpop.f32.mrb[0].mxu0
    %v7360 = vadd.f32 0.0, %v7359
    %v7361 = vpop.f32.mrb[0].mxu0
    %7362 = vmatprep.mubr.f32.mxu0 0.0
    %7363 = vmatmul.mubr.f32.gmra.mrb[0].mxu0 %v6999
    %v7364 = vpop.f32.mrb[0].mxu0
    %v7365 = vadd.f32 0.0, %v7364
    %v7366 = vpop.f32.mrb[0].mxu0
    %7367 = vmatprep.mubr.f32.mxu0 0.0
    %7368 = vmatmul.mubr.f32.gmra.mrb[0].mxu0 %v7002
    %v7369 = vpop.f32.mrb[0].mxu0
    %v7370 = vadd.f32 0.0, %v7369
    %v7371 = vpop.f32.mrb[0].mxu0
    %7372 = vmatprep.mubr.f32.mxu0 0.0
    %7373 = vmatmul.mubr.f32.gmra.mrb[0].mxu0 %v7005
    %v7374 = vpop.f32.mrb[0].mxu0
    %v7375 = vadd.f32 0.0, %v7374
    %v7376 = vpop.f32.mrb[0].mxu0
    %7377 = vmatprep.mubr.f32.mxu0 0.0
    %7378 = vmatmul.mubr.f32.gmra.mrb[0].mxu0 %v7008
    %v7379 = vpop.f32.mrb[0].mxu0
    %v7380 = vadd.f32 0.0, %v7379
    %v7381 = vpop.f32.mrb[0].mxu0
    %7382 = vmatprep.mubr.f32.mxu0 0.0
    %7383 = vmatmul.mubr.f32.gmra.mrb[0].mxu0 %v7011
    %v7384 = vpop.f32.mrb[0].mxu0
    %v7385 = vadd.f32 0.0, %v7384
    %v7386 = vpop.f32.mrb[0].mxu0
    %7387 = vmatprep.mubr.f32.mxu0 0.0
    %7388 = vmatmul.mubr.f32.gmra.mrb[0].mxu0 %v7014
    %v7389 = vpop.f32.mrb[0].mxu0
    %v7390 = vadd.f32 0.0, %v7389
    %v7391 = vpop.f32.mrb[0].mxu0
    %7392 = vmatprep.mubr.f32.mxu0 0.0
    %7393 = vmatmul.mubr.f32.gmra.mrb[0].mxu0 %v7017
    %v7394 = vpop.f32.mrb[0].mxu0
    %v7395 = vadd.f32 0.0, %v7394
    %v7396 = vpop.f32.mrb[0].mxu0
    %7397 = vmatprep.mubr.f32.mxu0 0.0
    %7398 = vmatmul.mubr.f32.gmra.mrb[0].mxu0 %v7020
    %v7399 = vpop.f32.mrb[0].mxu0
    %v7400 = vadd.f32 0.0, %v7399
    %v7401 = vpop.f32.mrb[0].mxu0
    %7402 = vmatprep.mubr.f32.mxu0 0.0
    %7403 = vmatmul.mubr.f32.gmra.mrb[0].mxu0 %v7023
    %v7404 = vpop.f32.mrb[0].mxu0
    %v7405 = vadd.f32 0.0, %v7404
    %v7406 = vpop.f32.mrb[0].mxu0
    %7407 = vmatprep.mubr.f32.mxu0 0.0
    %7408 = vmatmul.mubr.f32.gmra.mrb[0].mxu0 %v7026
    %v7409 = vpop.f32.mrb[0].mxu0
    %v7410 = vadd.f32 0.0, %v7409
    %v7411 = vpop.f32.mrb[0].mxu0
    %7412 = vdwg.mxu0
    %v7413 = vld [vmem:[#allocation6] sm:$0x1]
    %vm7414 = vcmask 15360
    %v7415 = vsel %vm7414, %v7095, -inf
    %v7416 = vsel %vm7414, %v7100, -inf
    %v7417 = vsel %vm7414, %v7105, -inf
    %v7418 = vsel %vm7414, %v7110, -inf
    %v7419 = vsel %vm7414, %v7115, -inf
    %v7420 = vmax.f32 %v7415, %v7419
    %v7421 = vsel %vm7414, %v7120, -inf
    %v7422 = vmax.f32 %v7416, %v7421
    %v7423 = vsel %vm7414, %v7125, -inf
    %v7424 = vmax.f32 %v7417, %v7423
    %v7425 = vsel %vm7414, %v7130, -inf
    %v7426 = vmax.f32 %v7418, %v7425
    %v7427 = vsel %vm7414, %v7135, -inf
    %v7428 = vmax.f32 %v7420, %v7427
    %v7429 = vsel %vm7414, %v7140, -inf
    %v7430 = vmax.f32 %v7422, %v7429
    %v7431 = vsel %vm7414, %v7145, -inf
    %v7432 = vmax.f32 %v7424, %v7431
    %v7433 = vsel %vm7414, %v7150, -inf
    %v7434 = vmax.f32 %v7426, %v7433
    %v7435 = vsel %vm7414, %v7155, -inf
    %v7436 = vmax.f32 %v7428, %v7435
    %v7437 = vsel %vm7414, %v7160, -inf
    %v7438 = vmax.f32 %v7430, %v7437
    %v7439 = vsel %vm7414, %v7165, -inf
    %v7440 = vmax.f32 %v7432, %v7439
    %v7441 = vsel %vm7414, %v7170, -inf
    %v7442 = vmax.f32 %v7434, %v7441
    %v7443 = vsel %vm7414, %v7175, -inf
    %v7444 = vmax.f32 %v7436, %v7443
    %v7445 = vsel %vm7414, %v7180, -inf
    %v7446 = vmax.f32 %v7438, %v7445
    %v7447 = vsel %vm7414, %v7185, -inf
    %v7448 = vmax.f32 %v7440, %v7447
    %v7449 = vsel %vm7414, %v7190, -inf
    %v7450 = vmax.f32 %v7442, %v7449
    %v7451 = vsel %vm7414, %v7195, -inf
    %v7452 = vmax.f32 %v7444, %v7451
    %v7453 = vsel %vm7414, %v7200, -inf
    %v7454 = vmax.f32 %v7446, %v7453
    %v7455 = vsel %vm7414, %v7205, -inf
    %v7456 = vmax.f32 %v7448, %v7455
    %v7457 = vsel %vm7414, %v7210, -inf
    %v7458 = vmax.f32 %v7450, %v7457
    %v7459 = vsel %vm7414, %v7215, -inf
    %v7460 = vmax.f32 %v7452, %v7459
    %v7461 = vsel %vm7414, %v7220, -inf
    %v7462 = vmax.f32 %v7454, %v7461
    %v7463 = vsel %vm7414, %v7225, -inf
    %v7464 = vmax.f32 %v7456, %v7463
    %v7465 = vsel %vm7414, %v7230, -inf
    %v7466 = vmax.f32 %v7458, %v7465
    %v7467 = vsel %vm7414, %v7235, -inf
    %v7468 = vmax.f32 %v7460, %v7467
    %v7469 = vsel %vm7414, %v7240, -inf
    %v7470 = vmax.f32 %v7462, %v7469
    %v7471 = vsel %vm7414, %v7245, -inf
    %v7472 = vmax.f32 %v7464, %v7471
    %v7473 = vsel %vm7414, %v7250, -inf
    %v7474 = vmax.f32 %v7466, %v7473
    %v7475 = vsel %vm7414, %v7255, -inf
    %v7476 = vmax.f32 %v7468, %v7475
    %v7477 = vsel %vm7414, %v7260, -inf
    %v7478 = vmax.f32 %v7470, %v7477
    %v7479 = vsel %vm7414, %v7265, -inf
    %v7480 = vmax.f32 %v7472, %v7479
    %v7481 = vsel %vm7414, %v7270, -inf
    %v7482 = vmax.f32 %v7474, %v7481
    %v7483 = vsel %vm7414, %v7275, -inf
    %v7484 = vmax.f32 %v7476, %v7483
    %v7485 = vsel %vm7414, %v7280, -inf
    %v7486 = vmax.f32 %v7478, %v7485
    %v7487 = vsel %vm7414, %v7285, -inf
    %v7488 = vmax.f32 %v7480, %v7487
    %v7489 = vsel %vm7414, %v7290, -inf
    %v7490 = vmax.f32 %v7482, %v7489
    %v7491 = vsel %vm7414, %v7295, -inf
    %v7492 = vmax.f32 %v7484, %v7491
    %v7493 = vsel %vm7414, %v7300, -inf
    %v7494 = vmax.f32 %v7486, %v7493
    %v7495 = vsel %vm7414, %v7305, -inf
    %v7496 = vmax.f32 %v7488, %v7495
    %v7497 = vsel %vm7414, %v7310, -inf
    %v7498 = vmax.f32 %v7490, %v7497
    %v7499 = vsel %vm7414, %v7315, -inf
    %v7500 = vmax.f32 %v7492, %v7499
    %v7501 = vsel %vm7414, %v7320, -inf
    %v7502 = vmax.f32 %v7494, %v7501
    %v7503 = vsel %vm7414, %v7325, -inf
    %v7504 = vmax.f32 %v7496, %v7503
    %v7505 = vsel %vm7414, %v7330, -inf
    %v7506 = vmax.f32 %v7498, %v7505
    %v7507 = vsel %vm7414, %v7335, -inf
    %v7508 = vmax.f32 %v7500, %v7507
    %v7509 = vsel %vm7414, %v7340, -inf
    %v7510 = vmax.f32 %v7502, %v7509
    %v7511 = vsel %vm7414, %v7345, -inf
    %v7512 = vmax.f32 %v7504, %v7511
    %v7513 = vsel %vm7414, %v7350, -inf
    %v7514 = vmax.f32 %v7506, %v7513
    %v7515 = vsel %vm7414, %v7355, -inf
    %v7516 = vmax.f32 %v7508, %v7515
    %v7517 = vsel %vm7414, %v7360, -inf
    %v7518 = vmax.f32 %v7510, %v7517
    %v7519 = vsel %vm7414, %v7365, -inf
    %v7520 = vmax.f32 %v7512, %v7519
    %v7521 = vsel %vm7414, %v7370, -inf
    %v7522 = vmax.f32 %v7514, %v7521
    %v7523 = vsel %vm7414, %v7375, -inf
    %v7524 = vmax.f32 %v7516, %v7523
    %v7525 = vsel %vm7414, %v7380, -inf
    %v7526 = vmax.f32 %v7518, %v7525
    %v7527 = vsel %vm7414, %v7385, -inf
    %v7528 = vmax.f32 %v7520, %v7527
    %v7529 = vsel %vm7414, %v7390, -inf
    %v7530 = vmax.f32 %v7522, %v7529
    %v7531 = vsel %vm7414, %v7395, -inf
    %v7532 = vmax.f32 %v7524, %v7531
    %v7533 = vsel %vm7414, %v7400, -inf
    %v7534 = vmax.f32 %v7526, %v7533
    %v7535 = vsel %vm7414, %v7405, -inf
    %v7536 = vmax.f32 %v7528, %v7535
    %v7537 = vsel %vm7414, %v7410, -inf
    %v7538 = vmax.f32 %v7530, %v7537
    %v7539 = vmax.f32 %v7532, %v7534
    %v7540 = vmax.f32 %v7536, %v7538
    %v7541 = vmax.f32 %v7539, %v7540
    %v7542 = vrot.slane %v7541, 4
    %v7543 = vmax.f32 %v7541, %v7542
    %v7544 = vrot.slane %v7543, 2
    %v7545 = vmax.f32 %v7543, %v7544
    %v7546 = vrot.slane %v7545, 1
    %v7547 = vmax.f32 %v7545, %v7546
    %v7548 = vmax.f32 %v7413, %v7547
    %v7549 = vsub.f32 %v7413, %v7548
    %v7550 = vmul.f32 %v7549, 1.442695
    %v7551 = vpow.pop %v7550
    %vm7552 = vcmask 8192
    %7553 = vst.msk [vmem:[#allocation6] sm:$0x1] %vm7552, %v7548
    %v7555 = vlaneseq
    %v7556 = vshrl.u32 %v7555, 7
    %v7557 = vsub.s32 0, %v7556
    %v7558 = vrot.slane %v7548, %v7557
    %v7560 = vsub.f32 %v7095, %v7558
    %v7561 = vsub.f32 %v7100, %v7558
    %v7562 = vsub.f32 %v7105, %v7558
    %v7563 = vsub.f32 %v7110, %v7558
    %v7564 = vsub.f32 %v7115, %v7558
    %v7565 = vsub.f32 %v7120, %v7558
    %v7566 = vsub.f32 %v7125, %v7558
    %v7567 = vsub.f32 %v7130, %v7558
    %v7568 = vsub.f32 %v7135, %v7558
    %v7569 = vsub.f32 %v7140, %v7558
    %v7570 = vsub.f32 %v7145, %v7558
    %v7571 = vsub.f32 %v7150, %v7558
    %v7572 = vsub.f32 %v7155, %v7558
    %v7573 = vsub.f32 %v7160, %v7558
    %v7574 = vsub.f32 %v7165, %v7558
    %v7575 = vsub.f32 %v7170, %v7558
    %v7576 = vsub.f32 %v7175, %v7558
    %v7577 = vsub.f32 %v7180, %v7558
    %v7578 = vsub.f32 %v7185, %v7558
    %v7579 = vsub.f32 %v7190, %v7558
    %v7580 = vsub.f32 %v7195, %v7558
    %v7581 = vsub.f32 %v7200, %v7558
    %v7582 = vsub.f32 %v7205, %v7558
    %v7583 = vsub.f32 %v7210, %v7558
    %v7584 = vsub.f32 %v7215, %v7558
    %v7585 = vsub.f32 %v7220, %v7558
    %v7586 = vsub.f32 %v7225, %v7558
    %v7587 = vsub.f32 %v7230, %v7558
    %v7588 = vsub.f32 %v7235, %v7558
    %v7589 = vsub.f32 %v7240, %v7558
    %v7590 = vsub.f32 %v7245, %v7558
    %v7591 = vsub.f32 %v7250, %v7558
    %v7592 = vsub.f32 %v7255, %v7558
    %v7593 = vsub.f32 %v7260, %v7558
    %v7594 = vsub.f32 %v7265, %v7558
    %v7595 = vsub.f32 %v7270, %v7558
    %v7596 = vsub.f32 %v7275, %v7558
    %v7597 = vsub.f32 %v7280, %v7558
    %v7598 = vsub.f32 %v7285, %v7558
    %v7599 = vsub.f32 %v7290, %v7558
    %v7600 = vsub.f32 %v7295, %v7558
    %v7601 = vsub.f32 %v7300, %v7558
    %v7602 = vsub.f32 %v7305, %v7558
    %v7603 = vsub.f32 %v7310, %v7558
    %v7604 = vsub.f32 %v7315, %v7558
    %v7605 = vsub.f32 %v7320, %v7558
    %v7606 = vsub.f32 %v7325, %v7558
    %v7607 = vsub.f32 %v7330, %v7558
    %v7608 = vsub.f32 %v7335, %v7558
    %v7609 = vsub.f32 %v7340, %v7558
    %v7610 = vsub.f32 %v7345, %v7558
    %v7611 = vsub.f32 %v7350, %v7558
    %v7612 = vsub.f32 %v7355, %v7558
    %v7613 = vsub.f32 %v7360, %v7558
    %v7614 = vsub.f32 %v7365, %v7558
    %v7615 = vsub.f32 %v7370, %v7558
    %v7616 = vsub.f32 %v7375, %v7558
    %v7617 = vsub.f32 %v7380, %v7558
    %v7618 = vsub.f32 %v7385, %v7558
    %v7619 = vsub.f32 %v7390, %v7558
    %v7620 = vsub.f32 %v7395, %v7558
    %v7621 = vsub.f32 %v7400, %v7558
    %v7622 = vsub.f32 %v7405, %v7558
    %v7623 = vsub.f32 %v7410, %v7558
    %v7624 = vmul.f32 %v7560, 1.442695
    %v7625 = vpow.pop %v7624
    %v7626 = vmul.f32 %v7561, 1.442695
    %v7627 = vpow.pop %v7626
    %v7628 = vmul.f32 %v7562, 1.442695
    %v7629 = vpow.pop %v7628
    %v7630 = vmul.f32 %v7563, 1.442695
    %v7631 = vpow.pop %v7630
    %v7632 = vmul.f32 %v7564, 1.442695
    %v7633 = vpow.pop %v7632
    %v7634 = vmul.f32 %v7565, 1.442695
    %v7635 = vpow.pop %v7634
    %v7636 = vmul.f32 %v7566, 1.442695
    %v7637 = vpow.pop %v7636
    %v7638 = vmul.f32 %v7567, 1.442695
    %v7639 = vpow.pop %v7638
    %v7640 = vmul.f32 %v7568, 1.442695
    %v7641 = vpow.pop %v7640
    %v7642 = vmul.f32 %v7569, 1.442695
    %v7643 = vpow.pop %v7642
    %v7644 = vmul.f32 %v7570, 1.442695
    %v7645 = vpow.pop %v7644
    %v7646 = vmul.f32 %v7571, 1.442695
    %v7647 = vpow.pop %v7646
    %v7648 = vmul.f32 %v7572, 1.442695
    %v7649 = vpow.pop %v7648
    %v7650 = vmul.f32 %v7573, 1.442695
    %v7651 = vpow.pop %v7650
    %v7652 = vmul.f32 %v7574, 1.442695
    %v7653 = vpow.pop %v7652
    %v7654 = vmul.f32 %v7575, 1.442695
    %v7655 = vpow.pop %v7654
    %v7656 = vmul.f32 %v7576, 1.442695
    %v7657 = vpow.pop %v7656
    %v7658 = vmul.f32 %v7577, 1.442695
    %v7659 = vpow.pop %v7658
    %v7660 = vmul.f32 %v7578, 1.442695
    %v7661 = vpow.pop %v7660
    %v7662 = vmul.f32 %v7579, 1.442695
    %v7663 = vpow.pop %v7662
    %v7664 = vmul.f32 %v7580, 1.442695
    %v7665 = vpow.pop %v7664
    %v7666 = vmul.f32 %v7581, 1.442695
    %v7667 = vpow.pop %v7666
    %v7668 = vmul.f32 %v7582, 1.442695
    %v7669 = vpow.pop %v7668
    %v7670 = vmul.f32 %v7583, 1.442695
    %v7671 = vpow.pop %v7670
    %v7672 = vmul.f32 %v7584, 1.442695
    %v7673 = vpow.pop %v7672
    %v7674 = vmul.f32 %v7585, 1.442695
    %v7675 = vpow.pop %v7674
    %v7676 = vmul.f32 %v7586, 1.442695
    %v7677 = vpow.pop %v7676
    %v7678 = vmul.f32 %v7587, 1.442695
    %v7679 = vpow.pop %v7678
    %v7680 = vmul.f32 %v7588, 1.442695
    %v7681 = vpow.pop %v7680
    %v7682 = vmul.f32 %v7589, 1.442695
    %v7683 = vpow.pop %v7682
    %v7684 = vmul.f32 %v7590, 1.442695
    %v7685 = vpow.pop %v7684
    %v7686 = vmul.f32 %v7591, 1.442695
    %v7687 = vpow.pop %v7686
    %v7688 = vmul.f32 %v7592, 1.442695
    %v7689 = vpow.pop %v7688
    %v7690 = vmul.f32 %v7593, 1.442695
    %v7691 = vpow.pop %v7690
    %v7692 = vmul.f32 %v7594, 1.442695
    %v7693 = vpow.pop %v7692
    %v7694 = vmul.f32 %v7595, 1.442695
    %v7695 = vpow.pop %v7694
    %v7696 = vmul.f32 %v7596, 1.442695
    %v7697 = vpow.pop %v7696
    %v7698 = vmul.f32 %v7597, 1.442695
    %v7699 = vpow.pop %v7698
    %v7700 = vmul.f32 %v7598, 1.442695
    %v7701 = vpow.pop %v7700
    %v7702 = vmul.f32 %v7599, 1.442695
    %v7703 = vpow.pop %v7702
    %v7704 = vmul.f32 %v7600, 1.442695
    %v7705 = vpow.pop %v7704
    %v7706 = vmul.f32 %v7601, 1.442695
    %v7707 = vpow.pop %v7706
    %v7708 = vmul.f32 %v7602, 1.442695
    %v7709 = vpow.pop %v7708
    %v7710 = vmul.f32 %v7603, 1.442695
    %v7711 = vpow.pop %v7710
    %v7712 = vmul.f32 %v7604, 1.442695
    %v7713 = vpow.pop %v7712
    %v7714 = vmul.f32 %v7605, 1.442695
    %v7715 = vpow.pop %v7714
    %v7716 = vmul.f32 %v7606, 1.442695
    %v7717 = vpow.pop %v7716
    %v7718 = vmul.f32 %v7607, 1.442695
    %v7719 = vpow.pop %v7718
    %v7720 = vmul.f32 %v7608, 1.442695
    %v7721 = vpow.pop %v7720
    %v7722 = vmul.f32 %v7609, 1.442695
    %v7723 = vpow.pop %v7722
    %v7724 = vmul.f32 %v7610, 1.442695
    %v7725 = vpow.pop %v7724
    %v7726 = vmul.f32 %v7611, 1.442695
    %v7727 = vpow.pop %v7726
    %v7728 = vmul.f32 %v7612, 1.442695
    %v7729 = vpow.pop %v7728
    %v7730 = vmul.f32 %v7613, 1.442695
    %v7731 = vpow.pop %v7730
    %v7732 = vmul.f32 %v7614, 1.442695
    %v7733 = vpow.pop %v7732
    %v7734 = vmul.f32 %v7615, 1.442695
    %v7735 = vpow.pop %v7734
    %v7736 = vmul.f32 %v7616, 1.442695
    %v7737 = vpow.pop %v7736
    %v7738 = vmul.f32 %v7617, 1.442695
    %v7739 = vpow.pop %v7738
    %v7740 = vmul.f32 %v7618, 1.442695
    %v7741 = vpow.pop %v7740
    %v7742 = vmul.f32 %v7619, 1.442695
    %v7743 = vpow.pop %v7742
    %v7744 = vmul.f32 %v7620, 1.442695
    %v7745 = vpow.pop %v7744
    %v7746 = vmul.f32 %v7621, 1.442695
    %v7747 = vpow.pop %v7746
    %v7748 = vmul.f32 %v7622, 1.442695
    %v7749 = vpow.pop %v7748
    %v7750 = vmul.f32 %v7623, 1.442695
    %v7751 = vpow.pop %v7750
    %v7752 = vld [vmem:[%s18] sm:$0x3]
    %v7754 = vsel %vm7414, %v7625, 0
    %v7757 = vsel %vm7414, %v7627, 0
    %v7760 = vsel %vm7414, %v7629, 0
    %v7763 = vsel %vm7414, %v7631, 0
    %v7766 = vsel %vm7414, %v7633, 0
    %v7769 = vsel %vm7414, %v7635, 0
    %v7772 = vsel %vm7414, %v7637, 0
    %v7775 = vsel %vm7414, %v7639, 0
    %v7778 = vsel %vm7414, %v7641, 0
    %v7781 = vsel %vm7414, %v7643, 0
    %v7784 = vsel %vm7414, %v7645, 0
    %v7787 = vsel %vm7414, %v7647, 0
    %v7790 = vsel %vm7414, %v7649, 0
    %v7793 = vsel %vm7414, %v7651, 0
    %v7796 = vsel %vm7414, %v7653, 0
    %v7799 = vsel %vm7414, %v7655, 0
    %v7802 = vsel %vm7414, %v7657, 0
    %v7805 = vsel %vm7414, %v7659, 0
    %v7808 = vsel %vm7414, %v7661, 0
    %v7811 = vsel %vm7414, %v7663, 0
    %v7814 = vsel %vm7414, %v7665, 0
    %v7817 = vsel %vm7414, %v7667, 0
    %v7820 = vsel %vm7414, %v7669, 0
    %v7823 = vsel %vm7414, %v7671, 0
    %v7826 = vsel %vm7414, %v7673, 0
    %v7829 = vsel %vm7414, %v7675, 0
    %v7832 = vsel %vm7414, %v7677, 0
    %v7835 = vsel %vm7414, %v7679, 0
    %v7838 = vsel %vm7414, %v7681, 0
    %v7841 = vsel %vm7414, %v7683, 0
    %v7844 = vsel %vm7414, %v7685, 0
    %v7847 = vsel %vm7414, %v7687, 0
    %v7850 = vsel %vm7414, %v7689, 0
    %v7853 = vsel %vm7414, %v7691, 0
    %v7856 = vsel %vm7414, %v7693, 0
    %v7859 = vsel %vm7414, %v7695, 0
    %v7862 = vsel %vm7414, %v7697, 0
    %v7865 = vsel %vm7414, %v7699, 0
    %v7868 = vsel %vm7414, %v7701, 0
    %v7871 = vsel %vm7414, %v7703, 0
    %v7874 = vsel %vm7414, %v7705, 0
    %v7877 = vsel %vm7414, %v7707, 0
    %v7880 = vsel %vm7414, %v7709, 0
    %v7883 = vsel %vm7414, %v7711, 0
    %v7886 = vsel %vm7414, %v7713, 0
    %v7889 = vsel %vm7414, %v7715, 0
    %v7892 = vsel %vm7414, %v7717, 0
    %v7895 = vsel %vm7414, %v7719, 0
    %v7898 = vsel %vm7414, %v7721, 0
    %v7901 = vsel %vm7414, %v7723, 0
    %v7904 = vsel %vm7414, %v7725, 0
    %v7907 = vsel %vm7414, %v7727, 0
    %v7910 = vsel %vm7414, %v7729, 0
    %v7913 = vsel %vm7414, %v7731, 0
    %v7916 = vsel %vm7414, %v7733, 0
    %v7919 = vsel %vm7414, %v7735, 0
    %v7922 = vsel %vm7414, %v7737, 0
    %v7925 = vsel %vm7414, %v7739, 0
    %v7928 = vsel %vm7414, %v7741, 0
    %v7931 = vsel %vm7414, %v7743, 0
    %v7934 = vsel %vm7414, %v7745, 0
    %v7937 = vsel %vm7414, %v7747, 0
    %v7940 = vsel %vm7414, %v7749, 0
    %v7943 = vsel %vm7414, %v7751, 0
    %vm7945 = vcmask 1041408
    %v7947 = vsel %vm7945, %v7752, 0
    %7949 = vmatprep.subr.mxu0 0.0
    %7950 = vmatpush1.msra.mxu0 %v7947
    %7951 = vmatprep.subr.mxu0 0.0
    %7952 = vmatpush1.msra.mxu0 0.0
    %7953 = vmatprep.subr.mxu0 0.0
    %7954 = vmatpush1.msra.mxu0 0.0
    %7955 = vmatprep.subr.mxu0 0.0
    %7956 = vmatpush1.msra.mxu0 0.0
    %7957 = vmatprep.subr.mxu0 0.0
    %7958 = vmatpush1.msra.mxu0 0.0
    %7959 = vmatprep.subr.mxu0 0.0
    %7960 = vmatpush1.msra.mxu0 0.0
    %7961 = vmatprep.subr.mxu0 0.0
    %7962 = vmatpush1.msra.mxu0 0.0
    %7963 = vmatprep.subr.mxu0 0.0
    %7964 = vmatpush1.msra.mxu0 0.0
    %7965 = vmatprep.subr.mxu0 0.0
    %7966 = vmatpush1.msra.mxu0 0.0
    %7967 = vmatprep.subr.mxu0 0.0
    %7968 = vmatpush1.msra.mxu0 0.0
    %7969 = vmatprep.subr.mxu0 0.0
    %7970 = vmatpush1.msra.mxu0 0.0
    %7971 = vmatprep.subr.mxu0 0.0
    %7972 = vmatpush1.msra.mxu0 0.0
    %7973 = vmatprep.subr.mxu0 0.0
    %7974 = vmatpush1.msra.mxu0 0.0
    %7975 = vmatprep.subr.mxu0 0.0
    %7976 = vmatpush1.msra.mxu0 0.0
    %7977 = vmatprep.subr.mxu0 0.0
    %7978 = vmatpush1.msra.mxu0 0.0
    %7979 = vmatprep.subr.mxu0 0.0
    %7980 = vmatpush1.msra.mxu0 0.0
    %7981 = vmatprep.subr.mxu0 0.0
    %7982 = vmatpush1.msra.mxu0 0.0
    %7983 = vmatprep.subr.mxu0 0.0
    %7984 = vmatpush1.msra.mxu0 0.0
    %7985 = vmatprep.subr.mxu0 0.0
    %7986 = vmatpush1.msra.mxu0 0.0
    %7987 = vmatprep.subr.mxu0 0.0
    %7988 = vmatpush1.msra.mxu0 0.0
    %7989 = vmatprep.subr.mxu0 0.0
    %7990 = vmatpush1.msra.mxu0 0.0
    %7991 = vmatprep.subr.mxu0 0.0
    %7992 = vmatpush1.msra.mxu0 0.0
    %7993 = vmatprep.subr.mxu0 0.0
    %7994 = vmatpush1.msra.mxu0 0.0
    %7995 = vmatprep.subr.mxu0 0.0
    %7996 = vmatpush1.msra.mxu0 0.0
    %7997 = vmatprep.subr.mxu0 0.0
    %7998 = vmatpush1.msra.mxu0 0.0
    %7999 = vmatprep.subr.mxu0 0.0
    %8000 = vmatpush1.msra.mxu0 0.0
    %8001 = vmatprep.subr.mxu0 0.0
    %8002 = vmatpush1.msra.mxu0 0.0
    %8003 = vmatprep.subr.mxu0 0.0
    %8004 = vmatpush1.msra.mxu0 0.0
    %8005 = vmatprep.subr.mxu0 0.0
    %8006 = vmatpush1.msra.mxu0 0.0
    %8007 = vmatprep.subr.mxu0 0.0
    %8008 = vmatpush1.msra.mxu0 0.0
    %8009 = vmatprep.subr.mxu0 0.0
    %8010 = vmatpush1.msra.mxu0 0.0
    %8011 = vmatprep.subr.mxu0 0.0
    %8012 = vmatpush1.msra.mxu0 0.0
    %8013 = vmatprep.mubr.f32.mxu0 0.0
    %8014 = vmatmul.mubr.f32.gmra.mrb[0].mxu0 %v7754
    %v8015 = vpop.f32.mrb[0].mxu0
    %v8016 = vadd.f32 0.0, %v8015
    %v8017 = vpop.f32.mrb[0].mxu0
    %8018 = vmatprep.mubr.f32.mxu0 0.0
    %8019 = vmatmul.mubr.f32.gmra.mrb[0].mxu0 %v7757
    %v8020 = vpop.f32.mrb[0].mxu0
    %v8021 = vadd.f32 0.0, %v8020
    %v8022 = vpop.f32.mrb[0].mxu0
    %8023 = vmatprep.mubr.f32.mxu0 0.0
    %8024 = vmatmul.mubr.f32.gmra.mrb[0].mxu0 %v7760
    %v8025 = vpop.f32.mrb[0].mxu0
    %v8026 = vadd.f32 0.0, %v8025
    %v8027 = vpop.f32.mrb[0].mxu0
    %8028 = vmatprep.mubr.f32.mxu0 0.0
    %8029 = vmatmul.mubr.f32.gmra.mrb[0].mxu0 %v7763
    %v8030 = vpop.f32.mrb[0].mxu0
    %v8031 = vadd.f32 0.0, %v8030
    %v8032 = vpop.f32.mrb[0].mxu0
    %8033 = vmatprep.mubr.f32.mxu0 0.0
    %8034 = vmatmul.mubr.f32.gmra.mrb[0].mxu0 %v7766
    %v8035 = vpop.f32.mrb[0].mxu0
    %v8036 = vadd.f32 0.0, %v8035
    %v8037 = vpop.f32.mrb[0].mxu0
    %8038 = vmatprep.mubr.f32.mxu0 0.0
    %8039 = vmatmul.mubr.f32.gmra.mrb[0].mxu0 %v7769
    %v8040 = vpop.f32.mrb[0].mxu0
    %v8041 = vadd.f32 0.0, %v8040
    %v8042 = vpop.f32.mrb[0].mxu0
    %8043 = vmatprep.mubr.f32.mxu0 0.0
    %8044 = vmatmul.mubr.f32.gmra.mrb[0].mxu0 %v7772
    %v8045 = vpop.f32.mrb[0].mxu0
    %v8046 = vadd.f32 0.0, %v8045
    %v8047 = vpop.f32.mrb[0].mxu0
    %8048 = vmatprep.mubr.f32.mxu0 0.0
    %8049 = vmatmul.mubr.f32.gmra.mrb[0].mxu0 %v7775
    %v8050 = vpop.f32.mrb[0].mxu0
    %v8051 = vadd.f32 0.0, %v8050
    %v8052 = vpop.f32.mrb[0].mxu0
    %8053 = vmatprep.mubr.f32.mxu0 0.0
    %8054 = vmatmul.mubr.f32.gmra.mrb[0].mxu0 %v7778
    %v8055 = vpop.f32.mrb[0].mxu0
    %v8056 = vadd.f32 0.0, %v8055
    %v8057 = vpop.f32.mrb[0].mxu0
    %8058 = vmatprep.mubr.f32.mxu0 0.0
    %8059 = vmatmul.mubr.f32.gmra.mrb[0].mxu0 %v7781
    %v8060 = vpop.f32.mrb[0].mxu0
    %v8061 = vadd.f32 0.0, %v8060
    %v8062 = vpop.f32.mrb[0].mxu0
    %8063 = vmatprep.mubr.f32.mxu0 0.0
    %8064 = vmatmul.mubr.f32.gmra.mrb[0].mxu0 %v7784
    %v8065 = vpop.f32.mrb[0].mxu0
    %v8066 = vadd.f32 0.0, %v8065
    %v8067 = vpop.f32.mrb[0].mxu0
    %8068 = vmatprep.mubr.f32.mxu0 0.0
    %8069 = vmatmul.mubr.f32.gmra.mrb[0].mxu0 %v7787
    %v8070 = vpop.f32.mrb[0].mxu0
    %v8071 = vadd.f32 0.0, %v8070
    %v8072 = vpop.f32.mrb[0].mxu0
    %8073 = vmatprep.mubr.f32.mxu0 0.0
    %8074 = vmatmul.mubr.f32.gmra.mrb[0].mxu0 %v7790
    %v8075 = vpop.f32.mrb[0].mxu0
    %v8076 = vadd.f32 0.0, %v8075
    %v8077 = vpop.f32.mrb[0].mxu0
    %8078 = vmatprep.mubr.f32.mxu0 0.0
    %8079 = vmatmul.mubr.f32.gmra.mrb[0].mxu0 %v7793
    %v8080 = vpop.f32.mrb[0].mxu0
    %v8081 = vadd.f32 0.0, %v8080
    %v8082 = vpop.f32.mrb[0].mxu0
    %8083 = vmatprep.mubr.f32.mxu0 0.0
    %8084 = vmatmul.mubr.f32.gmra.mrb[0].mxu0 %v7796
    %v8085 = vpop.f32.mrb[0].mxu0
    %v8086 = vadd.f32 0.0, %v8085
    %v8087 = vpop.f32.mrb[0].mxu0
    %8088 = vmatprep.mubr.f32.mxu0 0.0
    %8089 = vmatmul.mubr.f32.gmra.mrb[0].mxu0 %v7799
    %v8090 = vpop.f32.mrb[0].mxu0
    %v8091 = vadd.f32 0.0, %v8090
    %v8092 = vpop.f32.mrb[0].mxu0
    %8093 = vmatprep.mubr.f32.mxu0 0.0
    %8094 = vmatmul.mubr.f32.gmra.mrb[0].mxu0 %v7802
    %v8095 = vpop.f32.mrb[0].mxu0
    %v8096 = vadd.f32 0.0, %v8095
    %v8097 = vpop.f32.mrb[0].mxu0
    %8098 = vmatprep.mubr.f32.mxu0 0.0
    %8099 = vmatmul.mubr.f32.gmra.mrb[0].mxu0 %v7805
    %v8100 = vpop.f32.mrb[0].mxu0
    %v8101 = vadd.f32 0.0, %v8100
    %v8102 = vpop.f32.mrb[0].mxu0
    %8103 = vmatprep.mubr.f32.mxu0 0.0
    %8104 = vmatmul.mubr.f32.gmra.mrb[0].mxu0 %v7808
    %v8105 = vpop.f32.mrb[0].mxu0
    %v8106 = vadd.f32 0.0, %v8105
    %v8107 = vpop.f32.mrb[0].mxu0
    %8108 = vmatprep.mubr.f32.mxu0 0.0
    %8109 = vmatmul.mubr.f32.gmra.mrb[0].mxu0 %v7811
    %v8110 = vpop.f32.mrb[0].mxu0
    %v8111 = vadd.f32 0.0, %v8110
    %v8112 = vpop.f32.mrb[0].mxu0
    %8113 = vmatprep.mubr.f32.mxu0 0.0
    %8114 = vmatmul.mubr.f32.gmra.mrb[0].mxu0 %v7814
    %v8115 = vpop.f32.mrb[0].mxu0
    %v8116 = vadd.f32 0.0, %v8115
    %v8117 = vpop.f32.mrb[0].mxu0
    %8118 = vmatprep.mubr.f32.mxu0 0.0
    %8119 = vmatmul.mubr.f32.gmra.mrb[0].mxu0 %v7817
    %v8120 = vpop.f32.mrb[0].mxu0
    %v8121 = vadd.f32 0.0, %v8120
    %v8122 = vpop.f32.mrb[0].mxu0
    %8123 = vmatprep.mubr.f32.mxu0 0.0
    %8124 = vmatmul.mubr.f32.gmra.mrb[0].mxu0 %v7820
    %v8125 = vpop.f32.mrb[0].mxu0
    %v8126 = vadd.f32 0.0, %v8125
    %v8127 = vpop.f32.mrb[0].mxu0
    %8128 = vmatprep.mubr.f32.mxu0 0.0
    %8129 = vmatmul.mubr.f32.gmra.mrb[0].mxu0 %v7823
    %v8130 = vpop.f32.mrb[0].mxu0
    %v8131 = vadd.f32 0.0, %v8130
    %v8132 = vpop.f32.mrb[0].mxu0
    %8133 = vmatprep.mubr.f32.mxu0 0.0
    %8134 = vmatmul.mubr.f32.gmra.mrb[0].mxu0 %v7826
    %v8135 = vpop.f32.mrb[0].mxu0
    %v8136 = vadd.f32 0.0, %v8135
    %v8137 = vpop.f32.mrb[0].mxu0
    %8138 = vmatprep.mubr.f32.mxu0 0.0
    %8139 = vmatmul.mubr.f32.gmra.mrb[0].mxu0 %v7829
    %v8140 = vpop.f32.mrb[0].mxu0
    %v8141 = vadd.f32 0.0, %v8140
    %v8142 = vpop.f32.mrb[0].mxu0
    %8143 = vmatprep.mubr.f32.mxu0 0.0
    %8144 = vmatmul.mubr.f32.gmra.mrb[0].mxu0 %v7832
    %v8145 = vpop.f32.mrb[0].mxu0
    %v8146 = vadd.f32 0.0, %v8145
    %v8147 = vpop.f32.mrb[0].mxu0
    %8148 = vmatprep.mubr.f32.mxu0 0.0
    %8149 = vmatmul.mubr.f32.gmra.mrb[0].mxu0 %v7835
    %v8150 = vpop.f32.mrb[0].mxu0
    %v8151 = vadd.f32 0.0, %v8150
    %v8152 = vpop.f32.mrb[0].mxu0
    %8153 = vmatprep.mubr.f32.mxu0 0.0
    %8154 = vmatmul.mubr.f32.gmra.mrb[0].mxu0 %v7838
    %v8155 = vpop.f32.mrb[0].mxu0
    %v8156 = vadd.f32 0.0, %v8155
    %v8157 = vpop.f32.mrb[0].mxu0
    %8158 = vmatprep.mubr.f32.mxu0 0.0
    %8159 = vmatmul.mubr.f32.gmra.mrb[0].mxu0 %v7841
    %v8160 = vpop.f32.mrb[0].mxu0
    %v8161 = vadd.f32 0.0, %v8160
    %v8162 = vpop.f32.mrb[0].mxu0
    %8163 = vmatprep.mubr.f32.mxu0 0.0
    %8164 = vmatmul.mubr.f32.gmra.mrb[0].mxu0 %v7844
    %v8165 = vpop.f32.mrb[0].mxu0
    %v8166 = vadd.f32 0.0, %v8165
    %v8167 = vpop.f32.mrb[0].mxu0
    %8168 = vmatprep.mubr.f32.mxu0 0.0
    %8169 = vmatmul.mubr.f32.gmra.mrb[0].mxu0 %v7847
    %v8170 = vpop.f32.mrb[0].mxu0
    %v8171 = vadd.f32 0.0, %v8170
    %v8172 = vpop.f32.mrb[0].mxu0
    %8173 = vmatprep.mubr.f32.mxu0 0.0
    %8174 = vmatmul.mubr.f32.gmra.mrb[0].mxu0 %v7850
    %v8175 = vpop.f32.mrb[0].mxu0
    %v8176 = vadd.f32 0.0, %v8175
    %v8177 = vpop.f32.mrb[0].mxu0
    %8178 = vmatprep.mubr.f32.mxu0 0.0
    %8179 = vmatmul.mubr.f32.gmra.mrb[0].mxu0 %v7853
    %v8180 = vpop.f32.mrb[0].mxu0
    %v8181 = vadd.f32 0.0, %v8180
    %v8182 = vpop.f32.mrb[0].mxu0
    %8183 = vmatprep.mubr.f32.mxu0 0.0
    %8184 = vmatmul.mubr.f32.gmra.mrb[0].mxu0 %v7856
    %v8185 = vpop.f32.mrb[0].mxu0
    %v8186 = vadd.f32 0.0, %v8185
    %v8187 = vpop.f32.mrb[0].mxu0
    %8188 = vmatprep.mubr.f32.mxu0 0.0
    %8189 = vmatmul.mubr.f32.gmra.mrb[0].mxu0 %v7859
    %v8190 = vpop.f32.mrb[0].mxu0
    %v8191 = vadd.f32 0.0, %v8190
    %v8192 = vpop.f32.mrb[0].mxu0
    %8193 = vmatprep.mubr.f32.mxu0 0.0
    %8194 = vmatmul.mubr.f32.gmra.mrb[0].mxu0 %v7862
    %v8195 = vpop.f32.mrb[0].mxu0
    %v8196 = vadd.f32 0.0, %v8195
    %v8197 = vpop.f32.mrb[0].mxu0
    %8198 = vmatprep.mubr.f32.mxu0 0.0
    %8199 = vmatmul.mubr.f32.gmra.mrb[0].mxu0 %v7865
    %v8200 = vpop.f32.mrb[0].mxu0
    %v8201 = vadd.f32 0.0, %v8200
    %v8202 = vpop.f32.mrb[0].mxu0
    %8203 = vmatprep.mubr.f32.mxu0 0.0
    %8204 = vmatmul.mubr.f32.gmra.mrb[0].mxu0 %v7868
    %v8205 = vpop.f32.mrb[0].mxu0
    %v8206 = vadd.f32 0.0, %v8205
    %v8207 = vpop.f32.mrb[0].mxu0
    %8208 = vmatprep.mubr.f32.mxu0 0.0
    %8209 = vmatmul.mubr.f32.gmra.mrb[0].mxu0 %v7871
    %v8210 = vpop.f32.mrb[0].mxu0
    %v8211 = vadd.f32 0.0, %v8210
    %v8212 = vpop.f32.mrb[0].mxu0
    %8213 = vmatprep.mubr.f32.mxu0 0.0
    %8214 = vmatmul.mubr.f32.gmra.mrb[0].mxu0 %v7874
    %v8215 = vpop.f32.mrb[0].mxu0
    %v8216 = vadd.f32 0.0, %v8215
    %v8217 = vpop.f32.mrb[0].mxu0
    %8218 = vmatprep.mubr.f32.mxu0 0.0
    %8219 = vmatmul.mubr.f32.gmra.mrb[0].mxu0 %v7877
    %v8220 = vpop.f32.mrb[0].mxu0
    %v8221 = vadd.f32 0.0, %v8220
    %v8222 = vpop.f32.mrb[0].mxu0
    %8223 = vmatprep.mubr.f32.mxu0 0.0
    %8224 = vmatmul.mubr.f32.gmra.mrb[0].mxu0 %v7880
    %v8225 = vpop.f32.mrb[0].mxu0
    %v8226 = vadd.f32 0.0, %v8225
    %v8227 = vpop.f32.mrb[0].mxu0
    %8228 = vmatprep.mubr.f32.mxu0 0.0
    %8229 = vmatmul.mubr.f32.gmra.mrb[0].mxu0 %v7883
    %v8230 = vpop.f32.mrb[0].mxu0
    %v8231 = vadd.f32 0.0, %v8230
    %v8232 = vpop.f32.mrb[0].mxu0
    %8233 = vmatprep.mubr.f32.mxu0 0.0
    %8234 = vmatmul.mubr.f32.gmra.mrb[0].mxu0 %v7886
    %v8235 = vpop.f32.mrb[0].mxu0
    %v8236 = vadd.f32 0.0, %v8235
    %v8237 = vpop.f32.mrb[0].mxu0
    %8238 = vmatprep.mubr.f32.mxu0 0.0
    %8239 = vmatmul.mubr.f32.gmra.mrb[0].mxu0 %v7889
    %v8240 = vpop.f32.mrb[0].mxu0
    %v8241 = vadd.f32 0.0, %v8240
    %v8242 = vpop.f32.mrb[0].mxu0
    %8243 = vmatprep.mubr.f32.mxu0 0.0
    %8244 = vmatmul.mubr.f32.gmra.mrb[0].mxu0 %v7892
    %v8245 = vpop.f32.mrb[0].mxu0
    %v8246 = vadd.f32 0.0, %v8245
    %v8247 = vpop.f32.mrb[0].mxu0
    %8248 = vmatprep.mubr.f32.mxu0 0.0
    %8249 = vmatmul.mubr.f32.gmra.mrb[0].mxu0 %v7895
    %v8250 = vpop.f32.mrb[0].mxu0
    %v8251 = vadd.f32 0.0, %v8250
    %v8252 = vpop.f32.mrb[0].mxu0
    %8253 = vmatprep.mubr.f32.mxu0 0.0
    %8254 = vmatmul.mubr.f32.gmra.mrb[0].mxu0 %v7898
    %v8255 = vpop.f32.mrb[0].mxu0
    %v8256 = vadd.f32 0.0, %v8255
    %v8257 = vpop.f32.mrb[0].mxu0
    %8258 = vmatprep.mubr.f32.mxu0 0.0
    %8259 = vmatmul.mubr.f32.gmra.mrb[0].mxu0 %v7901
    %v8260 = vpop.f32.mrb[0].mxu0
    %v8261 = vadd.f32 0.0, %v8260
    %v8262 = vpop.f32.mrb[0].mxu0
    %8263 = vmatprep.mubr.f32.mxu0 0.0
    %8264 = vmatmul.mubr.f32.gmra.mrb[0].mxu0 %v7904
    %v8265 = vpop.f32.mrb[0].mxu0
    %v8266 = vadd.f32 0.0, %v8265
    %v8267 = vpop.f32.mrb[0].mxu0
    %8268 = vmatprep.mubr.f32.mxu0 0.0
    %8269 = vmatmul.mubr.f32.gmra.mrb[0].mxu0 %v7907
    %v8270 = vpop.f32.mrb[0].mxu0
    %v8271 = vadd.f32 0.0, %v8270
    %v8272 = vpop.f32.mrb[0].mxu0
    %8273 = vmatprep.mubr.f32.mxu0 0.0
    %8274 = vmatmul.mubr.f32.gmra.mrb[0].mxu0 %v7910
    %v8275 = vpop.f32.mrb[0].mxu0
    %v8276 = vadd.f32 0.0, %v8275
    %v8277 = vpop.f32.mrb[0].mxu0
    %8278 = vmatprep.mubr.f32.mxu0 0.0
    %8279 = vmatmul.mubr.f32.gmra.mrb[0].mxu0 %v7913
    %v8280 = vpop.f32.mrb[0].mxu0
    %v8281 = vadd.f32 0.0, %v8280
    %v8282 = vpop.f32.mrb[0].mxu0
    %8283 = vmatprep.mubr.f32.mxu0 0.0
    %8284 = vmatmul.mubr.f32.gmra.mrb[0].mxu0 %v7916
    %v8285 = vpop.f32.mrb[0].mxu0
    %v8286 = vadd.f32 0.0, %v8285
    %v8287 = vpop.f32.mrb[0].mxu0
    %8288 = vmatprep.mubr.f32.mxu0 0.0
    %8289 = vmatmul.mubr.f32.gmra.mrb[0].mxu0 %v7919
    %v8290 = vpop.f32.mrb[0].mxu0
    %v8291 = vadd.f32 0.0, %v8290
    %v8292 = vpop.f32.mrb[0].mxu0
    %8293 = vmatprep.mubr.f32.mxu0 0.0
    %8294 = vmatmul.mubr.f32.gmra.mrb[0].mxu0 %v7922
    %v8295 = vpop.f32.mrb[0].mxu0
    %v8296 = vadd.f32 0.0, %v8295
    %v8297 = vpop.f32.mrb[0].mxu0
    %8298 = vmatprep.mubr.f32.mxu0 0.0
    %8299 = vmatmul.mubr.f32.gmra.mrb[0].mxu0 %v7925
    %v8300 = vpop.f32.mrb[0].mxu0
    %v8301 = vadd.f32 0.0, %v8300
    %v8302 = vpop.f32.mrb[0].mxu0
    %8303 = vmatprep.mubr.f32.mxu0 0.0
    %8304 = vmatmul.mubr.f32.gmra.mrb[0].mxu0 %v7928
    %v8305 = vpop.f32.mrb[0].mxu0
    %v8306 = vadd.f32 0.0, %v8305
    %v8307 = vpop.f32.mrb[0].mxu0
    %8308 = vmatprep.mubr.f32.mxu0 0.0
    %8309 = vmatmul.mubr.f32.gmra.mrb[0].mxu0 %v7931
    %v8310 = vpop.f32.mrb[0].mxu0
    %v8311 = vadd.f32 0.0, %v8310
    %v8312 = vpop.f32.mrb[0].mxu0
    %8313 = vmatprep.mubr.f32.mxu0 0.0
    %8314 = vmatmul.mubr.f32.gmra.mrb[0].mxu0 %v7934
    %v8315 = vpop.f32.mrb[0].mxu0
    %v8316 = vadd.f32 0.0, %v8315
    %v8317 = vpop.f32.mrb[0].mxu0
    %8318 = vmatprep.mubr.f32.mxu0 0.0
    %8319 = vmatmul.mubr.f32.gmra.mrb[0].mxu0 %v7937
    %v8320 = vpop.f32.mrb[0].mxu0
    %v8321 = vadd.f32 0.0, %v8320
    %v8322 = vpop.f32.mrb[0].mxu0
    %8323 = vmatprep.mubr.f32.mxu0 0.0
    %8324 = vmatmul.mubr.f32.gmra.mrb[0].mxu0 %v7940
    %v8325 = vpop.f32.mrb[0].mxu0
    %v8326 = vadd.f32 0.0, %v8325
    %v8327 = vpop.f32.mrb[0].mxu0
    %8328 = vmatprep.mubr.f32.mxu0 0.0
    %8329 = vmatmul.mubr.f32.gmra.mrb[0].mxu0 %v7943
    %v8330 = vpop.f32.mrb[0].mxu0
    %v8331 = vadd.f32 0.0, %v8330
    %v8332 = vpop.f32.mrb[0].mxu0
    %8333 = vdwg.mxu0
    %v8334 = vlaneseq
    %v8335 = vshrl.u32 %v8334, 7
    %v8336 = vld [vmem:[%s1] sm:$0xf]
    %v8337 = vlaneseq
    %v8338 = vshrl.u32 %v8337, 7
    %v8339 = vsub.s32 0, %v8338
    %v8340 = vrot.slane %v8336, %v8339
    %v8341 = vlaneseq
    %v8342 = vshrl.u32 %v8341, 7
    %v8343 = vsub.s32 1, %v8342
    %v8344 = vrot.slane %v8336, %v8343
    %v8345 = vlaneseq
    %v8346 = vshrl.u32 %v8345, 7
    %v8347 = vsub.s32 2, %v8346
    %v8348 = vrot.slane %v8336, %v8347
    %v8349 = vlaneseq
    %v8350 = vshrl.u32 %v8349, 7
    %v8351 = vsub.s32 3, %v8350
    %v8352 = vrot.slane %v8336, %v8351
    %vm8353 = vcmp.eq.s32.totalorder %v8335, %v8340
    %vm8354 = vcmp.eq.s32.totalorder %v8335, %v8344
    %vm8355 = vcmp.eq.s32.totalorder %v8335, %v8348
    %vm8356 = vcmp.eq.s32.totalorder %v8335, %v8352
    %v8357 = vsel %vm8353, 1, 0
    %v8358 = vsel %vm8354, 1, 0
    %v8359 = vsel %vm8355, 1, 0
    %v8360 = vsel %vm8356, 1, 0
    %v8361 = vcvt.s32.f32 %v8357
    %v8362 = vcvt.s32.f32 %v8358
    %v8363 = vcvt.s32.f32 %v8359
    %v8364 = vcvt.s32.f32 %v8360
    %v8365 = vpack.c.bf16 %v8361, %v8361
    %v8366 = vpack.c.bf16 %v8362, %v8362
    %v8367 = vpack.c.bf16 %v8363, %v8363
    %v8368 = vpack.c.bf16 %v8364, %v8364
    %v8369 = vld [vmem:[#allocation4] sm:$0xff]
    %v8371 = vlaneseq
    %v8372 = vshrl.u32 %v8371, 7
    %v8373 = vsub.s32 0, %v8372
    %v8374 = vrot.slane %v7551, %v8373
    %v8376 = vmul.f32 %v8369, %v8374
    %v8377 = vpack.c.bf16 %v7627, %v7625
    %v8378 = vpack.c.bf16 %v7631, %v7629
    %v8379 = vpack.c.bf16 %v7635, %v7633
    %v8380 = vpack.c.bf16 %v7639, %v7637
    %v8381 = vpack.c.bf16 %v7643, %v7641
    %v8382 = vpack.c.bf16 %v7647, %v7645
    %v8383 = vpack.c.bf16 %v7651, %v7649
    %v8384 = vpack.c.bf16 %v7655, %v7653
    %v8385 = vpack.c.bf16 %v7659, %v7657
    %v8386 = vpack.c.bf16 %v7663, %v7661
    %v8387 = vpack.c.bf16 %v7667, %v7665
    %v8388 = vpack.c.bf16 %v7671, %v7669
    %v8389 = vpack.c.bf16 %v7675, %v7673
    %v8390 = vpack.c.bf16 %v7679, %v7677
    %v8391 = vpack.c.bf16 %v7683, %v7681
    %v8392 = vpack.c.bf16 %v7687, %v7685
    %v8393 = vpack.c.bf16 %v7691, %v7689
    %v8394 = vpack.c.bf16 %v7695, %v7693
    %v8395 = vpack.c.bf16 %v7699, %v7697
    %v8396 = vpack.c.bf16 %v7703, %v7701
    %v8397 = vpack.c.bf16 %v7707, %v7705
    %v8398 = vpack.c.bf16 %v7711, %v7709
    %v8399 = vpack.c.bf16 %v7715, %v7713
    %v8400 = vpack.c.bf16 %v7719, %v7717
    %v8401 = vpack.c.bf16 %v7723, %v7721
    %v8402 = vpack.c.bf16 %v7727, %v7725
    %v8403 = vpack.c.bf16 %v7731, %v7729
    %v8404 = vpack.c.bf16 %v7735, %v7733
    %v8405 = vpack.c.bf16 %v7739, %v7737
    %v8406 = vpack.c.bf16 %v7743, %v7741
    %v8407 = vpack.c.bf16 %v7747, %v7745
    %v8408 = vpack.c.bf16 %v7751, %v7749
    %8409 = vmatprep.subr.bf16.mxu0 0
    %8410 = vmatpush1.bf16.msra.mxu0 %v8377
    %8411 = vmatprep.subr.bf16.mxu0 0
    %8412 = vmatpush1.bf16.msra.mxu0 %v8378
    %8413 = vmatprep.subr.bf16.mxu0 0
    %8414 = vmatpush1.bf16.msra.mxu0 %v8379
    %8415 = vmatprep.subr.bf16.mxu0 0
    %8416 = vmatpush1.bf16.msra.mxu0 %v8380
    %8417 = vmatprep.subr.bf16.mxu0 0
    %8418 = vmatpush1.bf16.msra.mxu0 %v8381
    %8419 = vmatprep.subr.bf16.mxu0 0
    %8420 = vmatpush1.bf16.msra.mxu0 %v8382
    %8421 = vmatprep.subr.bf16.mxu0 0
    %8422 = vmatpush1.bf16.msra.mxu0 %v8383
    %8423 = vmatprep.subr.bf16.mxu0 0
    %8424 = vmatpush1.bf16.msra.mxu0 %v8384
    %8425 = vmatprep.subr.bf16.mxu0 0
    %8426 = vmatpush1.bf16.msra.mxu0 %v8385
    %8427 = vmatprep.subr.bf16.mxu0 0
    %8428 = vmatpush1.bf16.msra.mxu0 %v8386
    %8429 = vmatprep.subr.bf16.mxu0 0
    %8430 = vmatpush1.bf16.msra.mxu0 %v8387
    %8431 = vmatprep.subr.bf16.mxu0 0
    %8432 = vmatpush1.bf16.msra.mxu0 %v8388
    %8433 = vmatprep.subr.bf16.mxu0 0
    %8434 = vmatpush1.bf16.msra.mxu0 %v8389
    %8435 = vmatprep.subr.bf16.mxu0 0
    %8436 = vmatpush1.bf16.msra.mxu0 %v8390
    %8437 = vmatprep.subr.bf16.mxu0 0
    %8438 = vmatpush1.bf16.msra.mxu0 %v8391
    %8439 = vmatprep.subr.bf16.mxu0 0
    %8440 = vmatpush1.bf16.msra.mxu0 %v8392
    %8441 = vmatprep.mubr.bf16.mxu0 %v8366
    %8442 = vmatmul.mubr.bf16.gmra.mrb[0].mxu0 %v8365
    %v8443 = vpop.f32.mrb[0].mxu0
    %v8444 = vadd.f32 0.0, %v8443
    %v8445 = vpop.f32.mrb[0].mxu0
    %v8446 = vpop.f32.mrb[0].mxu0
    %v8447 = vpop.f32.mrb[0].mxu0
    %8448 = vdwg.mxu0
    %8449 = vmatprep.subr.bf16.mxu0 0
    %8450 = vmatpush1.bf16.msra.mxu0 %v8393
    %8451 = vmatprep.subr.bf16.mxu0 0
    %8452 = vmatpush1.bf16.msra.mxu0 %v8394
    %8453 = vmatprep.subr.bf16.mxu0 0
    %8454 = vmatpush1.bf16.msra.mxu0 %v8395
    %8455 = vmatprep.subr.bf16.mxu0 0
    %8456 = vmatpush1.bf16.msra.mxu0 %v8396
    %8457 = vmatprep.subr.bf16.mxu0 0
    %8458 = vmatpush1.bf16.msra.mxu0 %v8397
    %8459 = vmatprep.subr.bf16.mxu0 0
    %8460 = vmatpush1.bf16.msra.mxu0 %v8398
    %8461 = vmatprep.subr.bf16.mxu0 0
    %8462 = vmatpush1.bf16.msra.mxu0 %v8399
    %8463 = vmatprep.subr.bf16.mxu0 0
    %8464 = vmatpush1.bf16.msra.mxu0 %v8400
    %8465 = vmatprep.subr.bf16.mxu0 0
    %8466 = vmatpush1.bf16.msra.mxu0 %v8401
    %8467 = vmatprep.subr.bf16.mxu0 0
    %8468 = vmatpush1.bf16.msra.mxu0 %v8402
    %8469 = vmatprep.subr.bf16.mxu0 0
    %8470 = vmatpush1.bf16.msra.mxu0 %v8403
    %8471 = vmatprep.subr.bf16.mxu0 0
    %8472 = vmatpush1.bf16.msra.mxu0 %v8404
    %8473 = vmatprep.subr.bf16.mxu0 0
    %8474 = vmatpush1.bf16.msra.mxu0 %v8405
    %8475 = vmatprep.subr.bf16.mxu0 0
    %8476 = vmatpush1.bf16.msra.mxu0 %v8406
    %8477 = vmatprep.subr.bf16.mxu0 0
    %8478 = vmatpush1.bf16.msra.mxu0 %v8407
    %8479 = vmatprep.subr.bf16.mxu0 0
    %8480 = vmatpush1.bf16.msra.mxu0 %v8408
    %8481 = vmatprep.mubr.bf16.mxu0 %v8368
    %8482 = vmatmul.mubr.bf16.gmra.mrb[0].mxu0 %v8367
    %v8483 = vpop.f32.mrb[0].mxu0
    %v8484 = vadd.f32 %v8444, %v8483
    %v8485 = vpop.f32.mrb[0].mxu0
    %v8486 = vpop.f32.mrb[0].mxu0
    %v8487 = vpop.f32.mrb[0].mxu0
    %8488 = vdwg.mxu0
    %v8489 = vadd.f32 %v8376, %v8484
    %8490 = vst.msk [vmem:[#allocation4] sm:$0xff] %vm7414, %v8489
    %v8491 = vld [vmem:[%s18] sm:$0x3]
    %v8492 = vsel %vm7414, %v7551, 0
    %v8495 = vsel %vm7945, %v8491, 0
    %8497 = vmatprep.subr.mxu0 0.0
    %8498 = vmatpush1.msra.mxu0 %v8495
    %8499 = vmatprep.subr.mxu0 0.0
    %8500 = vmatpush1.msra.mxu0 0.0
    %8501 = vmatprep.subr.mxu0 0.0
    %8502 = vmatpush1.msra.mxu0 0.0
    %8503 = vmatprep.subr.mxu0 0.0
    %8504 = vmatpush1.msra.mxu0 0.0
    %8505 = vmatprep.subr.mxu0 0.0
    %8506 = vmatpush1.msra.mxu0 0.0
    %8507 = vmatprep.subr.mxu0 0.0
    %8508 = vmatpush1.msra.mxu0 0.0
    %8509 = vmatprep.subr.mxu0 0.0
    %8510 = vmatpush1.msra.mxu0 0.0
    %8511 = vmatprep.subr.mxu0 0.0
    %8512 = vmatpush1.msra.mxu0 0.0
    %8513 = vmatprep.subr.mxu0 0.0
    %8514 = vmatpush1.msra.mxu0 0.0
    %8515 = vmatprep.subr.mxu0 0.0
    %8516 = vmatpush1.msra.mxu0 0.0
    %8517 = vmatprep.subr.mxu0 0.0
    %8518 = vmatpush1.msra.mxu0 0.0
    %8519 = vmatprep.subr.mxu0 0.0
    %8520 = vmatpush1.msra.mxu0 0.0
    %8521 = vmatprep.subr.mxu0 0.0
    %8522 = vmatpush1.msra.mxu0 0.0
    %8523 = vmatprep.subr.mxu0 0.0
    %8524 = vmatpush1.msra.mxu0 0.0
    %8525 = vmatprep.subr.mxu0 0.0
    %8526 = vmatpush1.msra.mxu0 0.0
    %8527 = vmatprep.subr.mxu0 0.0
    %8528 = vmatpush1.msra.mxu0 0.0
    %8529 = vmatprep.subr.mxu0 0.0
    %8530 = vmatpush1.msra.mxu0 0.0
    %8531 = vmatprep.subr.mxu0 0.0
    %8532 = vmatpush1.msra.mxu0 0.0
    %8533 = vmatprep.subr.mxu0 0.0
    %8534 = vmatpush1.msra.mxu0 0.0
    %8535 = vmatprep.subr.mxu0 0.0
    %8536 = vmatpush1.msra.mxu0 0.0
    %8537 = vmatprep.subr.mxu0 0.0
    %8538 = vmatpush1.msra.mxu0 0.0
    %8539 = vmatprep.subr.mxu0 0.0
    %8540 = vmatpush1.msra.mxu0 0.0
    %8541 = vmatprep.subr.mxu0 0.0
    %8542 = vmatpush1.msra.mxu0 0.0
    %8543 = vmatprep.subr.mxu0 0.0
    %8544 = vmatpush1.msra.mxu0 0.0
    %8545 = vmatprep.subr.mxu0 0.0
    %8546 = vmatpush1.msra.mxu0 0.0
    %8547 = vmatprep.subr.mxu0 0.0
    %8548 = vmatpush1.msra.mxu0 0.0
    %8549 = vmatprep.subr.mxu0 0.0
    %8550 = vmatpush1.msra.mxu0 0.0
    %8551 = vmatprep.subr.mxu0 0.0
    %8552 = vmatpush1.msra.mxu0 0.0
    %8553 = vmatprep.subr.mxu0 0.0
    %8554 = vmatpush1.msra.mxu0 0.0
    %8555 = vmatprep.subr.mxu0 0.0
    %8556 = vmatpush1.msra.mxu0 0.0
    %8557 = vmatprep.subr.mxu0 0.0
    %8558 = vmatpush1.msra.mxu0 0.0
    %8559 = vmatprep.subr.mxu0 0.0
    %8560 = vmatpush1.msra.mxu0 0.0
    %8561 = vmatprep.mubr.f32.mxu0 0.0
    %8562 = vmatmul.mubr.f32.gmra.mrb[0].mxu0 %v8492
    %v8563 = vpop.f32.mrb[0].mxu0
    %v8564 = vadd.f32 0.0, %v8563
    %v8565 = vpop.f32.mrb[0].mxu0
    %8566 = vdwg.mxu0
    %v8567 = vld [vmem:[#allocation5] sm:$0xff]
    %v8568 = vlaneseq
    %v8569 = vshrl.u32 %v8568, 7
    %v8570 = vsub.s32 0, %v8569
    %v8571 = vrot.slane %v8564, %v8570
    %v8572 = vmul.f32 %v8567, %v8571
    %v8573 = vmul.f32 %v5748, %v8016
    %v8574 = vmul.f32 %v5753, %v8021
    %v8575 = vmul.f32 %v5758, %v8026
    %v8576 = vmul.f32 %v5763, %v8031
    %v8577 = vmul.f32 %v5768, %v8036
    %v8578 = vmul.f32 %v5773, %v8041
    %v8579 = vmul.f32 %v5778, %v8046
    %v8580 = vmul.f32 %v5783, %v8051
    %v8581 = vmul.f32 %v5788, %v8056
    %v8582 = vmul.f32 %v5793, %v8061
    %v8583 = vmul.f32 %v5798, %v8066
    %v8584 = vmul.f32 %v5803, %v8071
    %v8585 = vmul.f32 %v5808, %v8076
    %v8586 = vmul.f32 %v5813, %v8081
    %v8587 = vmul.f32 %v5818, %v8086
    %v8588 = vmul.f32 %v5823, %v8091
    %v8589 = vmul.f32 %v5828, %v8096
    %v8590 = vmul.f32 %v5833, %v8101
    %v8591 = vmul.f32 %v5838, %v8106
    %v8592 = vmul.f32 %v5843, %v8111
    %v8593 = vmul.f32 %v5848, %v8116
    %v8594 = vmul.f32 %v5853, %v8121
    %v8595 = vmul.f32 %v5858, %v8126
    %v8596 = vmul.f32 %v5863, %v8131
    %v8597 = vmul.f32 %v5868, %v8136
    %v8598 = vmul.f32 %v5873, %v8141
    %v8599 = vmul.f32 %v5878, %v8146
    %v8600 = vmul.f32 %v5883, %v8151
    %v8601 = vmul.f32 %v5888, %v8156
    %v8602 = vmul.f32 %v5893, %v8161
    %v8603 = vmul.f32 %v5898, %v8166
    %v8604 = vmul.f32 %v5903, %v8171
    %v8605 = vmul.f32 %v5908, %v8176
    %v8606 = vmul.f32 %v5913, %v8181
    %v8607 = vmul.f32 %v5918, %v8186
    %v8608 = vmul.f32 %v5923, %v8191
    %v8609 = vmul.f32 %v5928, %v8196
    %v8610 = vmul.f32 %v5933, %v8201
    %v8611 = vmul.f32 %v5938, %v8206
    %v8612 = vmul.f32 %v5943, %v8211
    %v8613 = vmul.f32 %v5948, %v8216
    %v8614 = vmul.f32 %v5953, %v8221
    %v8615 = vmul.f32 %v5958, %v8226
    %v8616 = vmul.f32 %v5963, %v8231
    %v8617 = vmul.f32 %v5968, %v8236
    %v8618 = vmul.f32 %v5973, %v8241
    %v8619 = vmul.f32 %v5978, %v8246
    %v8620 = vmul.f32 %v5983, %v8251
    %v8621 = vmul.f32 %v5988, %v8256
    %v8622 = vmul.f32 %v5993, %v8261
    %v8623 = vmul.f32 %v5998, %v8266
    %v8624 = vmul.f32 %v6003, %v8271
    %v8625 = vmul.f32 %v6008, %v8276
    %v8626 = vmul.f32 %v6013, %v8281
    %v8627 = vmul.f32 %v6018, %v8286
    %v8628 = vmul.f32 %v6023, %v8291
    %v8629 = vmul.f32 %v6028, %v8296
    %v8630 = vmul.f32 %v6033, %v8301
    %v8631 = vmul.f32 %v6038, %v8306
    %v8632 = vmul.f32 %v6043, %v8311
    %v8633 = vmul.f32 %v6048, %v8316
    %v8634 = vmul.f32 %v6053, %v8321
    %v8635 = vmul.f32 %v6058, %v8326
    %v8636 = vmul.f32 %v6063, %v8331
    %v8637 = vpack.c.bf16 %v8574, %v8573
    %v8638 = vpack.c.bf16 %v8576, %v8575
    %v8639 = vpack.c.bf16 %v8578, %v8577
    %v8640 = vpack.c.bf16 %v8580, %v8579
    %v8641 = vpack.c.bf16 %v8582, %v8581
    %v8642 = vpack.c.bf16 %v8584, %v8583
    %v8643 = vpack.c.bf16 %v8586, %v8585
    %v8644 = vpack.c.bf16 %v8588, %v8587
    %v8645 = vpack.c.bf16 %v8590, %v8589
    %v8646 = vpack.c.bf16 %v8592, %v8591
    %v8647 = vpack.c.bf16 %v8594, %v8593
    %v8648 = vpack.c.bf16 %v8596, %v8595
    %v8649 = vpack.c.bf16 %v8598, %v8597
    %v8650 = vpack.c.bf16 %v8600, %v8599
    %v8651 = vpack.c.bf16 %v8602, %v8601
    %v8652 = vpack.c.bf16 %v8604, %v8603
    %v8653 = vpack.c.bf16 %v8606, %v8605
    %v8654 = vpack.c.bf16 %v8608, %v8607
    %v8655 = vpack.c.bf16 %v8610, %v8609
    %v8656 = vpack.c.bf16 %v8612, %v8611
    %v8657 = vpack.c.bf16 %v8614, %v8613
    %v8658 = vpack.c.bf16 %v8616, %v8615
    %v8659 = vpack.c.bf16 %v8618, %v8617
    %v8660 = vpack.c.bf16 %v8620, %v8619
    %v8661 = vpack.c.bf16 %v8622, %v8621
    %v8662 = vpack.c.bf16 %v8624, %v8623
    %v8663 = vpack.c.bf16 %v8626, %v8625
    %v8664 = vpack.c.bf16 %v8628, %v8627
    %v8665 = vpack.c.bf16 %v8630, %v8629
    %v8666 = vpack.c.bf16 %v8632, %v8631
    %v8667 = vpack.c.bf16 %v8634, %v8633
    %v8668 = vpack.c.bf16 %v8636, %v8635
    %8669 = vmatprep.subr.bf16.mxu0 0
    %8670 = vmatpush1.bf16.msra.mxu0 %v8637
    %8671 = vmatprep.subr.bf16.mxu0 0
    %8672 = vmatpush1.bf16.msra.mxu0 %v8638
    %8673 = vmatprep.subr.bf16.mxu0 0
    %8674 = vmatpush1.bf16.msra.mxu0 %v8639
    %8675 = vmatprep.subr.bf16.mxu0 0
    %8676 = vmatpush1.bf16.msra.mxu0 %v8640
    %8677 = vmatprep.subr.bf16.mxu0 0
    %8678 = vmatpush1.bf16.msra.mxu0 %v8641
    %8679 = vmatprep.subr.bf16.mxu0 0
    %8680 = vmatpush1.bf16.msra.mxu0 %v8642
    %8681 = vmatprep.subr.bf16.mxu0 0
    %8682 = vmatpush1.bf16.msra.mxu0 %v8643
    %8683 = vmatprep.subr.bf16.mxu0 0
    %8684 = vmatpush1.bf16.msra.mxu0 %v8644
    %8685 = vmatprep.subr.bf16.mxu0 0
    %8686 = vmatpush1.bf16.msra.mxu0 %v8645
    %8687 = vmatprep.subr.bf16.mxu0 0
    %8688 = vmatpush1.bf16.msra.mxu0 %v8646
    %8689 = vmatprep.subr.bf16.mxu0 0
    %8690 = vmatpush1.bf16.msra.mxu0 %v8647
    %8691 = vmatprep.subr.bf16.mxu0 0
    %8692 = vmatpush1.bf16.msra.mxu0 %v8648
    %8693 = vmatprep.subr.bf16.mxu0 0
    %8694 = vmatpush1.bf16.msra.mxu0 %v8649
    %8695 = vmatprep.subr.bf16.mxu0 0
    %8696 = vmatpush1.bf16.msra.mxu0 %v8650
    %8697 = vmatprep.subr.bf16.mxu0 0
    %8698 = vmatpush1.bf16.msra.mxu0 %v8651
    %8699 = vmatprep.subr.bf16.mxu0 0
    %8700 = vmatpush1.bf16.msra.mxu0 %v8652
    %8701 = vmatprep.mubr.bf16.mxu0 %v8366
    %8702 = vmatmul.mubr.bf16.gmra.mrb[0].mxu0 %v8365
    %v8703 = vpop.f32.mrb[0].mxu0
    %v8704 = vadd.f32 0.0, %v8703
    %v8705 = vpop.f32.mrb[0].mxu0
    %v8706 = vpop.f32.mrb[0].mxu0
    %v8707 = vpop.f32.mrb[0].mxu0
    %8708 = vdwg.mxu0
    %8709 = vmatprep.subr.bf16.mxu0 0
    %8710 = vmatpush1.bf16.msra.mxu0 %v8653
    %8711 = vmatprep.subr.bf16.mxu0 0
    %8712 = vmatpush1.bf16.msra.mxu0 %v8654
    %8713 = vmatprep.subr.bf16.mxu0 0
    %8714 = vmatpush1.bf16.msra.mxu0 %v8655
    %8715 = vmatprep.subr.bf16.mxu0 0
    %8716 = vmatpush1.bf16.msra.mxu0 %v8656
    %8717 = vmatprep.subr.bf16.mxu0 0
    %8718 = vmatpush1.bf16.msra.mxu0 %v8657
    %8719 = vmatprep.subr.bf16.mxu0 0
    %8720 = vmatpush1.bf16.msra.mxu0 %v8658
    %8721 = vmatprep.subr.bf16.mxu0 0
    %8722 = vmatpush1.bf16.msra.mxu0 %v8659
    %8723 = vmatprep.subr.bf16.mxu0 0
    %8724 = vmatpush1.bf16.msra.mxu0 %v8660
    %8725 = vmatprep.subr.bf16.mxu0 0
    %8726 = vmatpush1.bf16.msra.mxu0 %v8661
    %8727 = vmatprep.subr.bf16.mxu0 0
    %8728 = vmatpush1.bf16.msra.mxu0 %v8662
    %8729 = vmatprep.subr.bf16.mxu0 0
    %8730 = vmatpush1.bf16.msra.mxu0 %v8663
    %8731 = vmatprep.subr.bf16.mxu0 0
    %8732 = vmatpush1.bf16.msra.mxu0 %v8664
    %8733 = vmatprep.subr.bf16.mxu0 0
    %8734 = vmatpush1.bf16.msra.mxu0 %v8665
    %8735 = vmatprep.subr.bf16.mxu0 0
    %8736 = vmatpush1.bf16.msra.mxu0 %v8666
    %8737 = vmatprep.subr.bf16.mxu0 0
    %8738 = vmatpush1.bf16.msra.mxu0 %v8667
    %8739 = vmatprep.subr.bf16.mxu0 0
    %8740 = vmatpush1.bf16.msra.mxu0 %v8668
    %8741 = vmatprep.mubr.bf16.mxu0 %v8368
    %8742 = vmatmul.mubr.bf16.gmra.mrb[0].mxu0 %v8367
    %v8743 = vpop.f32.mrb[0].mxu0
    %v8744 = vadd.f32 %v8704, %v8743
    %v8745 = vpop.f32.mrb[0].mxu0
    %v8746 = vpop.f32.mrb[0].mxu0
    %v8747 = vpop.f32.mrb[0].mxu0
    %8748 = vdwg.mxu0
    %v8749 = vadd.f32 %v8572, %v8744
    %8750 = vst.msk [vmem:[#allocation5] sm:$0xff] %vm1984, %v8749
    // Predicated region
    $region90: #{tpu_custom_call.1} parent=1 // pred_check
      %p8751 = pneg %p70
    $region91: #{tpu_custom_call.1} parent=1 // pred_check_branch
      %8753 = sbr.rel (%p8751) target = $region93
    $region92: #{tpu_custom_call.1} parent=1 // pred_region
      %v8754 = vld [vmem:[#allocation4] sm:$0xff]
      %vm8755 = vcmp.gt.f32.partialorder %v8754, 0.0
      %v8756 = vsel %vm8755, %v8754, 1.0
      %v8757 = vrcp.pop %v8756
      %v8758 = vld [vmem:[%s18] sm:$0x3]
      %v8760 = vsel %vm7414, %v8757, 0
      %v8763 = vsel %vm7945, %v8758, 0
      %8765 = vmatprep.subr.mxu0 0.0
      %8766 = vmatpush1.msra.mxu0 %v8763
      %8767 = vmatprep.subr.mxu0 0.0
      %8768 = vmatpush1.msra.mxu0 0.0
      %8769 = vmatprep.subr.mxu0 0.0
      %8770 = vmatpush1.msra.mxu0 0.0
      %8771 = vmatprep.subr.mxu0 0.0
      %8772 = vmatpush1.msra.mxu0 0.0
      %8773 = vmatprep.subr.mxu0 0.0
      %8774 = vmatpush1.msra.mxu0 0.0
      %8775 = vmatprep.subr.mxu0 0.0
      %8776 = vmatpush1.msra.mxu0 0.0
      %8777 = vmatprep.subr.mxu0 0.0
      %8778 = vmatpush1.msra.mxu0 0.0
      %8779 = vmatprep.subr.mxu0 0.0
      %8780 = vmatpush1.msra.mxu0 0.0
      %8781 = vmatprep.subr.mxu0 0.0
      %8782 = vmatpush1.msra.mxu0 0.0
      %8783 = vmatprep.subr.mxu0 0.0
      %8784 = vmatpush1.msra.mxu0 0.0
      %8785 = vmatprep.subr.mxu0 0.0
      %8786 = vmatpush1.msra.mxu0 0.0
      %8787 = vmatprep.subr.mxu0 0.0
      %8788 = vmatpush1.msra.mxu0 0.0
      %8789 = vmatprep.subr.mxu0 0.0
      %8790 = vmatpush1.msra.mxu0 0.0
      %8791 = vmatprep.subr.mxu0 0.0
      %8792 = vmatpush1.msra.mxu0 0.0
      %8793 = vmatprep.subr.mxu0 0.0
      %8794 = vmatpush1.msra.mxu0 0.0
      %8795 = vmatprep.subr.mxu0 0.0
      %8796 = vmatpush1.msra.mxu0 0.0
      %8797 = vmatprep.subr.mxu0 0.0
      %8798 = vmatpush1.msra.mxu0 0.0
      %8799 = vmatprep.subr.mxu0 0.0
      %8800 = vmatpush1.msra.mxu0 0.0
      %8801 = vmatprep.subr.mxu0 0.0
      %8802 = vmatpush1.msra.mxu0 0.0
      %8803 = vmatprep.subr.mxu0 0.0
      %8804 = vmatpush1.msra.mxu0 0.0
      %8805 = vmatprep.subr.mxu0 0.0
      %8806 = vmatpush1.msra.mxu0 0.0
      %8807 = vmatprep.subr.mxu0 0.0
      %8808 = vmatpush1.msra.mxu0 0.0
      %8809 = vmatprep.subr.mxu0 0.0
      %8810 = vmatpush1.msra.mxu0 0.0
      %8811 = vmatprep.subr.mxu0 0.0
      %8812 = vmatpush1.msra.mxu0 0.0
      %8813 = vmatprep.subr.mxu0 0.0
      %8814 = vmatpush1.msra.mxu0 0.0
      %8815 = vmatprep.subr.mxu0 0.0
      %8816 = vmatpush1.msra.mxu0 0.0
      %8817 = vmatprep.subr.mxu0 0.0
      %8818 = vmatpush1.msra.mxu0 0.0
      %8819 = vmatprep.subr.mxu0 0.0
      %8820 = vmatpush1.msra.mxu0 0.0
      %8821 = vmatprep.subr.mxu0 0.0
      %8822 = vmatpush1.msra.mxu0 0.0
      %8823 = vmatprep.subr.mxu0 0.0
      %8824 = vmatpush1.msra.mxu0 0.0
      %8825 = vmatprep.subr.mxu0 0.0
      %8826 = vmatpush1.msra.mxu0 0.0
      %8827 = vmatprep.subr.mxu0 0.0
      %8828 = vmatpush1.msra.mxu0 0.0
      %8829 = vmatprep.mubr.f32.mxu0 0.0
      %8830 = vmatmul.mubr.f32.gmra.mrb[0].mxu0 %v8760
      %v8831 = vpop.f32.mrb[0].mxu0
      %v8832 = vadd.f32 0.0, %v8831
      %v8833 = vpop.f32.mrb[0].mxu0
      %8834 = vdwg.mxu0
      %v8835 = vld [vmem:[#allocation5] sm:$0xff]
      %v8836 = vmul.f32 %v8835, %v8832
      %v8837 = vld [vmem:[%s19] sm:$0xff]
      %v8838 = vld [vmem:[%s19 + $0x8] sm:$0xff]
      %v8839 = vld [vmem:[%s20] sm:$0x1]
      %v8841 = vlaneseq
      %v8842 = vshrl.u32 %v8841, 7
      %v8843 = vsub.s32 0, %v8842
      %v8844 = vrot.slane %v8839, %v8843
      %v8847 = vsel %vm1984, %v8836, 0
      %8849 = vmatprep.subr.mxu0 0.0
      %8850 = vmatpush1.msra.mxu0 %v8837
      %8851 = vmatprep.subr.mxu0 0.0
      %8852 = vmatpush1.msra.mxu0 %v8838
      %8853 = vmatprep.subr.mxu0 0.0
      %8854 = vmatpush1.msra.mxu0 0.0
      %8855 = vmatprep.subr.mxu0 0.0
      %8856 = vmatpush1.msra.mxu0 0.0
      %8857 = vmatprep.subr.mxu0 0.0
      %8858 = vmatpush1.msra.mxu0 0.0
      %8859 = vmatprep.subr.mxu0 0.0
      %8860 = vmatpush1.msra.mxu0 0.0
      %8861 = vmatprep.subr.mxu0 0.0
      %8862 = vmatpush1.msra.mxu0 0.0
      %8863 = vmatprep.subr.mxu0 0.0
      %8864 = vmatpush1.msra.mxu0 0.0
      %8865 = vmatprep.subr.mxu0 0.0
      %8866 = vmatpush1.msra.mxu0 0.0
      %8867 = vmatprep.subr.mxu0 0.0
      %8868 = vmatpush1.msra.mxu0 0.0
      %8869 = vmatprep.subr.mxu0 0.0
      %8870 = vmatpush1.msra.mxu0 0.0
      %8871 = vmatprep.subr.mxu0 0.0
      %8872 = vmatpush1.msra.mxu0 0.0
      %8873 = vmatprep.subr.mxu0 0.0
      %8874 = vmatpush1.msra.mxu0 0.0
      %8875 = vmatprep.subr.mxu0 0.0
      %8876 = vmatpush1.msra.mxu0 0.0
      %8877 = vmatprep.subr.mxu0 0.0
      %8878 = vmatpush1.msra.mxu0 0.0
      %8879 = vmatprep.subr.mxu0 0.0
      %8880 = vmatpush1.msra.mxu0 0.0
      %8881 = vmatprep.subr.mxu0 0.0
      %8882 = vmatpush1.msra.mxu0 0.0
      %8883 = vmatprep.subr.mxu0 0.0
      %8884 = vmatpush1.msra.mxu0 0.0
      %8885 = vmatprep.subr.mxu0 0.0
      %8886 = vmatpush1.msra.mxu0 0.0
      %8887 = vmatprep.subr.mxu0 0.0
      %8888 = vmatpush1.msra.mxu0 0.0
      %8889 = vmatprep.subr.mxu0 0.0
      %8890 = vmatpush1.msra.mxu0 0.0
      %8891 = vmatprep.subr.mxu0 0.0
      %8892 = vmatpush1.msra.mxu0 0.0
      %8893 = vmatprep.subr.mxu0 0.0
      %8894 = vmatpush1.msra.mxu0 0.0
      %8895 = vmatprep.subr.mxu0 0.0
      %8896 = vmatpush1.msra.mxu0 0.0
      %8897 = vmatprep.subr.mxu0 0.0
      %8898 = vmatpush1.msra.mxu0 0.0
      %8899 = vmatprep.subr.mxu0 0.0
      %8900 = vmatpush1.msra.mxu0 0.0
      %8901 = vmatprep.subr.mxu0 0.0
      %8902 = vmatpush1.msra.mxu0 0.0
      %8903 = vmatprep.subr.mxu0 0.0
      %8904 = vmatpush1.msra.mxu0 0.0
      %8905 = vmatprep.subr.mxu0 0.0
      %8906 = vmatpush1.msra.mxu0 0.0
      %8907 = vmatprep.subr.mxu0 0.0
      %8908 = vmatpush1.msra.mxu0 0.0
      %8909 = vmatprep.subr.mxu0 0.0
      %8910 = vmatpush1.msra.mxu0 0.0
      %8911 = vmatprep.subr.mxu0 0.0
      %8912 = vmatpush1.msra.mxu0 0.0
      %8913 = vmatprep.mubr.f32.mxu0 0.0
      %8914 = vmatmul.mubr.f32.gmra.mrb[0].mxu0 %v8847
      %v8915 = vpop.f32.mrb[0].mxu0
      %v8916 = vadd.f32 %v8844, %v8915
      %v8917 = vpop.f32.mrb[0].mxu0
      %8918 = vdwg.mxu0
      %8919 = vst.msk [vmem:[#allocation7] sm:$0xff] %vm1984, %v8916
    $region93: #{tpu_custom_call.1} parent=1 // pred_fallthru
      _
    // Predicated region
    $region94: #{tpu_custom_call.1} parent=1 // pred_check
      _
    $region95: #{tpu_custom_call.1} parent=1 // pred_check_branch
      %8921 = sbr.rel (0) target = $region97
    $region96: #{tpu_custom_call.1} parent=1 // pred_region
      %s8923 = ssub.s32 128, 128
      %8924 = vsyncadd [#allocation8], %s8923
      %s8926 = sshll.u32 [#allocation7], 4
      %s8927 = int_to_ptr.vmem [resolvable:$true] %s8926
      %8929 = dma.vmem_to_hbm [thread:$0]  %s8927, 128, %s21, [#allocation8]
    $region97: #{tpu_custom_call.1} parent=1 // pred_fallthru
      _
    // Predicated region
    $region98: #{tpu_custom_call.1} parent=1 // pred_check
      _
    $region99: #{tpu_custom_call.1} parent=1 // pred_check_branch
      %8931 = sbr.rel (0) target = $region101
    $region100: #{tpu_custom_call.1} parent=1 // pred_region
      %8932 = dma.done [#allocation8], 128
    $region101: #{tpu_custom_call.1} parent=1 // pred_fallthru
      _
    %8933 = vsyncpa [#allocation8], 1

</llo_original>
